<compile_context>
chip_gen: v7x
topology: tpu7x:2x2x1
jax: 0.10.0
libtpu: 0.0.40
codegen_flags: <defaults>
</compile_context>

<pallas_src>
import functools

import jax
import jax.numpy as jnp
import numpy as np
from jax.experimental import pallas as pl
from jax.experimental.pallas import tpu as pltpu


def _round_up(x, m):
    return (x + m - 1) // m * m


# ----------------------------- Pallas kernel ------------------------------- #
def rnnlm_nll_kernel(emb_ref, y_ref, len_ref,
                     w_ih_ref, w_hh_ref, b_ref,
                     w_out_ref, b_out_ref,
                     out_ref,
                     h_scr, c_scr, acc_scr, xseq_scr,
                     *, v_tile):
    # grid = (batch_tiles, time_chunks); chunk axis (1) is sequential ("arbitrary").
    chunk = pl.program_id(1)
    num_layers, Nt, H = c_scr.shape
    T_chunk = xseq_scr.shape[0]
    V_pad = w_out_ref.shape[1]
    M = T_chunk * Nt                       # matmul M rows per chunk

    @pl.when(chunk == 0)
    def _init():
        h_scr[...] = jnp.zeros_like(h_scr)
        c_scr[...] = jnp.zeros_like(c_scr)
        acc_scr[...] = jnp.zeros_like(acc_scr)

    # ---------------- stacked LSTM, layer-major over the time chunk --------- #
    # TODO(synk): at production icefall sizes (E=H=2048) stream w_ih/w_hh per layer
    # from HBM (memory_space=pl.ANY + double-buffered make_async_copy) instead of
    # keeping them resident; resident weights alone exceed v7x's 64 MiB VMEM there.
    for l in range(num_layers):                              # static unroll over layers
        if l == 0:
            inp_seq = emb_ref[...]                           # (T_chunk, Nt, E) bf16
        else:
            inp_seq = xseq_scr[...]                          # (T_chunk, Nt, H) bf16

        # Hoisted input projection: one large MXU matmul for the whole chunk.
        x_proj = jnp.dot(inp_seq.reshape(M, inp_seq.shape[-1]), w_ih_ref[l],
                         preferred_element_type=jnp.float32)
        x_proj = x_proj.reshape(T_chunk, Nt, 4 * H) + b_ref[l]   # (T_chunk, Nt, 4H) f32

        h_prev = h_scr[l]                                    # (Nt, H) bf16 (no cast)
        c_prev = c_scr[l]                                    # (Nt, H) f32
        for t in range(T_chunk):                             # static unroll, small/fixed
            gates = x_proj[t] + jnp.dot(h_prev, w_hh_ref[l],
                                        preferred_element_type=jnp.float32)
            # gate order i,f,o,g: one contiguous lane-aligned sigmoid slab + one tanh
            sig = jax.nn.sigmoid(gates[:, 0:3 * H])
            g_g = jnp.tanh(gates[:, 3 * H:4 * H])
            i_g = sig[:, 0:H]
            f_g = sig[:, H:2 * H]
            o_g = sig[:, 2 * H:3 * H]
            c_prev = f_g * c_prev + i_g * g_g
            h_prev = (o_g * jnp.tanh(c_prev)).astype(jnp.bfloat16)
            xseq_scr[t] = h_prev                             # layer output -> next layer input
        h_scr[l] = h_prev
        c_scr[l] = c_prev

    # -------- output projection + CE on the whole chunk (vocab-tiled LSE) --- #
    top = xseq_scr[...].reshape(M, H)                        # (M, H) bf16
    y_flat = y_ref[...].reshape(M, 1)                        # (M, 1) int32
    m_run = jnp.full((M, 1), -jnp.inf, jnp.float32)
    s_run = jnp.zeros((M, 1), jnp.float32)
    tgt = jnp.zeros((M, 1), jnp.float32)
    for vt in range(V_pad // v_tile):                        # static vocab tiling
        lo = vt * v_tile
        logits = (jnp.dot(top, w_out_ref[:, lo:lo + v_tile],
                          preferred_element_type=jnp.float32)
                  + b_out_ref[:, lo:lo + v_tile])            # (M, v_tile) f32
        m_new = jnp.maximum(m_run, jnp.max(logits, axis=-1, keepdims=True))
        s_run = (s_run * jnp.exp(m_run - m_new)
                 + jnp.sum(jnp.exp(logits - m_new), axis=-1, keepdims=True))
        m_run = m_new
        vocab_iota = lo + jax.lax.broadcasted_iota(jnp.int32, (M, v_tile), 1)
        tgt = tgt + jnp.sum(jnp.where(vocab_iota == y_flat, logits, 0.0),
                            axis=-1, keepdims=True)
    nll = (m_run + jnp.log(s_run) - tgt).reshape(T_chunk, Nt, 1)

    # mask padded timesteps (global t >= length) and accumulate over the chunk
    t_iota = (jax.lax.broadcasted_iota(jnp.int32, (T_chunk, Nt, 1), 0)
              + chunk * T_chunk)
    valid = t_iota < len_ref[...].reshape(1, Nt, 1)
    acc_scr[...] = acc_scr[...] + jnp.sum(jnp.where(valid, nll, 0.0), axis=0)

    @pl.when(chunk == pl.num_programs(1) - 1)
    def _store():
        out_ref[...] = acc_scr[...]                          # single store per batch tile


# ------------------------------ JAX wrapper -------------------------------- #
def _permute_gates_ifgo_to_ifog(w):
    """Permute the last (4H) axis from PyTorch order i,f,g,o to i,f,o,g."""
    i, f, g, o = jnp.split(w, 4, axis=-1)
    return jnp.concatenate([i, f, o, g], axis=-1)


def rnn_lm_nll(x, x_lens, params, sos_id, eos_id,
               batch_tile=128, time_chunk=8, vocab_tile=512):
    """x: (N, L) int32 tokens (no SOS/EOS), x_lens: (N,) int32. Returns (N,) f32."""
    N, L = x.shape
    T = L + 1

    num_layers, E, fourH = params["w_ih_T"].shape
    H = fourH // 4
    V = params["w_out_T"].shape[1]
    # Layer stacking of W_ih requires embedding_dim == hidden_dim; fail loudly.
    assert E == H, "stacked W_ih layout requires embedding_dim == hidden_dim"

    # ---- tile geometry ----------------------------------------------------- #
    # batch tile: multiple of 16 (bf16 sublane pack), default up to MXU row width.
    bt = min(batch_tile, _round_up(N, 16))
    bt = max(16, (bt // 16) * 16)
    N_pad = _round_up(N, bt)
    n_b = N_pad // bt
    # TODO(synk): on v7x prefer n_b >= 2 so the "parallel" batch axis shards across
    # both TensorCores (shrink bt if the batch is too small for that).

    T_pad = _round_up(T, time_chunk)
    n_c = T_pad // time_chunk

    v_tile = min(vocab_tile, _round_up(V, 128))
    v_tile = max(128, (v_tile // 128) * 128)
    V_pad = _round_up(V, v_tile)

    # ---- glue: build sos_x / x_eos / lengths exactly like the torch wrapper -- #
    pad = N_pad - N
    x_p = jnp.pad(x, ((0, pad), (0, 0)))
    lens_p = jnp.pad(x_lens, (0, pad))
    sos_x = jnp.concatenate([jnp.full((N_pad, 1), sos_id, x.dtype), x_p], axis=1)  # (N_pad, T)
    x_eos = jnp.concatenate([x_p, jnp.zeros((N_pad, 1), x.dtype)], axis=1)          # (N_pad, T)
    x_eos = x_eos.at[jnp.arange(N_pad), lens_p].set(eos_id)
    lengths = (lens_p + 1).astype(jnp.int32).reshape(N_pad, 1)

    # ---- glue: embedding lookup, time-major, padded time axis ---------------- #
    # TODO(synk): scalar-prefetch token ids and gather embedding rows inside the
    # kernel instead of materializing emb in HBM (halves activation HBM traffic).
    emb = jnp.take(params["embedding"], sos_x, axis=0)                 # (N_pad, T, E)
    emb = jnp.transpose(emb, (1, 0, 2)).astype(jnp.bfloat16)           # (T, N_pad, E)
    emb = jnp.pad(emb, ((0, T_pad - T), (0, 0), (0, 0)))
    y = jnp.transpose(x_eos, (1, 0)).astype(jnp.int32)[:, :, None]     # (T, N_pad, 1)
    y = jnp.pad(y, ((0, T_pad - T), (0, 0), (0, 0)))

    # Gate columns permuted offline so the kernel can do one contiguous sigmoid.
    w_ih = _permute_gates_ifgo_to_ifog(params["w_ih_T"]).astype(jnp.bfloat16)
    w_hh = _permute_gates_ifgo_to_ifog(params["w_hh_T"]).astype(jnp.bfloat16)
    bias = _permute_gates_ifgo_to_ifog(params["bias"]).astype(jnp.float32)
    w_out = params["w_out_T"].astype(jnp.bfloat16)
    b_out = params["b_out"].astype(jnp.float32)
    if V_pad != V:  # pad vocab: zero weights + very negative bias -> exp() == 0, never a target
        w_out = jnp.pad(w_out, ((0, 0), (0, V_pad - V)))
        b_out = jnp.pad(b_out, ((0, 0), (0, V_pad - V)), constant_values=-1e30)

    # ---- VMEM budget: compute footprint + headroom, clamp to this chip's VMEM -- #
    bytes_resident = ((w_ih.size + w_hh.size + w_out.size) * 2
                      + (bias.size + b_out.size) * 4)
    bytes_stream = 2 * (time_chunk * bt * E * 2 + time_chunk * bt * 4)    # 2x-buffered emb+y
    bytes_scratch = (num_layers * bt * H * (2 + 4)            # h (bf16) + c (f32)
                     + time_chunk * bt * H * 2                # xseq (bf16)
                     + time_chunk * bt * fourH * 4            # x_proj temp (f32)
                     + 2 * time_chunk * bt * v_tile * 4       # logits + exp temps (f32)
                     + bt * 4 * 8)                            # small per-row scalars
    try:
        vmem_cap = int(pltpu.get_tpu_info().vmem_capacity_bytes)
    except Exception:
        vmem_cap = 64 * 1024 * 1024   # conservative default (v7x per-core VMEM)
    vmem_limit = int(min(vmem_cap,
                         max(32 * 1024 * 1024,
                             2 * (bytes_resident + bytes_stream + bytes_scratch))))

    kernel = functools.partial(rnnlm_nll_kernel, v_tile=v_tile)

    out = pl.pallas_call(
        kernel,
        out_shape=jax.ShapeDtypeStruct((N_pad, 1), jnp.float32),
        grid=(n_b, n_c),
        in_specs=[
            pl.BlockSpec((time_chunk, bt, E), lambda b, c: (c, b, 0)),       # emb chunk
            pl.BlockSpec((time_chunk, bt, 1), lambda b, c: (c, b, 0)),       # target chunk
            pl.BlockSpec((bt, 1), lambda b, c: (b, 0)),                      # lengths (resident)
            pl.BlockSpec((num_layers, E, fourH), lambda b, c: (0, 0, 0)),    # W_ih (resident)
            pl.BlockSpec((num_layers, H, fourH), lambda b, c: (0, 0, 0)),    # W_hh (resident)
            pl.BlockSpec((num_layers, 1, fourH), lambda b, c: (0, 0, 0)),    # bias (resident)
            pl.BlockSpec((H, V_pad), lambda b, c: (0, 0)),                   # W_out (resident)
            pl.BlockSpec((1, V_pad), lambda b, c: (0, 0)),                   # b_out (resident)
        ],
        out_specs=pl.BlockSpec((bt, 1), lambda b, c: (b, 0)),
        scratch_shapes=[
            pltpu.VMEM((num_layers, bt, H), jnp.bfloat16),   # h state (bf16: direct MXU operand)
            pltpu.VMEM((num_layers, bt, H), jnp.float32),    # c state
            pltpu.VMEM((bt, 1), jnp.float32),                # per-sentence NLL accumulator
            pltpu.VMEM((time_chunk, bt, H), jnp.bfloat16),   # per-layer h sequence buffer
        ],
        compiler_params=pltpu.CompilerParams(
            dimension_semantics=("parallel", "arbitrary"),
            vmem_limit_bytes=vmem_limit,
        ),
    )(emb, y, lengths, w_ih, w_hh, bias, w_out, b_out)

    return out[:N, 0]


# --------------------------- pure-JAX reference ----------------------------- #
def rnn_lm_nll_ref(x, x_lens, params, sos_id, eos_id):
    """Pure-JAX reference with the same precision recipe (bf16 matmul inputs,
    f32 accumulation) and the original PyTorch i,f,g,o gate order."""
    N, L = x.shape
    sos_x = jnp.concatenate([jnp.full((N, 1), sos_id, x.dtype), x], axis=1)
    x_eos = jnp.concatenate([x, jnp.zeros((N, 1), x.dtype)], axis=1)
    x_eos = x_eos.at[jnp.arange(N), x_lens].set(eos_id)
    lengths = x_lens + 1
    emb = jnp.take(params["embedding"], sos_x, axis=0).astype(jnp.bfloat16)  # (N, T, E)
    T = emb.shape[1]
    w_ih = params["w_ih_T"].astype(jnp.bfloat16)
    w_hh = params["w_hh_T"].astype(jnp.bfloat16)
    bias = params["bias"].astype(jnp.float32)
    w_out = params["w_out_T"].astype(jnp.bfloat16)
    b_out = params["b_out"].astype(jnp.float32)
    num_layers = w_ih.shape[0]
    H = w_hh.shape[1]
    h = jnp.zeros((num_layers, N, H), jnp.float32)
    c = jnp.zeros((num_layers, N, H), jnp.float32)
    acc = jnp.zeros((N,), jnp.float32)
    for t in range(T):
        inp = emb[:, t, :]
        for l in range(num_layers):
            gates = (jnp.dot(inp, w_ih[l], preferred_element_type=jnp.float32)
                     + jnp.dot(h[l].astype(jnp.bfloat16), w_hh[l],
                               preferred_element_type=jnp.float32)
                     + bias[l])
            i_g = jax.nn.sigmoid(gates[:, :H])
            f_g = jax.nn.sigmoid(gates[:, H:2 * H])
            g_g = jnp.tanh(gates[:, 2 * H:3 * H])
            o_g = jax.nn.sigmoid(gates[:, 3 * H:])
            cn = f_g * c[l] + i_g * g_g
            hn = o_g * jnp.tanh(cn)
            c = c.at[l].set(cn)
            h = h.at[l].set(hn)
            inp = hn.astype(jnp.bfloat16)
        logits = jnp.dot(inp, w_out, preferred_element_type=jnp.float32) + b_out
        logz = jax.scipy.special.logsumexp(logits, axis=-1)
        tgt = logits[jnp.arange(N), x_eos[:, t]]
        nll = logz - tgt
        acc = acc + jnp.where(t < lengths, nll, 0.0)
    return acc


# --------------------------------- main ------------------------------------- #
if __name__ == "__main__":
    # Small, lane-aligned, forward-consistent shapes. T = L+1 = 14 -> 2 time chunks.
    N, L = 2, 13
    vocab_size = 128
    embedding_dim = 128
    hidden_dim = 128          # == embedding_dim so layer-0 W_ih stacks with others
    num_layers = 2
    sos_id, eos_id = 1, 2

    key = jax.random.PRNGKey(0)
    k_emb, k_ih, k_hh, k_bih, k_bhh, k_wo, k_bo, k_x = jax.random.split(key, 8)

    scale = 1.0 / np.sqrt(hidden_dim)
    params = {
        "embedding": jax.random.normal(k_emb, (vocab_size, embedding_dim), jnp.float32) * 0.1,
        "w_ih_T": jax.random.uniform(k_ih, (num_layers, embedding_dim, 4 * hidden_dim),
                                     jnp.float32, -scale, scale),
        "w_hh_T": jax.random.uniform(k_hh, (num_layers, hidden_dim, 4 * hidden_dim),
                                     jnp.float32, -scale, scale),
        "bias": (jax.random.uniform(k_bih, (num_layers, 1, 4 * hidden_dim),
                                    jnp.float32, -scale, scale)
                 + jax.random.uniform(k_bhh, (num_layers, 1, 4 * hidden_dim),
                                      jnp.float32, -scale, scale)),
        "w_out_T": jax.random.uniform(k_wo, (hidden_dim, vocab_size),
                                      jnp.float32, -scale, scale),
        "b_out": jax.random.uniform(k_bo, (1, vocab_size), jnp.float32, -scale, scale),
    }

    # tokens in [3, vocab) so they never collide with sos/eos/pad
    x = jax.random.randint(k_x, (N, L), 3, vocab_size, dtype=jnp.int32)
    x_lens = jnp.array([L, 6], dtype=jnp.int32)

    fn = jax.jit(functools.partial(rnn_lm_nll, sos_id=sos_id, eos_id=eos_id))
    nll = jax.block_until_ready(fn(x, x_lens, params))

    nll_ref = rnn_lm_nll_ref(x, x_lens, params, sos_id, eos_id)
    np.testing.assert_allclose(np.asarray(nll), np.asarray(nll_ref),
                               rtol=1e-2, atol=1e-2)
    assert nll.shape == (N,) and nll.dtype == jnp.float32

    print("KERNEL_OK")
</pallas_src>

<mosaic_0001>
module attributes {stable_mosaic.version = 11 : i64} {
  func.func @rnnlm_nll_kernel(%arg0: i32, %arg1: i32, %arg2: memref<8x16x128xbf16, #tpu.memory_space<vmem>>, %arg3: memref<8x16x1xi32, #tpu.memory_space<vmem>>, %arg4: memref<16x1xi32, #tpu.memory_space<vmem>>, %arg5: memref<2x128x512xbf16, #tpu.memory_space<vmem>>, %arg6: memref<2x128x512xbf16, #tpu.memory_space<vmem>>, %arg7: memref<2x1x512xf32, #tpu.memory_space<vmem>>, %arg8: memref<128x128xbf16, #tpu.memory_space<vmem>>, %arg9: memref<1x128xf32, #tpu.memory_space<vmem>>, %arg10: memref<16x1xf32, #tpu.memory_space<vmem>>, %arg11: memref<2x16x128xbf16, #tpu.memory_space<vmem>>, %arg12: memref<2x16x128xf32, #tpu.memory_space<vmem>>, %arg13: memref<16x1xf32, #tpu.memory_space<vmem>>, %arg14: memref<8x16x128xbf16, #tpu.memory_space<vmem>>) attributes {dimension_semantics = [#tpu.dimension_semantics<parallel>, #tpu.dimension_semantics<arbitrary>], iteration_bounds = array<i64: 1, 2>, scalar_prefetch = 0 : i64, scratch_operands = 4 : i64, tpu.core_type = #tpu.core_type<tc>, window_params = [{transform_indices = @transform_0, window_bounds = array<i64: 8, 16, 128>}, {transform_indices = @transform_1, window_bounds = array<i64: 8, 16, 1>}, {transform_indices = @transform_2, window_bounds = array<i64: 16, 1>}, {pipeline_mode = #tpu.pipeline_mode<synchronous>, transform_indices = @transform_3, window_bounds = array<i64: 2, 128, 512>}, {pipeline_mode = #tpu.pipeline_mode<synchronous>, transform_indices = @transform_4, window_bounds = array<i64: 2, 128, 512>}, {pipeline_mode = #tpu.pipeline_mode<synchronous>, transform_indices = @transform_5, window_bounds = array<i64: 2, 1, 512>}, {pipeline_mode = #tpu.pipeline_mode<synchronous>, transform_indices = @transform_6, window_bounds = array<i64: 128, 128>}, {pipeline_mode = #tpu.pipeline_mode<synchronous>, transform_indices = @transform_7, window_bounds = array<i64: 1, 128>}, {transform_indices = @transform_8, window_bounds = array<i64: 16, 1>}]} {
    %c0_i32 = arith.constant 0 : i32
    %0 = arith.cmpi eq, %arg1, %c0_i32 : i32
    %1 = arith.extui %0 : i1 to i32
    %c0_i32_0 = arith.constant 0 : i32
    %2 = arith.cmpi ne, %1, %c0_i32_0 : i32
    scf.if %2 {
      %cst_192 = arith.constant 0.000000e+00 : bf16
      %516 = vector.broadcast %cst_192 : bf16 to vector<2x16x128xbf16>
      %c0_193 = arith.constant 0 : index
      %c0_194 = arith.constant 0 : index
      %c0_195 = arith.constant 0 : index
      %517 = vector.load %arg11[%c0_193, %c0_194, %c0_195] : memref<2x16x128xbf16, #tpu.memory_space<vmem>>, vector<2x16x128xbf16>
      tpu.vector_store %arg11[%c0_193, %c0_194, %c0_195], %516 {strides = array<i32>} : memref<2x16x128xbf16, #tpu.memory_space<vmem>>, vector<2x16x128xbf16>,
      %cst_196 = arith.constant 0.000000e+00 : f32
      %518 = vector.broadcast %cst_196 : f32 to vector<2x16x128xf32>
      %c0_197 = arith.constant 0 : index
      %c0_198 = arith.constant 0 : index
      %c0_199 = arith.constant 0 : index
      %519 = vector.load %arg12[%c0_197, %c0_198, %c0_199] : memref<2x16x128xf32, #tpu.memory_space<vmem>>, vector<2x16x128xf32>
      tpu.vector_store %arg12[%c0_197, %c0_198, %c0_199], %518 {strides = array<i32>} : memref<2x16x128xf32, #tpu.memory_space<vmem>>, vector<2x16x128xf32>,
      %cst_200 = arith.constant 0.000000e+00 : f32
      %520 = vector.broadcast %cst_200 : f32 to vector<16x1xf32>
      %c0_201 = arith.constant 0 : index
      %c0_202 = arith.constant 0 : index
      %521 = vector.load %arg13[%c0_201, %c0_202] : memref<16x1xf32, #tpu.memory_space<vmem>>, vector<16x1xf32>
      tpu.vector_store %arg13[%c0_201, %c0_202], %520 {strides = array<i32>} : memref<16x1xf32, #tpu.memory_space<vmem>>, vector<16x1xf32>,
    } else {
    }
    %c0 = arith.constant 0 : index
    %c0_1 = arith.constant 0 : index
    %c0_2 = arith.constant 0 : index
    %3 = vector.load %arg2[%c0, %c0_1, %c0_2] : memref<8x16x128xbf16, #tpu.memory_space<vmem>>, vector<8x16x128xbf16>
    %4 = vector.shape_cast %3 : vector<8x16x128xbf16> to vector<128x128xbf16>
    %c0_3 = arith.constant 0 : index
    %c0_4 = arith.constant 0 : index
    %c0_5 = arith.constant 0 : index
    %5 = vector.load %arg5[%c0_3, %c0_4, %c0_5] : memref<2x128x512xbf16, #tpu.memory_space<vmem>>, vector<1x128x512xbf16>
    %6 = vector.shape_cast %5 : vector<1x128x512xbf16> to vector<128x512xbf16>
    %cst = arith.constant dense<0.000000e+00> : vector<128x512xf32>
    %7 = tpu.matmul %4, %6, %cst {dimension_numbers = #tpu.dot_dimension_numbers<[1], [0], [0], [1], [0, 0, 1, 1], [], []>} : vector<128x128xbf16>, vector<128x512xbf16>, vector<128x512xf32> -> vector<128x512xf32>
    %8 = vector.shape_cast %7 : vector<128x512xf32> to vector<8x16x512xf32>
    %c0_6 = arith.constant 0 : index
    %c0_7 = arith.constant 0 : index
    %c0_8 = arith.constant 0 : index
    %9 = vector.load %arg7[%c0_6, %c0_7, %c0_8] : memref<2x1x512xf32, #tpu.memory_space<vmem>>, vector<1x1x512xf32>
    %10 = vector.shape_cast %9 : vector<1x1x512xf32> to vector<1x512xf32>
    %11 = vector.shape_cast %10 : vector<1x512xf32> to vector<1x1x512xf32>
    %12 = vector.broadcast %11 : vector<1x1x512xf32> to vector<8x16x512xf32>
    %13 = arith.addf %8, %12 : vector<8x16x512xf32>
    %c0_9 = arith.constant 0 : index
    %c0_10 = arith.constant 0 : index
    %c0_11 = arith.constant 0 : index
    %14 = vector.load %arg11[%c0_9, %c0_10, %c0_11] : memref<2x16x128xbf16, #tpu.memory_space<vmem>>, vector<1x16x128xbf16>
    %15 = vector.shape_cast %14 : vector<1x16x128xbf16> to vector<16x128xbf16>
    %c0_12 = arith.constant 0 : index
    %c0_13 = arith.constant 0 : index
    %c0_14 = arith.constant 0 : index
    %16 = vector.load %arg12[%c0_12, %c0_13, %c0_14] : memref<2x16x128xf32, #tpu.memory_space<vmem>>, vector<1x16x128xf32>
    %17 = vector.shape_cast %16 : vector<1x16x128xf32> to vector<16x128xf32>
    %18 = vector.extract_strided_slice %13 {offsets = [0, 0, 0], sizes = [1, 16, 512], strides = [1, 1, 1]} : vector<8x16x512xf32> to vector<1x16x512xf32>
    %19 = vector.shape_cast %18 : vector<1x16x512xf32> to vector<16x512xf32>
    %c0_15 = arith.constant 0 : index
    %c0_16 = arith.constant 0 : index
    %c0_17 = arith.constant 0 : index
    %20 = vector.load %arg6[%c0_15, %c0_16, %c0_17] : memref<2x128x512xbf16, #tpu.memory_space<vmem>>, vector<1x128x512xbf16>
    %21 = vector.shape_cast %20 : vector<1x128x512xbf16> to vector<128x512xbf16>
    %cst_18 = arith.constant dense<0.000000e+00> : vector<16x512xf32>
    %22 = tpu.matmul %15, %21, %cst_18 {dimension_numbers = #tpu.dot_dimension_numbers<[1], [0], [0], [1], [0, 0, 1, 1], [], []>} : vector<16x128xbf16>, vector<128x512xbf16>, vector<16x512xf32> -> vector<16x512xf32>
    %23 = arith.addf %19, %22 : vector<16x512xf32>
    %24 = vector.extract_strided_slice %23 {offsets = [0, 0], sizes = [16, 384], strides = [1, 1]} : vector<16x512xf32> to vector<16x384xf32>
    %25 = arith.negf %24 : vector<16x384xf32>
    %26 = math.exp %25 : vector<16x384xf32>
    %cst_19 = arith.constant 1.000000e+00 : f32
    %27 = vector.broadcast %cst_19 : f32 to vector<16x384xf32>
    %28 = arith.addf %27, %26 : vector<16x384xf32>
    %29 = arith.divf %27, %28 : vector<16x384xf32>
    %30 = vector.extract_strided_slice %23 {offsets = [0, 384], sizes = [16, 128], strides = [1, 1]} : vector<16x512xf32> to vector<16x128xf32>
    %31 = math.tanh %30 : vector<16x128xf32>
    %32 = vector.extract_strided_slice %29 {offsets = [0, 0], sizes = [16, 128], strides = [1, 1]} : vector<16x384xf32> to vector<16x128xf32>
    %33 = vector.extract_strided_slice %29 {offsets = [0, 128], sizes = [16, 128], strides = [1, 1]} : vector<16x384xf32> to vector<16x128xf32>
    %34 = vector.extract_strided_slice %29 {offsets = [0, 256], sizes = [16, 128], strides = [1, 1]} : vector<16x384xf32> to vector<16x128xf32>
    %35 = arith.mulf %33, %17 : vector<16x128xf32>
    %36 = arith.mulf %32, %31 : vector<16x128xf32>
    %37 = arith.addf %35, %36 : vector<16x128xf32>
    %38 = math.tanh %37 : vector<16x128xf32>
    %39 = arith.mulf %34, %38 : vector<16x128xf32>
    %40 = arith.truncf %39 : vector<16x128xf32> to vector<16x128xbf16>
    %c0_20 = arith.constant 0 : index
    %c0_21 = arith.constant 0 : index
    %c0_22 = arith.constant 0 : index
    %41 = vector.load %arg14[%c0_20, %c0_21, %c0_22] : memref<8x16x128xbf16, #tpu.memory_space<vmem>>, vector<1x16x128xbf16>
    %42 = vector.shape_cast %41 : vector<1x16x128xbf16> to vector<16x128xbf16>
    %43 = vector.shape_cast %40 : vector<16x128xbf16> to vector<1x16x128xbf16>
    tpu.vector_store %arg14[%c0_20, %c0_21, %c0_22], %43 {strides = array<i32>} : memref<8x16x128xbf16, #tpu.memory_space<vmem>>, vector<1x16x128xbf16>,
    %44 = vector.extract_strided_slice %13 {offsets = [1, 0, 0], sizes = [1, 16, 512], strides = [1, 1, 1]} : vector<8x16x512xf32> to vector<1x16x512xf32>
    %45 = vector.shape_cast %44 : vector<1x16x512xf32> to vector<16x512xf32>
    %c0_23 = arith.constant 0 : index
    %c0_24 = arith.constant 0 : index
    %c0_25 = arith.constant 0 : index
    %46 = vector.load %arg6[%c0_23, %c0_24, %c0_25] : memref<2x128x512xbf16, #tpu.memory_space<vmem>>, vector<1x128x512xbf16>
    %47 = vector.shape_cast %46 : vector<1x128x512xbf16> to vector<128x512xbf16>
    %cst_26 = arith.constant dense<0.000000e+00> : vector<16x512xf32>
    %48 = tpu.matmul %40, %47, %cst_26 {dimension_numbers = #tpu.dot_dimension_numbers<[1], [0], [0], [1], [0, 0, 1, 1], [], []>} : vector<16x128xbf16>, vector<128x512xbf16>, vector<16x512xf32> -> vector<16x512xf32>
    %49 = arith.addf %45, %48 : vector<16x512xf32>
    %50 = vector.extract_strided_slice %49 {offsets = [0, 0], sizes = [16, 384], strides = [1, 1]} : vector<16x512xf32> to vector<16x384xf32>
    %51 = arith.negf %50 : vector<16x384xf32>
    %52 = math.exp %51 : vector<16x384xf32>
    %cst_27 = arith.constant 1.000000e+00 : f32
    %53 = vector.broadcast %cst_27 : f32 to vector<16x384xf32>
    %54 = arith.addf %53, %52 : vector<16x384xf32>
    %55 = arith.divf %53, %54 : vector<16x384xf32>
    %56 = vector.extract_strided_slice %49 {offsets = [0, 384], sizes = [16, 128], strides = [1, 1]} : vector<16x512xf32> to vector<16x128xf32>
    %57 = math.tanh %56 : vector<16x128xf32>
    %58 = vector.extract_strided_slice %55 {offsets = [0, 0], sizes = [16, 128], strides = [1, 1]} : vector<16x384xf32> to vector<16x128xf32>
    %59 = vector.extract_strided_slice %55 {offsets = [0, 128], sizes = [16, 128], strides = [1, 1]} : vector<16x384xf32> to vector<16x128xf32>
    %60 = vector.extract_strided_slice %55 {offsets = [0, 256], sizes = [16, 128], strides = [1, 1]} : vector<16x384xf32> to vector<16x128xf32>
    %61 = arith.mulf %59, %37 : vector<16x128xf32>
    %62 = arith.mulf %58, %57 : vector<16x128xf32>
    %63 = arith.addf %61, %62 : vector<16x128xf32>
    %64 = math.tanh %63 : vector<16x128xf32>
    %65 = arith.mulf %60, %64 : vector<16x128xf32>
    %66 = arith.truncf %65 : vector<16x128xf32> to vector<16x128xbf16>
    %c1 = arith.constant 1 : index
    %c0_28 = arith.constant 0 : index
    %c0_29 = arith.constant 0 : index
    %67 = vector.load %arg14[%c1, %c0_28, %c0_29] : memref<8x16x128xbf16, #tpu.memory_space<vmem>>, vector<1x16x128xbf16>
    %68 = vector.shape_cast %67 : vector<1x16x128xbf16> to vector<16x128xbf16>
    %69 = vector.shape_cast %66 : vector<16x128xbf16> to vector<1x16x128xbf16>
    tpu.vector_store %arg14[%c1, %c0_28, %c0_29], %69 {strides = array<i32>} : memref<8x16x128xbf16, #tpu.memory_space<vmem>>, vector<1x16x128xbf16>,
    %70 = vector.extract_strided_slice %13 {offsets = [2, 0, 0], sizes = [1, 16, 512], strides = [1, 1, 1]} : vector<8x16x512xf32> to vector<1x16x512xf32>
    %71 = vector.shape_cast %70 : vector<1x16x512xf32> to vector<16x512xf32>
    %c0_30 = arith.constant 0 : index
    %c0_31 = arith.constant 0 : index
    %c0_32 = arith.constant 0 : index
    %72 = vector.load %arg6[%c0_30, %c0_31, %c0_32] : memref<2x128x512xbf16, #tpu.memory_space<vmem>>, vector<1x128x512xbf16>
    %73 = vector.shape_cast %72 : vector<1x128x512xbf16> to vector<128x512xbf16>
    %cst_33 = arith.constant dense<0.000000e+00> : vector<16x512xf32>
    %74 = tpu.matmul %66, %73, %cst_33 {dimension_numbers = #tpu.dot_dimension_numbers<[1], [0], [0], [1], [0, 0, 1, 1], [], []>} : vector<16x128xbf16>, vector<128x512xbf16>, vector<16x512xf32> -> vector<16x512xf32>
    %75 = arith.addf %71, %74 : vector<16x512xf32>
    %76 = vector.extract_strided_slice %75 {offsets = [0, 0], sizes = [16, 384], strides = [1, 1]} : vector<16x512xf32> to vector<16x384xf32>
    %77 = arith.negf %76 : vector<16x384xf32>
    %78 = math.exp %77 : vector<16x384xf32>
    %cst_34 = arith.constant 1.000000e+00 : f32
    %79 = vector.broadcast %cst_34 : f32 to vector<16x384xf32>
    %80 = arith.addf %79, %78 : vector<16x384xf32>
    %81 = arith.divf %79, %80 : vector<16x384xf32>
    %82 = vector.extract_strided_slice %75 {offsets = [0, 384], sizes = [16, 128], strides = [1, 1]} : vector<16x512xf32> to vector<16x128xf32>
    %83 = math.tanh %82 : vector<16x128xf32>
    %84 = vector.extract_strided_slice %81 {offsets = [0, 0], sizes = [16, 128], strides = [1, 1]} : vector<16x384xf32> to vector<16x128xf32>
    %85 = vector.extract_strided_slice %81 {offsets = [0, 128], sizes = [16, 128], strides = [1, 1]} : vector<16x384xf32> to vector<16x128xf32>
    %86 = vector.extract_strided_slice %81 {offsets = [0, 256], sizes = [16, 128], strides = [1, 1]} : vector<16x384xf32> to vector<16x128xf32>
    %87 = arith.mulf %85, %63 : vector<16x128xf32>
    %88 = arith.mulf %84, %83 : vector<16x128xf32>
    %89 = arith.addf %87, %88 : vector<16x128xf32>
    %90 = math.tanh %89 : vector<16x128xf32>
    %91 = arith.mulf %86, %90 : vector<16x128xf32>
    %92 = arith.truncf %91 : vector<16x128xf32> to vector<16x128xbf16>
    %c2 = arith.constant 2 : index
    %c0_35 = arith.constant 0 : index
    %c0_36 = arith.constant 0 : index
    %93 = vector.load %arg14[%c2, %c0_35, %c0_36] : memref<8x16x128xbf16, #tpu.memory_space<vmem>>, vector<1x16x128xbf16>
    %94 = vector.shape_cast %93 : vector<1x16x128xbf16> to vector<16x128xbf16>
    %95 = vector.shape_cast %92 : vector<16x128xbf16> to vector<1x16x128xbf16>
    tpu.vector_store %arg14[%c2, %c0_35, %c0_36], %95 {strides = array<i32>} : memref<8x16x128xbf16, #tpu.memory_space<vmem>>, vector<1x16x128xbf16>,
    %96 = vector.extract_strided_slice %13 {offsets = [3, 0, 0], sizes = [1, 16, 512], strides = [1, 1, 1]} : vector<8x16x512xf32> to vector<1x16x512xf32>
    %97 = vector.shape_cast %96 : vector<1x16x512xf32> to vector<16x512xf32>
    %c0_37 = arith.constant 0 : index
    %c0_38 = arith.constant 0 : index
    %c0_39 = arith.constant 0 : index
    %98 = vector.load %arg6[%c0_37, %c0_38, %c0_39] : memref<2x128x512xbf16, #tpu.memory_space<vmem>>, vector<1x128x512xbf16>
    %99 = vector.shape_cast %98 : vector<1x128x512xbf16> to vector<128x512xbf16>
    %cst_40 = arith.constant dense<0.000000e+00> : vector<16x512xf32>
    %100 = tpu.matmul %92, %99, %cst_40 {dimension_numbers = #tpu.dot_dimension_numbers<[1], [0], [0], [1], [0, 0, 1, 1], [], []>} : vector<16x128xbf16>, vector<128x512xbf16>, vector<16x512xf32> -> vector<16x512xf32>
    %101 = arith.addf %97, %100 : vector<16x512xf32>
    %102 = vector.extract_strided_slice %101 {offsets = [0, 0], sizes = [16, 384], strides = [1, 1]} : vector<16x512xf32> to vector<16x384xf32>
    %103 = arith.negf %102 : vector<16x384xf32>
    %104 = math.exp %103 : vector<16x384xf32>
    %cst_41 = arith.constant 1.000000e+00 : f32
    %105 = vector.broadcast %cst_41 : f32 to vector<16x384xf32>
    %106 = arith.addf %105, %104 : vector<16x384xf32>
    %107 = arith.divf %105, %106 : vector<16x384xf32>
    %108 = vector.extract_strided_slice %101 {offsets = [0, 384], sizes = [16, 128], strides = [1, 1]} : vector<16x512xf32> to vector<16x128xf32>
    %109 = math.tanh %108 : vector<16x128xf32>
    %110 = vector.extract_strided_slice %107 {offsets = [0, 0], sizes = [16, 128], strides = [1, 1]} : vector<16x384xf32> to vector<16x128xf32>
    %111 = vector.extract_strided_slice %107 {offsets = [0, 128], sizes = [16, 128], strides = [1, 1]} : vector<16x384xf32> to vector<16x128xf32>
    %112 = vector.extract_strided_slice %107 {offsets = [0, 256], sizes = [16, 128], strides = [1, 1]} : vector<16x384xf32> to vector<16x128xf32>
    %113 = arith.mulf %111, %89 : vector<16x128xf32>
    %114 = arith.mulf %110, %109 : vector<16x128xf32>
    %115 = arith.addf %113, %114 : vector<16x128xf32>
    %116 = math.tanh %115 : vector<16x128xf32>
    %117 = arith.mulf %112, %116 : vector<16x128xf32>
    %118 = arith.truncf %117 : vector<16x128xf32> to vector<16x128xbf16>
    %c3 = arith.constant 3 : index
    %c0_42 = arith.constant 0 : index
    %c0_43 = arith.constant 0 : index
    %119 = vector.load %arg14[%c3, %c0_42, %c0_43] : memref<8x16x128xbf16, #tpu.memory_space<vmem>>, vector<1x16x128xbf16>
    %120 = vector.shape_cast %119 : vector<1x16x128xbf16> to vector<16x128xbf16>
    %121 = vector.shape_cast %118 : vector<16x128xbf16> to vector<1x16x128xbf16>
    tpu.vector_store %arg14[%c3, %c0_42, %c0_43], %121 {strides = array<i32>} : memref<8x16x128xbf16, #tpu.memory_space<vmem>>, vector<1x16x128xbf16>,
    %122 = vector.extract_strided_slice %13 {offsets = [4, 0, 0], sizes = [1, 16, 512], strides = [1, 1, 1]} : vector<8x16x512xf32> to vector<1x16x512xf32>
    %123 = vector.shape_cast %122 : vector<1x16x512xf32> to vector<16x512xf32>
    %c0_44 = arith.constant 0 : index
    %c0_45 = arith.constant 0 : index
    %c0_46 = arith.constant 0 : index
    %124 = vector.load %arg6[%c0_44, %c0_45, %c0_46] : memref<2x128x512xbf16, #tpu.memory_space<vmem>>, vector<1x128x512xbf16>
    %125 = vector.shape_cast %124 : vector<1x128x512xbf16> to vector<128x512xbf16>
    %cst_47 = arith.constant dense<0.000000e+00> : vector<16x512xf32>
    %126 = tpu.matmul %118, %125, %cst_47 {dimension_numbers = #tpu.dot_dimension_numbers<[1], [0], [0], [1], [0, 0, 1, 1], [], []>} : vector<16x128xbf16>, vector<128x512xbf16>, vector<16x512xf32> -> vector<16x512xf32>
    %127 = arith.addf %123, %126 : vector<16x512xf32>
    %128 = vector.extract_strided_slice %127 {offsets = [0, 0], sizes = [16, 384], strides = [1, 1]} : vector<16x512xf32> to vector<16x384xf32>
    %129 = arith.negf %128 : vector<16x384xf32>
    %130 = math.exp %129 : vector<16x384xf32>
    %cst_48 = arith.constant 1.000000e+00 : f32
    %131 = vector.broadcast %cst_48 : f32 to vector<16x384xf32>
    %132 = arith.addf %131, %130 : vector<16x384xf32>
    %133 = arith.divf %131, %132 : vector<16x384xf32>
    %134 = vector.extract_strided_slice %127 {offsets = [0, 384], sizes = [16, 128], strides = [1, 1]} : vector<16x512xf32> to vector<16x128xf32>
    %135 = math.tanh %134 : vector<16x128xf32>
    %136 = vector.extract_strided_slice %133 {offsets = [0, 0], sizes = [16, 128], strides = [1, 1]} : vector<16x384xf32> to vector<16x128xf32>
    %137 = vector.extract_strided_slice %133 {offsets = [0, 128], sizes = [16, 128], strides = [1, 1]} : vector<16x384xf32> to vector<16x128xf32>
    %138 = vector.extract_strided_slice %133 {offsets = [0, 256], sizes = [16, 128], strides = [1, 1]} : vector<16x384xf32> to vector<16x128xf32>
    %139 = arith.mulf %137, %115 : vector<16x128xf32>
    %140 = arith.mulf %136, %135 : vector<16x128xf32>
    %141 = arith.addf %139, %140 : vector<16x128xf32>
    %142 = math.tanh %141 : vector<16x128xf32>
    %143 = arith.mulf %138, %142 : vector<16x128xf32>
    %144 = arith.truncf %143 : vector<16x128xf32> to vector<16x128xbf16>
    %c4 = arith.constant 4 : index
    %c0_49 = arith.constant 0 : index
    %c0_50 = arith.constant 0 : index
    %145 = vector.load %arg14[%c4, %c0_49, %c0_50] : memref<8x16x128xbf16, #tpu.memory_space<vmem>>, vector<1x16x128xbf16>
    %146 = vector.shape_cast %145 : vector<1x16x128xbf16> to vector<16x128xbf16>
    %147 = vector.shape_cast %144 : vector<16x128xbf16> to vector<1x16x128xbf16>
    tpu.vector_store %arg14[%c4, %c0_49, %c0_50], %147 {strides = array<i32>} : memref<8x16x128xbf16, #tpu.memory_space<vmem>>, vector<1x16x128xbf16>,
    %148 = vector.extract_strided_slice %13 {offsets = [5, 0, 0], sizes = [1, 16, 512], strides = [1, 1, 1]} : vector<8x16x512xf32> to vector<1x16x512xf32>
    %149 = vector.shape_cast %148 : vector<1x16x512xf32> to vector<16x512xf32>
    %c0_51 = arith.constant 0 : index
    %c0_52 = arith.constant 0 : index
    %c0_53 = arith.constant 0 : index
    %150 = vector.load %arg6[%c0_51, %c0_52, %c0_53] : memref<2x128x512xbf16, #tpu.memory_space<vmem>>, vector<1x128x512xbf16>
    %151 = vector.shape_cast %150 : vector<1x128x512xbf16> to vector<128x512xbf16>
    %cst_54 = arith.constant dense<0.000000e+00> : vector<16x512xf32>
    %152 = tpu.matmul %144, %151, %cst_54 {dimension_numbers = #tpu.dot_dimension_numbers<[1], [0], [0], [1], [0, 0, 1, 1], [], []>} : vector<16x128xbf16>, vector<128x512xbf16>, vector<16x512xf32> -> vector<16x512xf32>
    %153 = arith.addf %149, %152 : vector<16x512xf32>
    %154 = vector.extract_strided_slice %153 {offsets = [0, 0], sizes = [16, 384], strides = [1, 1]} : vector<16x512xf32> to vector<16x384xf32>
    %155 = arith.negf %154 : vector<16x384xf32>
    %156 = math.exp %155 : vector<16x384xf32>
    %cst_55 = arith.constant 1.000000e+00 : f32
    %157 = vector.broadcast %cst_55 : f32 to vector<16x384xf32>
    %158 = arith.addf %157, %156 : vector<16x384xf32>
    %159 = arith.divf %157, %158 : vector<16x384xf32>
    %160 = vector.extract_strided_slice %153 {offsets = [0, 384], sizes = [16, 128], strides = [1, 1]} : vector<16x512xf32> to vector<16x128xf32>
    %161 = math.tanh %160 : vector<16x128xf32>
    %162 = vector.extract_strided_slice %159 {offsets = [0, 0], sizes = [16, 128], strides = [1, 1]} : vector<16x384xf32> to vector<16x128xf32>
    %163 = vector.extract_strided_slice %159 {offsets = [0, 128], sizes = [16, 128], strides = [1, 1]} : vector<16x384xf32> to vector<16x128xf32>
    %164 = vector.extract_strided_slice %159 {offsets = [0, 256], sizes = [16, 128], strides = [1, 1]} : vector<16x384xf32> to vector<16x128xf32>
    %165 = arith.mulf %163, %141 : vector<16x128xf32>
    %166 = arith.mulf %162, %161 : vector<16x128xf32>
    %167 = arith.addf %165, %166 : vector<16x128xf32>
    %168 = math.tanh %167 : vector<16x128xf32>
    %169 = arith.mulf %164, %168 : vector<16x128xf32>
    %170 = arith.truncf %169 : vector<16x128xf32> to vector<16x128xbf16>
    %c5 = arith.constant 5 : index
    %c0_56 = arith.constant 0 : index
    %c0_57 = arith.constant 0 : index
    %171 = vector.load %arg14[%c5, %c0_56, %c0_57] : memref<8x16x128xbf16, #tpu.memory_space<vmem>>, vector<1x16x128xbf16>
    %172 = vector.shape_cast %171 : vector<1x16x128xbf16> to vector<16x128xbf16>
    %173 = vector.shape_cast %170 : vector<16x128xbf16> to vector<1x16x128xbf16>
    tpu.vector_store %arg14[%c5, %c0_56, %c0_57], %173 {strides = array<i32>} : memref<8x16x128xbf16, #tpu.memory_space<vmem>>, vector<1x16x128xbf16>,
    %174 = vector.extract_strided_slice %13 {offsets = [6, 0, 0], sizes = [1, 16, 512], strides = [1, 1, 1]} : vector<8x16x512xf32> to vector<1x16x512xf32>
    %175 = vector.shape_cast %174 : vector<1x16x512xf32> to vector<16x512xf32>
    %c0_58 = arith.constant 0 : index
    %c0_59 = arith.constant 0 : index
    %c0_60 = arith.constant 0 : index
    %176 = vector.load %arg6[%c0_58, %c0_59, %c0_60] : memref<2x128x512xbf16, #tpu.memory_space<vmem>>, vector<1x128x512xbf16>
    %177 = vector.shape_cast %176 : vector<1x128x512xbf16> to vector<128x512xbf16>
    %cst_61 = arith.constant dense<0.000000e+00> : vector<16x512xf32>
    %178 = tpu.matmul %170, %177, %cst_61 {dimension_numbers = #tpu.dot_dimension_numbers<[1], [0], [0], [1], [0, 0, 1, 1], [], []>} : vector<16x128xbf16>, vector<128x512xbf16>, vector<16x512xf32> -> vector<16x512xf32>
    %179 = arith.addf %175, %178 : vector<16x512xf32>
    %180 = vector.extract_strided_slice %179 {offsets = [0, 0], sizes = [16, 384], strides = [1, 1]} : vector<16x512xf32> to vector<16x384xf32>
    %181 = arith.negf %180 : vector<16x384xf32>
    %182 = math.exp %181 : vector<16x384xf32>
    %cst_62 = arith.constant 1.000000e+00 : f32
    %183 = vector.broadcast %cst_62 : f32 to vector<16x384xf32>
    %184 = arith.addf %183, %182 : vector<16x384xf32>
    %185 = arith.divf %183, %184 : vector<16x384xf32>
    %186 = vector.extract_strided_slice %179 {offsets = [0, 384], sizes = [16, 128], strides = [1, 1]} : vector<16x512xf32> to vector<16x128xf32>
    %187 = math.tanh %186 : vector<16x128xf32>
    %188 = vector.extract_strided_slice %185 {offsets = [0, 0], sizes = [16, 128], strides = [1, 1]} : vector<16x384xf32> to vector<16x128xf32>
    %189 = vector.extract_strided_slice %185 {offsets = [0, 128], sizes = [16, 128], strides = [1, 1]} : vector<16x384xf32> to vector<16x128xf32>
    %190 = vector.extract_strided_slice %185 {offsets = [0, 256], sizes = [16, 128], strides = [1, 1]} : vector<16x384xf32> to vector<16x128xf32>
    %191 = arith.mulf %189, %167 : vector<16x128xf32>
    %192 = arith.mulf %188, %187 : vector<16x128xf32>
    %193 = arith.addf %191, %192 : vector<16x128xf32>
    %194 = math.tanh %193 : vector<16x128xf32>
    %195 = arith.mulf %190, %194 : vector<16x128xf32>
    %196 = arith.truncf %195 : vector<16x128xf32> to vector<16x128xbf16>
    %c6 = arith.constant 6 : index
    %c0_63 = arith.constant 0 : index
    %c0_64 = arith.constant 0 : index
    %197 = vector.load %arg14[%c6, %c0_63, %c0_64] : memref<8x16x128xbf16, #tpu.memory_space<vmem>>, vector<1x16x128xbf16>
    %198 = vector.shape_cast %197 : vector<1x16x128xbf16> to vector<16x128xbf16>
    %199 = vector.shape_cast %196 : vector<16x128xbf16> to vector<1x16x128xbf16>
    tpu.vector_store %arg14[%c6, %c0_63, %c0_64], %199 {strides = array<i32>} : memref<8x16x128xbf16, #tpu.memory_space<vmem>>, vector<1x16x128xbf16>,
    %200 = vector.extract_strided_slice %13 {offsets = [7, 0, 0], sizes = [1, 16, 512], strides = [1, 1, 1]} : vector<8x16x512xf32> to vector<1x16x512xf32>
    %201 = vector.shape_cast %200 : vector<1x16x512xf32> to vector<16x512xf32>
    %c0_65 = arith.constant 0 : index
    %c0_66 = arith.constant 0 : index
    %c0_67 = arith.constant 0 : index
    %202 = vector.load %arg6[%c0_65, %c0_66, %c0_67] : memref<2x128x512xbf16, #tpu.memory_space<vmem>>, vector<1x128x512xbf16>
    %203 = vector.shape_cast %202 : vector<1x128x512xbf16> to vector<128x512xbf16>
    %cst_68 = arith.constant dense<0.000000e+00> : vector<16x512xf32>
    %204 = tpu.matmul %196, %203, %cst_68 {dimension_numbers = #tpu.dot_dimension_numbers<[1], [0], [0], [1], [0, 0, 1, 1], [], []>} : vector<16x128xbf16>, vector<128x512xbf16>, vector<16x512xf32> -> vector<16x512xf32>
    %205 = arith.addf %201, %204 : vector<16x512xf32>
    %206 = vector.extract_strided_slice %205 {offsets = [0, 0], sizes = [16, 384], strides = [1, 1]} : vector<16x512xf32> to vector<16x384xf32>
    %207 = arith.negf %206 : vector<16x384xf32>
    %208 = math.exp %207 : vector<16x384xf32>
    %cst_69 = arith.constant 1.000000e+00 : f32
    %209 = vector.broadcast %cst_69 : f32 to vector<16x384xf32>
    %210 = arith.addf %209, %208 : vector<16x384xf32>
    %211 = arith.divf %209, %210 : vector<16x384xf32>
    %212 = vector.extract_strided_slice %205 {offsets = [0, 384], sizes = [16, 128], strides = [1, 1]} : vector<16x512xf32> to vector<16x128xf32>
    %213 = math.tanh %212 : vector<16x128xf32>
    %214 = vector.extract_strided_slice %211 {offsets = [0, 0], sizes = [16, 128], strides = [1, 1]} : vector<16x384xf32> to vector<16x128xf32>
    %215 = vector.extract_strided_slice %211 {offsets = [0, 128], sizes = [16, 128], strides = [1, 1]} : vector<16x384xf32> to vector<16x128xf32>
    %216 = vector.extract_strided_slice %211 {offsets = [0, 256], sizes = [16, 128], strides = [1, 1]} : vector<16x384xf32> to vector<16x128xf32>
    %217 = arith.mulf %215, %193 : vector<16x128xf32>
    %218 = arith.mulf %214, %213 : vector<16x128xf32>
    %219 = arith.addf %217, %218 : vector<16x128xf32>
    %220 = math.tanh %219 : vector<16x128xf32>
    %221 = arith.mulf %216, %220 : vector<16x128xf32>
    %222 = arith.truncf %221 : vector<16x128xf32> to vector<16x128xbf16>
    %c7 = arith.constant 7 : index
    %c0_70 = arith.constant 0 : index
    %c0_71 = arith.constant 0 : index
    %223 = vector.load %arg14[%c7, %c0_70, %c0_71] : memref<8x16x128xbf16, #tpu.memory_space<vmem>>, vector<1x16x128xbf16>
    %224 = vector.shape_cast %223 : vector<1x16x128xbf16> to vector<16x128xbf16>
    %225 = vector.shape_cast %222 : vector<16x128xbf16> to vector<1x16x128xbf16>
    tpu.vector_store %arg14[%c7, %c0_70, %c0_71], %225 {strides = array<i32>} : memref<8x16x128xbf16, #tpu.memory_space<vmem>>, vector<1x16x128xbf16>,
    %c0_72 = arith.constant 0 : index
    %c0_73 = arith.constant 0 : index
    %c0_74 = arith.constant 0 : index
    %226 = vector.load %arg11[%c0_72, %c0_73, %c0_74] : memref<2x16x128xbf16, #tpu.memory_space<vmem>>, vector<1x16x128xbf16>
    %227 = vector.shape_cast %226 : vector<1x16x128xbf16> to vector<16x128xbf16>
    %228 = vector.shape_cast %222 : vector<16x128xbf16> to vector<1x16x128xbf16>
    tpu.vector_store %arg11[%c0_72, %c0_73, %c0_74], %228 {strides = array<i32>} : memref<2x16x128xbf16, #tpu.memory_space<vmem>>, vector<1x16x128xbf16>,
    %c0_75 = arith.constant 0 : index
    %c0_76 = arith.constant 0 : index
    %c0_77 = arith.constant 0 : index
    %229 = vector.load %arg12[%c0_75, %c0_76, %c0_77] : memref<2x16x128xf32, #tpu.memory_space<vmem>>, vector<1x16x128xf32>
    %230 = vector.shape_cast %229 : vector<1x16x128xf32> to vector<16x128xf32>
    %231 = vector.shape_cast %219 : vector<16x128xf32> to vector<1x16x128xf32>
    tpu.vector_store %arg12[%c0_75, %c0_76, %c0_77], %231 {strides = array<i32>} : memref<2x16x128xf32, #tpu.memory_space<vmem>>, vector<1x16x128xf32>,
    %c0_78 = arith.constant 0 : index
    %c0_79 = arith.constant 0 : index
    %c0_80 = arith.constant 0 : index
    %232 = vector.load %arg14[%c0_78, %c0_79, %c0_80] : memref<8x16x128xbf16, #tpu.memory_space<vmem>>, vector<8x16x128xbf16>
    %233 = vector.shape_cast %232 : vector<8x16x128xbf16> to vector<128x128xbf16>
    %c1_81 = arith.constant 1 : index
    %c0_82 = arith.constant 0 : index
    %c0_83 = arith.constant 0 : index
    %234 = vector.load %arg5[%c1_81, %c0_82, %c0_83] : memref<2x128x512xbf16, #tpu.memory_space<vmem>>, vector<1x128x512xbf16>
    %235 = vector.shape_cast %234 : vector<1x128x512xbf16> to vector<128x512xbf16>
    %cst_84 = arith.constant dense<0.000000e+00> : vector<128x512xf32>
    %236 = tpu.matmul %233, %235, %cst_84 {dimension_numbers = #tpu.dot_dimension_numbers<[1], [0], [0], [1], [0, 0, 1, 1], [], []>} : vector<128x128xbf16>, vector<128x512xbf16>, vector<128x512xf32> -> vector<128x512xf32>
    %237 = vector.shape_cast %236 : vector<128x512xf32> to vector<8x16x512xf32>
    %c1_85 = arith.constant 1 : index
    %c0_86 = arith.constant 0 : index
    %c0_87 = arith.constant 0 : index
    %238 = vector.load %arg7[%c1_85, %c0_86, %c0_87] : memref<2x1x512xf32, #tpu.memory_space<vmem>>, vector<1x1x512xf32>
    %239 = vector.shape_cast %238 : vector<1x1x512xf32> to vector<1x512xf32>
    %240 = vector.shape_cast %239 : vector<1x512xf32> to vector<1x1x512xf32>
    %241 = vector.broadcast %240 : vector<1x1x512xf32> to vector<8x16x512xf32>
    %242 = arith.addf %237, %241 : vector<8x16x512xf32>
    %c1_88 = arith.constant 1 : index
    %c0_89 = arith.constant 0 : index
    %c0_90 = arith.constant 0 : index
    %243 = vector.load %arg11[%c1_88, %c0_89, %c0_90] : memref<2x16x128xbf16, #tpu.memory_space<vmem>>, vector<1x16x128xbf16>
    %244 = vector.shape_cast %243 : vector<1x16x128xbf16> to vector<16x128xbf16>
    %c1_91 = arith.constant 1 : index
    %c0_92 = arith.constant 0 : index
    %c0_93 = arith.constant 0 : index
    %245 = vector.load %arg12[%c1_91, %c0_92, %c0_93] : memref<2x16x128xf32, #tpu.memory_space<vmem>>, vector<1x16x128xf32>
    %246 = vector.shape_cast %245 : vector<1x16x128xf32> to vector<16x128xf32>
    %247 = vector.extract_strided_slice %242 {offsets = [0, 0, 0], sizes = [1, 16, 512], strides = [1, 1, 1]} : vector<8x16x512xf32> to vector<1x16x512xf32>
    %248 = vector.shape_cast %247 : vector<1x16x512xf32> to vector<16x512xf32>
    %c1_94 = arith.constant 1 : index
    %c0_95 = arith.constant 0 : index
    %c0_96 = arith.constant 0 : index
    %249 = vector.load %arg6[%c1_94, %c0_95, %c0_96] : memref<2x128x512xbf16, #tpu.memory_space<vmem>>, vector<1x128x512xbf16>
    %250 = vector.shape_cast %249 : vector<1x128x512xbf16> to vector<128x512xbf16>
    %cst_97 = arith.constant dense<0.000000e+00> : vector<16x512xf32>
    %251 = tpu.matmul %244, %250, %cst_97 {dimension_numbers = #tpu.dot_dimension_numbers<[1], [0], [0], [1], [0, 0, 1, 1], [], []>} : vector<16x128xbf16>, vector<128x512xbf16>, vector<16x512xf32> -> vector<16x512xf32>
    %252 = arith.addf %248, %251 : vector<16x512xf32>
    %253 = vector.extract_strided_slice %252 {offsets = [0, 0], sizes = [16, 384], strides = [1, 1]} : vector<16x512xf32> to vector<16x384xf32>
    %254 = arith.negf %253 : vector<16x384xf32>
    %255 = math.exp %254 : vector<16x384xf32>
    %cst_98 = arith.constant 1.000000e+00 : f32
    %256 = vector.broadcast %cst_98 : f32 to vector<16x384xf32>
    %257 = arith.addf %256, %255 : vector<16x384xf32>
    %258 = arith.divf %256, %257 : vector<16x384xf32>
    %259 = vector.extract_strided_slice %252 {offsets = [0, 384], sizes = [16, 128], strides = [1, 1]} : vector<16x512xf32> to vector<16x128xf32>
    %260 = math.tanh %259 : vector<16x128xf32>
    %261 = vector.extract_strided_slice %258 {offsets = [0, 0], sizes = [16, 128], strides = [1, 1]} : vector<16x384xf32> to vector<16x128xf32>
    %262 = vector.extract_strided_slice %258 {offsets = [0, 128], sizes = [16, 128], strides = [1, 1]} : vector<16x384xf32> to vector<16x128xf32>
    %263 = vector.extract_strided_slice %258 {offsets = [0, 256], sizes = [16, 128], strides = [1, 1]} : vector<16x384xf32> to vector<16x128xf32>
    %264 = arith.mulf %262, %246 : vector<16x128xf32>
    %265 = arith.mulf %261, %260 : vector<16x128xf32>
    %266 = arith.addf %264, %265 : vector<16x128xf32>
    %267 = math.tanh %266 : vector<16x128xf32>
    %268 = arith.mulf %263, %267 : vector<16x128xf32>
    %269 = arith.truncf %268 : vector<16x128xf32> to vector<16x128xbf16>
    %c0_99 = arith.constant 0 : index
    %c0_100 = arith.constant 0 : index
    %c0_101 = arith.constant 0 : index
    %270 = vector.load %arg14[%c0_99, %c0_100, %c0_101] : memref<8x16x128xbf16, #tpu.memory_space<vmem>>, vector<1x16x128xbf16>
    %271 = vector.shape_cast %270 : vector<1x16x128xbf16> to vector<16x128xbf16>
    %272 = vector.shape_cast %269 : vector<16x128xbf16> to vector<1x16x128xbf16>
    tpu.vector_store %arg14[%c0_99, %c0_100, %c0_101], %272 {strides = array<i32>} : memref<8x16x128xbf16, #tpu.memory_space<vmem>>, vector<1x16x128xbf16>,
    %273 = vector.extract_strided_slice %242 {offsets = [1, 0, 0], sizes = [1, 16, 512], strides = [1, 1, 1]} : vector<8x16x512xf32> to vector<1x16x512xf32>
    %274 = vector.shape_cast %273 : vector<1x16x512xf32> to vector<16x512xf32>
    %c1_102 = arith.constant 1 : index
    %c0_103 = arith.constant 0 : index
    %c0_104 = arith.constant 0 : index
    %275 = vector.load %arg6[%c1_102, %c0_103, %c0_104] : memref<2x128x512xbf16, #tpu.memory_space<vmem>>, vector<1x128x512xbf16>
    %276 = vector.shape_cast %275 : vector<1x128x512xbf16> to vector<128x512xbf16>
    %cst_105 = arith.constant dense<0.000000e+00> : vector<16x512xf32>
    %277 = tpu.matmul %269, %276, %cst_105 {dimension_numbers = #tpu.dot_dimension_numbers<[1], [0], [0], [1], [0, 0, 1, 1], [], []>} : vector<16x128xbf16>, vector<128x512xbf16>, vector<16x512xf32> -> vector<16x512xf32>
    %278 = arith.addf %274, %277 : vector<16x512xf32>
    %279 = vector.extract_strided_slice %278 {offsets = [0, 0], sizes = [16, 384], strides = [1, 1]} : vector<16x512xf32> to vector<16x384xf32>
    %280 = arith.negf %279 : vector<16x384xf32>
    %281 = math.exp %280 : vector<16x384xf32>
    %cst_106 = arith.constant 1.000000e+00 : f32
    %282 = vector.broadcast %cst_106 : f32 to vector<16x384xf32>
    %283 = arith.addf %282, %281 : vector<16x384xf32>
    %284 = arith.divf %282, %283 : vector<16x384xf32>
    %285 = vector.extract_strided_slice %278 {offsets = [0, 384], sizes = [16, 128], strides = [1, 1]} : vector<16x512xf32> to vector<16x128xf32>
    %286 = math.tanh %285 : vector<16x128xf32>
    %287 = vector.extract_strided_slice %284 {offsets = [0, 0], sizes = [16, 128], strides = [1, 1]} : vector<16x384xf32> to vector<16x128xf32>
    %288 = vector.extract_strided_slice %284 {offsets = [0, 128], sizes = [16, 128], strides = [1, 1]} : vector<16x384xf32> to vector<16x128xf32>
    %289 = vector.extract_strided_slice %284 {offsets = [0, 256], sizes = [16, 128], strides = [1, 1]} : vector<16x384xf32> to vector<16x128xf32>
    %290 = arith.mulf %288, %266 : vector<16x128xf32>
    %291 = arith.mulf %287, %286 : vector<16x128xf32>
    %292 = arith.addf %290, %291 : vector<16x128xf32>
    %293 = math.tanh %292 : vector<16x128xf32>
    %294 = arith.mulf %289, %293 : vector<16x128xf32>
    %295 = arith.truncf %294 : vector<16x128xf32> to vector<16x128xbf16>
    %c1_107 = arith.constant 1 : index
    %c0_108 = arith.constant 0 : index
    %c0_109 = arith.constant 0 : index
    %296 = vector.load %arg14[%c1_107, %c0_108, %c0_109] : memref<8x16x128xbf16, #tpu.memory_space<vmem>>, vector<1x16x128xbf16>
    %297 = vector.shape_cast %296 : vector<1x16x128xbf16> to vector<16x128xbf16>
    %298 = vector.shape_cast %295 : vector<16x128xbf16> to vector<1x16x128xbf16>
    tpu.vector_store %arg14[%c1_107, %c0_108, %c0_109], %298 {strides = array<i32>} : memref<8x16x128xbf16, #tpu.memory_space<vmem>>, vector<1x16x128xbf16>,
    %299 = vector.extract_strided_slice %242 {offsets = [2, 0, 0], sizes = [1, 16, 512], strides = [1, 1, 1]} : vector<8x16x512xf32> to vector<1x16x512xf32>
    %300 = vector.shape_cast %299 : vector<1x16x512xf32> to vector<16x512xf32>
    %c1_110 = arith.constant 1 : index
    %c0_111 = arith.constant 0 : index
    %c0_112 = arith.constant 0 : index
    %301 = vector.load %arg6[%c1_110, %c0_111, %c0_112] : memref<2x128x512xbf16, #tpu.memory_space<vmem>>, vector<1x128x512xbf16>
    %302 = vector.shape_cast %301 : vector<1x128x512xbf16> to vector<128x512xbf16>
    %cst_113 = arith.constant dense<0.000000e+00> : vector<16x512xf32>
    %303 = tpu.matmul %295, %302, %cst_113 {dimension_numbers = #tpu.dot_dimension_numbers<[1], [0], [0], [1], [0, 0, 1, 1], [], []>} : vector<16x128xbf16>, vector<128x512xbf16>, vector<16x512xf32> -> vector<16x512xf32>
    %304 = arith.addf %300, %303 : vector<16x512xf32>
    %305 = vector.extract_strided_slice %304 {offsets = [0, 0], sizes = [16, 384], strides = [1, 1]} : vector<16x512xf32> to vector<16x384xf32>
    %306 = arith.negf %305 : vector<16x384xf32>
    %307 = math.exp %306 : vector<16x384xf32>
    %cst_114 = arith.constant 1.000000e+00 : f32
    %308 = vector.broadcast %cst_114 : f32 to vector<16x384xf32>
    %309 = arith.addf %308, %307 : vector<16x384xf32>
    %310 = arith.divf %308, %309 : vector<16x384xf32>
    %311 = vector.extract_strided_slice %304 {offsets = [0, 384], sizes = [16, 128], strides = [1, 1]} : vector<16x512xf32> to vector<16x128xf32>
    %312 = math.tanh %311 : vector<16x128xf32>
    %313 = vector.extract_strided_slice %310 {offsets = [0, 0], sizes = [16, 128], strides = [1, 1]} : vector<16x384xf32> to vector<16x128xf32>
    %314 = vector.extract_strided_slice %310 {offsets = [0, 128], sizes = [16, 128], strides = [1, 1]} : vector<16x384xf32> to vector<16x128xf32>
    %315 = vector.extract_strided_slice %310 {offsets = [0, 256], sizes = [16, 128], strides = [1, 1]} : vector<16x384xf32> to vector<16x128xf32>
    %316 = arith.mulf %314, %292 : vector<16x128xf32>
    %317 = arith.mulf %313, %312 : vector<16x128xf32>
    %318 = arith.addf %316, %317 : vector<16x128xf32>
    %319 = math.tanh %318 : vector<16x128xf32>
    %320 = arith.mulf %315, %319 : vector<16x128xf32>
    %321 = arith.truncf %320 : vector<16x128xf32> to vector<16x128xbf16>
    %c2_115 = arith.constant 2 : index
    %c0_116 = arith.constant 0 : index
    %c0_117 = arith.constant 0 : index
    %322 = vector.load %arg14[%c2_115, %c0_116, %c0_117] : memref<8x16x128xbf16, #tpu.memory_space<vmem>>, vector<1x16x128xbf16>
    %323 = vector.shape_cast %322 : vector<1x16x128xbf16> to vector<16x128xbf16>
    %324 = vector.shape_cast %321 : vector<16x128xbf16> to vector<1x16x128xbf16>
    tpu.vector_store %arg14[%c2_115, %c0_116, %c0_117], %324 {strides = array<i32>} : memref<8x16x128xbf16, #tpu.memory_space<vmem>>, vector<1x16x128xbf16>,
    %325 = vector.extract_strided_slice %242 {offsets = [3, 0, 0], sizes = [1, 16, 512], strides = [1, 1, 1]} : vector<8x16x512xf32> to vector<1x16x512xf32>
    %326 = vector.shape_cast %325 : vector<1x16x512xf32> to vector<16x512xf32>
    %c1_118 = arith.constant 1 : index
    %c0_119 = arith.constant 0 : index
    %c0_120 = arith.constant 0 : index
    %327 = vector.load %arg6[%c1_118, %c0_119, %c0_120] : memref<2x128x512xbf16, #tpu.memory_space<vmem>>, vector<1x128x512xbf16>
    %328 = vector.shape_cast %327 : vector<1x128x512xbf16> to vector<128x512xbf16>
    %cst_121 = arith.constant dense<0.000000e+00> : vector<16x512xf32>
    %329 = tpu.matmul %321, %328, %cst_121 {dimension_numbers = #tpu.dot_dimension_numbers<[1], [0], [0], [1], [0, 0, 1, 1], [], []>} : vector<16x128xbf16>, vector<128x512xbf16>, vector<16x512xf32> -> vector<16x512xf32>
    %330 = arith.addf %326, %329 : vector<16x512xf32>
    %331 = vector.extract_strided_slice %330 {offsets = [0, 0], sizes = [16, 384], strides = [1, 1]} : vector<16x512xf32> to vector<16x384xf32>
    %332 = arith.negf %331 : vector<16x384xf32>
    %333 = math.exp %332 : vector<16x384xf32>
    %cst_122 = arith.constant 1.000000e+00 : f32
    %334 = vector.broadcast %cst_122 : f32 to vector<16x384xf32>
    %335 = arith.addf %334, %333 : vector<16x384xf32>
    %336 = arith.divf %334, %335 : vector<16x384xf32>
    %337 = vector.extract_strided_slice %330 {offsets = [0, 384], sizes = [16, 128], strides = [1, 1]} : vector<16x512xf32> to vector<16x128xf32>
    %338 = math.tanh %337 : vector<16x128xf32>
    %339 = vector.extract_strided_slice %336 {offsets = [0, 0], sizes = [16, 128], strides = [1, 1]} : vector<16x384xf32> to vector<16x128xf32>
    %340 = vector.extract_strided_slice %336 {offsets = [0, 128], sizes = [16, 128], strides = [1, 1]} : vector<16x384xf32> to vector<16x128xf32>
    %341 = vector.extract_strided_slice %336 {offsets = [0, 256], sizes = [16, 128], strides = [1, 1]} : vector<16x384xf32> to vector<16x128xf32>
    %342 = arith.mulf %340, %318 : vector<16x128xf32>
    %343 = arith.mulf %339, %338 : vector<16x128xf32>
    %344 = arith.addf %342, %343 : vector<16x128xf32>
    %345 = math.tanh %344 : vector<16x128xf32>
    %346 = arith.mulf %341, %345 : vector<16x128xf32>
    %347 = arith.truncf %346 : vector<16x128xf32> to vector<16x128xbf16>
    %c3_123 = arith.constant 3 : index
    %c0_124 = arith.constant 0 : index
    %c0_125 = arith.constant 0 : index
    %348 = vector.load %arg14[%c3_123, %c0_124, %c0_125] : memref<8x16x128xbf16, #tpu.memory_space<vmem>>, vector<1x16x128xbf16>
    %349 = vector.shape_cast %348 : vector<1x16x128xbf16> to vector<16x128xbf16>
    %350 = vector.shape_cast %347 : vector<16x128xbf16> to vector<1x16x128xbf16>
    tpu.vector_store %arg14[%c3_123, %c0_124, %c0_125], %350 {strides = array<i32>} : memref<8x16x128xbf16, #tpu.memory_space<vmem>>, vector<1x16x128xbf16>,
    %351 = vector.extract_strided_slice %242 {offsets = [4, 0, 0], sizes = [1, 16, 512], strides = [1, 1, 1]} : vector<8x16x512xf32> to vector<1x16x512xf32>
    %352 = vector.shape_cast %351 : vector<1x16x512xf32> to vector<16x512xf32>
    %c1_126 = arith.constant 1 : index
    %c0_127 = arith.constant 0 : index
    %c0_128 = arith.constant 0 : index
    %353 = vector.load %arg6[%c1_126, %c0_127, %c0_128] : memref<2x128x512xbf16, #tpu.memory_space<vmem>>, vector<1x128x512xbf16>
    %354 = vector.shape_cast %353 : vector<1x128x512xbf16> to vector<128x512xbf16>
    %cst_129 = arith.constant dense<0.000000e+00> : vector<16x512xf32>
    %355 = tpu.matmul %347, %354, %cst_129 {dimension_numbers = #tpu.dot_dimension_numbers<[1], [0], [0], [1], [0, 0, 1, 1], [], []>} : vector<16x128xbf16>, vector<128x512xbf16>, vector<16x512xf32> -> vector<16x512xf32>
    %356 = arith.addf %352, %355 : vector<16x512xf32>
    %357 = vector.extract_strided_slice %356 {offsets = [0, 0], sizes = [16, 384], strides = [1, 1]} : vector<16x512xf32> to vector<16x384xf32>
    %358 = arith.negf %357 : vector<16x384xf32>
    %359 = math.exp %358 : vector<16x384xf32>
    %cst_130 = arith.constant 1.000000e+00 : f32
    %360 = vector.broadcast %cst_130 : f32 to vector<16x384xf32>
    %361 = arith.addf %360, %359 : vector<16x384xf32>
    %362 = arith.divf %360, %361 : vector<16x384xf32>
    %363 = vector.extract_strided_slice %356 {offsets = [0, 384], sizes = [16, 128], strides = [1, 1]} : vector<16x512xf32> to vector<16x128xf32>
    %364 = math.tanh %363 : vector<16x128xf32>
    %365 = vector.extract_strided_slice %362 {offsets = [0, 0], sizes = [16, 128], strides = [1, 1]} : vector<16x384xf32> to vector<16x128xf32>
    %366 = vector.extract_strided_slice %362 {offsets = [0, 128], sizes = [16, 128], strides = [1, 1]} : vector<16x384xf32> to vector<16x128xf32>
    %367 = vector.extract_strided_slice %362 {offsets = [0, 256], sizes = [16, 128], strides = [1, 1]} : vector<16x384xf32> to vector<16x128xf32>
    %368 = arith.mulf %366, %344 : vector<16x128xf32>
    %369 = arith.mulf %365, %364 : vector<16x128xf32>
    %370 = arith.addf %368, %369 : vector<16x128xf32>
    %371 = math.tanh %370 : vector<16x128xf32>
    %372 = arith.mulf %367, %371 : vector<16x128xf32>
    %373 = arith.truncf %372 : vector<16x128xf32> to vector<16x128xbf16>
    %c4_131 = arith.constant 4 : index
    %c0_132 = arith.constant 0 : index
    %c0_133 = arith.constant 0 : index
    %374 = vector.load %arg14[%c4_131, %c0_132, %c0_133] : memref<8x16x128xbf16, #tpu.memory_space<vmem>>, vector<1x16x128xbf16>
    %375 = vector.shape_cast %374 : vector<1x16x128xbf16> to vector<16x128xbf16>
    %376 = vector.shape_cast %373 : vector<16x128xbf16> to vector<1x16x128xbf16>
    tpu.vector_store %arg14[%c4_131, %c0_132, %c0_133], %376 {strides = array<i32>} : memref<8x16x128xbf16, #tpu.memory_space<vmem>>, vector<1x16x128xbf16>,
    %377 = vector.extract_strided_slice %242 {offsets = [5, 0, 0], sizes = [1, 16, 512], strides = [1, 1, 1]} : vector<8x16x512xf32> to vector<1x16x512xf32>
    %378 = vector.shape_cast %377 : vector<1x16x512xf32> to vector<16x512xf32>
    %c1_134 = arith.constant 1 : index
    %c0_135 = arith.constant 0 : index
    %c0_136 = arith.constant 0 : index
    %379 = vector.load %arg6[%c1_134, %c0_135, %c0_136] : memref<2x128x512xbf16, #tpu.memory_space<vmem>>, vector<1x128x512xbf16>
    %380 = vector.shape_cast %379 : vector<1x128x512xbf16> to vector<128x512xbf16>
    %cst_137 = arith.constant dense<0.000000e+00> : vector<16x512xf32>
    %381 = tpu.matmul %373, %380, %cst_137 {dimension_numbers = #tpu.dot_dimension_numbers<[1], [0], [0], [1], [0, 0, 1, 1], [], []>} : vector<16x128xbf16>, vector<128x512xbf16>, vector<16x512xf32> -> vector<16x512xf32>
    %382 = arith.addf %378, %381 : vector<16x512xf32>
    %383 = vector.extract_strided_slice %382 {offsets = [0, 0], sizes = [16, 384], strides = [1, 1]} : vector<16x512xf32> to vector<16x384xf32>
    %384 = arith.negf %383 : vector<16x384xf32>
    %385 = math.exp %384 : vector<16x384xf32>
    %cst_138 = arith.constant 1.000000e+00 : f32
    %386 = vector.broadcast %cst_138 : f32 to vector<16x384xf32>
    %387 = arith.addf %386, %385 : vector<16x384xf32>
    %388 = arith.divf %386, %387 : vector<16x384xf32>
    %389 = vector.extract_strided_slice %382 {offsets = [0, 384], sizes = [16, 128], strides = [1, 1]} : vector<16x512xf32> to vector<16x128xf32>
    %390 = math.tanh %389 : vector<16x128xf32>
    %391 = vector.extract_strided_slice %388 {offsets = [0, 0], sizes = [16, 128], strides = [1, 1]} : vector<16x384xf32> to vector<16x128xf32>
    %392 = vector.extract_strided_slice %388 {offsets = [0, 128], sizes = [16, 128], strides = [1, 1]} : vector<16x384xf32> to vector<16x128xf32>
    %393 = vector.extract_strided_slice %388 {offsets = [0, 256], sizes = [16, 128], strides = [1, 1]} : vector<16x384xf32> to vector<16x128xf32>
    %394 = arith.mulf %392, %370 : vector<16x128xf32>
    %395 = arith.mulf %391, %390 : vector<16x128xf32>
    %396 = arith.addf %394, %395 : vector<16x128xf32>
    %397 = math.tanh %396 : vector<16x128xf32>
    %398 = arith.mulf %393, %397 : vector<16x128xf32>
    %399 = arith.truncf %398 : vector<16x128xf32> to vector<16x128xbf16>
    %c5_139 = arith.constant 5 : index
    %c0_140 = arith.constant 0 : index
    %c0_141 = arith.constant 0 : index
    %400 = vector.load %arg14[%c5_139, %c0_140, %c0_141] : memref<8x16x128xbf16, #tpu.memory_space<vmem>>, vector<1x16x128xbf16>
    %401 = vector.shape_cast %400 : vector<1x16x128xbf16> to vector<16x128xbf16>
    %402 = vector.shape_cast %399 : vector<16x128xbf16> to vector<1x16x128xbf16>
    tpu.vector_store %arg14[%c5_139, %c0_140, %c0_141], %402 {strides = array<i32>} : memref<8x16x128xbf16, #tpu.memory_space<vmem>>, vector<1x16x128xbf16>,
    %403 = vector.extract_strided_slice %242 {offsets = [6, 0, 0], sizes = [1, 16, 512], strides = [1, 1, 1]} : vector<8x16x512xf32> to vector<1x16x512xf32>
    %404 = vector.shape_cast %403 : vector<1x16x512xf32> to vector<16x512xf32>
    %c1_142 = arith.constant 1 : index
    %c0_143 = arith.constant 0 : index
    %c0_144 = arith.constant 0 : index
    %405 = vector.load %arg6[%c1_142, %c0_143, %c0_144] : memref<2x128x512xbf16, #tpu.memory_space<vmem>>, vector<1x128x512xbf16>
    %406 = vector.shape_cast %405 : vector<1x128x512xbf16> to vector<128x512xbf16>
    %cst_145 = arith.constant dense<0.000000e+00> : vector<16x512xf32>
    %407 = tpu.matmul %399, %406, %cst_145 {dimension_numbers = #tpu.dot_dimension_numbers<[1], [0], [0], [1], [0, 0, 1, 1], [], []>} : vector<16x128xbf16>, vector<128x512xbf16>, vector<16x512xf32> -> vector<16x512xf32>
    %408 = arith.addf %404, %407 : vector<16x512xf32>
    %409 = vector.extract_strided_slice %408 {offsets = [0, 0], sizes = [16, 384], strides = [1, 1]} : vector<16x512xf32> to vector<16x384xf32>
    %410 = arith.negf %409 : vector<16x384xf32>
    %411 = math.exp %410 : vector<16x384xf32>
    %cst_146 = arith.constant 1.000000e+00 : f32
    %412 = vector.broadcast %cst_146 : f32 to vector<16x384xf32>
    %413 = arith.addf %412, %411 : vector<16x384xf32>
    %414 = arith.divf %412, %413 : vector<16x384xf32>
    %415 = vector.extract_strided_slice %408 {offsets = [0, 384], sizes = [16, 128], strides = [1, 1]} : vector<16x512xf32> to vector<16x128xf32>
    %416 = math.tanh %415 : vector<16x128xf32>
    %417 = vector.extract_strided_slice %414 {offsets = [0, 0], sizes = [16, 128], strides = [1, 1]} : vector<16x384xf32> to vector<16x128xf32>
    %418 = vector.extract_strided_slice %414 {offsets = [0, 128], sizes = [16, 128], strides = [1, 1]} : vector<16x384xf32> to vector<16x128xf32>
    %419 = vector.extract_strided_slice %414 {offsets = [0, 256], sizes = [16, 128], strides = [1, 1]} : vector<16x384xf32> to vector<16x128xf32>
    %420 = arith.mulf %418, %396 : vector<16x128xf32>
    %421 = arith.mulf %417, %416 : vector<16x128xf32>
    %422 = arith.addf %420, %421 : vector<16x128xf32>
    %423 = math.tanh %422 : vector<16x128xf32>
    %424 = arith.mulf %419, %423 : vector<16x128xf32>
    %425 = arith.truncf %424 : vector<16x128xf32> to vector<16x128xbf16>
    %c6_147 = arith.constant 6 : index
    %c0_148 = arith.constant 0 : index
    %c0_149 = arith.constant 0 : index
    %426 = vector.load %arg14[%c6_147, %c0_148, %c0_149] : memref<8x16x128xbf16, #tpu.memory_space<vmem>>, vector<1x16x128xbf16>
    %427 = vector.shape_cast %426 : vector<1x16x128xbf16> to vector<16x128xbf16>
    %428 = vector.shape_cast %425 : vector<16x128xbf16> to vector<1x16x128xbf16>
    tpu.vector_store %arg14[%c6_147, %c0_148, %c0_149], %428 {strides = array<i32>} : memref<8x16x128xbf16, #tpu.memory_space<vmem>>, vector<1x16x128xbf16>,
    %429 = vector.extract_strided_slice %242 {offsets = [7, 0, 0], sizes = [1, 16, 512], strides = [1, 1, 1]} : vector<8x16x512xf32> to vector<1x16x512xf32>
    %430 = vector.shape_cast %429 : vector<1x16x512xf32> to vector<16x512xf32>
    %c1_150 = arith.constant 1 : index
    %c0_151 = arith.constant 0 : index
    %c0_152 = arith.constant 0 : index
    %431 = vector.load %arg6[%c1_150, %c0_151, %c0_152] : memref<2x128x512xbf16, #tpu.memory_space<vmem>>, vector<1x128x512xbf16>
    %432 = vector.shape_cast %431 : vector<1x128x512xbf16> to vector<128x512xbf16>
    %cst_153 = arith.constant dense<0.000000e+00> : vector<16x512xf32>
    %433 = tpu.matmul %425, %432, %cst_153 {dimension_numbers = #tpu.dot_dimension_numbers<[1], [0], [0], [1], [0, 0, 1, 1], [], []>} : vector<16x128xbf16>, vector<128x512xbf16>, vector<16x512xf32> -> vector<16x512xf32>
    %434 = arith.addf %430, %433 : vector<16x512xf32>
    %435 = vector.extract_strided_slice %434 {offsets = [0, 0], sizes = [16, 384], strides = [1, 1]} : vector<16x512xf32> to vector<16x384xf32>
    %436 = arith.negf %435 : vector<16x384xf32>
    %437 = math.exp %436 : vector<16x384xf32>
    %cst_154 = arith.constant 1.000000e+00 : f32
    %438 = vector.broadcast %cst_154 : f32 to vector<16x384xf32>
    %439 = arith.addf %438, %437 : vector<16x384xf32>
    %440 = arith.divf %438, %439 : vector<16x384xf32>
    %441 = vector.extract_strided_slice %434 {offsets = [0, 384], sizes = [16, 128], strides = [1, 1]} : vector<16x512xf32> to vector<16x128xf32>
    %442 = math.tanh %441 : vector<16x128xf32>
    %443 = vector.extract_strided_slice %440 {offsets = [0, 0], sizes = [16, 128], strides = [1, 1]} : vector<16x384xf32> to vector<16x128xf32>
    %444 = vector.extract_strided_slice %440 {offsets = [0, 128], sizes = [16, 128], strides = [1, 1]} : vector<16x384xf32> to vector<16x128xf32>
    %445 = vector.extract_strided_slice %440 {offsets = [0, 256], sizes = [16, 128], strides = [1, 1]} : vector<16x384xf32> to vector<16x128xf32>
    %446 = arith.mulf %444, %422 : vector<16x128xf32>
    %447 = arith.mulf %443, %442 : vector<16x128xf32>
    %448 = arith.addf %446, %447 : vector<16x128xf32>
    %449 = math.tanh %448 : vector<16x128xf32>
    %450 = arith.mulf %445, %449 : vector<16x128xf32>
    %451 = arith.truncf %450 : vector<16x128xf32> to vector<16x128xbf16>
    %c7_155 = arith.constant 7 : index
    %c0_156 = arith.constant 0 : index
    %c0_157 = arith.constant 0 : index
    %452 = vector.load %arg14[%c7_155, %c0_156, %c0_157] : memref<8x16x128xbf16, #tpu.memory_space<vmem>>, vector<1x16x128xbf16>
    %453 = vector.shape_cast %452 : vector<1x16x128xbf16> to vector<16x128xbf16>
    %454 = vector.shape_cast %451 : vector<16x128xbf16> to vector<1x16x128xbf16>
    tpu.vector_store %arg14[%c7_155, %c0_156, %c0_157], %454 {strides = array<i32>} : memref<8x16x128xbf16, #tpu.memory_space<vmem>>, vector<1x16x128xbf16>,
    %c1_158 = arith.constant 1 : index
    %c0_159 = arith.constant 0 : index
    %c0_160 = arith.constant 0 : index
    %455 = vector.load %arg11[%c1_158, %c0_159, %c0_160] : memref<2x16x128xbf16, #tpu.memory_space<vmem>>, vector<1x16x128xbf16>
    %456 = vector.shape_cast %455 : vector<1x16x128xbf16> to vector<16x128xbf16>
    %457 = vector.shape_cast %451 : vector<16x128xbf16> to vector<1x16x128xbf16>
    tpu.vector_store %arg11[%c1_158, %c0_159, %c0_160], %457 {strides = array<i32>} : memref<2x16x128xbf16, #tpu.memory_space<vmem>>, vector<1x16x128xbf16>,
    %c1_161 = arith.constant 1 : index
    %c0_162 = arith.constant 0 : index
    %c0_163 = arith.constant 0 : index
    %458 = vector.load %arg12[%c1_161, %c0_162, %c0_163] : memref<2x16x128xf32, #tpu.memory_space<vmem>>, vector<1x16x128xf32>
    %459 = vector.shape_cast %458 : vector<1x16x128xf32> to vector<16x128xf32>
    %460 = vector.shape_cast %448 : vector<16x128xf32> to vector<1x16x128xf32>
    tpu.vector_store %arg12[%c1_161, %c0_162, %c0_163], %460 {strides = array<i32>} : memref<2x16x128xf32, #tpu.memory_space<vmem>>, vector<1x16x128xf32>,
    %c0_164 = arith.constant 0 : index
    %c0_165 = arith.constant 0 : index
    %c0_166 = arith.constant 0 : index
    %461 = vector.load %arg14[%c0_164, %c0_165, %c0_166] : memref<8x16x128xbf16, #tpu.memory_space<vmem>>, vector<8x16x128xbf16>
    %462 = vector.shape_cast %461 : vector<8x16x128xbf16> to vector<128x128xbf16>
    %c0_167 = arith.constant 0 : index
    %c0_168 = arith.constant 0 : index
    %c0_169 = arith.constant 0 : index
    %463 = vector.load %arg3[%c0_167, %c0_168, %c0_169] : memref<8x16x1xi32, #tpu.memory_space<vmem>>, vector<8x16x1xi32>
    %464 = vector.shape_cast %463 : vector<8x16x1xi32> to vector<128x1xi32>
    %cst_170 = arith.constant 0xFF800000 : f32
    %465 = vector.broadcast %cst_170 : f32 to vector<128x1xf32>
    %cst_171 = arith.constant 0.000000e+00 : f32
    %466 = vector.broadcast %cst_171 : f32 to vector<128x1xf32>
    %cst_172 = arith.constant 0.000000e+00 : f32
    %467 = vector.broadcast %cst_172 : f32 to vector<128x1xf32>
    %c0_173 = arith.constant 0 : index
    %c0_174 = arith.constant 0 : index
    %468 = vector.load %arg8[%c0_173, %c0_174] : memref<128x128xbf16, #tpu.memory_space<vmem>>, vector<128x128xbf16>
    %cst_175 = arith.constant dense<0.000000e+00> : vector<128x128xf32>
    %469 = tpu.matmul %462, %468, %cst_175 {dimension_numbers = #tpu.dot_dimension_numbers<[1], [0], [0], [1], [0, 0, 1, 1], [], []>} : vector<128x128xbf16>, vector<128x128xbf16>, vector<128x128xf32> -> vector<128x128xf32>
    %c0_176 = arith.constant 0 : index
    %c0_177 = arith.constant 0 : index
    %470 = vector.load %arg9[%c0_176, %c0_177] : memref<1x128xf32, #tpu.memory_space<vmem>>, vector<1x128xf32>
    %471 = vector.broadcast %470 : vector<1x128xf32> to vector<128x128xf32>
    %472 = arith.addf %469, %471 : vector<128x128xf32>
    %cst_178 = arith.constant dense<0xFF800000> : vector<128xf32>
    %473 = vector.multi_reduction <maximumf>, %472, %cst_178 [1] : vector<128x128xf32> to vector<128xf32>
    %474 = vector.shape_cast %473 : vector<128xf32> to vector<128x1xf32>
    %475 = arith.maximumf %465, %474 : vector<128x1xf32>
    %476 = arith.subf %465, %475 : vector<128x1xf32>
    %477 = math.exp %476 : vector<128x1xf32>
    %478 = arith.mulf %466, %477 : vector<128x1xf32>
    %479 = vector.broadcast %475 : vector<128x1xf32> to vector<128x128xf32>
    %480 = arith.subf %472, %479 : vector<128x128xf32>
    %481 = math.exp %480 : vector<128x128xf32>
    %cst_179 = arith.constant dense<0.000000e+00> : vector<128xf32>
    %482 = vector.multi_reduction <add>, %481, %cst_179 [1] : vector<128x128xf32> to vector<128xf32>
    %483 = vector.shape_cast %482 : vector<128xf32> to vector<128x1xf32>
    %484 = arith.addf %478, %483 : vector<128x1xf32>
    %485 = tpu.iota {dimensions = array<i32: 1>} : vector<128x128xi32>
    %c0_i32_180 = arith.constant 0 : i32
    %486 = vector.broadcast %c0_i32_180 : i32 to vector<128x128xi32>
    %487 = arith.addi %486, %485 : vector<128x128xi32>
    %488 = vector.broadcast %464 : vector<128x1xi32> to vector<128x128xi32>
    %489 = arith.cmpi eq, %487, %488 : vector<128x128xi32>
    %cst_181 = arith.constant 0.000000e+00 : f32
    %490 = vector.broadcast %cst_181 : f32 to vector<128x128xf32>
    %491 = arith.select %489, %472, %490 : vector<128x128xi1>, vector<128x128xf32>
    %cst_182 = arith.constant dense<0.000000e+00> : vector<128xf32>
    %492 = vector.multi_reduction <add>, %491, %cst_182 [1] : vector<128x128xf32> to vector<128xf32>
    %493 = vector.shape_cast %492 : vector<128xf32> to vector<128x1xf32>
    %494 = arith.addf %467, %493 : vector<128x1xf32>
    %495 = math.log %484 : vector<128x1xf32>
    %496 = arith.addf %475, %495 : vector<128x1xf32>
    %497 = arith.subf %496, %494 : vector<128x1xf32>
    %498 = vector.shape_cast %497 : vector<128x1xf32> to vector<8x16x1xf32>
    %499 = tpu.iota {dimensions = array<i32: 0>} : vector<8x16x1xi32>
    %c8_i32 = arith.constant 8 : i32
    %500 = arith.muli %arg1, %c8_i32 : i32
    %501 = vector.broadcast %500 : i32 to vector<8x16x1xi32>
    %502 = arith.addi %499, %501 : vector<8x16x1xi32>
    %c0_183 = arith.constant 0 : index
    %c0_184 = arith.constant 0 : index
    %503 = vector.load %arg4[%c0_183, %c0_184] : memref<16x1xi32, #tpu.memory_space<vmem>>, vector<16x1xi32>
    %504 = vector.shape_cast %503 : vector<16x1xi32> to vector<1x16x1xi32>
    %505 = vector.broadcast %504 : vector<1x16x1xi32> to vector<8x16x1xi32>
    %506 = arith.cmpi slt, %502, %505 : vector<8x16x1xi32>
    %c0_185 = arith.constant 0 : index
    %c0_186 = arith.constant 0 : index
    %507 = vector.load %arg13[%c0_185, %c0_186] : memref<16x1xf32, #tpu.memory_space<vmem>>, vector<16x1xf32>
    %cst_187 = arith.constant 0.000000e+00 : f32
    %508 = vector.broadcast %cst_187 : f32 to vector<8x16x1xf32>
    %509 = arith.select %506, %498, %508 : vector<8x16x1xi1>, vector<8x16x1xf32>
    %cst_188 = arith.constant dense<0.000000e+00> : vector<16x1xf32>
    %510 = vector.multi_reduction <add>, %509, %cst_188 [0] : vector<8x16x1xf32> to vector<16x1xf32>
    %511 = arith.addf %507, %510 : vector<16x1xf32>
    %c0_189 = arith.constant 0 : index
    %c0_190 = arith.constant 0 : index
    %512 = vector.load %arg13[%c0_189, %c0_190] : memref<16x1xf32, #tpu.memory_space<vmem>>, vector<16x1xf32>
    tpu.vector_store %arg13[%c0_189, %c0_190], %511 {strides = array<i32>} : memref<16x1xf32, #tpu.memory_space<vmem>>, vector<16x1xf32>,
    %c1_i32 = arith.constant 1 : i32
    %513 = arith.cmpi eq, %arg1, %c1_i32 : i32
    %514 = arith.extui %513 : i1 to i32
    %c0_i32_191 = arith.constant 0 : i32
    %515 = arith.cmpi ne, %514, %c0_i32_191 : i32
    scf.if %515 {
      %c0_192 = arith.constant 0 : index
      %c0_193 = arith.constant 0 : index
      %516 = vector.load %arg13[%c0_192, %c0_193] : memref<16x1xf32, #tpu.memory_space<vmem>>, vector<16x1xf32>
      %c0_194 = arith.constant 0 : index
      %c0_195 = arith.constant 0 : index
      %517 = vector.load %arg10[%c0_194, %c0_195] : memref<16x1xf32, #tpu.memory_space<vmem>>, vector<16x1xf32>
      tpu.vector_store %arg10[%c0_194, %c0_195], %516 {strides = array<i32>} : memref<16x1xf32, #tpu.memory_space<vmem>>, vector<16x1xf32>,
    } else {
    }
    return
  }
  func.func @transform_0(%arg0: i32, %arg1: i32) -> (i32, i32, i32) {
    %c0_i32 = arith.constant 0 : i32
    %c0_i32_0 = arith.constant 0 : i32
    return %arg1, %arg0, %c0_i32 : i32, i32, i32
  }
  func.func @transform_1(%arg0: i32, %arg1: i32) -> (i32, i32, i32) {
    %c0_i32 = arith.constant 0 : i32
    %c0_i32_0 = arith.constant 0 : i32
    return %arg1, %arg0, %c0_i32 : i32, i32, i32
  }
  func.func @transform_2(%arg0: i32, %arg1: i32) -> (i32, i32) {
    %c0_i32 = arith.constant 0 : i32
    %c0_i32_0 = arith.constant 0 : i32
    return %arg0, %c0_i32 : i32, i32
  }
  func.func @transform_3(%arg0: i32, %arg1: i32) -> (i32, i32, i32) {
    %c0_i32 = arith.constant 0 : i32
    %c0_i32_0 = arith.constant 0 : i32
    %c0_i32_1 = arith.constant 0 : i32
    %c0_i32_2 = arith.constant 0 : i32
    return %c0_i32, %c0_i32_0, %c0_i32_1 : i32, i32, i32
  }
  func.func @transform_4(%arg0: i32, %arg1: i32) -> (i32, i32, i32) {
    %c0_i32 = arith.constant 0 : i32
    %c0_i32_0 = arith.constant 0 : i32
    %c0_i32_1 = arith.constant 0 : i32
    %c0_i32_2 = arith.constant 0 : i32
    return %c0_i32, %c0_i32_0, %c0_i32_1 : i32, i32, i32
  }
  func.func @transform_5(%arg0: i32, %arg1: i32) -> (i32, i32, i32) {
    %c0_i32 = arith.constant 0 : i32
    %c0_i32_0 = arith.constant 0 : i32
    %c0_i32_1 = arith.constant 0 : i32
    %c0_i32_2 = arith.constant 0 : i32
    return %c0_i32, %c0_i32_0, %c0_i32_1 : i32, i32, i32
  }
  func.func @transform_6(%arg0: i32, %arg1: i32) -> (i32, i32) {
    %c0_i32 = arith.constant 0 : i32
    %c0_i32_0 = arith.constant 0 : i32
    %c0_i32_1 = arith.constant 0 : i32
    return %c0_i32, %c0_i32_0 : i32, i32
  }
  func.func @transform_7(%arg0: i32, %arg1: i32) -> (i32, i32) {
    %c0_i32 = arith.constant 0 : i32
    %c0_i32_0 = arith.constant 0 : i32
    %c0_i32_1 = arith.constant 0 : i32
    return %c0_i32, %c0_i32_0 : i32, i32
  }
  func.func @transform_8(%arg0: i32, %arg1: i32) -> (i32, i32) {
    %c0_i32 = arith.constant 0 : i32
    %c0_i32_0 = arith.constant 0 : i32
    return %arg0, %c0_i32 : i32, i32
  }
}

</mosaic_0001>

<llo_original>
// kernel: rnn_lm_nll.1
$region0: #{rnn_lm_nll.1}
  #allocation0 [shape = 'u32[]', space=smem, size = 0x4, offset = 0x4, fixed_abs, tag = 'smem constant byte address 0x4 - core index']
  #allocation1 [shape = 'u32[144,128]{1,0:T(1,128)}', space=vmem, size = 0x12000, scoped, tag = 'internal scratch']
  #allocation2 [shape = 'bf16[2,16,128]{2,1,0:T(16,128)(2,1)}', space=vmem, size = 0x2000, scoped, tag = 'scratch operand']
  #allocation3 [shape = 'f32[2,16,128]{2,1,0:T(8,128)}', space=vmem, size = 0x4000, scoped, tag = 'scratch operand']
  #allocation4 [shape = 'f32[16,1]{1,0:T(8,128)}', space=vmem, size = 0x2000, scoped, tag = 'scratch operand']
  #allocation5 [shape = 'bf16[8,16,128]{2,1,0:T(16,128)(2,1)}', space=vmem, size = 0x8000, scoped, tag = 'scratch operand']
  %s0 = inlined_call_operand.vmem [shape: bf16[16,16,128], index: 0, kind: input, shape index: {}]
  %s1 = inlined_call_operand.vmem [shape: s32[16,16,1], index: 1, kind: input, shape index: {}]
  %s2 = inlined_call_operand.vmem [shape: s32[16,1], index: 2, kind: input, shape index: {}]
  %s3 = inlined_call_operand.vmem [shape: bf16[2,128,512], index: 3, kind: input, shape index: {}]
  %s4 = inlined_call_operand.vmem [shape: bf16[2,128,512], index: 4, kind: input, shape index: {}]
  %s5 = inlined_call_operand.vmem [shape: f32[2,1,512], index: 5, kind: input, shape index: {}]
  %s6 = inlined_call_operand.vmem [shape: bf16[128,128], index: 6, kind: input, shape index: {}]
  %s7 = inlined_call_operand.vmem [shape: f32[1,128], index: 7, kind: input, shape index: {}]
  %s8 = inlined_call_operand.vmem [shape: f32[16,1], index: 8, kind: output, shape index: {}]
  %s9 = sld [smem:[#allocation0]]
  $region73: #{rnn_lm_nll.1} parent=0
    _
  %s11 = ssub.s32 1, %s9
  %s12 = scalar_select 0, %s11, %s9
  loop: start=0, step=1, limit=4
  $region2: #{rnn_lm_nll.1} parent=0 // loop_pre_header
    _
  $region3: #{rnn_lm_nll.1} parent=0 // loop_header
    %s14 = sphi 0, %s18
    %p15 = scmp.ge.s32.totalorder %s14, 4
    %s21 = sphi 0, %s33
    %s22 = sphi 0, %s29
    %s23 = sphi 0, %s21
    %s24 = sphi 0, %s22
    %s25 = sphi 0, %s23
    %s26 = sphi 0, %s24
    %s38 = sphi 0, %s40
    %s41 = sphi 0, %s38
    %s42 = sphi 0, %s41
    %s58 = sphi 0, %s42
    %s66 = sphi 0, %s68
    %s69 = sphi 0, %s66
    %s70 = sphi 0, %s69
    %s86 = sphi 0, %s70
    %s92 = sphi 0, %s94
    %s95 = sphi 0, %s92
    %s96 = sphi 0, %s95
    %s112 = sphi 0, %s96
    %s116 = sphi 0, %s116
    %s118 = sphi 0, %s116
    %s119 = sphi 0, %s118
    %s133 = sphi 0, %s119
    %s137 = sphi 0, %s137
    %s139 = sphi 0, %s137
    %s140 = sphi 0, %s139
    %s154 = sphi 0, %s140
    %s158 = sphi 0, %s158
    %s160 = sphi 0, %s158
    %s161 = sphi 0, %s160
    %s175 = sphi 0, %s161
    %s179 = sphi 0, %s179
    %s181 = sphi 0, %s179
    %s182 = sphi 0, %s181
    %s196 = sphi 0, %s182
    %s200 = sphi 0, %s200
    %s202 = sphi 0, %s200
    %s203 = sphi 0, %s202
    %s217 = sphi 0, %s203
    %s223 = sphi 0, %s225
    %s226 = sphi 0, %s223
    %s227 = sphi 0, %s226
    %s243 = sphi 0, %s227
  $region4: #{rnn_lm_nll.1} parent=0 // loop_header_branch
    %17 = sbr.rel (%p15) target = $region8
  $region5: #{rnn_lm_nll.1} parent=0 // loop_body
    %s19 = ssub.s32 %s14, 1
    %s20 = ssub.s32 %s14, 2
    %s27 = sadd.s32 1, %s22
    %p28 = scmp.ge.s32.totalorder %s27, 2
    %s29 = scalar_select %p28, 0, %s27
    %s30 = sadd.s32 1, %s21
    %s31 = scalar_select %p28, %s30, %s21
    %p32 = scmp.ge.s32.totalorder %s31, 1
    %s33 = scalar_select %p32, 0, %s31
    %s34 = ssub.s32 %s22, %s29
    %s35 = ssub.s32 %s21, %s33
    %s36 = sor.u32 %s34, %s35
    %p37 = scmp.eq.s32.totalorder %s36, 0
    %s39 = sadd.s32 %s38, 1
    %s40 = scalar_select %p37, %s38, %s39
    %p43 = pneg %p37
    %p44 = scmp.eq.s32.totalorder %s14, 1
    %p45 = por %p43, %p44
    %p46 = scmp.ne.s32.totalorder %s38, %s41
    %p47 = scmp.eq.s32.totalorder %s14, 0
    %p48 = por %p46, %p47
    %p49 = scmp.ne.s32.totalorder %s38, %s41
    %p50 = scmp.eq.s32.totalorder %s19, 1
    %p51 = por %p49, %p50
    %p52 = scmp.ne.s32.totalorder %s41, %s42
    %p53 = scmp.eq.s32.totalorder %s19, 0
    %p54 = por %p52, %p53
    %p55 = scmp.ne.s32.totalorder %s41, %s42
    %p56 = scmp.eq.s32.totalorder %s20, 1
    %p57 = por %p55, %p56
    %p59 = scmp.ne.s32.totalorder %s42, %s58
    %p60 = scmp.eq.s32.totalorder %s20, 0
    %p61 = por %p59, %p60
    %s62 = ssub.s32 %s22, %s29
    %s63 = ssub.s32 %s21, %s33
    %s64 = sor.u32 %s62, %s63
    %p65 = scmp.eq.s32.totalorder %s64, 0
    %s67 = sadd.s32 %s66, 1
    %s68 = scalar_select %p65, %s66, %s67
    %p71 = pneg %p65
    %p72 = scmp.eq.s32.totalorder %s14, 1
    %p73 = por %p71, %p72
    %p74 = scmp.ne.s32.totalorder %s66, %s69
    %p75 = scmp.eq.s32.totalorder %s14, 0
    %p76 = por %p74, %p75
    %p77 = scmp.ne.s32.totalorder %s66, %s69
    %p78 = scmp.eq.s32.totalorder %s19, 1
    %p79 = por %p77, %p78
    %p80 = scmp.ne.s32.totalorder %s69, %s70
    %p81 = scmp.eq.s32.totalorder %s19, 0
    %p82 = por %p80, %p81
    %p83 = scmp.ne.s32.totalorder %s69, %s70
    %p84 = scmp.eq.s32.totalorder %s20, 1
    %p85 = por %p83, %p84
    %p87 = scmp.ne.s32.totalorder %s70, %s86
    %p88 = scmp.eq.s32.totalorder %s20, 0
    %p89 = por %p87, %p88
    %s90 = ssub.s32 %s21, %s33
    %p91 = scmp.eq.s32.totalorder %s90, 0
    %s93 = sadd.s32 %s92, 1
    %s94 = scalar_select %p91, %s92, %s93
    %p97 = pneg %p91
    %p98 = scmp.eq.s32.totalorder %s14, 1
    %p99 = por %p97, %p98
    %p100 = scmp.ne.s32.totalorder %s92, %s95
    %p101 = scmp.eq.s32.totalorder %s14, 0
    %p102 = por %p100, %p101
    %p103 = scmp.ne.s32.totalorder %s92, %s95
    %p104 = scmp.eq.s32.totalorder %s19, 1
    %p105 = por %p103, %p104
    %p106 = scmp.ne.s32.totalorder %s95, %s96
    %p107 = scmp.eq.s32.totalorder %s19, 0
    %p108 = por %p106, %p107
    %p109 = scmp.ne.s32.totalorder %s95, %s96
    %p110 = scmp.eq.s32.totalorder %s20, 1
    %p111 = por %p109, %p110
    %p113 = scmp.ne.s32.totalorder %s96, %s112
    %p114 = scmp.eq.s32.totalorder %s20, 0
    %p115 = por %p113, %p114
    %s117 = sadd.s32 %s116, 1
    %p120 = scmp.eq.s32.totalorder %s14, 1
    %p121 = scmp.ne.s32.totalorder %s116, %s118
    %p122 = scmp.eq.s32.totalorder %s14, 0
    %p123 = por %p121, %p122
    %p124 = scmp.ne.s32.totalorder %s116, %s118
    %p125 = scmp.eq.s32.totalorder %s19, 1
    %p126 = por %p124, %p125
    %p127 = scmp.ne.s32.totalorder %s118, %s119
    %p128 = scmp.eq.s32.totalorder %s19, 0
    %p129 = por %p127, %p128
    %p130 = scmp.ne.s32.totalorder %s118, %s119
    %p131 = scmp.eq.s32.totalorder %s20, 1
    %p132 = por %p130, %p131
    %p134 = scmp.ne.s32.totalorder %s119, %s133
    %p135 = scmp.eq.s32.totalorder %s20, 0
    %p136 = por %p134, %p135
    %s138 = sadd.s32 %s137, 1
    %p141 = scmp.eq.s32.totalorder %s14, 1
    %p142 = scmp.ne.s32.totalorder %s137, %s139
    %p143 = scmp.eq.s32.totalorder %s14, 0
    %p144 = por %p142, %p143
    %p145 = scmp.ne.s32.totalorder %s137, %s139
    %p146 = scmp.eq.s32.totalorder %s19, 1
    %p147 = por %p145, %p146
    %p148 = scmp.ne.s32.totalorder %s139, %s140
    %p149 = scmp.eq.s32.totalorder %s19, 0
    %p150 = por %p148, %p149
    %p151 = scmp.ne.s32.totalorder %s139, %s140
    %p152 = scmp.eq.s32.totalorder %s20, 1
    %p153 = por %p151, %p152
    %p155 = scmp.ne.s32.totalorder %s140, %s154
    %p156 = scmp.eq.s32.totalorder %s20, 0
    %p157 = por %p155, %p156
    %s159 = sadd.s32 %s158, 1
    %p162 = scmp.eq.s32.totalorder %s14, 1
    %p163 = scmp.ne.s32.totalorder %s158, %s160
    %p164 = scmp.eq.s32.totalorder %s14, 0
    %p165 = por %p163, %p164
    %p166 = scmp.ne.s32.totalorder %s158, %s160
    %p167 = scmp.eq.s32.totalorder %s19, 1
    %p168 = por %p166, %p167
    %p169 = scmp.ne.s32.totalorder %s160, %s161
    %p170 = scmp.eq.s32.totalorder %s19, 0
    %p171 = por %p169, %p170
    %p172 = scmp.ne.s32.totalorder %s160, %s161
    %p173 = scmp.eq.s32.totalorder %s20, 1
    %p174 = por %p172, %p173
    %p176 = scmp.ne.s32.totalorder %s161, %s175
    %p177 = scmp.eq.s32.totalorder %s20, 0
    %p178 = por %p176, %p177
    %s180 = sadd.s32 %s179, 1
    %p183 = scmp.eq.s32.totalorder %s14, 1
    %p184 = scmp.ne.s32.totalorder %s179, %s181
    %p185 = scmp.eq.s32.totalorder %s14, 0
    %p186 = por %p184, %p185
    %p187 = scmp.ne.s32.totalorder %s179, %s181
    %p188 = scmp.eq.s32.totalorder %s19, 1
    %p189 = por %p187, %p188
    %p190 = scmp.ne.s32.totalorder %s181, %s182
    %p191 = scmp.eq.s32.totalorder %s19, 0
    %p192 = por %p190, %p191
    %p193 = scmp.ne.s32.totalorder %s181, %s182
    %p194 = scmp.eq.s32.totalorder %s20, 1
    %p195 = por %p193, %p194
    %p197 = scmp.ne.s32.totalorder %s182, %s196
    %p198 = scmp.eq.s32.totalorder %s20, 0
    %p199 = por %p197, %p198
    %s201 = sadd.s32 %s200, 1
    %p204 = scmp.eq.s32.totalorder %s14, 1
    %p205 = scmp.ne.s32.totalorder %s200, %s202
    %p206 = scmp.eq.s32.totalorder %s14, 0
    %p207 = por %p205, %p206
    %p208 = scmp.ne.s32.totalorder %s200, %s202
    %p209 = scmp.eq.s32.totalorder %s19, 1
    %p210 = por %p208, %p209
    %p211 = scmp.ne.s32.totalorder %s202, %s203
    %p212 = scmp.eq.s32.totalorder %s19, 0
    %p213 = por %p211, %p212
    %p214 = scmp.ne.s32.totalorder %s202, %s203
    %p215 = scmp.eq.s32.totalorder %s20, 1
    %p216 = por %p214, %p215
    %p218 = scmp.ne.s32.totalorder %s203, %s217
    %p219 = scmp.eq.s32.totalorder %s20, 0
    %p220 = por %p218, %p219
    %s221 = ssub.s32 %s21, %s33
    %p222 = scmp.eq.s32.totalorder %s221, 0
    %s224 = sadd.s32 %s223, 1
    %s225 = scalar_select %p222, %s223, %s224
    %p228 = pneg %p222
    %p229 = scmp.eq.s32.totalorder %s14, 1
    %p230 = por %p228, %p229
    %p231 = scmp.ne.s32.totalorder %s223, %s226
    %p232 = scmp.eq.s32.totalorder %s14, 0
    %p233 = por %p231, %p232
    %p234 = scmp.ne.s32.totalorder %s223, %s226
    %p235 = scmp.eq.s32.totalorder %s19, 1
    %p236 = por %p234, %p235
    %p237 = scmp.ne.s32.totalorder %s226, %s227
    %p238 = scmp.eq.s32.totalorder %s19, 0
    %p239 = por %p237, %p238
    %p240 = scmp.ne.s32.totalorder %s226, %s227
    %p241 = scmp.eq.s32.totalorder %s20, 1
    %p242 = por %p240, %p241
    %p244 = scmp.ne.s32.totalorder %s227, %s243
    %p245 = scmp.eq.s32.totalorder %s20, 0
    %p246 = por %p244, %p245
    %p247 = scmp.le.s32.totalorder 1, %s14
    %p248 = scmp.lt.s32.totalorder %s14, 3
    %p249 = pnand %p247, %p248
    %p250 = pneg %p249
    // Predicated region
    $region9: #{rnn_lm_nll.1} parent=5 // pred_check
      _
    $region10: #{rnn_lm_nll.1} parent=5 // pred_check_branch
      %252 = sbr.rel (%p249) target = $region12
    $region11: #{rnn_lm_nll.1} parent=5 // pred_region
      %s253 = ssub.s32 %s14, 1
      // Predicated region
      $region13: #{rnn_lm_nll.1} parent=11 // pred_check
        %p254 = pneg %p108
      $region14: #{rnn_lm_nll.1} parent=11 // pred_check_branch
        %256 = sbr.rel (%p254) target = $region16
      $region15: #{rnn_lm_nll.1} parent=11 // pred_region
        %s257 = smul.u32 2, %s23
        %p258 = scmp.lt.s32.totalorder %s257, 1
        %s259 = scalar_select %p258, %s257, 1
        %s260 = smul.addr %s259, 8
        %s261 = scalar_lea.vmem %s2, %s260
        %s262 = smul.u32 2, %s23
      $region16: #{rnn_lm_nll.1} parent=11 // pred_fallthru
        _
      // Predicated region
      $region17: #{rnn_lm_nll.1} parent=11 // pred_check
        %p263 = pneg %p129
      $region18: #{rnn_lm_nll.1} parent=11 // pred_check_branch
        %265 = sbr.rel (%p263) target = $region20
      $region19: #{rnn_lm_nll.1} parent=11 // pred_region
        _
      $region20: #{rnn_lm_nll.1} parent=11 // pred_fallthru
        _
      // Predicated region
      $region21: #{rnn_lm_nll.1} parent=11 // pred_check
        %p266 = pneg %p150
      $region22: #{rnn_lm_nll.1} parent=11 // pred_check_branch
        %268 = sbr.rel (%p266) target = $region24
      $region23: #{rnn_lm_nll.1} parent=11 // pred_region
        _
      $region24: #{rnn_lm_nll.1} parent=11 // pred_fallthru
        _
      // Predicated region
      $region25: #{rnn_lm_nll.1} parent=11 // pred_check
        %p269 = pneg %p171
      $region26: #{rnn_lm_nll.1} parent=11 // pred_check_branch
        %271 = sbr.rel (%p269) target = $region28
      $region27: #{rnn_lm_nll.1} parent=11 // pred_region
        _
      $region28: #{rnn_lm_nll.1} parent=11 // pred_fallthru
        _
      // Predicated region
      $region29: #{rnn_lm_nll.1} parent=11 // pred_check
        %p272 = pneg %p192
      $region30: #{rnn_lm_nll.1} parent=11 // pred_check_branch
        %274 = sbr.rel (%p272) target = $region32
      $region31: #{rnn_lm_nll.1} parent=11 // pred_region
        _
      $region32: #{rnn_lm_nll.1} parent=11 // pred_fallthru
        _
      // Predicated region
      $region33: #{rnn_lm_nll.1} parent=11 // pred_check
        %p275 = pneg %p213
      $region34: #{rnn_lm_nll.1} parent=11 // pred_check_branch
        %277 = sbr.rel (%p275) target = $region36
      $region35: #{rnn_lm_nll.1} parent=11 // pred_region
        _
      $region36: #{rnn_lm_nll.1} parent=11 // pred_fallthru
        _
    $region12: #{rnn_lm_nll.1} parent=5 // pred_fallthru
      _
    %p278 = scmp.lt.s32.totalorder %s14, 2
    // Predicated region
    $region37: #{rnn_lm_nll.1} parent=5 // pred_check
      %p279 = pneg %p278
    $region38: #{rnn_lm_nll.1} parent=5 // pred_check_branch
      %281 = sbr.rel (%p279) target = $region40
    $region39: #{rnn_lm_nll.1} parent=5 // pred_region
      // Predicated region
      $region41: #{rnn_lm_nll.1} parent=39 // pred_check
        %p282 = pneg %p48
      $region42: #{rnn_lm_nll.1} parent=39 // pred_check_branch
        %284 = sbr.rel (%p282) target = $region44
      $region43: #{rnn_lm_nll.1} parent=39 // pred_region
        %s285 = smul.u32 8, %s22
        %s286 = smul.u32 2, %s21
        %p287 = scmp.lt.s32.totalorder %s285, 15
        %s288 = scalar_select %p287, %s285, 15
        %p289 = scmp.lt.s32.totalorder %s286, 1
        %s290 = scalar_select %p289, %s286, 1
        %s291 = smul.addr %s288, 2
        %s292 = sadd.s32 %s290, %s291
        %s293 = smul.addr %s292, 4
        %s294 = scalar_lea.vmem %s0, %s293
        %s295 = smul.u32 8, %s22
        %s296 = smul.u32 2, %s21
      $region44: #{rnn_lm_nll.1} parent=39 // pred_fallthru
        _
      // Predicated region
      $region45: #{rnn_lm_nll.1} parent=39 // pred_check
        %p297 = pneg %p76
      $region46: #{rnn_lm_nll.1} parent=39 // pred_check_branch
        %299 = sbr.rel (%p297) target = $region48
      $region47: #{rnn_lm_nll.1} parent=39 // pred_region
        %s300 = smul.u32 8, %s22
        %s301 = smul.u32 2, %s21
        %p302 = scmp.lt.s32.totalorder %s300, 15
        %s303 = scalar_select %p302, %s300, 15
        %p304 = scmp.lt.s32.totalorder %s301, 1
        %s305 = scalar_select %p304, %s301, 1
        %s306 = smul.addr %s303, 2
        %s307 = sadd.s32 %s305, %s306
        %s308 = smul.addr %s307, 8
        %s309 = scalar_lea.vmem %s1, %s308
        %s310 = smul.u32 8, %s22
        %s311 = smul.u32 2, %s21
      $region48: #{rnn_lm_nll.1} parent=39 // pred_fallthru
        _
    $region40: #{rnn_lm_nll.1} parent=5 // pred_fallthru
      _
    %p312 = scmp.le.s32.totalorder 1, %s14
    %p313 = scmp.lt.s32.totalorder %s14, 3
    %p314 = pnand %p312, %p313
    %p315 = pneg %p314
    // Predicated region
    $region49: #{rnn_lm_nll.1} parent=5 // pred_check
      _
    $region50: #{rnn_lm_nll.1} parent=5 // pred_check_branch
      %317 = sbr.rel (%p314) target = $region52
    $region51: #{rnn_lm_nll.1} parent=5 // pred_region
      %s318 = ssub.s32 %s14, 1
      %s319 = smul.u32 8, %s24
      %s320 = smul.u32 2, %s23
      %p321 = scmp.lt.s32.totalorder %s319, 15
      %s322 = scalar_select %p321, %s319, 15
      %p323 = scmp.lt.s32.totalorder %s320, 1
      %s324 = scalar_select %p323, %s320, 1
      %s325 = smul.addr %s322, 2
      %s326 = sadd.s32 %s324, %s325
      %s327 = smul.addr %s326, 4
      %s328 = scalar_lea.vmem %s0, %s327
      %p329 = pneg %p54
      %p330 = pneg %p51
      %s331 = smul.u32 8, %s24
      %s332 = smul.u32 2, %s23
      %p333 = scmp.lt.s32.totalorder %s331, 15
      %s334 = scalar_select %p333, %s331, 15
      %p335 = scmp.lt.s32.totalorder %s332, 1
      %s336 = scalar_select %p335, %s332, 1
      %s337 = smul.addr %s334, 2
      %s338 = sadd.s32 %s336, %s337
      %s339 = smul.addr %s338, 8
      %s340 = scalar_lea.vmem %s1, %s339
      %p341 = pneg %p82
      %p342 = pneg %p79
      %s343 = smul.u32 2, %s23
      %p344 = scmp.lt.s32.totalorder %s343, 1
      %s345 = scalar_select %p344, %s343, 1
      %s346 = smul.addr %s345, 8
      %s347 = scalar_lea.vmem %s2, %s346
      %p348 = pneg %p108
      %p349 = pneg %p105
      %p350 = pneg %p129
      %p351 = pneg %p126
      %p352 = pneg %p150
      %p353 = pneg %p147
      %p354 = pneg %p171
      %p355 = pneg %p168
      %p356 = pneg %p192
      %p357 = pneg %p189
      %p358 = pneg %p213
      %p359 = pneg %p210
      %p360 = pneg %p239
      %p361 = pneg %p236
      %s362 = smul.u32 2, %s23
      %p363 = scmp.lt.s32.totalorder %s362, 1
      %s364 = scalar_select %p363, %s362, 1
      %s365 = smul.addr %s364, 8
      %s366 = scalar_lea.vmem %s8, %s365
      %s367 = smul.u32 8, %s24
      %s368 = smul.u32 2, %s23
      %p369 = scmp.lt.s32.totalorder %s367, 15
      %s370 = scalar_select %p369, %s367, 15
      %p371 = scmp.lt.s32.totalorder %s368, 1
      %s372 = scalar_select %p371, %s368, 1
      %s373 = smul.addr %s370, 2
      %s374 = sadd.s32 %s372, %s373
      %s375 = smul.addr %s374, 4
      %s376 = scalar_lea.vmem %s0, %s375
      %s377 = smul.u32 8, %s24
      %s378 = smul.u32 2, %s23
      %s379 = smul.u32 8, %s24
      %s380 = smul.u32 2, %s23
      %p381 = scmp.lt.s32.totalorder %s379, 15
      %s382 = scalar_select %p381, %s379, 15
      %p383 = scmp.lt.s32.totalorder %s380, 1
      %s384 = scalar_select %p383, %s380, 1
      %s385 = smul.addr %s382, 2
      %s386 = sadd.s32 %s384, %s385
      %s387 = smul.addr %s386, 8
      %s388 = scalar_lea.vmem %s1, %s387
      %s389 = smul.u32 8, %s24
      %s390 = smul.u32 2, %s23
      %s391 = smul.u32 2, %s23
      %p392 = scmp.lt.s32.totalorder %s391, 1
      %s393 = scalar_select %p392, %s391, 1
      %s394 = smul.addr %s393, 8
      %s395 = scalar_lea.vmem %s2, %s394
      %s396 = smul.u32 2, %s23
      %s397 = smul.u32 2, %s23
      %p398 = scmp.lt.s32.totalorder %s397, 1
      %s399 = scalar_select %p398, %s397, 1
      %s400 = smul.addr %s399, 8
      %s401 = scalar_lea.vmem %s8, %s400
      %s402 = smul.u32 2, %s23
      %p404 = scmp.eq.s32.totalorder %s24, 0
      // Predicated region
      $region53: #{rnn_lm_nll.1} parent=51 // pred_check
        %p405 = pneg %p404
      $region54: #{rnn_lm_nll.1} parent=51 // pred_check_branch
        %407 = sbr.rel (%p405) target = $region56
      $region55: #{rnn_lm_nll.1} parent=51 // pred_region
        %408 = vst [vmem:[#allocation2] sm:$0xff] 0
        %409 = vst [vmem:[#allocation2 + $0x8] sm:$0xff] 0
        %410 = vst [vmem:[#allocation3] sm:$0xff] 0.0
        %411 = vst [vmem:[#allocation3 + $0x8] sm:$0xff] 0.0
        %412 = vst [vmem:[#allocation3 + $0x10] sm:$0xff] 0.0
        %413 = vst [vmem:[#allocation3 + $0x18] sm:$0xff] 0.0
        %vm414 = vcmask 7168
        %415 = vst.msk [vmem:[#allocation4] sm:$0xff] %vm414, 0.0
        %416 = vst.msk [vmem:[#allocation4 + $0x8] sm:$0xff] %vm414, 0.0
      $region56: #{rnn_lm_nll.1} parent=51 // pred_fallthru
        _
      %v417 = vld [vmem:[%s376] sm:$0xf]
      %v418 = vld [vmem:[%s376 + $0x4] sm:$0xf]
      %v419 = vld [vmem:[%s376 + $0x8] sm:$0xf]
      %v420 = vld [vmem:[%s376 + $0xc] sm:$0xf]
      %v421 = vld [vmem:[%s376 + $0x10] sm:$0xf]
      %v422 = vld [vmem:[%s376 + $0x14] sm:$0xf]
      %v423 = vld [vmem:[%s376 + $0x18] sm:$0xf]
      %v424 = vld [vmem:[%s376 + $0x1c] sm:$0xf]
      %v425 = vld [vmem:[%s376 + $0x20] sm:$0xf]
      %v426 = vld [vmem:[%s376 + $0x24] sm:$0xf]
      %v427 = vld [vmem:[%s376 + $0x28] sm:$0xf]
      %v428 = vld [vmem:[%s376 + $0x2c] sm:$0xf]
      %v429 = vld [vmem:[%s376 + $0x30] sm:$0xf]
      %v430 = vld [vmem:[%s376 + $0x34] sm:$0xf]
      %v431 = vld [vmem:[%s376 + $0x38] sm:$0xf]
      %v432 = vld [vmem:[%s376 + $0x3c] sm:$0xf]
      %v433 = vld [vmem:[%s3] sm:$0xff]
      %v434 = vld [vmem:[%s3 + $0x8] sm:$0xff]
      %v435 = vld [vmem:[%s3 + $0x10] sm:$0xff]
      %v436 = vld [vmem:[%s3 + $0x18] sm:$0xff]
      %v437 = vld [vmem:[%s3 + $0x20] sm:$0xff]
      %v438 = vld [vmem:[%s3 + $0x28] sm:$0xff]
      %v439 = vld [vmem:[%s3 + $0x30] sm:$0xff]
      %v440 = vld [vmem:[%s3 + $0x38] sm:$0xff]
      %v441 = vld [vmem:[%s3 + $0x40] sm:$0xff]
      %v442 = vld [vmem:[%s3 + $0x48] sm:$0xff]
      %v443 = vld [vmem:[%s3 + $0x50] sm:$0xff]
      %v444 = vld [vmem:[%s3 + $0x58] sm:$0xff]
      %v445 = vld [vmem:[%s3 + $0x60] sm:$0xff]
      %v446 = vld [vmem:[%s3 + $0x68] sm:$0xff]
      %v447 = vld [vmem:[%s3 + $0x70] sm:$0xff]
      %v448 = vld [vmem:[%s3 + $0x78] sm:$0xff]
      %v449 = vld [vmem:[%s3 + $0x80] sm:$0xff]
      %v450 = vld [vmem:[%s3 + $0x88] sm:$0xff]
      %v451 = vld [vmem:[%s3 + $0x90] sm:$0xff]
      %v452 = vld [vmem:[%s3 + $0x98] sm:$0xff]
      %v453 = vld [vmem:[%s3 + $0xa0] sm:$0xff]
      %v454 = vld [vmem:[%s3 + $0xa8] sm:$0xff]
      %v455 = vld [vmem:[%s3 + $0xb0] sm:$0xff]
      %v456 = vld [vmem:[%s3 + $0xb8] sm:$0xff]
      %v457 = vld [vmem:[%s3 + $0xc0] sm:$0xff]
      %v458 = vld [vmem:[%s3 + $0xc8] sm:$0xff]
      %v459 = vld [vmem:[%s3 + $0xd0] sm:$0xff]
      %v460 = vld [vmem:[%s3 + $0xd8] sm:$0xff]
      %v461 = vld [vmem:[%s3 + $0xe0] sm:$0xff]
      %v462 = vld [vmem:[%s3 + $0xe8] sm:$0xff]
      %v463 = vld [vmem:[%s3 + $0xf0] sm:$0xff]
      %v464 = vld [vmem:[%s3 + $0xf8] sm:$0xff]
      %v481 = vunpack.c.l.b16 %v417
      %v482 = vunpack.c.l.b16 %v418
      %v483 = vunpack.c.l.b16 %v419
      %v484 = vunpack.c.l.b16 %v420
      %v485 = vunpack.c.l.b16 %v421
      %v486 = vunpack.c.l.b16 %v422
      %v487 = vunpack.c.l.b16 %v423
      %v488 = vunpack.c.l.b16 %v424
      %v489 = vunpack.c.l.b16 %v425
      %v490 = vunpack.c.l.b16 %v426
      %v491 = vunpack.c.l.b16 %v427
      %v492 = vunpack.c.l.b16 %v428
      %v493 = vunpack.c.l.b16 %v429
      %v494 = vunpack.c.l.b16 %v430
      %v495 = vunpack.c.l.b16 %v431
      %v496 = vunpack.c.l.b16 %v432
      %v497 = vpack.c.b16 %v482, %v481
      %v498 = vpack.c.b16 %v484, %v483
      %v499 = vpack.c.b16 %v486, %v485
      %v500 = vpack.c.b16 %v488, %v487
      %v501 = vpack.c.b16 %v490, %v489
      %v502 = vpack.c.b16 %v492, %v491
      %v503 = vpack.c.b16 %v494, %v493
      %v504 = vpack.c.b16 %v496, %v495
      %v545 = vunpack.c.l.b16 %v433
      %v546 = vunpack.c.h.b16 %v433
      %v547 = vunpack.c.l.b16 %v434
      %v548 = vunpack.c.h.b16 %v434
      %v549 = vunpack.c.l.b16 %v435
      %v550 = vunpack.c.h.b16 %v435
      %v551 = vunpack.c.l.b16 %v436
      %v552 = vunpack.c.h.b16 %v436
      %v553 = vunpack.c.l.b16 %v437
      %v554 = vunpack.c.h.b16 %v437
      %v555 = vunpack.c.l.b16 %v438
      %v556 = vunpack.c.h.b16 %v438
      %v557 = vunpack.c.l.b16 %v439
      %v558 = vunpack.c.h.b16 %v439
      %v559 = vunpack.c.l.b16 %v440
      %v560 = vunpack.c.h.b16 %v440
      %v561 = vunpack.c.l.b16 %v441
      %v562 = vunpack.c.h.b16 %v441
      %v563 = vunpack.c.l.b16 %v442
      %v564 = vunpack.c.h.b16 %v442
      %v565 = vunpack.c.l.b16 %v443
      %v566 = vunpack.c.h.b16 %v443
      %v567 = vunpack.c.l.b16 %v444
      %v568 = vunpack.c.h.b16 %v444
      %v569 = vunpack.c.l.b16 %v445
      %v570 = vunpack.c.h.b16 %v445
      %v571 = vunpack.c.l.b16 %v446
      %v572 = vunpack.c.h.b16 %v446
      %v573 = vunpack.c.l.b16 %v447
      %v574 = vunpack.c.h.b16 %v447
      %v575 = vunpack.c.l.b16 %v448
      %v576 = vunpack.c.h.b16 %v448
      %v577 = vunpack.c.l.b16 %v449
      %v578 = vunpack.c.h.b16 %v449
      %v579 = vunpack.c.l.b16 %v450
      %v580 = vunpack.c.h.b16 %v450
      %v581 = vunpack.c.l.b16 %v451
      %v582 = vunpack.c.h.b16 %v451
      %v583 = vunpack.c.l.b16 %v452
      %v584 = vunpack.c.h.b16 %v452
      %v585 = vunpack.c.l.b16 %v453
      %v586 = vunpack.c.h.b16 %v453
      %v587 = vunpack.c.l.b16 %v454
      %v588 = vunpack.c.h.b16 %v454
      %v589 = vunpack.c.l.b16 %v455
      %v590 = vunpack.c.h.b16 %v455
      %v591 = vunpack.c.l.b16 %v456
      %v592 = vunpack.c.h.b16 %v456
      %v593 = vunpack.c.l.b16 %v457
      %v594 = vunpack.c.h.b16 %v457
      %v595 = vunpack.c.l.b16 %v458
      %v596 = vunpack.c.h.b16 %v458
      %v597 = vunpack.c.l.b16 %v459
      %v598 = vunpack.c.h.b16 %v459
      %v599 = vunpack.c.l.b16 %v460
      %v600 = vunpack.c.h.b16 %v460
      %v601 = vunpack.c.l.b16 %v461
      %v602 = vunpack.c.h.b16 %v461
      %v603 = vunpack.c.l.b16 %v462
      %v604 = vunpack.c.h.b16 %v462
      %v605 = vunpack.c.l.b16 %v463
      %v606 = vunpack.c.h.b16 %v463
      %v607 = vunpack.c.l.b16 %v464
      %v608 = vunpack.c.h.b16 %v464
      %v609 = vpack.c.b16 %v549, %v545
      %v610 = vpack.c.b16 %v550, %v546
      %v611 = vpack.c.b16 %v551, %v547
      %v612 = vpack.c.b16 %v552, %v548
      %v613 = vpack.c.b16 %v557, %v553
      %v614 = vpack.c.b16 %v558, %v554
      %v615 = vpack.c.b16 %v559, %v555
      %v616 = vpack.c.b16 %v560, %v556
      %v617 = vpack.c.b16 %v565, %v561
      %v618 = vpack.c.b16 %v566, %v562
      %v619 = vpack.c.b16 %v567, %v563
      %v620 = vpack.c.b16 %v568, %v564
      %v621 = vpack.c.b16 %v573, %v569
      %v622 = vpack.c.b16 %v574, %v570
      %v623 = vpack.c.b16 %v575, %v571
      %v624 = vpack.c.b16 %v576, %v572
      %v625 = vpack.c.b16 %v581, %v577
      %v626 = vpack.c.b16 %v582, %v578
      %v627 = vpack.c.b16 %v583, %v579
      %v628 = vpack.c.b16 %v584, %v580
      %v629 = vpack.c.b16 %v589, %v585
      %v630 = vpack.c.b16 %v590, %v586
      %v631 = vpack.c.b16 %v591, %v587
      %v632 = vpack.c.b16 %v592, %v588
      %v633 = vpack.c.b16 %v597, %v593
      %v634 = vpack.c.b16 %v598, %v594
      %v635 = vpack.c.b16 %v599, %v595
      %v636 = vpack.c.b16 %v600, %v596
      %v637 = vpack.c.b16 %v605, %v601
      %v638 = vpack.c.b16 %v606, %v602
      %v639 = vpack.c.b16 %v607, %v603
      %v640 = vpack.c.b16 %v608, %v604
      %673 = vmatprep.subr.bf16.mxu0 %v610
      %674 = vmatpush1.bf16.msra.mxu0 %v609
      %675 = vmatprep.subr.bf16.mxu0 %v614
      %676 = vmatpush1.bf16.msra.mxu0 %v613
      %677 = vmatprep.subr.bf16.mxu0 %v618
      %678 = vmatpush1.bf16.msra.mxu0 %v617
      %679 = vmatprep.subr.bf16.mxu0 %v622
      %680 = vmatpush1.bf16.msra.mxu0 %v621
      %681 = vmatprep.subr.bf16.mxu0 %v626
      %682 = vmatpush1.bf16.msra.mxu0 %v625
      %683 = vmatprep.subr.bf16.mxu0 %v630
      %684 = vmatpush1.bf16.msra.mxu0 %v629
      %685 = vmatprep.subr.bf16.mxu0 %v634
      %686 = vmatpush1.bf16.msra.mxu0 %v633
      %687 = vmatprep.subr.bf16.mxu0 %v638
      %688 = vmatpush1.bf16.msra.mxu0 %v637
      %689 = vmatprep.subr.bf16.mxu0 0
      %690 = vmatpush1.bf16.msra.mxu0 0
      %691 = vmatprep.subr.bf16.mxu0 0
      %692 = vmatpush1.bf16.msra.mxu0 0
      %693 = vmatprep.subr.bf16.mxu0 0
      %694 = vmatpush1.bf16.msra.mxu0 0
      %695 = vmatprep.subr.bf16.mxu0 0
      %696 = vmatpush1.bf16.msra.mxu0 0
      %697 = vmatprep.subr.bf16.mxu0 0
      %698 = vmatpush1.bf16.msra.mxu0 0
      %699 = vmatprep.subr.bf16.mxu0 0
      %700 = vmatpush1.bf16.msra.mxu0 0
      %701 = vmatprep.subr.bf16.mxu0 0
      %702 = vmatpush1.bf16.msra.mxu0 0
      %703 = vmatprep.subr.bf16.mxu0 0
      %704 = vmatpush1.bf16.msra.mxu0 0
      %705 = vmatprep.mubr.bf16.mxu0 0
      %706 = vmatmul.mubr.bf16.gmra.mrb[0].mxu0 %v497
      %v707 = vpop.f32.mrb[0].mxu0
      %v708 = vadd.f32 0.0, %v707
      %v709 = vpop.f32.mrb[0].mxu0
      %v710 = vadd.f32 0.0, %v709
      %v711 = vpop.f32.mrb[0].mxu0
      %v712 = vadd.f32 0.0, %v711
      %v713 = vpop.f32.mrb[0].mxu0
      %v714 = vadd.f32 0.0, %v713
      %715 = vmatprep.mubr.bf16.mxu0 0
      %716 = vmatmul.mubr.bf16.gmra.mrb[0].mxu0 %v498
      %v717 = vpop.f32.mrb[0].mxu0
      %v718 = vadd.f32 0.0, %v717
      %v719 = vpop.f32.mrb[0].mxu0
      %v720 = vadd.f32 0.0, %v719
      %v721 = vpop.f32.mrb[0].mxu0
      %v722 = vadd.f32 0.0, %v721
      %v723 = vpop.f32.mrb[0].mxu0
      %v724 = vadd.f32 0.0, %v723
      %725 = vmatprep.mubr.bf16.mxu0 0
      %726 = vmatmul.mubr.bf16.gmra.mrb[0].mxu0 %v499
      %v727 = vpop.f32.mrb[0].mxu0
      %v728 = vadd.f32 0.0, %v727
      %v729 = vpop.f32.mrb[0].mxu0
      %v730 = vadd.f32 0.0, %v729
      %v731 = vpop.f32.mrb[0].mxu0
      %v732 = vadd.f32 0.0, %v731
      %v733 = vpop.f32.mrb[0].mxu0
      %v734 = vadd.f32 0.0, %v733
      %735 = vmatprep.mubr.bf16.mxu0 0
      %736 = vmatmul.mubr.bf16.gmra.mrb[0].mxu0 %v500
      %v737 = vpop.f32.mrb[0].mxu0
      %v738 = vadd.f32 0.0, %v737
      %v739 = vpop.f32.mrb[0].mxu0
      %v740 = vadd.f32 0.0, %v739
      %v741 = vpop.f32.mrb[0].mxu0
      %v742 = vadd.f32 0.0, %v741
      %v743 = vpop.f32.mrb[0].mxu0
      %v744 = vadd.f32 0.0, %v743
      %745 = vmatprep.mubr.bf16.mxu0 0
      %746 = vmatmul.mubr.bf16.gmra.mrb[0].mxu0 %v501
      %v747 = vpop.f32.mrb[0].mxu0
      %v748 = vadd.f32 0.0, %v747
      %v749 = vpop.f32.mrb[0].mxu0
      %v750 = vadd.f32 0.0, %v749
      %v751 = vpop.f32.mrb[0].mxu0
      %v752 = vadd.f32 0.0, %v751
      %v753 = vpop.f32.mrb[0].mxu0
      %v754 = vadd.f32 0.0, %v753
      %755 = vmatprep.mubr.bf16.mxu0 0
      %756 = vmatmul.mubr.bf16.gmra.mrb[0].mxu0 %v502
      %v757 = vpop.f32.mrb[0].mxu0
      %v758 = vadd.f32 0.0, %v757
      %v759 = vpop.f32.mrb[0].mxu0
      %v760 = vadd.f32 0.0, %v759
      %v761 = vpop.f32.mrb[0].mxu0
      %v762 = vadd.f32 0.0, %v761
      %v763 = vpop.f32.mrb[0].mxu0
      %v764 = vadd.f32 0.0, %v763
      %765 = vmatprep.mubr.bf16.mxu0 0
      %766 = vmatmul.mubr.bf16.gmra.mrb[0].mxu0 %v503
      %v767 = vpop.f32.mrb[0].mxu0
      %v768 = vadd.f32 0.0, %v767
      %v769 = vpop.f32.mrb[0].mxu0
      %v770 = vadd.f32 0.0, %v769
      %v771 = vpop.f32.mrb[0].mxu0
      %v772 = vadd.f32 0.0, %v771
      %v773 = vpop.f32.mrb[0].mxu0
      %v774 = vadd.f32 0.0, %v773
      %775 = vmatprep.mubr.bf16.mxu0 0
      %776 = vmatmul.mubr.bf16.gmra.mrb[0].mxu0 %v504
      %v777 = vpop.f32.mrb[0].mxu0
      %v778 = vadd.f32 0.0, %v777
      %v779 = vpop.f32.mrb[0].mxu0
      %v780 = vadd.f32 0.0, %v779
      %v781 = vpop.f32.mrb[0].mxu0
      %v782 = vadd.f32 0.0, %v781
      %v783 = vpop.f32.mrb[0].mxu0
      %v784 = vadd.f32 0.0, %v783
      %785 = vdwg.mxu0
      %786 = vmatprep.subr.bf16.mxu0 %v612
      %787 = vmatpush1.bf16.msra.mxu0 %v611
      %788 = vmatprep.subr.bf16.mxu0 %v616
      %789 = vmatpush1.bf16.msra.mxu0 %v615
      %790 = vmatprep.subr.bf16.mxu0 %v620
      %791 = vmatpush1.bf16.msra.mxu0 %v619
      %792 = vmatprep.subr.bf16.mxu0 %v624
      %793 = vmatpush1.bf16.msra.mxu0 %v623
      %794 = vmatprep.subr.bf16.mxu0 %v628
      %795 = vmatpush1.bf16.msra.mxu0 %v627
      %796 = vmatprep.subr.bf16.mxu0 %v632
      %797 = vmatpush1.bf16.msra.mxu0 %v631
      %798 = vmatprep.subr.bf16.mxu0 %v636
      %799 = vmatpush1.bf16.msra.mxu0 %v635
      %800 = vmatprep.subr.bf16.mxu0 %v640
      %801 = vmatpush1.bf16.msra.mxu0 %v639
      %802 = vmatprep.subr.bf16.mxu0 0
      %803 = vmatpush1.bf16.msra.mxu0 0
      %804 = vmatprep.subr.bf16.mxu0 0
      %805 = vmatpush1.bf16.msra.mxu0 0
      %806 = vmatprep.subr.bf16.mxu0 0
      %807 = vmatpush1.bf16.msra.mxu0 0
      %808 = vmatprep.subr.bf16.mxu0 0
      %809 = vmatpush1.bf16.msra.mxu0 0
      %810 = vmatprep.subr.bf16.mxu0 0
      %811 = vmatpush1.bf16.msra.mxu0 0
      %812 = vmatprep.subr.bf16.mxu0 0
      %813 = vmatpush1.bf16.msra.mxu0 0
      %814 = vmatprep.subr.bf16.mxu0 0
      %815 = vmatpush1.bf16.msra.mxu0 0
      %816 = vmatprep.subr.bf16.mxu0 0
      %817 = vmatpush1.bf16.msra.mxu0 0
      %818 = vmatprep.mubr.bf16.mxu0 0
      %819 = vmatmul.mubr.bf16.gmra.mrb[0].mxu0 %v497
      %v820 = vpop.f32.mrb[0].mxu0
      %v821 = vadd.f32 0.0, %v820
      %v822 = vpop.f32.mrb[0].mxu0
      %v823 = vadd.f32 0.0, %v822
      %v824 = vpop.f32.mrb[0].mxu0
      %v825 = vadd.f32 0.0, %v824
      %v826 = vpop.f32.mrb[0].mxu0
      %v827 = vadd.f32 0.0, %v826
      %828 = vmatprep.mubr.bf16.mxu0 0
      %829 = vmatmul.mubr.bf16.gmra.mrb[0].mxu0 %v498
      %v830 = vpop.f32.mrb[0].mxu0
      %v831 = vadd.f32 0.0, %v830
      %v832 = vpop.f32.mrb[0].mxu0
      %v833 = vadd.f32 0.0, %v832
      %v834 = vpop.f32.mrb[0].mxu0
      %v835 = vadd.f32 0.0, %v834
      %v836 = vpop.f32.mrb[0].mxu0
      %v837 = vadd.f32 0.0, %v836
      %838 = vmatprep.mubr.bf16.mxu0 0
      %839 = vmatmul.mubr.bf16.gmra.mrb[0].mxu0 %v499
      %v840 = vpop.f32.mrb[0].mxu0
      %v841 = vadd.f32 0.0, %v840
      %v842 = vpop.f32.mrb[0].mxu0
      %v843 = vadd.f32 0.0, %v842
      %v844 = vpop.f32.mrb[0].mxu0
      %v845 = vadd.f32 0.0, %v844
      %v846 = vpop.f32.mrb[0].mxu0
      %v847 = vadd.f32 0.0, %v846
      %848 = vmatprep.mubr.bf16.mxu0 0
      %849 = vmatmul.mubr.bf16.gmra.mrb[0].mxu0 %v500
      %v850 = vpop.f32.mrb[0].mxu0
      %v851 = vadd.f32 0.0, %v850
      %v852 = vpop.f32.mrb[0].mxu0
      %v853 = vadd.f32 0.0, %v852
      %v854 = vpop.f32.mrb[0].mxu0
      %v855 = vadd.f32 0.0, %v854
      %v856 = vpop.f32.mrb[0].mxu0
      %v857 = vadd.f32 0.0, %v856
      %858 = vmatprep.mubr.bf16.mxu0 0
      %859 = vmatmul.mubr.bf16.gmra.mrb[0].mxu0 %v501
      %v860 = vpop.f32.mrb[0].mxu0
      %v861 = vadd.f32 0.0, %v860
      %v862 = vpop.f32.mrb[0].mxu0
      %v863 = vadd.f32 0.0, %v862
      %v864 = vpop.f32.mrb[0].mxu0
      %v865 = vadd.f32 0.0, %v864
      %v866 = vpop.f32.mrb[0].mxu0
      %v867 = vadd.f32 0.0, %v866
      %868 = vmatprep.mubr.bf16.mxu0 0
      %869 = vmatmul.mubr.bf16.gmra.mrb[0].mxu0 %v502
      %v870 = vpop.f32.mrb[0].mxu0
      %v871 = vadd.f32 0.0, %v870
      %v872 = vpop.f32.mrb[0].mxu0
      %v873 = vadd.f32 0.0, %v872
      %v874 = vpop.f32.mrb[0].mxu0
      %v875 = vadd.f32 0.0, %v874
      %v876 = vpop.f32.mrb[0].mxu0
      %v877 = vadd.f32 0.0, %v876
      %878 = vmatprep.mubr.bf16.mxu0 0
      %879 = vmatmul.mubr.bf16.gmra.mrb[0].mxu0 %v503
      %v880 = vpop.f32.mrb[0].mxu0
      %v881 = vadd.f32 0.0, %v880
      %v882 = vpop.f32.mrb[0].mxu0
      %v883 = vadd.f32 0.0, %v882
      %v884 = vpop.f32.mrb[0].mxu0
      %v885 = vadd.f32 0.0, %v884
      %v886 = vpop.f32.mrb[0].mxu0
      %v887 = vadd.f32 0.0, %v886
      %888 = vmatprep.mubr.bf16.mxu0 0
      %889 = vmatmul.mubr.bf16.gmra.mrb[0].mxu0 %v504
      %v890 = vpop.f32.mrb[0].mxu0
      %v891 = vadd.f32 0.0, %v890
      %v892 = vpop.f32.mrb[0].mxu0
      %v893 = vadd.f32 0.0, %v892
      %v894 = vpop.f32.mrb[0].mxu0
      %v895 = vadd.f32 0.0, %v894
      %v896 = vpop.f32.mrb[0].mxu0
      %v897 = vadd.f32 0.0, %v896
      %898 = vdwg.mxu0
      %v899 = vld [vmem:[%s5] sm:$0xf]
      %v901 = vlaneseq
      %v902 = vshrl.u32 %v901, 7
      %v903 = vsub.s32 0, %v902
      %v904 = vrot.slane %v899, %v903
      %v905 = vlaneseq
      %v906 = vshrl.u32 %v905, 7
      %v907 = vsub.s32 1, %v906
      %v908 = vrot.slane %v899, %v907
      %v909 = vlaneseq
      %v910 = vshrl.u32 %v909, 7
      %v911 = vsub.s32 2, %v910
      %v912 = vrot.slane %v899, %v911
      %v913 = vlaneseq
      %v914 = vshrl.u32 %v913, 7
      %v915 = vsub.s32 3, %v914
      %v916 = vrot.slane %v899, %v915
      %v921 = vadd.f32 %v708, %v904
      %v922 = vadd.f32 %v710, %v908
      %v923 = vadd.f32 %v821, %v912
      %v924 = vadd.f32 %v823, %v916
      %v925 = vadd.f32 %v712, %v904
      %v926 = vadd.f32 %v714, %v908
      %v927 = vadd.f32 %v825, %v912
      %v928 = vadd.f32 %v827, %v916
      %v929 = vadd.f32 %v718, %v904
      %v930 = vadd.f32 %v720, %v908
      %v931 = vadd.f32 %v831, %v912
      %v932 = vadd.f32 %v833, %v916
      %v933 = vadd.f32 %v722, %v904
      %v934 = vadd.f32 %v724, %v908
      %v935 = vadd.f32 %v835, %v912
      %v936 = vadd.f32 %v837, %v916
      %v937 = vadd.f32 %v728, %v904
      %v938 = vadd.f32 %v730, %v908
      %v939 = vadd.f32 %v841, %v912
      %v940 = vadd.f32 %v843, %v916
      %v941 = vadd.f32 %v732, %v904
      %v942 = vadd.f32 %v734, %v908
      %v943 = vadd.f32 %v845, %v912
      %v944 = vadd.f32 %v847, %v916
      %v945 = vadd.f32 %v738, %v904
      %v946 = vadd.f32 %v740, %v908
      %v947 = vadd.f32 %v851, %v912
      %v948 = vadd.f32 %v853, %v916
      %v949 = vadd.f32 %v742, %v904
      %v950 = vadd.f32 %v744, %v908
      %v951 = vadd.f32 %v855, %v912
      %v952 = vadd.f32 %v857, %v916
      %v953 = vadd.f32 %v748, %v904
      %v954 = vadd.f32 %v750, %v908
      %v955 = vadd.f32 %v861, %v912
      %v956 = vadd.f32 %v863, %v916
      %v957 = vadd.f32 %v752, %v904
      %v958 = vadd.f32 %v754, %v908
      %v959 = vadd.f32 %v865, %v912
      %v960 = vadd.f32 %v867, %v916
      %v961 = vadd.f32 %v758, %v904
      %v962 = vadd.f32 %v760, %v908
      %v963 = vadd.f32 %v871, %v912
      %v964 = vadd.f32 %v873, %v916
      %v965 = vadd.f32 %v762, %v904
      %v966 = vadd.f32 %v764, %v908
      %v967 = vadd.f32 %v875, %v912
      %v968 = vadd.f32 %v877, %v916
      %v969 = vadd.f32 %v768, %v904
      %v970 = vadd.f32 %v770, %v908
      %v971 = vadd.f32 %v881, %v912
      %v972 = vadd.f32 %v883, %v916
      %v973 = vadd.f32 %v772, %v904
      %v974 = vadd.f32 %v774, %v908
      %v975 = vadd.f32 %v885, %v912
      %v976 = vadd.f32 %v887, %v916
      %v977 = vadd.f32 %v778, %v904
      %v978 = vadd.f32 %v780, %v908
      %v979 = vadd.f32 %v891, %v912
      %v980 = vadd.f32 %v893, %v916
      %v981 = vadd.f32 %v782, %v904
      %v982 = vadd.f32 %v784, %v908
      %v983 = vadd.f32 %v895, %v912
      %v984 = vadd.f32 %v897, %v916
      %v985 = vld [vmem:[#allocation2] sm:$0xff]
      %v986 = vld [vmem:[#allocation3] sm:$0xff]
      %v987 = vld [vmem:[#allocation3 + $0x8] sm:$0xff]
      %v988 = vld [vmem:[%s4] sm:$0xff]
      %v989 = vld [vmem:[%s4 + $0x8] sm:$0xff]
      %v990 = vld [vmem:[%s4 + $0x10] sm:$0xff]
      %v991 = vld [vmem:[%s4 + $0x18] sm:$0xff]
      %v992 = vld [vmem:[%s4 + $0x20] sm:$0xff]
      %v993 = vld [vmem:[%s4 + $0x28] sm:$0xff]
      %v994 = vld [vmem:[%s4 + $0x30] sm:$0xff]
      %v995 = vld [vmem:[%s4 + $0x38] sm:$0xff]
      %v996 = vld [vmem:[%s4 + $0x40] sm:$0xff]
      %v997 = vld [vmem:[%s4 + $0x48] sm:$0xff]
      %v998 = vld [vmem:[%s4 + $0x50] sm:$0xff]
      %v999 = vld [vmem:[%s4 + $0x58] sm:$0xff]
      %v1000 = vld [vmem:[%s4 + $0x60] sm:$0xff]
      %v1001 = vld [vmem:[%s4 + $0x68] sm:$0xff]
      %v1002 = vld [vmem:[%s4 + $0x70] sm:$0xff]
      %v1003 = vld [vmem:[%s4 + $0x78] sm:$0xff]
      %v1004 = vld [vmem:[%s4 + $0x80] sm:$0xff]
      %v1005 = vld [vmem:[%s4 + $0x88] sm:$0xff]
      %v1006 = vld [vmem:[%s4 + $0x90] sm:$0xff]
      %v1007 = vld [vmem:[%s4 + $0x98] sm:$0xff]
      %v1008 = vld [vmem:[%s4 + $0xa0] sm:$0xff]
      %v1009 = vld [vmem:[%s4 + $0xa8] sm:$0xff]
      %v1010 = vld [vmem:[%s4 + $0xb0] sm:$0xff]
      %v1011 = vld [vmem:[%s4 + $0xb8] sm:$0xff]
      %v1012 = vld [vmem:[%s4 + $0xc0] sm:$0xff]
      %v1013 = vld [vmem:[%s4 + $0xc8] sm:$0xff]
      %v1014 = vld [vmem:[%s4 + $0xd0] sm:$0xff]
      %v1015 = vld [vmem:[%s4 + $0xd8] sm:$0xff]
      %v1016 = vld [vmem:[%s4 + $0xe0] sm:$0xff]
      %v1017 = vld [vmem:[%s4 + $0xe8] sm:$0xff]
      %v1018 = vld [vmem:[%s4 + $0xf0] sm:$0xff]
      %v1019 = vld [vmem:[%s4 + $0xf8] sm:$0xff]
      %v1052 = vunpack.c.l.b16 %v988
      %v1053 = vunpack.c.h.b16 %v988
      %v1054 = vunpack.c.l.b16 %v989
      %v1055 = vunpack.c.h.b16 %v989
      %v1056 = vunpack.c.l.b16 %v990
      %v1057 = vunpack.c.h.b16 %v990
      %v1058 = vunpack.c.l.b16 %v991
      %v1059 = vunpack.c.h.b16 %v991
      %v1060 = vunpack.c.l.b16 %v992
      %v1061 = vunpack.c.h.b16 %v992
      %v1062 = vunpack.c.l.b16 %v993
      %v1063 = vunpack.c.h.b16 %v993
      %v1064 = vunpack.c.l.b16 %v994
      %v1065 = vunpack.c.h.b16 %v994
      %v1066 = vunpack.c.l.b16 %v995
      %v1067 = vunpack.c.h.b16 %v995
      %v1068 = vunpack.c.l.b16 %v996
      %v1069 = vunpack.c.h.b16 %v996
      %v1070 = vunpack.c.l.b16 %v997
      %v1071 = vunpack.c.h.b16 %v997
      %v1072 = vunpack.c.l.b16 %v998
      %v1073 = vunpack.c.h.b16 %v998
      %v1074 = vunpack.c.l.b16 %v999
      %v1075 = vunpack.c.h.b16 %v999
      %v1076 = vunpack.c.l.b16 %v1000
      %v1077 = vunpack.c.h.b16 %v1000
      %v1078 = vunpack.c.l.b16 %v1001
      %v1079 = vunpack.c.h.b16 %v1001
      %v1080 = vunpack.c.l.b16 %v1002
      %v1081 = vunpack.c.h.b16 %v1002
      %v1082 = vunpack.c.l.b16 %v1003
      %v1083 = vunpack.c.h.b16 %v1003
      %v1084 = vunpack.c.l.b16 %v1004
      %v1085 = vunpack.c.h.b16 %v1004
      %v1086 = vunpack.c.l.b16 %v1005
      %v1087 = vunpack.c.h.b16 %v1005
      %v1088 = vunpack.c.l.b16 %v1006
      %v1089 = vunpack.c.h.b16 %v1006
      %v1090 = vunpack.c.l.b16 %v1007
      %v1091 = vunpack.c.h.b16 %v1007
      %v1092 = vunpack.c.l.b16 %v1008
      %v1093 = vunpack.c.h.b16 %v1008
      %v1094 = vunpack.c.l.b16 %v1009
      %v1095 = vunpack.c.h.b16 %v1009
      %v1096 = vunpack.c.l.b16 %v1010
      %v1097 = vunpack.c.h.b16 %v1010
      %v1098 = vunpack.c.l.b16 %v1011
      %v1099 = vunpack.c.h.b16 %v1011
      %v1100 = vunpack.c.l.b16 %v1012
      %v1101 = vunpack.c.h.b16 %v1012
      %v1102 = vunpack.c.l.b16 %v1013
      %v1103 = vunpack.c.h.b16 %v1013
      %v1104 = vunpack.c.l.b16 %v1014
      %v1105 = vunpack.c.h.b16 %v1014
      %v1106 = vunpack.c.l.b16 %v1015
      %v1107 = vunpack.c.h.b16 %v1015
      %v1108 = vunpack.c.l.b16 %v1016
      %v1109 = vunpack.c.h.b16 %v1016
      %v1110 = vunpack.c.l.b16 %v1017
      %v1111 = vunpack.c.h.b16 %v1017
      %v1112 = vunpack.c.l.b16 %v1018
      %v1113 = vunpack.c.h.b16 %v1018
      %v1114 = vunpack.c.l.b16 %v1019
      %v1115 = vunpack.c.h.b16 %v1019
      %v1116 = vpack.c.b16 %v1056, %v1052
      %v1117 = vpack.c.b16 %v1057, %v1053
      %v1118 = vpack.c.b16 %v1058, %v1054
      %v1119 = vpack.c.b16 %v1059, %v1055
      %v1120 = vpack.c.b16 %v1064, %v1060
      %v1121 = vpack.c.b16 %v1065, %v1061
      %v1122 = vpack.c.b16 %v1066, %v1062
      %v1123 = vpack.c.b16 %v1067, %v1063
      %v1124 = vpack.c.b16 %v1072, %v1068
      %v1125 = vpack.c.b16 %v1073, %v1069
      %v1126 = vpack.c.b16 %v1074, %v1070
      %v1127 = vpack.c.b16 %v1075, %v1071
      %v1128 = vpack.c.b16 %v1080, %v1076
      %v1129 = vpack.c.b16 %v1081, %v1077
      %v1130 = vpack.c.b16 %v1082, %v1078
      %v1131 = vpack.c.b16 %v1083, %v1079
      %v1132 = vpack.c.b16 %v1088, %v1084
      %v1133 = vpack.c.b16 %v1089, %v1085
      %v1134 = vpack.c.b16 %v1090, %v1086
      %v1135 = vpack.c.b16 %v1091, %v1087
      %v1136 = vpack.c.b16 %v1096, %v1092
      %v1137 = vpack.c.b16 %v1097, %v1093
      %v1138 = vpack.c.b16 %v1098, %v1094
      %v1139 = vpack.c.b16 %v1099, %v1095
      %v1140 = vpack.c.b16 %v1104, %v1100
      %v1141 = vpack.c.b16 %v1105, %v1101
      %v1142 = vpack.c.b16 %v1106, %v1102
      %v1143 = vpack.c.b16 %v1107, %v1103
      %v1144 = vpack.c.b16 %v1112, %v1108
      %v1145 = vpack.c.b16 %v1113, %v1109
      %v1146 = vpack.c.b16 %v1114, %v1110
      %v1147 = vpack.c.b16 %v1115, %v1111
      %1180 = vmatprep.subr.bf16.mxu0 %v1117
      %1181 = vmatpush1.bf16.msra.mxu0 %v1116
      %1182 = vmatprep.subr.bf16.mxu0 %v1121
      %1183 = vmatpush1.bf16.msra.mxu0 %v1120
      %1184 = vmatprep.subr.bf16.mxu0 %v1125
      %1185 = vmatpush1.bf16.msra.mxu0 %v1124
      %1186 = vmatprep.subr.bf16.mxu0 %v1129
      %1187 = vmatpush1.bf16.msra.mxu0 %v1128
      %1188 = vmatprep.subr.bf16.mxu0 %v1133
      %1189 = vmatpush1.bf16.msra.mxu0 %v1132
      %1190 = vmatprep.subr.bf16.mxu0 %v1137
      %1191 = vmatpush1.bf16.msra.mxu0 %v1136
      %1192 = vmatprep.subr.bf16.mxu0 %v1141
      %1193 = vmatpush1.bf16.msra.mxu0 %v1140
      %1194 = vmatprep.subr.bf16.mxu0 %v1145
      %1195 = vmatpush1.bf16.msra.mxu0 %v1144
      %1196 = vmatprep.subr.bf16.mxu0 0
      %1197 = vmatpush1.bf16.msra.mxu0 0
      %1198 = vmatprep.subr.bf16.mxu0 0
      %1199 = vmatpush1.bf16.msra.mxu0 0
      %1200 = vmatprep.subr.bf16.mxu0 0
      %1201 = vmatpush1.bf16.msra.mxu0 0
      %1202 = vmatprep.subr.bf16.mxu0 0
      %1203 = vmatpush1.bf16.msra.mxu0 0
      %1204 = vmatprep.subr.bf16.mxu0 0
      %1205 = vmatpush1.bf16.msra.mxu0 0
      %1206 = vmatprep.subr.bf16.mxu0 0
      %1207 = vmatpush1.bf16.msra.mxu0 0
      %1208 = vmatprep.subr.bf16.mxu0 0
      %1209 = vmatpush1.bf16.msra.mxu0 0
      %1210 = vmatprep.subr.bf16.mxu0 0
      %1211 = vmatpush1.bf16.msra.mxu0 0
      %1212 = vmatprep.mubr.bf16.mxu0 0
      %1213 = vmatmul.mubr.bf16.gmra.mrb[0].mxu0 %v985
      %v1214 = vpop.f32.mrb[0].mxu0
      %v1215 = vadd.f32 0.0, %v1214
      %v1216 = vpop.f32.mrb[0].mxu0
      %v1217 = vadd.f32 0.0, %v1216
      %v1218 = vpop.f32.mrb[0].mxu0
      %v1219 = vadd.f32 0.0, %v1218
      %v1220 = vpop.f32.mrb[0].mxu0
      %v1221 = vadd.f32 0.0, %v1220
      %1222 = vdwg.mxu0
      %1223 = vmatprep.subr.bf16.mxu0 %v1119
      %1224 = vmatpush1.bf16.msra.mxu0 %v1118
      %1225 = vmatprep.subr.bf16.mxu0 %v1123
      %1226 = vmatpush1.bf16.msra.mxu0 %v1122
      %1227 = vmatprep.subr.bf16.mxu0 %v1127
      %1228 = vmatpush1.bf16.msra.mxu0 %v1126
      %1229 = vmatprep.subr.bf16.mxu0 %v1131
      %1230 = vmatpush1.bf16.msra.mxu0 %v1130
      %1231 = vmatprep.subr.bf16.mxu0 %v1135
      %1232 = vmatpush1.bf16.msra.mxu0 %v1134
      %1233 = vmatprep.subr.bf16.mxu0 %v1139
      %1234 = vmatpush1.bf16.msra.mxu0 %v1138
      %1235 = vmatprep.subr.bf16.mxu0 %v1143
      %1236 = vmatpush1.bf16.msra.mxu0 %v1142
      %1237 = vmatprep.subr.bf16.mxu0 %v1147
      %1238 = vmatpush1.bf16.msra.mxu0 %v1146
      %1239 = vmatprep.subr.bf16.mxu0 0
      %1240 = vmatpush1.bf16.msra.mxu0 0
      %1241 = vmatprep.subr.bf16.mxu0 0
      %1242 = vmatpush1.bf16.msra.mxu0 0
      %1243 = vmatprep.subr.bf16.mxu0 0
      %1244 = vmatpush1.bf16.msra.mxu0 0
      %1245 = vmatprep.subr.bf16.mxu0 0
      %1246 = vmatpush1.bf16.msra.mxu0 0
      %1247 = vmatprep.subr.bf16.mxu0 0
      %1248 = vmatpush1.bf16.msra.mxu0 0
      %1249 = vmatprep.subr.bf16.mxu0 0
      %1250 = vmatpush1.bf16.msra.mxu0 0
      %1251 = vmatprep.subr.bf16.mxu0 0
      %1252 = vmatpush1.bf16.msra.mxu0 0
      %1253 = vmatprep.subr.bf16.mxu0 0
      %1254 = vmatpush1.bf16.msra.mxu0 0
      %1255 = vmatprep.mubr.bf16.mxu0 0
      %1256 = vmatmul.mubr.bf16.gmra.mrb[0].mxu0 %v985
      %v1257 = vpop.f32.mrb[0].mxu0
      %v1258 = vadd.f32 0.0, %v1257
      %v1259 = vpop.f32.mrb[0].mxu0
      %v1260 = vadd.f32 0.0, %v1259
      %v1261 = vpop.f32.mrb[0].mxu0
      %v1262 = vadd.f32 0.0, %v1261
      %v1263 = vpop.f32.mrb[0].mxu0
      %v1264 = vadd.f32 0.0, %v1263
      %1265 = vdwg.mxu0
      %v1266 = vadd.f32 %v921, %v1215
      %v1267 = vadd.f32 %v922, %v1217
      %v1268 = vadd.f32 %v923, %v1258
      %v1269 = vadd.f32 %v924, %v1260
      %v1270 = vadd.f32 %v925, %v1219
      %v1271 = vadd.f32 %v926, %v1221
      %v1272 = vadd.f32 %v927, %v1262
      %v1273 = vadd.f32 %v928, %v1264
      %v1274 = vxor.u32 %v1266, 2147483648
      %v1275 = vxor.u32 %v1267, 2147483648
      %v1276 = vxor.u32 %v1268, 2147483648
      %v1277 = vxor.u32 %v1270, 2147483648
      %v1278 = vxor.u32 %v1271, 2147483648
      %v1279 = vxor.u32 %v1272, 2147483648
      %v1280 = vmul.f32 %v1274, 1.442695
      %v1281 = vpow.pop %v1280
      %v1282 = vmul.f32 %v1275, 1.442695
      %v1283 = vpow.pop %v1282
      %v1284 = vmul.f32 %v1276, 1.442695
      %v1285 = vpow.pop %v1284
      %v1286 = vmul.f32 %v1277, 1.442695
      %v1287 = vpow.pop %v1286
      %v1288 = vmul.f32 %v1278, 1.442695
      %v1289 = vpow.pop %v1288
      %v1290 = vmul.f32 %v1279, 1.442695
      %v1291 = vpow.pop %v1290
      %v1292 = vadd.f32 %v1281, 1.0
      %v1293 = vadd.f32 %v1283, 1.0
      %v1294 = vadd.f32 %v1285, 1.0
      %v1295 = vadd.f32 %v1287, 1.0
      %v1296 = vadd.f32 %v1289, 1.0
      %v1297 = vadd.f32 %v1291, 1.0
      %v1298 = vrcp.pop %v1292
      %v1299 = vmul.f32 1.0, %v1298
      %v1300 = vrcp.pop %v1293
      %v1301 = vmul.f32 1.0, %v1300
      %v1302 = vrcp.pop %v1294
      %v1303 = vmul.f32 1.0, %v1302
      %v1304 = vrcp.pop %v1295
      %v1305 = vmul.f32 1.0, %v1304
      %v1306 = vrcp.pop %v1296
      %v1307 = vmul.f32 1.0, %v1306
      %v1308 = vrcp.pop %v1297
      %v1309 = vmul.f32 1.0, %v1308
      %v1310 = vtanh.pop %v1269
      %v1311 = vtanh.pop %v1273
      %v1312 = vmul.f32 %v1301, %v986
      %v1313 = vmul.f32 %v1307, %v987
      %v1314 = vmul.f32 %v1299, %v1310
      %v1315 = vmul.f32 %v1305, %v1311
      %v1316 = vadd.f32 %v1312, %v1314
      %v1317 = vadd.f32 %v1313, %v1315
      %v1318 = vtanh.pop %v1316
      %v1319 = vtanh.pop %v1317
      %v1320 = vmul.f32 %v1303, %v1318
      %v1321 = vmul.f32 %v1309, %v1319
      %v1322 = vpack.c.bf16 %v1321, %v1320
      %1323 = vst [vmem:[#allocation5] sm:$0xff] %v1322
      %v1324 = vld [vmem:[%s4] sm:$0xff]
      %v1325 = vld [vmem:[%s4 + $0x8] sm:$0xff]
      %v1326 = vld [vmem:[%s4 + $0x10] sm:$0xff]
      %v1327 = vld [vmem:[%s4 + $0x18] sm:$0xff]
      %v1328 = vld [vmem:[%s4 + $0x20] sm:$0xff]
      %v1329 = vld [vmem:[%s4 + $0x28] sm:$0xff]
      %v1330 = vld [vmem:[%s4 + $0x30] sm:$0xff]
      %v1331 = vld [vmem:[%s4 + $0x38] sm:$0xff]
      %v1332 = vld [vmem:[%s4 + $0x40] sm:$0xff]
      %v1333 = vld [vmem:[%s4 + $0x48] sm:$0xff]
      %v1334 = vld [vmem:[%s4 + $0x50] sm:$0xff]
      %v1335 = vld [vmem:[%s4 + $0x58] sm:$0xff]
      %v1336 = vld [vmem:[%s4 + $0x60] sm:$0xff]
      %v1337 = vld [vmem:[%s4 + $0x68] sm:$0xff]
      %v1338 = vld [vmem:[%s4 + $0x70] sm:$0xff]
      %v1339 = vld [vmem:[%s4 + $0x78] sm:$0xff]
      %v1340 = vld [vmem:[%s4 + $0x80] sm:$0xff]
      %v1341 = vld [vmem:[%s4 + $0x88] sm:$0xff]
      %v1342 = vld [vmem:[%s4 + $0x90] sm:$0xff]
      %v1343 = vld [vmem:[%s4 + $0x98] sm:$0xff]
      %v1344 = vld [vmem:[%s4 + $0xa0] sm:$0xff]
      %v1345 = vld [vmem:[%s4 + $0xa8] sm:$0xff]
      %v1346 = vld [vmem:[%s4 + $0xb0] sm:$0xff]
      %v1347 = vld [vmem:[%s4 + $0xb8] sm:$0xff]
      %v1348 = vld [vmem:[%s4 + $0xc0] sm:$0xff]
      %v1349 = vld [vmem:[%s4 + $0xc8] sm:$0xff]
      %v1350 = vld [vmem:[%s4 + $0xd0] sm:$0xff]
      %v1351 = vld [vmem:[%s4 + $0xd8] sm:$0xff]
      %v1352 = vld [vmem:[%s4 + $0xe0] sm:$0xff]
      %v1353 = vld [vmem:[%s4 + $0xe8] sm:$0xff]
      %v1354 = vld [vmem:[%s4 + $0xf0] sm:$0xff]
      %v1355 = vld [vmem:[%s4 + $0xf8] sm:$0xff]
      %v1388 = vunpack.c.l.b16 %v1324
      %v1389 = vunpack.c.h.b16 %v1324
      %v1390 = vunpack.c.l.b16 %v1325
      %v1391 = vunpack.c.h.b16 %v1325
      %v1392 = vunpack.c.l.b16 %v1326
      %v1393 = vunpack.c.h.b16 %v1326
      %v1394 = vunpack.c.l.b16 %v1327
      %v1395 = vunpack.c.h.b16 %v1327
      %v1396 = vunpack.c.l.b16 %v1328
      %v1397 = vunpack.c.h.b16 %v1328
      %v1398 = vunpack.c.l.b16 %v1329
      %v1399 = vunpack.c.h.b16 %v1329
      %v1400 = vunpack.c.l.b16 %v1330
      %v1401 = vunpack.c.h.b16 %v1330
      %v1402 = vunpack.c.l.b16 %v1331
      %v1403 = vunpack.c.h.b16 %v1331
      %v1404 = vunpack.c.l.b16 %v1332
      %v1405 = vunpack.c.h.b16 %v1332
      %v1406 = vunpack.c.l.b16 %v1333
      %v1407 = vunpack.c.h.b16 %v1333
      %v1408 = vunpack.c.l.b16 %v1334
      %v1409 = vunpack.c.h.b16 %v1334
      %v1410 = vunpack.c.l.b16 %v1335
      %v1411 = vunpack.c.h.b16 %v1335
      %v1412 = vunpack.c.l.b16 %v1336
      %v1413 = vunpack.c.h.b16 %v1336
      %v1414 = vunpack.c.l.b16 %v1337
      %v1415 = vunpack.c.h.b16 %v1337
      %v1416 = vunpack.c.l.b16 %v1338
      %v1417 = vunpack.c.h.b16 %v1338
      %v1418 = vunpack.c.l.b16 %v1339
      %v1419 = vunpack.c.h.b16 %v1339
      %v1420 = vunpack.c.l.b16 %v1340
      %v1421 = vunpack.c.h.b16 %v1340
      %v1422 = vunpack.c.l.b16 %v1341
      %v1423 = vunpack.c.h.b16 %v1341
      %v1424 = vunpack.c.l.b16 %v1342
      %v1425 = vunpack.c.h.b16 %v1342
      %v1426 = vunpack.c.l.b16 %v1343
      %v1427 = vunpack.c.h.b16 %v1343
      %v1428 = vunpack.c.l.b16 %v1344
      %v1429 = vunpack.c.h.b16 %v1344
      %v1430 = vunpack.c.l.b16 %v1345
      %v1431 = vunpack.c.h.b16 %v1345
      %v1432 = vunpack.c.l.b16 %v1346
      %v1433 = vunpack.c.h.b16 %v1346
      %v1434 = vunpack.c.l.b16 %v1347
      %v1435 = vunpack.c.h.b16 %v1347
      %v1436 = vunpack.c.l.b16 %v1348
      %v1437 = vunpack.c.h.b16 %v1348
      %v1438 = vunpack.c.l.b16 %v1349
      %v1439 = vunpack.c.h.b16 %v1349
      %v1440 = vunpack.c.l.b16 %v1350
      %v1441 = vunpack.c.h.b16 %v1350
      %v1442 = vunpack.c.l.b16 %v1351
      %v1443 = vunpack.c.h.b16 %v1351
      %v1444 = vunpack.c.l.b16 %v1352
      %v1445 = vunpack.c.h.b16 %v1352
      %v1446 = vunpack.c.l.b16 %v1353
      %v1447 = vunpack.c.h.b16 %v1353
      %v1448 = vunpack.c.l.b16 %v1354
      %v1449 = vunpack.c.h.b16 %v1354
      %v1450 = vunpack.c.l.b16 %v1355
      %v1451 = vunpack.c.h.b16 %v1355
      %v1452 = vpack.c.b16 %v1392, %v1388
      %v1453 = vpack.c.b16 %v1393, %v1389
      %v1454 = vpack.c.b16 %v1394, %v1390
      %v1455 = vpack.c.b16 %v1395, %v1391
      %v1456 = vpack.c.b16 %v1400, %v1396
      %v1457 = vpack.c.b16 %v1401, %v1397
      %v1458 = vpack.c.b16 %v1402, %v1398
      %v1459 = vpack.c.b16 %v1403, %v1399
      %v1460 = vpack.c.b16 %v1408, %v1404
      %v1461 = vpack.c.b16 %v1409, %v1405
      %v1462 = vpack.c.b16 %v1410, %v1406
      %v1463 = vpack.c.b16 %v1411, %v1407
      %v1464 = vpack.c.b16 %v1416, %v1412
      %v1465 = vpack.c.b16 %v1417, %v1413
      %v1466 = vpack.c.b16 %v1418, %v1414
      %v1467 = vpack.c.b16 %v1419, %v1415
      %v1468 = vpack.c.b16 %v1424, %v1420
      %v1469 = vpack.c.b16 %v1425, %v1421
      %v1470 = vpack.c.b16 %v1426, %v1422
      %v1471 = vpack.c.b16 %v1427, %v1423
      %v1472 = vpack.c.b16 %v1432, %v1428
      %v1473 = vpack.c.b16 %v1433, %v1429
      %v1474 = vpack.c.b16 %v1434, %v1430
      %v1475 = vpack.c.b16 %v1435, %v1431
      %v1476 = vpack.c.b16 %v1440, %v1436
      %v1477 = vpack.c.b16 %v1441, %v1437
      %v1478 = vpack.c.b16 %v1442, %v1438
      %v1479 = vpack.c.b16 %v1443, %v1439
      %v1480 = vpack.c.b16 %v1448, %v1444
      %v1481 = vpack.c.b16 %v1449, %v1445
      %v1482 = vpack.c.b16 %v1450, %v1446
      %v1483 = vpack.c.b16 %v1451, %v1447
      %1516 = vmatprep.subr.bf16.mxu0 %v1453
      %1517 = vmatpush1.bf16.msra.mxu0 %v1452
      %1518 = vmatprep.subr.bf16.mxu0 %v1457
      %1519 = vmatpush1.bf16.msra.mxu0 %v1456
      %1520 = vmatprep.subr.bf16.mxu0 %v1461
      %1521 = vmatpush1.bf16.msra.mxu0 %v1460
      %1522 = vmatprep.subr.bf16.mxu0 %v1465
      %1523 = vmatpush1.bf16.msra.mxu0 %v1464
      %1524 = vmatprep.subr.bf16.mxu0 %v1469
      %1525 = vmatpush1.bf16.msra.mxu0 %v1468
      %1526 = vmatprep.subr.bf16.mxu0 %v1473
      %1527 = vmatpush1.bf16.msra.mxu0 %v1472
      %1528 = vmatprep.subr.bf16.mxu0 %v1477
      %1529 = vmatpush1.bf16.msra.mxu0 %v1476
      %1530 = vmatprep.subr.bf16.mxu0 %v1481
      %1531 = vmatpush1.bf16.msra.mxu0 %v1480
      %1532 = vmatprep.subr.bf16.mxu0 0
      %1533 = vmatpush1.bf16.msra.mxu0 0
      %1534 = vmatprep.subr.bf16.mxu0 0
      %1535 = vmatpush1.bf16.msra.mxu0 0
      %1536 = vmatprep.subr.bf16.mxu0 0
      %1537 = vmatpush1.bf16.msra.mxu0 0
      %1538 = vmatprep.subr.bf16.mxu0 0
      %1539 = vmatpush1.bf16.msra.mxu0 0
      %1540 = vmatprep.subr.bf16.mxu0 0
      %1541 = vmatpush1.bf16.msra.mxu0 0
      %1542 = vmatprep.subr.bf16.mxu0 0
      %1543 = vmatpush1.bf16.msra.mxu0 0
      %1544 = vmatprep.subr.bf16.mxu0 0
      %1545 = vmatpush1.bf16.msra.mxu0 0
      %1546 = vmatprep.subr.bf16.mxu0 0
      %1547 = vmatpush1.bf16.msra.mxu0 0
      %1548 = vmatprep.mubr.bf16.mxu0 0
      %1549 = vmatmul.mubr.bf16.gmra.mrb[0].mxu0 %v1322
      %v1550 = vpop.f32.mrb[0].mxu0
      %v1551 = vadd.f32 0.0, %v1550
      %v1552 = vpop.f32.mrb[0].mxu0
      %v1553 = vadd.f32 0.0, %v1552
      %v1554 = vpop.f32.mrb[0].mxu0
      %v1555 = vadd.f32 0.0, %v1554
      %v1556 = vpop.f32.mrb[0].mxu0
      %v1557 = vadd.f32 0.0, %v1556
      %1558 = vdwg.mxu0
      %1559 = vmatprep.subr.bf16.mxu0 %v1455
      %1560 = vmatpush1.bf16.msra.mxu0 %v1454
      %1561 = vmatprep.subr.bf16.mxu0 %v1459
      %1562 = vmatpush1.bf16.msra.mxu0 %v1458
      %1563 = vmatprep.subr.bf16.mxu0 %v1463
      %1564 = vmatpush1.bf16.msra.mxu0 %v1462
      %1565 = vmatprep.subr.bf16.mxu0 %v1467
      %1566 = vmatpush1.bf16.msra.mxu0 %v1466
      %1567 = vmatprep.subr.bf16.mxu0 %v1471
      %1568 = vmatpush1.bf16.msra.mxu0 %v1470
      %1569 = vmatprep.subr.bf16.mxu0 %v1475
      %1570 = vmatpush1.bf16.msra.mxu0 %v1474
      %1571 = vmatprep.subr.bf16.mxu0 %v1479
      %1572 = vmatpush1.bf16.msra.mxu0 %v1478
      %1573 = vmatprep.subr.bf16.mxu0 %v1483
      %1574 = vmatpush1.bf16.msra.mxu0 %v1482
      %1575 = vmatprep.subr.bf16.mxu0 0
      %1576 = vmatpush1.bf16.msra.mxu0 0
      %1577 = vmatprep.subr.bf16.mxu0 0
      %1578 = vmatpush1.bf16.msra.mxu0 0
      %1579 = vmatprep.subr.bf16.mxu0 0
      %1580 = vmatpush1.bf16.msra.mxu0 0
      %1581 = vmatprep.subr.bf16.mxu0 0
      %1582 = vmatpush1.bf16.msra.mxu0 0
      %1583 = vmatprep.subr.bf16.mxu0 0
      %1584 = vmatpush1.bf16.msra.mxu0 0
      %1585 = vmatprep.subr.bf16.mxu0 0
      %1586 = vmatpush1.bf16.msra.mxu0 0
      %1587 = vmatprep.subr.bf16.mxu0 0
      %1588 = vmatpush1.bf16.msra.mxu0 0
      %1589 = vmatprep.subr.bf16.mxu0 0
      %1590 = vmatpush1.bf16.msra.mxu0 0
      %1591 = vmatprep.mubr.bf16.mxu0 0
      %1592 = vmatmul.mubr.bf16.gmra.mrb[0].mxu0 %v1322
      %v1593 = vpop.f32.mrb[0].mxu0
      %v1594 = vadd.f32 0.0, %v1593
      %v1595 = vpop.f32.mrb[0].mxu0
      %v1596 = vadd.f32 0.0, %v1595
      %v1597 = vpop.f32.mrb[0].mxu0
      %v1598 = vadd.f32 0.0, %v1597
      %v1599 = vpop.f32.mrb[0].mxu0
      %v1600 = vadd.f32 0.0, %v1599
      %1601 = vdwg.mxu0
      %v1602 = vadd.f32 %v929, %v1551
      %v1603 = vadd.f32 %v930, %v1553
      %v1604 = vadd.f32 %v931, %v1594
      %v1605 = vadd.f32 %v932, %v1596
      %v1606 = vadd.f32 %v933, %v1555
      %v1607 = vadd.f32 %v934, %v1557
      %v1608 = vadd.f32 %v935, %v1598
      %v1609 = vadd.f32 %v936, %v1600
      %v1610 = vxor.u32 %v1602, 2147483648
      %v1611 = vxor.u32 %v1603, 2147483648
      %v1612 = vxor.u32 %v1604, 2147483648
      %v1613 = vxor.u32 %v1606, 2147483648
      %v1614 = vxor.u32 %v1607, 2147483648
      %v1615 = vxor.u32 %v1608, 2147483648
      %v1616 = vmul.f32 %v1610, 1.442695
      %v1617 = vpow.pop %v1616
      %v1618 = vmul.f32 %v1611, 1.442695
      %v1619 = vpow.pop %v1618
      %v1620 = vmul.f32 %v1612, 1.442695
      %v1621 = vpow.pop %v1620
      %v1622 = vmul.f32 %v1613, 1.442695
      %v1623 = vpow.pop %v1622
      %v1624 = vmul.f32 %v1614, 1.442695
      %v1625 = vpow.pop %v1624
      %v1626 = vmul.f32 %v1615, 1.442695
      %v1627 = vpow.pop %v1626
      %v1628 = vadd.f32 %v1617, 1.0
      %v1629 = vadd.f32 %v1619, 1.0
      %v1630 = vadd.f32 %v1621, 1.0
      %v1631 = vadd.f32 %v1623, 1.0
      %v1632 = vadd.f32 %v1625, 1.0
      %v1633 = vadd.f32 %v1627, 1.0
      %v1634 = vrcp.pop %v1628
      %v1635 = vmul.f32 1.0, %v1634
      %v1636 = vrcp.pop %v1629
      %v1637 = vmul.f32 1.0, %v1636
      %v1638 = vrcp.pop %v1630
      %v1639 = vmul.f32 1.0, %v1638
      %v1640 = vrcp.pop %v1631
      %v1641 = vmul.f32 1.0, %v1640
      %v1642 = vrcp.pop %v1632
      %v1643 = vmul.f32 1.0, %v1642
      %v1644 = vrcp.pop %v1633
      %v1645 = vmul.f32 1.0, %v1644
      %v1646 = vtanh.pop %v1605
      %v1647 = vtanh.pop %v1609
      %v1648 = vmul.f32 %v1637, %v1316
      %v1649 = vmul.f32 %v1643, %v1317
      %v1650 = vmul.f32 %v1635, %v1646
      %v1651 = vmul.f32 %v1641, %v1647
      %v1652 = vadd.f32 %v1648, %v1650
      %v1653 = vadd.f32 %v1649, %v1651
      %v1654 = vtanh.pop %v1652
      %v1655 = vtanh.pop %v1653
      %v1656 = vmul.f32 %v1639, %v1654
      %v1657 = vmul.f32 %v1645, %v1655
      %v1658 = vpack.c.bf16 %v1657, %v1656
      %s1659 = scalar_lea.vmem [#allocation5], 8
      %1660 = vst [vmem:[%s1659] sm:$0xff] %v1658
      %v1661 = vld [vmem:[%s4] sm:$0xff]
      %v1662 = vld [vmem:[%s4 + $0x8] sm:$0xff]
      %v1663 = vld [vmem:[%s4 + $0x10] sm:$0xff]
      %v1664 = vld [vmem:[%s4 + $0x18] sm:$0xff]
      %v1665 = vld [vmem:[%s4 + $0x20] sm:$0xff]
      %v1666 = vld [vmem:[%s4 + $0x28] sm:$0xff]
      %v1667 = vld [vmem:[%s4 + $0x30] sm:$0xff]
      %v1668 = vld [vmem:[%s4 + $0x38] sm:$0xff]
      %v1669 = vld [vmem:[%s4 + $0x40] sm:$0xff]
      %v1670 = vld [vmem:[%s4 + $0x48] sm:$0xff]
      %v1671 = vld [vmem:[%s4 + $0x50] sm:$0xff]
      %v1672 = vld [vmem:[%s4 + $0x58] sm:$0xff]
      %v1673 = vld [vmem:[%s4 + $0x60] sm:$0xff]
      %v1674 = vld [vmem:[%s4 + $0x68] sm:$0xff]
      %v1675 = vld [vmem:[%s4 + $0x70] sm:$0xff]
      %v1676 = vld [vmem:[%s4 + $0x78] sm:$0xff]
      %v1677 = vld [vmem:[%s4 + $0x80] sm:$0xff]
      %v1678 = vld [vmem:[%s4 + $0x88] sm:$0xff]
      %v1679 = vld [vmem:[%s4 + $0x90] sm:$0xff]
      %v1680 = vld [vmem:[%s4 + $0x98] sm:$0xff]
      %v1681 = vld [vmem:[%s4 + $0xa0] sm:$0xff]
      %v1682 = vld [vmem:[%s4 + $0xa8] sm:$0xff]
      %v1683 = vld [vmem:[%s4 + $0xb0] sm:$0xff]
      %v1684 = vld [vmem:[%s4 + $0xb8] sm:$0xff]
      %v1685 = vld [vmem:[%s4 + $0xc0] sm:$0xff]
      %v1686 = vld [vmem:[%s4 + $0xc8] sm:$0xff]
      %v1687 = vld [vmem:[%s4 + $0xd0] sm:$0xff]
      %v1688 = vld [vmem:[%s4 + $0xd8] sm:$0xff]
      %v1689 = vld [vmem:[%s4 + $0xe0] sm:$0xff]
      %v1690 = vld [vmem:[%s4 + $0xe8] sm:$0xff]
      %v1691 = vld [vmem:[%s4 + $0xf0] sm:$0xff]
      %v1692 = vld [vmem:[%s4 + $0xf8] sm:$0xff]
      %v1725 = vunpack.c.l.b16 %v1661
      %v1726 = vunpack.c.h.b16 %v1661
      %v1727 = vunpack.c.l.b16 %v1662
      %v1728 = vunpack.c.h.b16 %v1662
      %v1729 = vunpack.c.l.b16 %v1663
      %v1730 = vunpack.c.h.b16 %v1663
      %v1731 = vunpack.c.l.b16 %v1664
      %v1732 = vunpack.c.h.b16 %v1664
      %v1733 = vunpack.c.l.b16 %v1665
      %v1734 = vunpack.c.h.b16 %v1665
      %v1735 = vunpack.c.l.b16 %v1666
      %v1736 = vunpack.c.h.b16 %v1666
      %v1737 = vunpack.c.l.b16 %v1667
      %v1738 = vunpack.c.h.b16 %v1667
      %v1739 = vunpack.c.l.b16 %v1668
      %v1740 = vunpack.c.h.b16 %v1668
      %v1741 = vunpack.c.l.b16 %v1669
      %v1742 = vunpack.c.h.b16 %v1669
      %v1743 = vunpack.c.l.b16 %v1670
      %v1744 = vunpack.c.h.b16 %v1670
      %v1745 = vunpack.c.l.b16 %v1671
      %v1746 = vunpack.c.h.b16 %v1671
      %v1747 = vunpack.c.l.b16 %v1672
      %v1748 = vunpack.c.h.b16 %v1672
      %v1749 = vunpack.c.l.b16 %v1673
      %v1750 = vunpack.c.h.b16 %v1673
      %v1751 = vunpack.c.l.b16 %v1674
      %v1752 = vunpack.c.h.b16 %v1674
      %v1753 = vunpack.c.l.b16 %v1675
      %v1754 = vunpack.c.h.b16 %v1675
      %v1755 = vunpack.c.l.b16 %v1676
      %v1756 = vunpack.c.h.b16 %v1676
      %v1757 = vunpack.c.l.b16 %v1677
      %v1758 = vunpack.c.h.b16 %v1677
      %v1759 = vunpack.c.l.b16 %v1678
      %v1760 = vunpack.c.h.b16 %v1678
      %v1761 = vunpack.c.l.b16 %v1679
      %v1762 = vunpack.c.h.b16 %v1679
      %v1763 = vunpack.c.l.b16 %v1680
      %v1764 = vunpack.c.h.b16 %v1680
      %v1765 = vunpack.c.l.b16 %v1681
      %v1766 = vunpack.c.h.b16 %v1681
      %v1767 = vunpack.c.l.b16 %v1682
      %v1768 = vunpack.c.h.b16 %v1682
      %v1769 = vunpack.c.l.b16 %v1683
      %v1770 = vunpack.c.h.b16 %v1683
      %v1771 = vunpack.c.l.b16 %v1684
      %v1772 = vunpack.c.h.b16 %v1684
      %v1773 = vunpack.c.l.b16 %v1685
      %v1774 = vunpack.c.h.b16 %v1685
      %v1775 = vunpack.c.l.b16 %v1686
      %v1776 = vunpack.c.h.b16 %v1686
      %v1777 = vunpack.c.l.b16 %v1687
      %v1778 = vunpack.c.h.b16 %v1687
      %v1779 = vunpack.c.l.b16 %v1688
      %v1780 = vunpack.c.h.b16 %v1688
      %v1781 = vunpack.c.l.b16 %v1689
      %v1782 = vunpack.c.h.b16 %v1689
      %v1783 = vunpack.c.l.b16 %v1690
      %v1784 = vunpack.c.h.b16 %v1690
      %v1785 = vunpack.c.l.b16 %v1691
      %v1786 = vunpack.c.h.b16 %v1691
      %v1787 = vunpack.c.l.b16 %v1692
      %v1788 = vunpack.c.h.b16 %v1692
      %v1789 = vpack.c.b16 %v1729, %v1725
      %v1790 = vpack.c.b16 %v1730, %v1726
      %v1791 = vpack.c.b16 %v1731, %v1727
      %v1792 = vpack.c.b16 %v1732, %v1728
      %v1793 = vpack.c.b16 %v1737, %v1733
      %v1794 = vpack.c.b16 %v1738, %v1734
      %v1795 = vpack.c.b16 %v1739, %v1735
      %v1796 = vpack.c.b16 %v1740, %v1736
      %v1797 = vpack.c.b16 %v1745, %v1741
      %v1798 = vpack.c.b16 %v1746, %v1742
      %v1799 = vpack.c.b16 %v1747, %v1743
      %v1800 = vpack.c.b16 %v1748, %v1744
      %v1801 = vpack.c.b16 %v1753, %v1749
      %v1802 = vpack.c.b16 %v1754, %v1750
      %v1803 = vpack.c.b16 %v1755, %v1751
      %v1804 = vpack.c.b16 %v1756, %v1752
      %v1805 = vpack.c.b16 %v1761, %v1757
      %v1806 = vpack.c.b16 %v1762, %v1758
      %v1807 = vpack.c.b16 %v1763, %v1759
      %v1808 = vpack.c.b16 %v1764, %v1760
      %v1809 = vpack.c.b16 %v1769, %v1765
      %v1810 = vpack.c.b16 %v1770, %v1766
      %v1811 = vpack.c.b16 %v1771, %v1767
      %v1812 = vpack.c.b16 %v1772, %v1768
      %v1813 = vpack.c.b16 %v1777, %v1773
      %v1814 = vpack.c.b16 %v1778, %v1774
      %v1815 = vpack.c.b16 %v1779, %v1775
      %v1816 = vpack.c.b16 %v1780, %v1776
      %v1817 = vpack.c.b16 %v1785, %v1781
      %v1818 = vpack.c.b16 %v1786, %v1782
      %v1819 = vpack.c.b16 %v1787, %v1783
      %v1820 = vpack.c.b16 %v1788, %v1784
      %1853 = vmatprep.subr.bf16.mxu0 %v1790
      %1854 = vmatpush1.bf16.msra.mxu0 %v1789
      %1855 = vmatprep.subr.bf16.mxu0 %v1794
      %1856 = vmatpush1.bf16.msra.mxu0 %v1793
      %1857 = vmatprep.subr.bf16.mxu0 %v1798
      %1858 = vmatpush1.bf16.msra.mxu0 %v1797
      %1859 = vmatprep.subr.bf16.mxu0 %v1802
      %1860 = vmatpush1.bf16.msra.mxu0 %v1801
      %1861 = vmatprep.subr.bf16.mxu0 %v1806
      %1862 = vmatpush1.bf16.msra.mxu0 %v1805
      %1863 = vmatprep.subr.bf16.mxu0 %v1810
      %1864 = vmatpush1.bf16.msra.mxu0 %v1809
      %1865 = vmatprep.subr.bf16.mxu0 %v1814
      %1866 = vmatpush1.bf16.msra.mxu0 %v1813
      %1867 = vmatprep.subr.bf16.mxu0 %v1818
      %1868 = vmatpush1.bf16.msra.mxu0 %v1817
      %1869 = vmatprep.subr.bf16.mxu0 0
      %1870 = vmatpush1.bf16.msra.mxu0 0
      %1871 = vmatprep.subr.bf16.mxu0 0
      %1872 = vmatpush1.bf16.msra.mxu0 0
      %1873 = vmatprep.subr.bf16.mxu0 0
      %1874 = vmatpush1.bf16.msra.mxu0 0
      %1875 = vmatprep.subr.bf16.mxu0 0
      %1876 = vmatpush1.bf16.msra.mxu0 0
      %1877 = vmatprep.subr.bf16.mxu0 0
      %1878 = vmatpush1.bf16.msra.mxu0 0
      %1879 = vmatprep.subr.bf16.mxu0 0
      %1880 = vmatpush1.bf16.msra.mxu0 0
      %1881 = vmatprep.subr.bf16.mxu0 0
      %1882 = vmatpush1.bf16.msra.mxu0 0
      %1883 = vmatprep.subr.bf16.mxu0 0
      %1884 = vmatpush1.bf16.msra.mxu0 0
      %1885 = vmatprep.mubr.bf16.mxu0 0
      %1886 = vmatmul.mubr.bf16.gmra.mrb[0].mxu0 %v1658
      %v1887 = vpop.f32.mrb[0].mxu0
      %v1888 = vadd.f32 0.0, %v1887
      %v1889 = vpop.f32.mrb[0].mxu0
      %v1890 = vadd.f32 0.0, %v1889
      %v1891 = vpop.f32.mrb[0].mxu0
      %v1892 = vadd.f32 0.0, %v1891
      %v1893 = vpop.f32.mrb[0].mxu0
      %v1894 = vadd.f32 0.0, %v1893
      %1895 = vdwg.mxu0
      %1896 = vmatprep.subr.bf16.mxu0 %v1792
      %1897 = vmatpush1.bf16.msra.mxu0 %v1791
      %1898 = vmatprep.subr.bf16.mxu0 %v1796
      %1899 = vmatpush1.bf16.msra.mxu0 %v1795
      %1900 = vmatprep.subr.bf16.mxu0 %v1800
      %1901 = vmatpush1.bf16.msra.mxu0 %v1799
      %1902 = vmatprep.subr.bf16.mxu0 %v1804
      %1903 = vmatpush1.bf16.msra.mxu0 %v1803
      %1904 = vmatprep.subr.bf16.mxu0 %v1808
      %1905 = vmatpush1.bf16.msra.mxu0 %v1807
      %1906 = vmatprep.subr.bf16.mxu0 %v1812
      %1907 = vmatpush1.bf16.msra.mxu0 %v1811
      %1908 = vmatprep.subr.bf16.mxu0 %v1816
      %1909 = vmatpush1.bf16.msra.mxu0 %v1815
      %1910 = vmatprep.subr.bf16.mxu0 %v1820
      %1911 = vmatpush1.bf16.msra.mxu0 %v1819
      %1912 = vmatprep.subr.bf16.mxu0 0
      %1913 = vmatpush1.bf16.msra.mxu0 0
      %1914 = vmatprep.subr.bf16.mxu0 0
      %1915 = vmatpush1.bf16.msra.mxu0 0
      %1916 = vmatprep.subr.bf16.mxu0 0
      %1917 = vmatpush1.bf16.msra.mxu0 0
      %1918 = vmatprep.subr.bf16.mxu0 0
      %1919 = vmatpush1.bf16.msra.mxu0 0
      %1920 = vmatprep.subr.bf16.mxu0 0
      %1921 = vmatpush1.bf16.msra.mxu0 0
      %1922 = vmatprep.subr.bf16.mxu0 0
      %1923 = vmatpush1.bf16.msra.mxu0 0
      %1924 = vmatprep.subr.bf16.mxu0 0
      %1925 = vmatpush1.bf16.msra.mxu0 0
      %1926 = vmatprep.subr.bf16.mxu0 0
      %1927 = vmatpush1.bf16.msra.mxu0 0
      %1928 = vmatprep.mubr.bf16.mxu0 0
      %1929 = vmatmul.mubr.bf16.gmra.mrb[0].mxu0 %v1658
      %v1930 = vpop.f32.mrb[0].mxu0
      %v1931 = vadd.f32 0.0, %v1930
      %v1932 = vpop.f32.mrb[0].mxu0
      %v1933 = vadd.f32 0.0, %v1932
      %v1934 = vpop.f32.mrb[0].mxu0
      %v1935 = vadd.f32 0.0, %v1934
      %v1936 = vpop.f32.mrb[0].mxu0
      %v1937 = vadd.f32 0.0, %v1936
      %1938 = vdwg.mxu0
      %v1939 = vadd.f32 %v937, %v1888
      %v1940 = vadd.f32 %v938, %v1890
      %v1941 = vadd.f32 %v939, %v1931
      %v1942 = vadd.f32 %v940, %v1933
      %v1943 = vadd.f32 %v941, %v1892
      %v1944 = vadd.f32 %v942, %v1894
      %v1945 = vadd.f32 %v943, %v1935
      %v1946 = vadd.f32 %v944, %v1937
      %v1947 = vxor.u32 %v1939, 2147483648
      %v1948 = vxor.u32 %v1940, 2147483648
      %v1949 = vxor.u32 %v1941, 2147483648
      %v1950 = vxor.u32 %v1943, 2147483648
      %v1951 = vxor.u32 %v1944, 2147483648
      %v1952 = vxor.u32 %v1945, 2147483648
      %v1953 = vmul.f32 %v1947, 1.442695
      %v1954 = vpow.pop %v1953
      %v1955 = vmul.f32 %v1948, 1.442695
      %v1956 = vpow.pop %v1955
      %v1957 = vmul.f32 %v1949, 1.442695
      %v1958 = vpow.pop %v1957
      %v1959 = vmul.f32 %v1950, 1.442695
      %v1960 = vpow.pop %v1959
      %v1961 = vmul.f32 %v1951, 1.442695
      %v1962 = vpow.pop %v1961
      %v1963 = vmul.f32 %v1952, 1.442695
      %v1964 = vpow.pop %v1963
      %v1965 = vadd.f32 %v1954, 1.0
      %v1966 = vadd.f32 %v1956, 1.0
      %v1967 = vadd.f32 %v1958, 1.0
      %v1968 = vadd.f32 %v1960, 1.0
      %v1969 = vadd.f32 %v1962, 1.0
      %v1970 = vadd.f32 %v1964, 1.0
      %v1971 = vrcp.pop %v1965
      %v1972 = vmul.f32 1.0, %v1971
      %v1973 = vrcp.pop %v1966
      %v1974 = vmul.f32 1.0, %v1973
      %v1975 = vrcp.pop %v1967
      %v1976 = vmul.f32 1.0, %v1975
      %v1977 = vrcp.pop %v1968
      %v1978 = vmul.f32 1.0, %v1977
      %v1979 = vrcp.pop %v1969
      %v1980 = vmul.f32 1.0, %v1979
      %v1981 = vrcp.pop %v1970
      %v1982 = vmul.f32 1.0, %v1981
      %v1983 = vtanh.pop %v1942
      %v1984 = vtanh.pop %v1946
      %v1985 = vmul.f32 %v1974, %v1652
      %v1986 = vmul.f32 %v1980, %v1653
      %v1987 = vmul.f32 %v1972, %v1983
      %v1988 = vmul.f32 %v1978, %v1984
      %v1989 = vadd.f32 %v1985, %v1987
      %v1990 = vadd.f32 %v1986, %v1988
      %v1991 = vtanh.pop %v1989
      %v1992 = vtanh.pop %v1990
      %v1993 = vmul.f32 %v1976, %v1991
      %v1994 = vmul.f32 %v1982, %v1992
      %v1995 = vpack.c.bf16 %v1994, %v1993
      %s1996 = scalar_lea.vmem [#allocation5], 16
      %1997 = vst [vmem:[%s1996] sm:$0xff] %v1995
      %v1998 = vld [vmem:[%s4] sm:$0xff]
      %v1999 = vld [vmem:[%s4 + $0x8] sm:$0xff]
      %v2000 = vld [vmem:[%s4 + $0x10] sm:$0xff]
      %v2001 = vld [vmem:[%s4 + $0x18] sm:$0xff]
      %v2002 = vld [vmem:[%s4 + $0x20] sm:$0xff]
      %v2003 = vld [vmem:[%s4 + $0x28] sm:$0xff]
      %v2004 = vld [vmem:[%s4 + $0x30] sm:$0xff]
      %v2005 = vld [vmem:[%s4 + $0x38] sm:$0xff]
      %v2006 = vld [vmem:[%s4 + $0x40] sm:$0xff]
      %v2007 = vld [vmem:[%s4 + $0x48] sm:$0xff]
      %v2008 = vld [vmem:[%s4 + $0x50] sm:$0xff]
      %v2009 = vld [vmem:[%s4 + $0x58] sm:$0xff]
      %v2010 = vld [vmem:[%s4 + $0x60] sm:$0xff]
      %v2011 = vld [vmem:[%s4 + $0x68] sm:$0xff]
      %v2012 = vld [vmem:[%s4 + $0x70] sm:$0xff]
      %v2013 = vld [vmem:[%s4 + $0x78] sm:$0xff]
      %v2014 = vld [vmem:[%s4 + $0x80] sm:$0xff]
      %v2015 = vld [vmem:[%s4 + $0x88] sm:$0xff]
      %v2016 = vld [vmem:[%s4 + $0x90] sm:$0xff]
      %v2017 = vld [vmem:[%s4 + $0x98] sm:$0xff]
      %v2018 = vld [vmem:[%s4 + $0xa0] sm:$0xff]
      %v2019 = vld [vmem:[%s4 + $0xa8] sm:$0xff]
      %v2020 = vld [vmem:[%s4 + $0xb0] sm:$0xff]
      %v2021 = vld [vmem:[%s4 + $0xb8] sm:$0xff]
      %v2022 = vld [vmem:[%s4 + $0xc0] sm:$0xff]
      %v2023 = vld [vmem:[%s4 + $0xc8] sm:$0xff]
      %v2024 = vld [vmem:[%s4 + $0xd0] sm:$0xff]
      %v2025 = vld [vmem:[%s4 + $0xd8] sm:$0xff]
      %v2026 = vld [vmem:[%s4 + $0xe0] sm:$0xff]
      %v2027 = vld [vmem:[%s4 + $0xe8] sm:$0xff]
      %v2028 = vld [vmem:[%s4 + $0xf0] sm:$0xff]
      %v2029 = vld [vmem:[%s4 + $0xf8] sm:$0xff]
      %v2062 = vunpack.c.l.b16 %v1998
      %v2063 = vunpack.c.h.b16 %v1998
      %v2064 = vunpack.c.l.b16 %v1999
      %v2065 = vunpack.c.h.b16 %v1999
      %v2066 = vunpack.c.l.b16 %v2000
      %v2067 = vunpack.c.h.b16 %v2000
      %v2068 = vunpack.c.l.b16 %v2001
      %v2069 = vunpack.c.h.b16 %v2001
      %v2070 = vunpack.c.l.b16 %v2002
      %v2071 = vunpack.c.h.b16 %v2002
      %v2072 = vunpack.c.l.b16 %v2003
      %v2073 = vunpack.c.h.b16 %v2003
      %v2074 = vunpack.c.l.b16 %v2004
      %v2075 = vunpack.c.h.b16 %v2004
      %v2076 = vunpack.c.l.b16 %v2005
      %v2077 = vunpack.c.h.b16 %v2005
      %v2078 = vunpack.c.l.b16 %v2006
      %v2079 = vunpack.c.h.b16 %v2006
      %v2080 = vunpack.c.l.b16 %v2007
      %v2081 = vunpack.c.h.b16 %v2007
      %v2082 = vunpack.c.l.b16 %v2008
      %v2083 = vunpack.c.h.b16 %v2008
      %v2084 = vunpack.c.l.b16 %v2009
      %v2085 = vunpack.c.h.b16 %v2009
      %v2086 = vunpack.c.l.b16 %v2010
      %v2087 = vunpack.c.h.b16 %v2010
      %v2088 = vunpack.c.l.b16 %v2011
      %v2089 = vunpack.c.h.b16 %v2011
      %v2090 = vunpack.c.l.b16 %v2012
      %v2091 = vunpack.c.h.b16 %v2012
      %v2092 = vunpack.c.l.b16 %v2013
      %v2093 = vunpack.c.h.b16 %v2013
      %v2094 = vunpack.c.l.b16 %v2014
      %v2095 = vunpack.c.h.b16 %v2014
      %v2096 = vunpack.c.l.b16 %v2015
      %v2097 = vunpack.c.h.b16 %v2015
      %v2098 = vunpack.c.l.b16 %v2016
      %v2099 = vunpack.c.h.b16 %v2016
      %v2100 = vunpack.c.l.b16 %v2017
      %v2101 = vunpack.c.h.b16 %v2017
      %v2102 = vunpack.c.l.b16 %v2018
      %v2103 = vunpack.c.h.b16 %v2018
      %v2104 = vunpack.c.l.b16 %v2019
      %v2105 = vunpack.c.h.b16 %v2019
      %v2106 = vunpack.c.l.b16 %v2020
      %v2107 = vunpack.c.h.b16 %v2020
      %v2108 = vunpack.c.l.b16 %v2021
      %v2109 = vunpack.c.h.b16 %v2021
      %v2110 = vunpack.c.l.b16 %v2022
      %v2111 = vunpack.c.h.b16 %v2022
      %v2112 = vunpack.c.l.b16 %v2023
      %v2113 = vunpack.c.h.b16 %v2023
      %v2114 = vunpack.c.l.b16 %v2024
      %v2115 = vunpack.c.h.b16 %v2024
      %v2116 = vunpack.c.l.b16 %v2025
      %v2117 = vunpack.c.h.b16 %v2025
      %v2118 = vunpack.c.l.b16 %v2026
      %v2119 = vunpack.c.h.b16 %v2026
      %v2120 = vunpack.c.l.b16 %v2027
      %v2121 = vunpack.c.h.b16 %v2027
      %v2122 = vunpack.c.l.b16 %v2028
      %v2123 = vunpack.c.h.b16 %v2028
      %v2124 = vunpack.c.l.b16 %v2029
      %v2125 = vunpack.c.h.b16 %v2029
      %v2126 = vpack.c.b16 %v2066, %v2062
      %v2127 = vpack.c.b16 %v2067, %v2063
      %v2128 = vpack.c.b16 %v2068, %v2064
      %v2129 = vpack.c.b16 %v2069, %v2065
      %v2130 = vpack.c.b16 %v2074, %v2070
      %v2131 = vpack.c.b16 %v2075, %v2071
      %v2132 = vpack.c.b16 %v2076, %v2072
      %v2133 = vpack.c.b16 %v2077, %v2073
      %v2134 = vpack.c.b16 %v2082, %v2078
      %v2135 = vpack.c.b16 %v2083, %v2079
      %v2136 = vpack.c.b16 %v2084, %v2080
      %v2137 = vpack.c.b16 %v2085, %v2081
      %v2138 = vpack.c.b16 %v2090, %v2086
      %v2139 = vpack.c.b16 %v2091, %v2087
      %v2140 = vpack.c.b16 %v2092, %v2088
      %v2141 = vpack.c.b16 %v2093, %v2089
      %v2142 = vpack.c.b16 %v2098, %v2094
      %v2143 = vpack.c.b16 %v2099, %v2095
      %v2144 = vpack.c.b16 %v2100, %v2096
      %v2145 = vpack.c.b16 %v2101, %v2097
      %v2146 = vpack.c.b16 %v2106, %v2102
      %v2147 = vpack.c.b16 %v2107, %v2103
      %v2148 = vpack.c.b16 %v2108, %v2104
      %v2149 = vpack.c.b16 %v2109, %v2105
      %v2150 = vpack.c.b16 %v2114, %v2110
      %v2151 = vpack.c.b16 %v2115, %v2111
      %v2152 = vpack.c.b16 %v2116, %v2112
      %v2153 = vpack.c.b16 %v2117, %v2113
      %v2154 = vpack.c.b16 %v2122, %v2118
      %v2155 = vpack.c.b16 %v2123, %v2119
      %v2156 = vpack.c.b16 %v2124, %v2120
      %v2157 = vpack.c.b16 %v2125, %v2121
      %2190 = vmatprep.subr.bf16.mxu0 %v2127
      %2191 = vmatpush1.bf16.msra.mxu0 %v2126
      %2192 = vmatprep.subr.bf16.mxu0 %v2131
      %2193 = vmatpush1.bf16.msra.mxu0 %v2130
      %2194 = vmatprep.subr.bf16.mxu0 %v2135
      %2195 = vmatpush1.bf16.msra.mxu0 %v2134
      %2196 = vmatprep.subr.bf16.mxu0 %v2139
      %2197 = vmatpush1.bf16.msra.mxu0 %v2138
      %2198 = vmatprep.subr.bf16.mxu0 %v2143
      %2199 = vmatpush1.bf16.msra.mxu0 %v2142
      %2200 = vmatprep.subr.bf16.mxu0 %v2147
      %2201 = vmatpush1.bf16.msra.mxu0 %v2146
      %2202 = vmatprep.subr.bf16.mxu0 %v2151
      %2203 = vmatpush1.bf16.msra.mxu0 %v2150
      %2204 = vmatprep.subr.bf16.mxu0 %v2155
      %2205 = vmatpush1.bf16.msra.mxu0 %v2154
      %2206 = vmatprep.subr.bf16.mxu0 0
      %2207 = vmatpush1.bf16.msra.mxu0 0
      %2208 = vmatprep.subr.bf16.mxu0 0
      %2209 = vmatpush1.bf16.msra.mxu0 0
      %2210 = vmatprep.subr.bf16.mxu0 0
      %2211 = vmatpush1.bf16.msra.mxu0 0
      %2212 = vmatprep.subr.bf16.mxu0 0
      %2213 = vmatpush1.bf16.msra.mxu0 0
      %2214 = vmatprep.subr.bf16.mxu0 0
      %2215 = vmatpush1.bf16.msra.mxu0 0
      %2216 = vmatprep.subr.bf16.mxu0 0
      %2217 = vmatpush1.bf16.msra.mxu0 0
      %2218 = vmatprep.subr.bf16.mxu0 0
      %2219 = vmatpush1.bf16.msra.mxu0 0
      %2220 = vmatprep.subr.bf16.mxu0 0
      %2221 = vmatpush1.bf16.msra.mxu0 0
      %2222 = vmatprep.mubr.bf16.mxu0 0
      %2223 = vmatmul.mubr.bf16.gmra.mrb[0].mxu0 %v1995
      %v2224 = vpop.f32.mrb[0].mxu0
      %v2225 = vadd.f32 0.0, %v2224
      %v2226 = vpop.f32.mrb[0].mxu0
      %v2227 = vadd.f32 0.0, %v2226
      %v2228 = vpop.f32.mrb[0].mxu0
      %v2229 = vadd.f32 0.0, %v2228
      %v2230 = vpop.f32.mrb[0].mxu0
      %v2231 = vadd.f32 0.0, %v2230
      %2232 = vdwg.mxu0
      %2233 = vmatprep.subr.bf16.mxu0 %v2129
      %2234 = vmatpush1.bf16.msra.mxu0 %v2128
      %2235 = vmatprep.subr.bf16.mxu0 %v2133
      %2236 = vmatpush1.bf16.msra.mxu0 %v2132
      %2237 = vmatprep.subr.bf16.mxu0 %v2137
      %2238 = vmatpush1.bf16.msra.mxu0 %v2136
      %2239 = vmatprep.subr.bf16.mxu0 %v2141
      %2240 = vmatpush1.bf16.msra.mxu0 %v2140
      %2241 = vmatprep.subr.bf16.mxu0 %v2145
      %2242 = vmatpush1.bf16.msra.mxu0 %v2144
      %2243 = vmatprep.subr.bf16.mxu0 %v2149
      %2244 = vmatpush1.bf16.msra.mxu0 %v2148
      %2245 = vmatprep.subr.bf16.mxu0 %v2153
      %2246 = vmatpush1.bf16.msra.mxu0 %v2152
      %2247 = vmatprep.subr.bf16.mxu0 %v2157
      %2248 = vmatpush1.bf16.msra.mxu0 %v2156
      %2249 = vmatprep.subr.bf16.mxu0 0
      %2250 = vmatpush1.bf16.msra.mxu0 0
      %2251 = vmatprep.subr.bf16.mxu0 0
      %2252 = vmatpush1.bf16.msra.mxu0 0
      %2253 = vmatprep.subr.bf16.mxu0 0
      %2254 = vmatpush1.bf16.msra.mxu0 0
      %2255 = vmatprep.subr.bf16.mxu0 0
      %2256 = vmatpush1.bf16.msra.mxu0 0
      %2257 = vmatprep.subr.bf16.mxu0 0
      %2258 = vmatpush1.bf16.msra.mxu0 0
      %2259 = vmatprep.subr.bf16.mxu0 0
      %2260 = vmatpush1.bf16.msra.mxu0 0
      %2261 = vmatprep.subr.bf16.mxu0 0
      %2262 = vmatpush1.bf16.msra.mxu0 0
      %2263 = vmatprep.subr.bf16.mxu0 0
      %2264 = vmatpush1.bf16.msra.mxu0 0
      %2265 = vmatprep.mubr.bf16.mxu0 0
      %2266 = vmatmul.mubr.bf16.gmra.mrb[0].mxu0 %v1995
      %v2267 = vpop.f32.mrb[0].mxu0
      %v2268 = vadd.f32 0.0, %v2267
      %v2269 = vpop.f32.mrb[0].mxu0
      %v2270 = vadd.f32 0.0, %v2269
      %v2271 = vpop.f32.mrb[0].mxu0
      %v2272 = vadd.f32 0.0, %v2271
      %v2273 = vpop.f32.mrb[0].mxu0
      %v2274 = vadd.f32 0.0, %v2273
      %2275 = vdwg.mxu0
      %v2276 = vadd.f32 %v945, %v2225
      %v2277 = vadd.f32 %v946, %v2227
      %v2278 = vadd.f32 %v947, %v2268
      %v2279 = vadd.f32 %v948, %v2270
      %v2280 = vadd.f32 %v949, %v2229
      %v2281 = vadd.f32 %v950, %v2231
      %v2282 = vadd.f32 %v951, %v2272
      %v2283 = vadd.f32 %v952, %v2274
      %v2284 = vxor.u32 %v2276, 2147483648
      %v2285 = vxor.u32 %v2277, 2147483648
      %v2286 = vxor.u32 %v2278, 2147483648
      %v2287 = vxor.u32 %v2280, 2147483648
      %v2288 = vxor.u32 %v2281, 2147483648
      %v2289 = vxor.u32 %v2282, 2147483648
      %v2290 = vmul.f32 %v2284, 1.442695
      %v2291 = vpow.pop %v2290
      %v2292 = vmul.f32 %v2285, 1.442695
      %v2293 = vpow.pop %v2292
      %v2294 = vmul.f32 %v2286, 1.442695
      %v2295 = vpow.pop %v2294
      %v2296 = vmul.f32 %v2287, 1.442695
      %v2297 = vpow.pop %v2296
      %v2298 = vmul.f32 %v2288, 1.442695
      %v2299 = vpow.pop %v2298
      %v2300 = vmul.f32 %v2289, 1.442695
      %v2301 = vpow.pop %v2300
      %v2302 = vadd.f32 %v2291, 1.0
      %v2303 = vadd.f32 %v2293, 1.0
      %v2304 = vadd.f32 %v2295, 1.0
      %v2305 = vadd.f32 %v2297, 1.0
      %v2306 = vadd.f32 %v2299, 1.0
      %v2307 = vadd.f32 %v2301, 1.0
      %v2308 = vrcp.pop %v2302
      %v2309 = vmul.f32 1.0, %v2308
      %v2310 = vrcp.pop %v2303
      %v2311 = vmul.f32 1.0, %v2310
      %v2312 = vrcp.pop %v2304
      %v2313 = vmul.f32 1.0, %v2312
      %v2314 = vrcp.pop %v2305
      %v2315 = vmul.f32 1.0, %v2314
      %v2316 = vrcp.pop %v2306
      %v2317 = vmul.f32 1.0, %v2316
      %v2318 = vrcp.pop %v2307
      %v2319 = vmul.f32 1.0, %v2318
      %v2320 = vtanh.pop %v2279
      %v2321 = vtanh.pop %v2283
      %v2322 = vmul.f32 %v2311, %v1989
      %v2323 = vmul.f32 %v2317, %v1990
      %v2324 = vmul.f32 %v2309, %v2320
      %v2325 = vmul.f32 %v2315, %v2321
      %v2326 = vadd.f32 %v2322, %v2324
      %v2327 = vadd.f32 %v2323, %v2325
      %v2328 = vtanh.pop %v2326
      %v2329 = vtanh.pop %v2327
      %v2330 = vmul.f32 %v2313, %v2328
      %v2331 = vmul.f32 %v2319, %v2329
      %v2332 = vpack.c.bf16 %v2331, %v2330
      %s2333 = scalar_lea.vmem [#allocation5], 24
      %2334 = vst [vmem:[%s2333] sm:$0xff] %v2332
      %v2335 = vld [vmem:[%s4] sm:$0xff]
      %v2336 = vld [vmem:[%s4 + $0x8] sm:$0xff]
      %v2337 = vld [vmem:[%s4 + $0x10] sm:$0xff]
      %v2338 = vld [vmem:[%s4 + $0x18] sm:$0xff]
      %v2339 = vld [vmem:[%s4 + $0x20] sm:$0xff]
      %v2340 = vld [vmem:[%s4 + $0x28] sm:$0xff]
      %v2341 = vld [vmem:[%s4 + $0x30] sm:$0xff]
      %v2342 = vld [vmem:[%s4 + $0x38] sm:$0xff]
      %v2343 = vld [vmem:[%s4 + $0x40] sm:$0xff]
      %v2344 = vld [vmem:[%s4 + $0x48] sm:$0xff]
      %v2345 = vld [vmem:[%s4 + $0x50] sm:$0xff]
      %v2346 = vld [vmem:[%s4 + $0x58] sm:$0xff]
      %v2347 = vld [vmem:[%s4 + $0x60] sm:$0xff]
      %v2348 = vld [vmem:[%s4 + $0x68] sm:$0xff]
      %v2349 = vld [vmem:[%s4 + $0x70] sm:$0xff]
      %v2350 = vld [vmem:[%s4 + $0x78] sm:$0xff]
      %v2351 = vld [vmem:[%s4 + $0x80] sm:$0xff]
      %v2352 = vld [vmem:[%s4 + $0x88] sm:$0xff]
      %v2353 = vld [vmem:[%s4 + $0x90] sm:$0xff]
      %v2354 = vld [vmem:[%s4 + $0x98] sm:$0xff]
      %v2355 = vld [vmem:[%s4 + $0xa0] sm:$0xff]
      %v2356 = vld [vmem:[%s4 + $0xa8] sm:$0xff]
      %v2357 = vld [vmem:[%s4 + $0xb0] sm:$0xff]
      %v2358 = vld [vmem:[%s4 + $0xb8] sm:$0xff]
      %v2359 = vld [vmem:[%s4 + $0xc0] sm:$0xff]
      %v2360 = vld [vmem:[%s4 + $0xc8] sm:$0xff]
      %v2361 = vld [vmem:[%s4 + $0xd0] sm:$0xff]
      %v2362 = vld [vmem:[%s4 + $0xd8] sm:$0xff]
      %v2363 = vld [vmem:[%s4 + $0xe0] sm:$0xff]
      %v2364 = vld [vmem:[%s4 + $0xe8] sm:$0xff]
      %v2365 = vld [vmem:[%s4 + $0xf0] sm:$0xff]
      %v2366 = vld [vmem:[%s4 + $0xf8] sm:$0xff]
      %v2399 = vunpack.c.l.b16 %v2335
      %v2400 = vunpack.c.h.b16 %v2335
      %v2401 = vunpack.c.l.b16 %v2336
      %v2402 = vunpack.c.h.b16 %v2336
      %v2403 = vunpack.c.l.b16 %v2337
      %v2404 = vunpack.c.h.b16 %v2337
      %v2405 = vunpack.c.l.b16 %v2338
      %v2406 = vunpack.c.h.b16 %v2338
      %v2407 = vunpack.c.l.b16 %v2339
      %v2408 = vunpack.c.h.b16 %v2339
      %v2409 = vunpack.c.l.b16 %v2340
      %v2410 = vunpack.c.h.b16 %v2340
      %v2411 = vunpack.c.l.b16 %v2341
      %v2412 = vunpack.c.h.b16 %v2341
      %v2413 = vunpack.c.l.b16 %v2342
      %v2414 = vunpack.c.h.b16 %v2342
      %v2415 = vunpack.c.l.b16 %v2343
      %v2416 = vunpack.c.h.b16 %v2343
      %v2417 = vunpack.c.l.b16 %v2344
      %v2418 = vunpack.c.h.b16 %v2344
      %v2419 = vunpack.c.l.b16 %v2345
      %v2420 = vunpack.c.h.b16 %v2345
      %v2421 = vunpack.c.l.b16 %v2346
      %v2422 = vunpack.c.h.b16 %v2346
      %v2423 = vunpack.c.l.b16 %v2347
      %v2424 = vunpack.c.h.b16 %v2347
      %v2425 = vunpack.c.l.b16 %v2348
      %v2426 = vunpack.c.h.b16 %v2348
      %v2427 = vunpack.c.l.b16 %v2349
      %v2428 = vunpack.c.h.b16 %v2349
      %v2429 = vunpack.c.l.b16 %v2350
      %v2430 = vunpack.c.h.b16 %v2350
      %v2431 = vunpack.c.l.b16 %v2351
      %v2432 = vunpack.c.h.b16 %v2351
      %v2433 = vunpack.c.l.b16 %v2352
      %v2434 = vunpack.c.h.b16 %v2352
      %v2435 = vunpack.c.l.b16 %v2353
      %v2436 = vunpack.c.h.b16 %v2353
      %v2437 = vunpack.c.l.b16 %v2354
      %v2438 = vunpack.c.h.b16 %v2354
      %v2439 = vunpack.c.l.b16 %v2355
      %v2440 = vunpack.c.h.b16 %v2355
      %v2441 = vunpack.c.l.b16 %v2356
      %v2442 = vunpack.c.h.b16 %v2356
      %v2443 = vunpack.c.l.b16 %v2357
      %v2444 = vunpack.c.h.b16 %v2357
      %v2445 = vunpack.c.l.b16 %v2358
      %v2446 = vunpack.c.h.b16 %v2358
      %v2447 = vunpack.c.l.b16 %v2359
      %v2448 = vunpack.c.h.b16 %v2359
      %v2449 = vunpack.c.l.b16 %v2360
      %v2450 = vunpack.c.h.b16 %v2360
      %v2451 = vunpack.c.l.b16 %v2361
      %v2452 = vunpack.c.h.b16 %v2361
      %v2453 = vunpack.c.l.b16 %v2362
      %v2454 = vunpack.c.h.b16 %v2362
      %v2455 = vunpack.c.l.b16 %v2363
      %v2456 = vunpack.c.h.b16 %v2363
      %v2457 = vunpack.c.l.b16 %v2364
      %v2458 = vunpack.c.h.b16 %v2364
      %v2459 = vunpack.c.l.b16 %v2365
      %v2460 = vunpack.c.h.b16 %v2365
      %v2461 = vunpack.c.l.b16 %v2366
      %v2462 = vunpack.c.h.b16 %v2366
      %v2463 = vpack.c.b16 %v2403, %v2399
      %v2464 = vpack.c.b16 %v2404, %v2400
      %v2465 = vpack.c.b16 %v2405, %v2401
      %v2466 = vpack.c.b16 %v2406, %v2402
      %v2467 = vpack.c.b16 %v2411, %v2407
      %v2468 = vpack.c.b16 %v2412, %v2408
      %v2469 = vpack.c.b16 %v2413, %v2409
      %v2470 = vpack.c.b16 %v2414, %v2410
      %v2471 = vpack.c.b16 %v2419, %v2415
      %v2472 = vpack.c.b16 %v2420, %v2416
      %v2473 = vpack.c.b16 %v2421, %v2417
      %v2474 = vpack.c.b16 %v2422, %v2418
      %v2475 = vpack.c.b16 %v2427, %v2423
      %v2476 = vpack.c.b16 %v2428, %v2424
      %v2477 = vpack.c.b16 %v2429, %v2425
      %v2478 = vpack.c.b16 %v2430, %v2426
      %v2479 = vpack.c.b16 %v2435, %v2431
      %v2480 = vpack.c.b16 %v2436, %v2432
      %v2481 = vpack.c.b16 %v2437, %v2433
      %v2482 = vpack.c.b16 %v2438, %v2434
      %v2483 = vpack.c.b16 %v2443, %v2439
      %v2484 = vpack.c.b16 %v2444, %v2440
      %v2485 = vpack.c.b16 %v2445, %v2441
      %v2486 = vpack.c.b16 %v2446, %v2442
      %v2487 = vpack.c.b16 %v2451, %v2447
      %v2488 = vpack.c.b16 %v2452, %v2448
      %v2489 = vpack.c.b16 %v2453, %v2449
      %v2490 = vpack.c.b16 %v2454, %v2450
      %v2491 = vpack.c.b16 %v2459, %v2455
      %v2492 = vpack.c.b16 %v2460, %v2456
      %v2493 = vpack.c.b16 %v2461, %v2457
      %v2494 = vpack.c.b16 %v2462, %v2458
      %2527 = vmatprep.subr.bf16.mxu0 %v2464
      %2528 = vmatpush1.bf16.msra.mxu0 %v2463
      %2529 = vmatprep.subr.bf16.mxu0 %v2468
      %2530 = vmatpush1.bf16.msra.mxu0 %v2467
      %2531 = vmatprep.subr.bf16.mxu0 %v2472
      %2532 = vmatpush1.bf16.msra.mxu0 %v2471
      %2533 = vmatprep.subr.bf16.mxu0 %v2476
      %2534 = vmatpush1.bf16.msra.mxu0 %v2475
      %2535 = vmatprep.subr.bf16.mxu0 %v2480
      %2536 = vmatpush1.bf16.msra.mxu0 %v2479
      %2537 = vmatprep.subr.bf16.mxu0 %v2484
      %2538 = vmatpush1.bf16.msra.mxu0 %v2483
      %2539 = vmatprep.subr.bf16.mxu0 %v2488
      %2540 = vmatpush1.bf16.msra.mxu0 %v2487
      %2541 = vmatprep.subr.bf16.mxu0 %v2492
      %2542 = vmatpush1.bf16.msra.mxu0 %v2491
      %2543 = vmatprep.subr.bf16.mxu0 0
      %2544 = vmatpush1.bf16.msra.mxu0 0
      %2545 = vmatprep.subr.bf16.mxu0 0
      %2546 = vmatpush1.bf16.msra.mxu0 0
      %2547 = vmatprep.subr.bf16.mxu0 0
      %2548 = vmatpush1.bf16.msra.mxu0 0
      %2549 = vmatprep.subr.bf16.mxu0 0
      %2550 = vmatpush1.bf16.msra.mxu0 0
      %2551 = vmatprep.subr.bf16.mxu0 0
      %2552 = vmatpush1.bf16.msra.mxu0 0
      %2553 = vmatprep.subr.bf16.mxu0 0
      %2554 = vmatpush1.bf16.msra.mxu0 0
      %2555 = vmatprep.subr.bf16.mxu0 0
      %2556 = vmatpush1.bf16.msra.mxu0 0
      %2557 = vmatprep.subr.bf16.mxu0 0
      %2558 = vmatpush1.bf16.msra.mxu0 0
      %2559 = vmatprep.mubr.bf16.mxu0 0
      %2560 = vmatmul.mubr.bf16.gmra.mrb[0].mxu0 %v2332
      %v2561 = vpop.f32.mrb[0].mxu0
      %v2562 = vadd.f32 0.0, %v2561
      %v2563 = vpop.f32.mrb[0].mxu0
      %v2564 = vadd.f32 0.0, %v2563
      %v2565 = vpop.f32.mrb[0].mxu0
      %v2566 = vadd.f32 0.0, %v2565
      %v2567 = vpop.f32.mrb[0].mxu0
      %v2568 = vadd.f32 0.0, %v2567
      %2569 = vdwg.mxu0
      %2570 = vmatprep.subr.bf16.mxu0 %v2466
      %2571 = vmatpush1.bf16.msra.mxu0 %v2465
      %2572 = vmatprep.subr.bf16.mxu0 %v2470
      %2573 = vmatpush1.bf16.msra.mxu0 %v2469
      %2574 = vmatprep.subr.bf16.mxu0 %v2474
      %2575 = vmatpush1.bf16.msra.mxu0 %v2473
      %2576 = vmatprep.subr.bf16.mxu0 %v2478
      %2577 = vmatpush1.bf16.msra.mxu0 %v2477
      %2578 = vmatprep.subr.bf16.mxu0 %v2482
      %2579 = vmatpush1.bf16.msra.mxu0 %v2481
      %2580 = vmatprep.subr.bf16.mxu0 %v2486
      %2581 = vmatpush1.bf16.msra.mxu0 %v2485
      %2582 = vmatprep.subr.bf16.mxu0 %v2490
      %2583 = vmatpush1.bf16.msra.mxu0 %v2489
      %2584 = vmatprep.subr.bf16.mxu0 %v2494
      %2585 = vmatpush1.bf16.msra.mxu0 %v2493
      %2586 = vmatprep.subr.bf16.mxu0 0
      %2587 = vmatpush1.bf16.msra.mxu0 0
      %2588 = vmatprep.subr.bf16.mxu0 0
      %2589 = vmatpush1.bf16.msra.mxu0 0
      %2590 = vmatprep.subr.bf16.mxu0 0
      %2591 = vmatpush1.bf16.msra.mxu0 0
      %2592 = vmatprep.subr.bf16.mxu0 0
      %2593 = vmatpush1.bf16.msra.mxu0 0
      %2594 = vmatprep.subr.bf16.mxu0 0
      %2595 = vmatpush1.bf16.msra.mxu0 0
      %2596 = vmatprep.subr.bf16.mxu0 0
      %2597 = vmatpush1.bf16.msra.mxu0 0
      %2598 = vmatprep.subr.bf16.mxu0 0
      %2599 = vmatpush1.bf16.msra.mxu0 0
      %2600 = vmatprep.subr.bf16.mxu0 0
      %2601 = vmatpush1.bf16.msra.mxu0 0
      %2602 = vmatprep.mubr.bf16.mxu0 0
      %2603 = vmatmul.mubr.bf16.gmra.mrb[0].mxu0 %v2332
      %v2604 = vpop.f32.mrb[0].mxu0
      %v2605 = vadd.f32 0.0, %v2604
      %v2606 = vpop.f32.mrb[0].mxu0
      %v2607 = vadd.f32 0.0, %v2606
      %v2608 = vpop.f32.mrb[0].mxu0
      %v2609 = vadd.f32 0.0, %v2608
      %v2610 = vpop.f32.mrb[0].mxu0
      %v2611 = vadd.f32 0.0, %v2610
      %2612 = vdwg.mxu0
      %v2613 = vadd.f32 %v953, %v2562
      %v2614 = vadd.f32 %v954, %v2564
      %v2615 = vadd.f32 %v955, %v2605
      %v2616 = vadd.f32 %v956, %v2607
      %v2617 = vadd.f32 %v957, %v2566
      %v2618 = vadd.f32 %v958, %v2568
      %v2619 = vadd.f32 %v959, %v2609
      %v2620 = vadd.f32 %v960, %v2611
      %v2621 = vxor.u32 %v2613, 2147483648
      %v2622 = vxor.u32 %v2614, 2147483648
      %v2623 = vxor.u32 %v2615, 2147483648
      %v2624 = vxor.u32 %v2617, 2147483648
      %v2625 = vxor.u32 %v2618, 2147483648
      %v2626 = vxor.u32 %v2619, 2147483648
      %v2627 = vmul.f32 %v2621, 1.442695
      %v2628 = vpow.pop %v2627
      %v2629 = vmul.f32 %v2622, 1.442695
      %v2630 = vpow.pop %v2629
      %v2631 = vmul.f32 %v2623, 1.442695
      %v2632 = vpow.pop %v2631
      %v2633 = vmul.f32 %v2624, 1.442695
      %v2634 = vpow.pop %v2633
      %v2635 = vmul.f32 %v2625, 1.442695
      %v2636 = vpow.pop %v2635
      %v2637 = vmul.f32 %v2626, 1.442695
      %v2638 = vpow.pop %v2637
      %v2639 = vadd.f32 %v2628, 1.0
      %v2640 = vadd.f32 %v2630, 1.0
      %v2641 = vadd.f32 %v2632, 1.0
      %v2642 = vadd.f32 %v2634, 1.0
      %v2643 = vadd.f32 %v2636, 1.0
      %v2644 = vadd.f32 %v2638, 1.0
      %v2645 = vrcp.pop %v2639
      %v2646 = vmul.f32 1.0, %v2645
      %v2647 = vrcp.pop %v2640
      %v2648 = vmul.f32 1.0, %v2647
      %v2649 = vrcp.pop %v2641
      %v2650 = vmul.f32 1.0, %v2649
      %v2651 = vrcp.pop %v2642
      %v2652 = vmul.f32 1.0, %v2651
      %v2653 = vrcp.pop %v2643
      %v2654 = vmul.f32 1.0, %v2653
      %v2655 = vrcp.pop %v2644
      %v2656 = vmul.f32 1.0, %v2655
      %v2657 = vtanh.pop %v2616
      %v2658 = vtanh.pop %v2620
      %v2659 = vmul.f32 %v2648, %v2326
      %v2660 = vmul.f32 %v2654, %v2327
      %v2661 = vmul.f32 %v2646, %v2657
      %v2662 = vmul.f32 %v2652, %v2658
      %v2663 = vadd.f32 %v2659, %v2661
      %v2664 = vadd.f32 %v2660, %v2662
      %v2665 = vtanh.pop %v2663
      %v2666 = vtanh.pop %v2664
      %v2667 = vmul.f32 %v2650, %v2665
      %v2668 = vmul.f32 %v2656, %v2666
      %v2669 = vpack.c.bf16 %v2668, %v2667
      %s2670 = scalar_lea.vmem [#allocation5], 32
      %2671 = vst [vmem:[%s2670] sm:$0xff] %v2669
      %v2672 = vld [vmem:[%s4] sm:$0xff]
      %v2673 = vld [vmem:[%s4 + $0x8] sm:$0xff]
      %v2674 = vld [vmem:[%s4 + $0x10] sm:$0xff]
      %v2675 = vld [vmem:[%s4 + $0x18] sm:$0xff]
      %v2676 = vld [vmem:[%s4 + $0x20] sm:$0xff]
      %v2677 = vld [vmem:[%s4 + $0x28] sm:$0xff]
      %v2678 = vld [vmem:[%s4 + $0x30] sm:$0xff]
      %v2679 = vld [vmem:[%s4 + $0x38] sm:$0xff]
      %v2680 = vld [vmem:[%s4 + $0x40] sm:$0xff]
      %v2681 = vld [vmem:[%s4 + $0x48] sm:$0xff]
      %v2682 = vld [vmem:[%s4 + $0x50] sm:$0xff]
      %v2683 = vld [vmem:[%s4 + $0x58] sm:$0xff]
      %v2684 = vld [vmem:[%s4 + $0x60] sm:$0xff]
      %v2685 = vld [vmem:[%s4 + $0x68] sm:$0xff]
      %v2686 = vld [vmem:[%s4 + $0x70] sm:$0xff]
      %v2687 = vld [vmem:[%s4 + $0x78] sm:$0xff]
      %v2688 = vld [vmem:[%s4 + $0x80] sm:$0xff]
      %v2689 = vld [vmem:[%s4 + $0x88] sm:$0xff]
      %v2690 = vld [vmem:[%s4 + $0x90] sm:$0xff]
      %v2691 = vld [vmem:[%s4 + $0x98] sm:$0xff]
      %v2692 = vld [vmem:[%s4 + $0xa0] sm:$0xff]
      %v2693 = vld [vmem:[%s4 + $0xa8] sm:$0xff]
      %v2694 = vld [vmem:[%s4 + $0xb0] sm:$0xff]
      %v2695 = vld [vmem:[%s4 + $0xb8] sm:$0xff]
      %v2696 = vld [vmem:[%s4 + $0xc0] sm:$0xff]
      %v2697 = vld [vmem:[%s4 + $0xc8] sm:$0xff]
      %v2698 = vld [vmem:[%s4 + $0xd0] sm:$0xff]
      %v2699 = vld [vmem:[%s4 + $0xd8] sm:$0xff]
      %v2700 = vld [vmem:[%s4 + $0xe0] sm:$0xff]
      %v2701 = vld [vmem:[%s4 + $0xe8] sm:$0xff]
      %v2702 = vld [vmem:[%s4 + $0xf0] sm:$0xff]
      %v2703 = vld [vmem:[%s4 + $0xf8] sm:$0xff]
      %v2736 = vunpack.c.l.b16 %v2672
      %v2737 = vunpack.c.h.b16 %v2672
      %v2738 = vunpack.c.l.b16 %v2673
      %v2739 = vunpack.c.h.b16 %v2673
      %v2740 = vunpack.c.l.b16 %v2674
      %v2741 = vunpack.c.h.b16 %v2674
      %v2742 = vunpack.c.l.b16 %v2675
      %v2743 = vunpack.c.h.b16 %v2675
      %v2744 = vunpack.c.l.b16 %v2676
      %v2745 = vunpack.c.h.b16 %v2676
      %v2746 = vunpack.c.l.b16 %v2677
      %v2747 = vunpack.c.h.b16 %v2677
      %v2748 = vunpack.c.l.b16 %v2678
      %v2749 = vunpack.c.h.b16 %v2678
      %v2750 = vunpack.c.l.b16 %v2679
      %v2751 = vunpack.c.h.b16 %v2679
      %v2752 = vunpack.c.l.b16 %v2680
      %v2753 = vunpack.c.h.b16 %v2680
      %v2754 = vunpack.c.l.b16 %v2681
      %v2755 = vunpack.c.h.b16 %v2681
      %v2756 = vunpack.c.l.b16 %v2682
      %v2757 = vunpack.c.h.b16 %v2682
      %v2758 = vunpack.c.l.b16 %v2683
      %v2759 = vunpack.c.h.b16 %v2683
      %v2760 = vunpack.c.l.b16 %v2684
      %v2761 = vunpack.c.h.b16 %v2684
      %v2762 = vunpack.c.l.b16 %v2685
      %v2763 = vunpack.c.h.b16 %v2685
      %v2764 = vunpack.c.l.b16 %v2686
      %v2765 = vunpack.c.h.b16 %v2686
      %v2766 = vunpack.c.l.b16 %v2687
      %v2767 = vunpack.c.h.b16 %v2687
      %v2768 = vunpack.c.l.b16 %v2688
      %v2769 = vunpack.c.h.b16 %v2688
      %v2770 = vunpack.c.l.b16 %v2689
      %v2771 = vunpack.c.h.b16 %v2689
      %v2772 = vunpack.c.l.b16 %v2690
      %v2773 = vunpack.c.h.b16 %v2690
      %v2774 = vunpack.c.l.b16 %v2691
      %v2775 = vunpack.c.h.b16 %v2691
      %v2776 = vunpack.c.l.b16 %v2692
      %v2777 = vunpack.c.h.b16 %v2692
      %v2778 = vunpack.c.l.b16 %v2693
      %v2779 = vunpack.c.h.b16 %v2693
      %v2780 = vunpack.c.l.b16 %v2694
      %v2781 = vunpack.c.h.b16 %v2694
      %v2782 = vunpack.c.l.b16 %v2695
      %v2783 = vunpack.c.h.b16 %v2695
      %v2784 = vunpack.c.l.b16 %v2696
      %v2785 = vunpack.c.h.b16 %v2696
      %v2786 = vunpack.c.l.b16 %v2697
      %v2787 = vunpack.c.h.b16 %v2697
      %v2788 = vunpack.c.l.b16 %v2698
      %v2789 = vunpack.c.h.b16 %v2698
      %v2790 = vunpack.c.l.b16 %v2699
      %v2791 = vunpack.c.h.b16 %v2699
      %v2792 = vunpack.c.l.b16 %v2700
      %v2793 = vunpack.c.h.b16 %v2700
      %v2794 = vunpack.c.l.b16 %v2701
      %v2795 = vunpack.c.h.b16 %v2701
      %v2796 = vunpack.c.l.b16 %v2702
      %v2797 = vunpack.c.h.b16 %v2702
      %v2798 = vunpack.c.l.b16 %v2703
      %v2799 = vunpack.c.h.b16 %v2703
      %v2800 = vpack.c.b16 %v2740, %v2736
      %v2801 = vpack.c.b16 %v2741, %v2737
      %v2802 = vpack.c.b16 %v2742, %v2738
      %v2803 = vpack.c.b16 %v2743, %v2739
      %v2804 = vpack.c.b16 %v2748, %v2744
      %v2805 = vpack.c.b16 %v2749, %v2745
      %v2806 = vpack.c.b16 %v2750, %v2746
      %v2807 = vpack.c.b16 %v2751, %v2747
      %v2808 = vpack.c.b16 %v2756, %v2752
      %v2809 = vpack.c.b16 %v2757, %v2753
      %v2810 = vpack.c.b16 %v2758, %v2754
      %v2811 = vpack.c.b16 %v2759, %v2755
      %v2812 = vpack.c.b16 %v2764, %v2760
      %v2813 = vpack.c.b16 %v2765, %v2761
      %v2814 = vpack.c.b16 %v2766, %v2762
      %v2815 = vpack.c.b16 %v2767, %v2763
      %v2816 = vpack.c.b16 %v2772, %v2768
      %v2817 = vpack.c.b16 %v2773, %v2769
      %v2818 = vpack.c.b16 %v2774, %v2770
      %v2819 = vpack.c.b16 %v2775, %v2771
      %v2820 = vpack.c.b16 %v2780, %v2776
      %v2821 = vpack.c.b16 %v2781, %v2777
      %v2822 = vpack.c.b16 %v2782, %v2778
      %v2823 = vpack.c.b16 %v2783, %v2779
      %v2824 = vpack.c.b16 %v2788, %v2784
      %v2825 = vpack.c.b16 %v2789, %v2785
      %v2826 = vpack.c.b16 %v2790, %v2786
      %v2827 = vpack.c.b16 %v2791, %v2787
      %v2828 = vpack.c.b16 %v2796, %v2792
      %v2829 = vpack.c.b16 %v2797, %v2793
      %v2830 = vpack.c.b16 %v2798, %v2794
      %v2831 = vpack.c.b16 %v2799, %v2795
      %2864 = vmatprep.subr.bf16.mxu0 %v2801
      %2865 = vmatpush1.bf16.msra.mxu0 %v2800
      %2866 = vmatprep.subr.bf16.mxu0 %v2805
      %2867 = vmatpush1.bf16.msra.mxu0 %v2804
      %2868 = vmatprep.subr.bf16.mxu0 %v2809
      %2869 = vmatpush1.bf16.msra.mxu0 %v2808
      %2870 = vmatprep.subr.bf16.mxu0 %v2813
      %2871 = vmatpush1.bf16.msra.mxu0 %v2812
      %2872 = vmatprep.subr.bf16.mxu0 %v2817
      %2873 = vmatpush1.bf16.msra.mxu0 %v2816
      %2874 = vmatprep.subr.bf16.mxu0 %v2821
      %2875 = vmatpush1.bf16.msra.mxu0 %v2820
      %2876 = vmatprep.subr.bf16.mxu0 %v2825
      %2877 = vmatpush1.bf16.msra.mxu0 %v2824
      %2878 = vmatprep.subr.bf16.mxu0 %v2829
      %2879 = vmatpush1.bf16.msra.mxu0 %v2828
      %2880 = vmatprep.subr.bf16.mxu0 0
      %2881 = vmatpush1.bf16.msra.mxu0 0
      %2882 = vmatprep.subr.bf16.mxu0 0
      %2883 = vmatpush1.bf16.msra.mxu0 0
      %2884 = vmatprep.subr.bf16.mxu0 0
      %2885 = vmatpush1.bf16.msra.mxu0 0
      %2886 = vmatprep.subr.bf16.mxu0 0
      %2887 = vmatpush1.bf16.msra.mxu0 0
      %2888 = vmatprep.subr.bf16.mxu0 0
      %2889 = vmatpush1.bf16.msra.mxu0 0
      %2890 = vmatprep.subr.bf16.mxu0 0
      %2891 = vmatpush1.bf16.msra.mxu0 0
      %2892 = vmatprep.subr.bf16.mxu0 0
      %2893 = vmatpush1.bf16.msra.mxu0 0
      %2894 = vmatprep.subr.bf16.mxu0 0
      %2895 = vmatpush1.bf16.msra.mxu0 0
      %2896 = vmatprep.mubr.bf16.mxu0 0
      %2897 = vmatmul.mubr.bf16.gmra.mrb[0].mxu0 %v2669
      %v2898 = vpop.f32.mrb[0].mxu0
      %v2899 = vadd.f32 0.0, %v2898
      %v2900 = vpop.f32.mrb[0].mxu0
      %v2901 = vadd.f32 0.0, %v2900
      %v2902 = vpop.f32.mrb[0].mxu0
      %v2903 = vadd.f32 0.0, %v2902
      %v2904 = vpop.f32.mrb[0].mxu0
      %v2905 = vadd.f32 0.0, %v2904
      %2906 = vdwg.mxu0
      %2907 = vmatprep.subr.bf16.mxu0 %v2803
      %2908 = vmatpush1.bf16.msra.mxu0 %v2802
      %2909 = vmatprep.subr.bf16.mxu0 %v2807
      %2910 = vmatpush1.bf16.msra.mxu0 %v2806
      %2911 = vmatprep.subr.bf16.mxu0 %v2811
      %2912 = vmatpush1.bf16.msra.mxu0 %v2810
      %2913 = vmatprep.subr.bf16.mxu0 %v2815
      %2914 = vmatpush1.bf16.msra.mxu0 %v2814
      %2915 = vmatprep.subr.bf16.mxu0 %v2819
      %2916 = vmatpush1.bf16.msra.mxu0 %v2818
      %2917 = vmatprep.subr.bf16.mxu0 %v2823
      %2918 = vmatpush1.bf16.msra.mxu0 %v2822
      %2919 = vmatprep.subr.bf16.mxu0 %v2827
      %2920 = vmatpush1.bf16.msra.mxu0 %v2826
      %2921 = vmatprep.subr.bf16.mxu0 %v2831
      %2922 = vmatpush1.bf16.msra.mxu0 %v2830
      %2923 = vmatprep.subr.bf16.mxu0 0
      %2924 = vmatpush1.bf16.msra.mxu0 0
      %2925 = vmatprep.subr.bf16.mxu0 0
      %2926 = vmatpush1.bf16.msra.mxu0 0
      %2927 = vmatprep.subr.bf16.mxu0 0
      %2928 = vmatpush1.bf16.msra.mxu0 0
      %2929 = vmatprep.subr.bf16.mxu0 0
      %2930 = vmatpush1.bf16.msra.mxu0 0
      %2931 = vmatprep.subr.bf16.mxu0 0
      %2932 = vmatpush1.bf16.msra.mxu0 0
      %2933 = vmatprep.subr.bf16.mxu0 0
      %2934 = vmatpush1.bf16.msra.mxu0 0
      %2935 = vmatprep.subr.bf16.mxu0 0
      %2936 = vmatpush1.bf16.msra.mxu0 0
      %2937 = vmatprep.subr.bf16.mxu0 0
      %2938 = vmatpush1.bf16.msra.mxu0 0
      %2939 = vmatprep.mubr.bf16.mxu0 0
      %2940 = vmatmul.mubr.bf16.gmra.mrb[0].mxu0 %v2669
      %v2941 = vpop.f32.mrb[0].mxu0
      %v2942 = vadd.f32 0.0, %v2941
      %v2943 = vpop.f32.mrb[0].mxu0
      %v2944 = vadd.f32 0.0, %v2943
      %v2945 = vpop.f32.mrb[0].mxu0
      %v2946 = vadd.f32 0.0, %v2945
      %v2947 = vpop.f32.mrb[0].mxu0
      %v2948 = vadd.f32 0.0, %v2947
      %2949 = vdwg.mxu0
      %v2950 = vadd.f32 %v961, %v2899
      %v2951 = vadd.f32 %v962, %v2901
      %v2952 = vadd.f32 %v963, %v2942
      %v2953 = vadd.f32 %v964, %v2944
      %v2954 = vadd.f32 %v965, %v2903
      %v2955 = vadd.f32 %v966, %v2905
      %v2956 = vadd.f32 %v967, %v2946
      %v2957 = vadd.f32 %v968, %v2948
      %v2958 = vxor.u32 %v2950, 2147483648
      %v2959 = vxor.u32 %v2951, 2147483648
      %v2960 = vxor.u32 %v2952, 2147483648
      %v2961 = vxor.u32 %v2954, 2147483648
      %v2962 = vxor.u32 %v2955, 2147483648
      %v2963 = vxor.u32 %v2956, 2147483648
      %v2964 = vmul.f32 %v2958, 1.442695
      %v2965 = vpow.pop %v2964
      %v2966 = vmul.f32 %v2959, 1.442695
      %v2967 = vpow.pop %v2966
      %v2968 = vmul.f32 %v2960, 1.442695
      %v2969 = vpow.pop %v2968
      %v2970 = vmul.f32 %v2961, 1.442695
      %v2971 = vpow.pop %v2970
      %v2972 = vmul.f32 %v2962, 1.442695
      %v2973 = vpow.pop %v2972
      %v2974 = vmul.f32 %v2963, 1.442695
      %v2975 = vpow.pop %v2974
      %v2976 = vadd.f32 %v2965, 1.0
      %v2977 = vadd.f32 %v2967, 1.0
      %v2978 = vadd.f32 %v2969, 1.0
      %v2979 = vadd.f32 %v2971, 1.0
      %v2980 = vadd.f32 %v2973, 1.0
      %v2981 = vadd.f32 %v2975, 1.0
      %v2982 = vrcp.pop %v2976
      %v2983 = vmul.f32 1.0, %v2982
      %v2984 = vrcp.pop %v2977
      %v2985 = vmul.f32 1.0, %v2984
      %v2986 = vrcp.pop %v2978
      %v2987 = vmul.f32 1.0, %v2986
      %v2988 = vrcp.pop %v2979
      %v2989 = vmul.f32 1.0, %v2988
      %v2990 = vrcp.pop %v2980
      %v2991 = vmul.f32 1.0, %v2990
      %v2992 = vrcp.pop %v2981
      %v2993 = vmul.f32 1.0, %v2992
      %v2994 = vtanh.pop %v2953
      %v2995 = vtanh.pop %v2957
      %v2996 = vmul.f32 %v2985, %v2663
      %v2997 = vmul.f32 %v2991, %v2664
      %v2998 = vmul.f32 %v2983, %v2994
      %v2999 = vmul.f32 %v2989, %v2995
      %v3000 = vadd.f32 %v2996, %v2998
      %v3001 = vadd.f32 %v2997, %v2999
      %v3002 = vtanh.pop %v3000
      %v3003 = vtanh.pop %v3001
      %v3004 = vmul.f32 %v2987, %v3002
      %v3005 = vmul.f32 %v2993, %v3003
      %v3006 = vpack.c.bf16 %v3005, %v3004
      %s3007 = scalar_lea.vmem [#allocation5], 40
      %3008 = vst [vmem:[%s3007] sm:$0xff] %v3006
      %v3009 = vld [vmem:[%s4] sm:$0xff]
      %v3010 = vld [vmem:[%s4 + $0x8] sm:$0xff]
      %v3011 = vld [vmem:[%s4 + $0x10] sm:$0xff]
      %v3012 = vld [vmem:[%s4 + $0x18] sm:$0xff]
      %v3013 = vld [vmem:[%s4 + $0x20] sm:$0xff]
      %v3014 = vld [vmem:[%s4 + $0x28] sm:$0xff]
      %v3015 = vld [vmem:[%s4 + $0x30] sm:$0xff]
      %v3016 = vld [vmem:[%s4 + $0x38] sm:$0xff]
      %v3017 = vld [vmem:[%s4 + $0x40] sm:$0xff]
      %v3018 = vld [vmem:[%s4 + $0x48] sm:$0xff]
      %v3019 = vld [vmem:[%s4 + $0x50] sm:$0xff]
      %v3020 = vld [vmem:[%s4 + $0x58] sm:$0xff]
      %v3021 = vld [vmem:[%s4 + $0x60] sm:$0xff]
      %v3022 = vld [vmem:[%s4 + $0x68] sm:$0xff]
      %v3023 = vld [vmem:[%s4 + $0x70] sm:$0xff]
      %v3024 = vld [vmem:[%s4 + $0x78] sm:$0xff]
      %v3025 = vld [vmem:[%s4 + $0x80] sm:$0xff]
      %v3026 = vld [vmem:[%s4 + $0x88] sm:$0xff]
      %v3027 = vld [vmem:[%s4 + $0x90] sm:$0xff]
      %v3028 = vld [vmem:[%s4 + $0x98] sm:$0xff]
      %v3029 = vld [vmem:[%s4 + $0xa0] sm:$0xff]
      %v3030 = vld [vmem:[%s4 + $0xa8] sm:$0xff]
      %v3031 = vld [vmem:[%s4 + $0xb0] sm:$0xff]
      %v3032 = vld [vmem:[%s4 + $0xb8] sm:$0xff]
      %v3033 = vld [vmem:[%s4 + $0xc0] sm:$0xff]
      %v3034 = vld [vmem:[%s4 + $0xc8] sm:$0xff]
      %v3035 = vld [vmem:[%s4 + $0xd0] sm:$0xff]
      %v3036 = vld [vmem:[%s4 + $0xd8] sm:$0xff]
      %v3037 = vld [vmem:[%s4 + $0xe0] sm:$0xff]
      %v3038 = vld [vmem:[%s4 + $0xe8] sm:$0xff]
      %v3039 = vld [vmem:[%s4 + $0xf0] sm:$0xff]
      %v3040 = vld [vmem:[%s4 + $0xf8] sm:$0xff]
      %v3073 = vunpack.c.l.b16 %v3009
      %v3074 = vunpack.c.h.b16 %v3009
      %v3075 = vunpack.c.l.b16 %v3010
      %v3076 = vunpack.c.h.b16 %v3010
      %v3077 = vunpack.c.l.b16 %v3011
      %v3078 = vunpack.c.h.b16 %v3011
      %v3079 = vunpack.c.l.b16 %v3012
      %v3080 = vunpack.c.h.b16 %v3012
      %v3081 = vunpack.c.l.b16 %v3013
      %v3082 = vunpack.c.h.b16 %v3013
      %v3083 = vunpack.c.l.b16 %v3014
      %v3084 = vunpack.c.h.b16 %v3014
      %v3085 = vunpack.c.l.b16 %v3015
      %v3086 = vunpack.c.h.b16 %v3015
      %v3087 = vunpack.c.l.b16 %v3016
      %v3088 = vunpack.c.h.b16 %v3016
      %v3089 = vunpack.c.l.b16 %v3017
      %v3090 = vunpack.c.h.b16 %v3017
      %v3091 = vunpack.c.l.b16 %v3018
      %v3092 = vunpack.c.h.b16 %v3018
      %v3093 = vunpack.c.l.b16 %v3019
      %v3094 = vunpack.c.h.b16 %v3019
      %v3095 = vunpack.c.l.b16 %v3020
      %v3096 = vunpack.c.h.b16 %v3020
      %v3097 = vunpack.c.l.b16 %v3021
      %v3098 = vunpack.c.h.b16 %v3021
      %v3099 = vunpack.c.l.b16 %v3022
      %v3100 = vunpack.c.h.b16 %v3022
      %v3101 = vunpack.c.l.b16 %v3023
      %v3102 = vunpack.c.h.b16 %v3023
      %v3103 = vunpack.c.l.b16 %v3024
      %v3104 = vunpack.c.h.b16 %v3024
      %v3105 = vunpack.c.l.b16 %v3025
      %v3106 = vunpack.c.h.b16 %v3025
      %v3107 = vunpack.c.l.b16 %v3026
      %v3108 = vunpack.c.h.b16 %v3026
      %v3109 = vunpack.c.l.b16 %v3027
      %v3110 = vunpack.c.h.b16 %v3027
      %v3111 = vunpack.c.l.b16 %v3028
      %v3112 = vunpack.c.h.b16 %v3028
      %v3113 = vunpack.c.l.b16 %v3029
      %v3114 = vunpack.c.h.b16 %v3029
      %v3115 = vunpack.c.l.b16 %v3030
      %v3116 = vunpack.c.h.b16 %v3030
      %v3117 = vunpack.c.l.b16 %v3031
      %v3118 = vunpack.c.h.b16 %v3031
      %v3119 = vunpack.c.l.b16 %v3032
      %v3120 = vunpack.c.h.b16 %v3032
      %v3121 = vunpack.c.l.b16 %v3033
      %v3122 = vunpack.c.h.b16 %v3033
      %v3123 = vunpack.c.l.b16 %v3034
      %v3124 = vunpack.c.h.b16 %v3034
      %v3125 = vunpack.c.l.b16 %v3035
      %v3126 = vunpack.c.h.b16 %v3035
      %v3127 = vunpack.c.l.b16 %v3036
      %v3128 = vunpack.c.h.b16 %v3036
      %v3129 = vunpack.c.l.b16 %v3037
      %v3130 = vunpack.c.h.b16 %v3037
      %v3131 = vunpack.c.l.b16 %v3038
      %v3132 = vunpack.c.h.b16 %v3038
      %v3133 = vunpack.c.l.b16 %v3039
      %v3134 = vunpack.c.h.b16 %v3039
      %v3135 = vunpack.c.l.b16 %v3040
      %v3136 = vunpack.c.h.b16 %v3040
      %v3137 = vpack.c.b16 %v3077, %v3073
      %v3138 = vpack.c.b16 %v3078, %v3074
      %v3139 = vpack.c.b16 %v3079, %v3075
      %v3140 = vpack.c.b16 %v3080, %v3076
      %v3141 = vpack.c.b16 %v3085, %v3081
      %v3142 = vpack.c.b16 %v3086, %v3082
      %v3143 = vpack.c.b16 %v3087, %v3083
      %v3144 = vpack.c.b16 %v3088, %v3084
      %v3145 = vpack.c.b16 %v3093, %v3089
      %v3146 = vpack.c.b16 %v3094, %v3090
      %v3147 = vpack.c.b16 %v3095, %v3091
      %v3148 = vpack.c.b16 %v3096, %v3092
      %v3149 = vpack.c.b16 %v3101, %v3097
      %v3150 = vpack.c.b16 %v3102, %v3098
      %v3151 = vpack.c.b16 %v3103, %v3099
      %v3152 = vpack.c.b16 %v3104, %v3100
      %v3153 = vpack.c.b16 %v3109, %v3105
      %v3154 = vpack.c.b16 %v3110, %v3106
      %v3155 = vpack.c.b16 %v3111, %v3107
      %v3156 = vpack.c.b16 %v3112, %v3108
      %v3157 = vpack.c.b16 %v3117, %v3113
      %v3158 = vpack.c.b16 %v3118, %v3114
      %v3159 = vpack.c.b16 %v3119, %v3115
      %v3160 = vpack.c.b16 %v3120, %v3116
      %v3161 = vpack.c.b16 %v3125, %v3121
      %v3162 = vpack.c.b16 %v3126, %v3122
      %v3163 = vpack.c.b16 %v3127, %v3123
      %v3164 = vpack.c.b16 %v3128, %v3124
      %v3165 = vpack.c.b16 %v3133, %v3129
      %v3166 = vpack.c.b16 %v3134, %v3130
      %v3167 = vpack.c.b16 %v3135, %v3131
      %v3168 = vpack.c.b16 %v3136, %v3132
      %3201 = vmatprep.subr.bf16.mxu0 %v3138
      %3202 = vmatpush1.bf16.msra.mxu0 %v3137
      %3203 = vmatprep.subr.bf16.mxu0 %v3142
      %3204 = vmatpush1.bf16.msra.mxu0 %v3141
      %3205 = vmatprep.subr.bf16.mxu0 %v3146
      %3206 = vmatpush1.bf16.msra.mxu0 %v3145
      %3207 = vmatprep.subr.bf16.mxu0 %v3150
      %3208 = vmatpush1.bf16.msra.mxu0 %v3149
      %3209 = vmatprep.subr.bf16.mxu0 %v3154
      %3210 = vmatpush1.bf16.msra.mxu0 %v3153
      %3211 = vmatprep.subr.bf16.mxu0 %v3158
      %3212 = vmatpush1.bf16.msra.mxu0 %v3157
      %3213 = vmatprep.subr.bf16.mxu0 %v3162
      %3214 = vmatpush1.bf16.msra.mxu0 %v3161
      %3215 = vmatprep.subr.bf16.mxu0 %v3166
      %3216 = vmatpush1.bf16.msra.mxu0 %v3165
      %3217 = vmatprep.subr.bf16.mxu0 0
      %3218 = vmatpush1.bf16.msra.mxu0 0
      %3219 = vmatprep.subr.bf16.mxu0 0
      %3220 = vmatpush1.bf16.msra.mxu0 0
      %3221 = vmatprep.subr.bf16.mxu0 0
      %3222 = vmatpush1.bf16.msra.mxu0 0
      %3223 = vmatprep.subr.bf16.mxu0 0
      %3224 = vmatpush1.bf16.msra.mxu0 0
      %3225 = vmatprep.subr.bf16.mxu0 0
      %3226 = vmatpush1.bf16.msra.mxu0 0
      %3227 = vmatprep.subr.bf16.mxu0 0
      %3228 = vmatpush1.bf16.msra.mxu0 0
      %3229 = vmatprep.subr.bf16.mxu0 0
      %3230 = vmatpush1.bf16.msra.mxu0 0
      %3231 = vmatprep.subr.bf16.mxu0 0
      %3232 = vmatpush1.bf16.msra.mxu0 0
      %3233 = vmatprep.mubr.bf16.mxu0 0
      %3234 = vmatmul.mubr.bf16.gmra.mrb[0].mxu0 %v3006
      %v3235 = vpop.f32.mrb[0].mxu0
      %v3236 = vadd.f32 0.0, %v3235
      %v3237 = vpop.f32.mrb[0].mxu0
      %v3238 = vadd.f32 0.0, %v3237
      %v3239 = vpop.f32.mrb[0].mxu0
      %v3240 = vadd.f32 0.0, %v3239
      %v3241 = vpop.f32.mrb[0].mxu0
      %v3242 = vadd.f32 0.0, %v3241
      %3243 = vdwg.mxu0
      %3244 = vmatprep.subr.bf16.mxu0 %v3140
      %3245 = vmatpush1.bf16.msra.mxu0 %v3139
      %3246 = vmatprep.subr.bf16.mxu0 %v3144
      %3247 = vmatpush1.bf16.msra.mxu0 %v3143
      %3248 = vmatprep.subr.bf16.mxu0 %v3148
      %3249 = vmatpush1.bf16.msra.mxu0 %v3147
      %3250 = vmatprep.subr.bf16.mxu0 %v3152
      %3251 = vmatpush1.bf16.msra.mxu0 %v3151
      %3252 = vmatprep.subr.bf16.mxu0 %v3156
      %3253 = vmatpush1.bf16.msra.mxu0 %v3155
      %3254 = vmatprep.subr.bf16.mxu0 %v3160
      %3255 = vmatpush1.bf16.msra.mxu0 %v3159
      %3256 = vmatprep.subr.bf16.mxu0 %v3164
      %3257 = vmatpush1.bf16.msra.mxu0 %v3163
      %3258 = vmatprep.subr.bf16.mxu0 %v3168
      %3259 = vmatpush1.bf16.msra.mxu0 %v3167
      %3260 = vmatprep.subr.bf16.mxu0 0
      %3261 = vmatpush1.bf16.msra.mxu0 0
      %3262 = vmatprep.subr.bf16.mxu0 0
      %3263 = vmatpush1.bf16.msra.mxu0 0
      %3264 = vmatprep.subr.bf16.mxu0 0
      %3265 = vmatpush1.bf16.msra.mxu0 0
      %3266 = vmatprep.subr.bf16.mxu0 0
      %3267 = vmatpush1.bf16.msra.mxu0 0
      %3268 = vmatprep.subr.bf16.mxu0 0
      %3269 = vmatpush1.bf16.msra.mxu0 0
      %3270 = vmatprep.subr.bf16.mxu0 0
      %3271 = vmatpush1.bf16.msra.mxu0 0
      %3272 = vmatprep.subr.bf16.mxu0 0
      %3273 = vmatpush1.bf16.msra.mxu0 0
      %3274 = vmatprep.subr.bf16.mxu0 0
      %3275 = vmatpush1.bf16.msra.mxu0 0
      %3276 = vmatprep.mubr.bf16.mxu0 0
      %3277 = vmatmul.mubr.bf16.gmra.mrb[0].mxu0 %v3006
      %v3278 = vpop.f32.mrb[0].mxu0
      %v3279 = vadd.f32 0.0, %v3278
      %v3280 = vpop.f32.mrb[0].mxu0
      %v3281 = vadd.f32 0.0, %v3280
      %v3282 = vpop.f32.mrb[0].mxu0
      %v3283 = vadd.f32 0.0, %v3282
      %v3284 = vpop.f32.mrb[0].mxu0
      %v3285 = vadd.f32 0.0, %v3284
      %3286 = vdwg.mxu0
      %v3287 = vadd.f32 %v969, %v3236
      %v3288 = vadd.f32 %v970, %v3238
      %v3289 = vadd.f32 %v971, %v3279
      %v3290 = vadd.f32 %v972, %v3281
      %v3291 = vadd.f32 %v973, %v3240
      %v3292 = vadd.f32 %v974, %v3242
      %v3293 = vadd.f32 %v975, %v3283
      %v3294 = vadd.f32 %v976, %v3285
      %v3295 = vxor.u32 %v3287, 2147483648
      %v3296 = vxor.u32 %v3288, 2147483648
      %v3297 = vxor.u32 %v3289, 2147483648
      %v3298 = vxor.u32 %v3291, 2147483648
      %v3299 = vxor.u32 %v3292, 2147483648
      %v3300 = vxor.u32 %v3293, 2147483648
      %v3301 = vmul.f32 %v3295, 1.442695
      %v3302 = vpow.pop %v3301
      %v3303 = vmul.f32 %v3296, 1.442695
      %v3304 = vpow.pop %v3303
      %v3305 = vmul.f32 %v3297, 1.442695
      %v3306 = vpow.pop %v3305
      %v3307 = vmul.f32 %v3298, 1.442695
      %v3308 = vpow.pop %v3307
      %v3309 = vmul.f32 %v3299, 1.442695
      %v3310 = vpow.pop %v3309
      %v3311 = vmul.f32 %v3300, 1.442695
      %v3312 = vpow.pop %v3311
      %v3313 = vadd.f32 %v3302, 1.0
      %v3314 = vadd.f32 %v3304, 1.0
      %v3315 = vadd.f32 %v3306, 1.0
      %v3316 = vadd.f32 %v3308, 1.0
      %v3317 = vadd.f32 %v3310, 1.0
      %v3318 = vadd.f32 %v3312, 1.0
      %v3319 = vrcp.pop %v3313
      %v3320 = vmul.f32 1.0, %v3319
      %v3321 = vrcp.pop %v3314
      %v3322 = vmul.f32 1.0, %v3321
      %v3323 = vrcp.pop %v3315
      %v3324 = vmul.f32 1.0, %v3323
      %v3325 = vrcp.pop %v3316
      %v3326 = vmul.f32 1.0, %v3325
      %v3327 = vrcp.pop %v3317
      %v3328 = vmul.f32 1.0, %v3327
      %v3329 = vrcp.pop %v3318
      %v3330 = vmul.f32 1.0, %v3329
      %v3331 = vtanh.pop %v3290
      %v3332 = vtanh.pop %v3294
      %v3333 = vmul.f32 %v3322, %v3000
      %v3334 = vmul.f32 %v3328, %v3001
      %v3335 = vmul.f32 %v3320, %v3331
      %v3336 = vmul.f32 %v3326, %v3332
      %v3337 = vadd.f32 %v3333, %v3335
      %v3338 = vadd.f32 %v3334, %v3336
      %v3339 = vtanh.pop %v3337
      %v3340 = vtanh.pop %v3338
      %v3341 = vmul.f32 %v3324, %v3339
      %v3342 = vmul.f32 %v3330, %v3340
      %v3343 = vpack.c.bf16 %v3342, %v3341
      %s3344 = scalar_lea.vmem [#allocation5], 48
      %3345 = vst [vmem:[%s3344] sm:$0xff] %v3343
      %v3346 = vld [vmem:[%s4] sm:$0xff]
      %v3347 = vld [vmem:[%s4 + $0x8] sm:$0xff]
      %v3348 = vld [vmem:[%s4 + $0x10] sm:$0xff]
      %v3349 = vld [vmem:[%s4 + $0x18] sm:$0xff]
      %v3350 = vld [vmem:[%s4 + $0x20] sm:$0xff]
      %v3351 = vld [vmem:[%s4 + $0x28] sm:$0xff]
      %v3352 = vld [vmem:[%s4 + $0x30] sm:$0xff]
      %v3353 = vld [vmem:[%s4 + $0x38] sm:$0xff]
      %v3354 = vld [vmem:[%s4 + $0x40] sm:$0xff]
      %v3355 = vld [vmem:[%s4 + $0x48] sm:$0xff]
      %v3356 = vld [vmem:[%s4 + $0x50] sm:$0xff]
      %v3357 = vld [vmem:[%s4 + $0x58] sm:$0xff]
      %v3358 = vld [vmem:[%s4 + $0x60] sm:$0xff]
      %v3359 = vld [vmem:[%s4 + $0x68] sm:$0xff]
      %v3360 = vld [vmem:[%s4 + $0x70] sm:$0xff]
      %v3361 = vld [vmem:[%s4 + $0x78] sm:$0xff]
      %v3362 = vld [vmem:[%s4 + $0x80] sm:$0xff]
      %v3363 = vld [vmem:[%s4 + $0x88] sm:$0xff]
      %v3364 = vld [vmem:[%s4 + $0x90] sm:$0xff]
      %v3365 = vld [vmem:[%s4 + $0x98] sm:$0xff]
      %v3366 = vld [vmem:[%s4 + $0xa0] sm:$0xff]
      %v3367 = vld [vmem:[%s4 + $0xa8] sm:$0xff]
      %v3368 = vld [vmem:[%s4 + $0xb0] sm:$0xff]
      %v3369 = vld [vmem:[%s4 + $0xb8] sm:$0xff]
      %v3370 = vld [vmem:[%s4 + $0xc0] sm:$0xff]
      %v3371 = vld [vmem:[%s4 + $0xc8] sm:$0xff]
      %v3372 = vld [vmem:[%s4 + $0xd0] sm:$0xff]
      %v3373 = vld [vmem:[%s4 + $0xd8] sm:$0xff]
      %v3374 = vld [vmem:[%s4 + $0xe0] sm:$0xff]
      %v3375 = vld [vmem:[%s4 + $0xe8] sm:$0xff]
      %v3376 = vld [vmem:[%s4 + $0xf0] sm:$0xff]
      %v3377 = vld [vmem:[%s4 + $0xf8] sm:$0xff]
      %v3410 = vunpack.c.l.b16 %v3346
      %v3411 = vunpack.c.h.b16 %v3346
      %v3412 = vunpack.c.l.b16 %v3347
      %v3413 = vunpack.c.h.b16 %v3347
      %v3414 = vunpack.c.l.b16 %v3348
      %v3415 = vunpack.c.h.b16 %v3348
      %v3416 = vunpack.c.l.b16 %v3349
      %v3417 = vunpack.c.h.b16 %v3349
      %v3418 = vunpack.c.l.b16 %v3350
      %v3419 = vunpack.c.h.b16 %v3350
      %v3420 = vunpack.c.l.b16 %v3351
      %v3421 = vunpack.c.h.b16 %v3351
      %v3422 = vunpack.c.l.b16 %v3352
      %v3423 = vunpack.c.h.b16 %v3352
      %v3424 = vunpack.c.l.b16 %v3353
      %v3425 = vunpack.c.h.b16 %v3353
      %v3426 = vunpack.c.l.b16 %v3354
      %v3427 = vunpack.c.h.b16 %v3354
      %v3428 = vunpack.c.l.b16 %v3355
      %v3429 = vunpack.c.h.b16 %v3355
      %v3430 = vunpack.c.l.b16 %v3356
      %v3431 = vunpack.c.h.b16 %v3356
      %v3432 = vunpack.c.l.b16 %v3357
      %v3433 = vunpack.c.h.b16 %v3357
      %v3434 = vunpack.c.l.b16 %v3358
      %v3435 = vunpack.c.h.b16 %v3358
      %v3436 = vunpack.c.l.b16 %v3359
      %v3437 = vunpack.c.h.b16 %v3359
      %v3438 = vunpack.c.l.b16 %v3360
      %v3439 = vunpack.c.h.b16 %v3360
      %v3440 = vunpack.c.l.b16 %v3361
      %v3441 = vunpack.c.h.b16 %v3361
      %v3442 = vunpack.c.l.b16 %v3362
      %v3443 = vunpack.c.h.b16 %v3362
      %v3444 = vunpack.c.l.b16 %v3363
      %v3445 = vunpack.c.h.b16 %v3363
      %v3446 = vunpack.c.l.b16 %v3364
      %v3447 = vunpack.c.h.b16 %v3364
      %v3448 = vunpack.c.l.b16 %v3365
      %v3449 = vunpack.c.h.b16 %v3365
      %v3450 = vunpack.c.l.b16 %v3366
      %v3451 = vunpack.c.h.b16 %v3366
      %v3452 = vunpack.c.l.b16 %v3367
      %v3453 = vunpack.c.h.b16 %v3367
      %v3454 = vunpack.c.l.b16 %v3368
      %v3455 = vunpack.c.h.b16 %v3368
      %v3456 = vunpack.c.l.b16 %v3369
      %v3457 = vunpack.c.h.b16 %v3369
      %v3458 = vunpack.c.l.b16 %v3370
      %v3459 = vunpack.c.h.b16 %v3370
      %v3460 = vunpack.c.l.b16 %v3371
      %v3461 = vunpack.c.h.b16 %v3371
      %v3462 = vunpack.c.l.b16 %v3372
      %v3463 = vunpack.c.h.b16 %v3372
      %v3464 = vunpack.c.l.b16 %v3373
      %v3465 = vunpack.c.h.b16 %v3373
      %v3466 = vunpack.c.l.b16 %v3374
      %v3467 = vunpack.c.h.b16 %v3374
      %v3468 = vunpack.c.l.b16 %v3375
      %v3469 = vunpack.c.h.b16 %v3375
      %v3470 = vunpack.c.l.b16 %v3376
      %v3471 = vunpack.c.h.b16 %v3376
      %v3472 = vunpack.c.l.b16 %v3377
      %v3473 = vunpack.c.h.b16 %v3377
      %v3474 = vpack.c.b16 %v3414, %v3410
      %v3475 = vpack.c.b16 %v3415, %v3411
      %v3476 = vpack.c.b16 %v3416, %v3412
      %v3477 = vpack.c.b16 %v3417, %v3413
      %v3478 = vpack.c.b16 %v3422, %v3418
      %v3479 = vpack.c.b16 %v3423, %v3419
      %v3480 = vpack.c.b16 %v3424, %v3420
      %v3481 = vpack.c.b16 %v3425, %v3421
      %v3482 = vpack.c.b16 %v3430, %v3426
      %v3483 = vpack.c.b16 %v3431, %v3427
      %v3484 = vpack.c.b16 %v3432, %v3428
      %v3485 = vpack.c.b16 %v3433, %v3429
      %v3486 = vpack.c.b16 %v3438, %v3434
      %v3487 = vpack.c.b16 %v3439, %v3435
      %v3488 = vpack.c.b16 %v3440, %v3436
      %v3489 = vpack.c.b16 %v3441, %v3437
      %v3490 = vpack.c.b16 %v3446, %v3442
      %v3491 = vpack.c.b16 %v3447, %v3443
      %v3492 = vpack.c.b16 %v3448, %v3444
      %v3493 = vpack.c.b16 %v3449, %v3445
      %v3494 = vpack.c.b16 %v3454, %v3450
      %v3495 = vpack.c.b16 %v3455, %v3451
      %v3496 = vpack.c.b16 %v3456, %v3452
      %v3497 = vpack.c.b16 %v3457, %v3453
      %v3498 = vpack.c.b16 %v3462, %v3458
      %v3499 = vpack.c.b16 %v3463, %v3459
      %v3500 = vpack.c.b16 %v3464, %v3460
      %v3501 = vpack.c.b16 %v3465, %v3461
      %v3502 = vpack.c.b16 %v3470, %v3466
      %v3503 = vpack.c.b16 %v3471, %v3467
      %v3504 = vpack.c.b16 %v3472, %v3468
      %v3505 = vpack.c.b16 %v3473, %v3469
      %3538 = vmatprep.subr.bf16.mxu0 %v3475
      %3539 = vmatpush1.bf16.msra.mxu0 %v3474
      %3540 = vmatprep.subr.bf16.mxu0 %v3479
      %3541 = vmatpush1.bf16.msra.mxu0 %v3478
      %3542 = vmatprep.subr.bf16.mxu0 %v3483
      %3543 = vmatpush1.bf16.msra.mxu0 %v3482
      %3544 = vmatprep.subr.bf16.mxu0 %v3487
      %3545 = vmatpush1.bf16.msra.mxu0 %v3486
      %3546 = vmatprep.subr.bf16.mxu0 %v3491
      %3547 = vmatpush1.bf16.msra.mxu0 %v3490
      %3548 = vmatprep.subr.bf16.mxu0 %v3495
      %3549 = vmatpush1.bf16.msra.mxu0 %v3494
      %3550 = vmatprep.subr.bf16.mxu0 %v3499
      %3551 = vmatpush1.bf16.msra.mxu0 %v3498
      %3552 = vmatprep.subr.bf16.mxu0 %v3503
      %3553 = vmatpush1.bf16.msra.mxu0 %v3502
      %3554 = vmatprep.subr.bf16.mxu0 0
      %3555 = vmatpush1.bf16.msra.mxu0 0
      %3556 = vmatprep.subr.bf16.mxu0 0
      %3557 = vmatpush1.bf16.msra.mxu0 0
      %3558 = vmatprep.subr.bf16.mxu0 0
      %3559 = vmatpush1.bf16.msra.mxu0 0
      %3560 = vmatprep.subr.bf16.mxu0 0
      %3561 = vmatpush1.bf16.msra.mxu0 0
      %3562 = vmatprep.subr.bf16.mxu0 0
      %3563 = vmatpush1.bf16.msra.mxu0 0
      %3564 = vmatprep.subr.bf16.mxu0 0
      %3565 = vmatpush1.bf16.msra.mxu0 0
      %3566 = vmatprep.subr.bf16.mxu0 0
      %3567 = vmatpush1.bf16.msra.mxu0 0
      %3568 = vmatprep.subr.bf16.mxu0 0
      %3569 = vmatpush1.bf16.msra.mxu0 0
      %3570 = vmatprep.mubr.bf16.mxu0 0
      %3571 = vmatmul.mubr.bf16.gmra.mrb[0].mxu0 %v3343
      %v3572 = vpop.f32.mrb[0].mxu0
      %v3573 = vadd.f32 0.0, %v3572
      %v3574 = vpop.f32.mrb[0].mxu0
      %v3575 = vadd.f32 0.0, %v3574
      %v3576 = vpop.f32.mrb[0].mxu0
      %v3577 = vadd.f32 0.0, %v3576
      %v3578 = vpop.f32.mrb[0].mxu0
      %v3579 = vadd.f32 0.0, %v3578
      %3580 = vdwg.mxu0
      %3581 = vmatprep.subr.bf16.mxu0 %v3477
      %3582 = vmatpush1.bf16.msra.mxu0 %v3476
      %3583 = vmatprep.subr.bf16.mxu0 %v3481
      %3584 = vmatpush1.bf16.msra.mxu0 %v3480
      %3585 = vmatprep.subr.bf16.mxu0 %v3485
      %3586 = vmatpush1.bf16.msra.mxu0 %v3484
      %3587 = vmatprep.subr.bf16.mxu0 %v3489
      %3588 = vmatpush1.bf16.msra.mxu0 %v3488
      %3589 = vmatprep.subr.bf16.mxu0 %v3493
      %3590 = vmatpush1.bf16.msra.mxu0 %v3492
      %3591 = vmatprep.subr.bf16.mxu0 %v3497
      %3592 = vmatpush1.bf16.msra.mxu0 %v3496
      %3593 = vmatprep.subr.bf16.mxu0 %v3501
      %3594 = vmatpush1.bf16.msra.mxu0 %v3500
      %3595 = vmatprep.subr.bf16.mxu0 %v3505
      %3596 = vmatpush1.bf16.msra.mxu0 %v3504
      %3597 = vmatprep.subr.bf16.mxu0 0
      %3598 = vmatpush1.bf16.msra.mxu0 0
      %3599 = vmatprep.subr.bf16.mxu0 0
      %3600 = vmatpush1.bf16.msra.mxu0 0
      %3601 = vmatprep.subr.bf16.mxu0 0
      %3602 = vmatpush1.bf16.msra.mxu0 0
      %3603 = vmatprep.subr.bf16.mxu0 0
      %3604 = vmatpush1.bf16.msra.mxu0 0
      %3605 = vmatprep.subr.bf16.mxu0 0
      %3606 = vmatpush1.bf16.msra.mxu0 0
      %3607 = vmatprep.subr.bf16.mxu0 0
      %3608 = vmatpush1.bf16.msra.mxu0 0
      %3609 = vmatprep.subr.bf16.mxu0 0
      %3610 = vmatpush1.bf16.msra.mxu0 0
      %3611 = vmatprep.subr.bf16.mxu0 0
      %3612 = vmatpush1.bf16.msra.mxu0 0
      %3613 = vmatprep.mubr.bf16.mxu0 0
      %3614 = vmatmul.mubr.bf16.gmra.mrb[0].mxu0 %v3343
      %v3615 = vpop.f32.mrb[0].mxu0
      %v3616 = vadd.f32 0.0, %v3615
      %v3617 = vpop.f32.mrb[0].mxu0
      %v3618 = vadd.f32 0.0, %v3617
      %v3619 = vpop.f32.mrb[0].mxu0
      %v3620 = vadd.f32 0.0, %v3619
      %v3621 = vpop.f32.mrb[0].mxu0
      %v3622 = vadd.f32 0.0, %v3621
      %3623 = vdwg.mxu0
      %v3624 = vadd.f32 %v977, %v3573
      %v3625 = vadd.f32 %v978, %v3575
      %v3626 = vadd.f32 %v979, %v3616
      %v3627 = vadd.f32 %v980, %v3618
      %v3628 = vadd.f32 %v981, %v3577
      %v3629 = vadd.f32 %v982, %v3579
      %v3630 = vadd.f32 %v983, %v3620
      %v3631 = vadd.f32 %v984, %v3622
      %v3632 = vxor.u32 %v3624, 2147483648
      %v3633 = vxor.u32 %v3625, 2147483648
      %v3634 = vxor.u32 %v3626, 2147483648
      %v3635 = vxor.u32 %v3628, 2147483648
      %v3636 = vxor.u32 %v3629, 2147483648
      %v3637 = vxor.u32 %v3630, 2147483648
      %v3638 = vmul.f32 %v3632, 1.442695
      %v3639 = vpow.pop %v3638
      %v3640 = vmul.f32 %v3633, 1.442695
      %v3641 = vpow.pop %v3640
      %v3642 = vmul.f32 %v3634, 1.442695
      %v3643 = vpow.pop %v3642
      %v3644 = vmul.f32 %v3635, 1.442695
      %v3645 = vpow.pop %v3644
      %v3646 = vmul.f32 %v3636, 1.442695
      %v3647 = vpow.pop %v3646
      %v3648 = vmul.f32 %v3637, 1.442695
      %v3649 = vpow.pop %v3648
      %v3650 = vadd.f32 %v3639, 1.0
      %v3651 = vadd.f32 %v3641, 1.0
      %v3652 = vadd.f32 %v3643, 1.0
      %v3653 = vadd.f32 %v3645, 1.0
      %v3654 = vadd.f32 %v3647, 1.0
      %v3655 = vadd.f32 %v3649, 1.0
      %v3656 = vrcp.pop %v3650
      %v3657 = vmul.f32 1.0, %v3656
      %v3658 = vrcp.pop %v3651
      %v3659 = vmul.f32 1.0, %v3658
      %v3660 = vrcp.pop %v3652
      %v3661 = vmul.f32 1.0, %v3660
      %v3662 = vrcp.pop %v3653
      %v3663 = vmul.f32 1.0, %v3662
      %v3664 = vrcp.pop %v3654
      %v3665 = vmul.f32 1.0, %v3664
      %v3666 = vrcp.pop %v3655
      %v3667 = vmul.f32 1.0, %v3666
      %v3668 = vtanh.pop %v3627
      %v3669 = vtanh.pop %v3631
      %v3670 = vmul.f32 %v3659, %v3337
      %v3671 = vmul.f32 %v3665, %v3338
      %v3672 = vmul.f32 %v3657, %v3668
      %v3673 = vmul.f32 %v3663, %v3669
      %v3674 = vadd.f32 %v3670, %v3672
      %v3675 = vadd.f32 %v3671, %v3673
      %v3676 = vtanh.pop %v3674
      %v3677 = vtanh.pop %v3675
      %v3678 = vmul.f32 %v3661, %v3676
      %v3679 = vmul.f32 %v3667, %v3677
      %v3680 = vpack.c.bf16 %v3679, %v3678
      %s3681 = scalar_lea.vmem [#allocation5], 56
      %3682 = vst [vmem:[%s3681] sm:$0xff] %v3680
      %3683 = vst [vmem:[#allocation2] sm:$0xff] %v3680
      %3684 = vst [vmem:[#allocation3] sm:$0xff] %v3674
      %3685 = vst [vmem:[#allocation3 + $0x8] sm:$0xff] %v3675
      %v3686 = vld [vmem:[#allocation5] sm:$0xff]
      %v3687 = vld [vmem:[#allocation5 + $0x8] sm:$0xff]
      %v3688 = vld [vmem:[#allocation5 + $0x10] sm:$0xff]
      %v3689 = vld [vmem:[#allocation5 + $0x18] sm:$0xff]
      %v3690 = vld [vmem:[#allocation5 + $0x20] sm:$0xff]
      %v3691 = vld [vmem:[#allocation5 + $0x28] sm:$0xff]
      %v3692 = vld [vmem:[#allocation5 + $0x30] sm:$0xff]
      %v3693 = vld [vmem:[#allocation5 + $0x38] sm:$0xff]
      %s3694 = scalar_lea.vmem %s3, 256
      %v3695 = vld [vmem:[%s3694] sm:$0xff]
      %v3696 = vld [vmem:[%s3694 + $0x8] sm:$0xff]
      %v3697 = vld [vmem:[%s3694 + $0x10] sm:$0xff]
      %v3698 = vld [vmem:[%s3694 + $0x18] sm:$0xff]
      %v3699 = vld [vmem:[%s3694 + $0x20] sm:$0xff]
      %v3700 = vld [vmem:[%s3694 + $0x28] sm:$0xff]
      %v3701 = vld [vmem:[%s3694 + $0x30] sm:$0xff]
      %v3702 = vld [vmem:[%s3694 + $0x38] sm:$0xff]
      %v3703 = vld [vmem:[%s3694 + $0x40] sm:$0xff]
      %v3704 = vld [vmem:[%s3694 + $0x48] sm:$0xff]
      %v3705 = vld [vmem:[%s3694 + $0x50] sm:$0xff]
      %v3706 = vld [vmem:[%s3694 + $0x58] sm:$0xff]
      %v3707 = vld [vmem:[%s3694 + $0x60] sm:$0xff]
      %v3708 = vld [vmem:[%s3694 + $0x68] sm:$0xff]
      %v3709 = vld [vmem:[%s3694 + $0x70] sm:$0xff]
      %v3710 = vld [vmem:[%s3694 + $0x78] sm:$0xff]
      %v3711 = vld [vmem:[%s3694 + $0x80] sm:$0xff]
      %v3712 = vld [vmem:[%s3694 + $0x88] sm:$0xff]
      %v3713 = vld [vmem:[%s3694 + $0x90] sm:$0xff]
      %v3714 = vld [vmem:[%s3694 + $0x98] sm:$0xff]
      %v3715 = vld [vmem:[%s3694 + $0xa0] sm:$0xff]
      %v3716 = vld [vmem:[%s3694 + $0xa8] sm:$0xff]
      %v3717 = vld [vmem:[%s3694 + $0xb0] sm:$0xff]
      %v3718 = vld [vmem:[%s3694 + $0xb8] sm:$0xff]
      %v3719 = vld [vmem:[%s3694 + $0xc0] sm:$0xff]
      %v3720 = vld [vmem:[%s3694 + $0xc8] sm:$0xff]
      %v3721 = vld [vmem:[%s3694 + $0xd0] sm:$0xff]
      %v3722 = vld [vmem:[%s3694 + $0xd8] sm:$0xff]
      %v3723 = vld [vmem:[%s3694 + $0xe0] sm:$0xff]
      %v3724 = vld [vmem:[%s3694 + $0xe8] sm:$0xff]
      %v3725 = vld [vmem:[%s3694 + $0xf0] sm:$0xff]
      %v3726 = vld [vmem:[%s3694 + $0xf8] sm:$0xff]
      %v3759 = vunpack.c.l.b16 %v3695
      %v3760 = vunpack.c.h.b16 %v3695
      %v3761 = vunpack.c.l.b16 %v3696
      %v3762 = vunpack.c.h.b16 %v3696
      %v3763 = vunpack.c.l.b16 %v3697
      %v3764 = vunpack.c.h.b16 %v3697
      %v3765 = vunpack.c.l.b16 %v3698
      %v3766 = vunpack.c.h.b16 %v3698
      %v3767 = vunpack.c.l.b16 %v3699
      %v3768 = vunpack.c.h.b16 %v3699
      %v3769 = vunpack.c.l.b16 %v3700
      %v3770 = vunpack.c.h.b16 %v3700
      %v3771 = vunpack.c.l.b16 %v3701
      %v3772 = vunpack.c.h.b16 %v3701
      %v3773 = vunpack.c.l.b16 %v3702
      %v3774 = vunpack.c.h.b16 %v3702
      %v3775 = vunpack.c.l.b16 %v3703
      %v3776 = vunpack.c.h.b16 %v3703
      %v3777 = vunpack.c.l.b16 %v3704
      %v3778 = vunpack.c.h.b16 %v3704
      %v3779 = vunpack.c.l.b16 %v3705
      %v3780 = vunpack.c.h.b16 %v3705
      %v3781 = vunpack.c.l.b16 %v3706
      %v3782 = vunpack.c.h.b16 %v3706
      %v3783 = vunpack.c.l.b16 %v3707
      %v3784 = vunpack.c.h.b16 %v3707
      %v3785 = vunpack.c.l.b16 %v3708
      %v3786 = vunpack.c.h.b16 %v3708
      %v3787 = vunpack.c.l.b16 %v3709
      %v3788 = vunpack.c.h.b16 %v3709
      %v3789 = vunpack.c.l.b16 %v3710
      %v3790 = vunpack.c.h.b16 %v3710
      %v3791 = vunpack.c.l.b16 %v3711
      %v3792 = vunpack.c.h.b16 %v3711
      %v3793 = vunpack.c.l.b16 %v3712
      %v3794 = vunpack.c.h.b16 %v3712
      %v3795 = vunpack.c.l.b16 %v3713
      %v3796 = vunpack.c.h.b16 %v3713
      %v3797 = vunpack.c.l.b16 %v3714
      %v3798 = vunpack.c.h.b16 %v3714
      %v3799 = vunpack.c.l.b16 %v3715
      %v3800 = vunpack.c.h.b16 %v3715
      %v3801 = vunpack.c.l.b16 %v3716
      %v3802 = vunpack.c.h.b16 %v3716
      %v3803 = vunpack.c.l.b16 %v3717
      %v3804 = vunpack.c.h.b16 %v3717
      %v3805 = vunpack.c.l.b16 %v3718
      %v3806 = vunpack.c.h.b16 %v3718
      %v3807 = vunpack.c.l.b16 %v3719
      %v3808 = vunpack.c.h.b16 %v3719
      %v3809 = vunpack.c.l.b16 %v3720
      %v3810 = vunpack.c.h.b16 %v3720
      %v3811 = vunpack.c.l.b16 %v3721
      %v3812 = vunpack.c.h.b16 %v3721
      %v3813 = vunpack.c.l.b16 %v3722
      %v3814 = vunpack.c.h.b16 %v3722
      %v3815 = vunpack.c.l.b16 %v3723
      %v3816 = vunpack.c.h.b16 %v3723
      %v3817 = vunpack.c.l.b16 %v3724
      %v3818 = vunpack.c.h.b16 %v3724
      %v3819 = vunpack.c.l.b16 %v3725
      %v3820 = vunpack.c.h.b16 %v3725
      %v3821 = vunpack.c.l.b16 %v3726
      %v3822 = vunpack.c.h.b16 %v3726
      %v3823 = vpack.c.b16 %v3763, %v3759
      %v3824 = vpack.c.b16 %v3764, %v3760
      %v3825 = vpack.c.b16 %v3765, %v3761
      %v3826 = vpack.c.b16 %v3766, %v3762
      %v3827 = vpack.c.b16 %v3771, %v3767
      %v3828 = vpack.c.b16 %v3772, %v3768
      %v3829 = vpack.c.b16 %v3773, %v3769
      %v3830 = vpack.c.b16 %v3774, %v3770
      %v3831 = vpack.c.b16 %v3779, %v3775
      %v3832 = vpack.c.b16 %v3780, %v3776
      %v3833 = vpack.c.b16 %v3781, %v3777
      %v3834 = vpack.c.b16 %v3782, %v3778
      %v3835 = vpack.c.b16 %v3787, %v3783
      %v3836 = vpack.c.b16 %v3788, %v3784
      %v3837 = vpack.c.b16 %v3789, %v3785
      %v3838 = vpack.c.b16 %v3790, %v3786
      %v3839 = vpack.c.b16 %v3795, %v3791
      %v3840 = vpack.c.b16 %v3796, %v3792
      %v3841 = vpack.c.b16 %v3797, %v3793
      %v3842 = vpack.c.b16 %v3798, %v3794
      %v3843 = vpack.c.b16 %v3803, %v3799
      %v3844 = vpack.c.b16 %v3804, %v3800
      %v3845 = vpack.c.b16 %v3805, %v3801
      %v3846 = vpack.c.b16 %v3806, %v3802
      %v3847 = vpack.c.b16 %v3811, %v3807
      %v3848 = vpack.c.b16 %v3812, %v3808
      %v3849 = vpack.c.b16 %v3813, %v3809
      %v3850 = vpack.c.b16 %v3814, %v3810
      %v3851 = vpack.c.b16 %v3819, %v3815
      %v3852 = vpack.c.b16 %v3820, %v3816
      %v3853 = vpack.c.b16 %v3821, %v3817
      %v3854 = vpack.c.b16 %v3822, %v3818
      %3887 = vmatprep.subr.bf16.mxu0 %v3824
      %3888 = vmatpush1.bf16.msra.mxu0 %v3823
      %3889 = vmatprep.subr.bf16.mxu0 %v3828
      %3890 = vmatpush1.bf16.msra.mxu0 %v3827
      %3891 = vmatprep.subr.bf16.mxu0 %v3832
      %3892 = vmatpush1.bf16.msra.mxu0 %v3831
      %3893 = vmatprep.subr.bf16.mxu0 %v3836
      %3894 = vmatpush1.bf16.msra.mxu0 %v3835
      %3895 = vmatprep.subr.bf16.mxu0 %v3840
      %3896 = vmatpush1.bf16.msra.mxu0 %v3839
      %3897 = vmatprep.subr.bf16.mxu0 %v3844
      %3898 = vmatpush1.bf16.msra.mxu0 %v3843
      %3899 = vmatprep.subr.bf16.mxu0 %v3848
      %3900 = vmatpush1.bf16.msra.mxu0 %v3847
      %3901 = vmatprep.subr.bf16.mxu0 %v3852
      %3902 = vmatpush1.bf16.msra.mxu0 %v3851
      %3903 = vmatprep.subr.bf16.mxu0 0
      %3904 = vmatpush1.bf16.msra.mxu0 0
      %3905 = vmatprep.subr.bf16.mxu0 0
      %3906 = vmatpush1.bf16.msra.mxu0 0
      %3907 = vmatprep.subr.bf16.mxu0 0
      %3908 = vmatpush1.bf16.msra.mxu0 0
      %3909 = vmatprep.subr.bf16.mxu0 0
      %3910 = vmatpush1.bf16.msra.mxu0 0
      %3911 = vmatprep.subr.bf16.mxu0 0
      %3912 = vmatpush1.bf16.msra.mxu0 0
      %3913 = vmatprep.subr.bf16.mxu0 0
      %3914 = vmatpush1.bf16.msra.mxu0 0
      %3915 = vmatprep.subr.bf16.mxu0 0
      %3916 = vmatpush1.bf16.msra.mxu0 0
      %3917 = vmatprep.subr.bf16.mxu0 0
      %3918 = vmatpush1.bf16.msra.mxu0 0
      %3919 = vmatprep.mubr.bf16.mxu0 0
      %3920 = vmatmul.mubr.bf16.gmra.mrb[0].mxu0 %v3686
      %v3921 = vpop.f32.mrb[0].mxu0
      %v3922 = vadd.f32 0.0, %v3921
      %v3923 = vpop.f32.mrb[0].mxu0
      %v3924 = vadd.f32 0.0, %v3923
      %v3925 = vpop.f32.mrb[0].mxu0
      %v3926 = vadd.f32 0.0, %v3925
      %v3927 = vpop.f32.mrb[0].mxu0
      %v3928 = vadd.f32 0.0, %v3927
      %3929 = vmatprep.mubr.bf16.mxu0 0
      %3930 = vmatmul.mubr.bf16.gmra.mrb[0].mxu0 %v3687
      %v3931 = vpop.f32.mrb[0].mxu0
      %v3932 = vadd.f32 0.0, %v3931
      %v3933 = vpop.f32.mrb[0].mxu0
      %v3934 = vadd.f32 0.0, %v3933
      %v3935 = vpop.f32.mrb[0].mxu0
      %v3936 = vadd.f32 0.0, %v3935
      %v3937 = vpop.f32.mrb[0].mxu0
      %v3938 = vadd.f32 0.0, %v3937
      %3939 = vmatprep.mubr.bf16.mxu0 0
      %3940 = vmatmul.mubr.bf16.gmra.mrb[0].mxu0 %v3688
      %v3941 = vpop.f32.mrb[0].mxu0
      %v3942 = vadd.f32 0.0, %v3941
      %v3943 = vpop.f32.mrb[0].mxu0
      %v3944 = vadd.f32 0.0, %v3943
      %v3945 = vpop.f32.mrb[0].mxu0
      %v3946 = vadd.f32 0.0, %v3945
      %v3947 = vpop.f32.mrb[0].mxu0
      %v3948 = vadd.f32 0.0, %v3947
      %3949 = vmatprep.mubr.bf16.mxu0 0
      %3950 = vmatmul.mubr.bf16.gmra.mrb[0].mxu0 %v3689
      %v3951 = vpop.f32.mrb[0].mxu0
      %v3952 = vadd.f32 0.0, %v3951
      %v3953 = vpop.f32.mrb[0].mxu0
      %v3954 = vadd.f32 0.0, %v3953
      %v3955 = vpop.f32.mrb[0].mxu0
      %v3956 = vadd.f32 0.0, %v3955
      %v3957 = vpop.f32.mrb[0].mxu0
      %v3958 = vadd.f32 0.0, %v3957
      %3959 = vmatprep.mubr.bf16.mxu0 0
      %3960 = vmatmul.mubr.bf16.gmra.mrb[0].mxu0 %v3690
      %v3961 = vpop.f32.mrb[0].mxu0
      %v3962 = vadd.f32 0.0, %v3961
      %v3963 = vpop.f32.mrb[0].mxu0
      %v3964 = vadd.f32 0.0, %v3963
      %v3965 = vpop.f32.mrb[0].mxu0
      %v3966 = vadd.f32 0.0, %v3965
      %v3967 = vpop.f32.mrb[0].mxu0
      %v3968 = vadd.f32 0.0, %v3967
      %3969 = vmatprep.mubr.bf16.mxu0 0
      %3970 = vmatmul.mubr.bf16.gmra.mrb[0].mxu0 %v3691
      %v3971 = vpop.f32.mrb[0].mxu0
      %v3972 = vadd.f32 0.0, %v3971
      %v3973 = vpop.f32.mrb[0].mxu0
      %v3974 = vadd.f32 0.0, %v3973
      %v3975 = vpop.f32.mrb[0].mxu0
      %v3976 = vadd.f32 0.0, %v3975
      %v3977 = vpop.f32.mrb[0].mxu0
      %v3978 = vadd.f32 0.0, %v3977
      %3979 = vmatprep.mubr.bf16.mxu0 0
      %3980 = vmatmul.mubr.bf16.gmra.mrb[0].mxu0 %v3692
      %v3981 = vpop.f32.mrb[0].mxu0
      %v3982 = vadd.f32 0.0, %v3981
      %v3983 = vpop.f32.mrb[0].mxu0
      %v3984 = vadd.f32 0.0, %v3983
      %v3985 = vpop.f32.mrb[0].mxu0
      %v3986 = vadd.f32 0.0, %v3985
      %v3987 = vpop.f32.mrb[0].mxu0
      %v3988 = vadd.f32 0.0, %v3987
      %3989 = vmatprep.mubr.bf16.mxu0 0
      %3990 = vmatmul.mubr.bf16.gmra.mrb[0].mxu0 %v3693
      %v3991 = vpop.f32.mrb[0].mxu0
      %v3992 = vadd.f32 0.0, %v3991
      %v3993 = vpop.f32.mrb[0].mxu0
      %v3994 = vadd.f32 0.0, %v3993
      %v3995 = vpop.f32.mrb[0].mxu0
      %v3996 = vadd.f32 0.0, %v3995
      %v3997 = vpop.f32.mrb[0].mxu0
      %v3998 = vadd.f32 0.0, %v3997
      %3999 = vdwg.mxu0
      %4000 = vmatprep.subr.bf16.mxu0 %v3826
      %4001 = vmatpush1.bf16.msra.mxu0 %v3825
      %4002 = vmatprep.subr.bf16.mxu0 %v3830
      %4003 = vmatpush1.bf16.msra.mxu0 %v3829
      %4004 = vmatprep.subr.bf16.mxu0 %v3834
      %4005 = vmatpush1.bf16.msra.mxu0 %v3833
      %4006 = vmatprep.subr.bf16.mxu0 %v3838
      %4007 = vmatpush1.bf16.msra.mxu0 %v3837
      %4008 = vmatprep.subr.bf16.mxu0 %v3842
      %4009 = vmatpush1.bf16.msra.mxu0 %v3841
      %4010 = vmatprep.subr.bf16.mxu0 %v3846
      %4011 = vmatpush1.bf16.msra.mxu0 %v3845
      %4012 = vmatprep.subr.bf16.mxu0 %v3850
      %4013 = vmatpush1.bf16.msra.mxu0 %v3849
      %4014 = vmatprep.subr.bf16.mxu0 %v3854
      %4015 = vmatpush1.bf16.msra.mxu0 %v3853
      %4016 = vmatprep.subr.bf16.mxu0 0
      %4017 = vmatpush1.bf16.msra.mxu0 0
      %4018 = vmatprep.subr.bf16.mxu0 0
      %4019 = vmatpush1.bf16.msra.mxu0 0
      %4020 = vmatprep.subr.bf16.mxu0 0
      %4021 = vmatpush1.bf16.msra.mxu0 0
      %4022 = vmatprep.subr.bf16.mxu0 0
      %4023 = vmatpush1.bf16.msra.mxu0 0
      %4024 = vmatprep.subr.bf16.mxu0 0
      %4025 = vmatpush1.bf16.msra.mxu0 0
      %4026 = vmatprep.subr.bf16.mxu0 0
      %4027 = vmatpush1.bf16.msra.mxu0 0
      %4028 = vmatprep.subr.bf16.mxu0 0
      %4029 = vmatpush1.bf16.msra.mxu0 0
      %4030 = vmatprep.subr.bf16.mxu0 0
      %4031 = vmatpush1.bf16.msra.mxu0 0
      %4032 = vmatprep.mubr.bf16.mxu0 0
      %4033 = vmatmul.mubr.bf16.gmra.mrb[0].mxu0 %v3686
      %v4034 = vpop.f32.mrb[0].mxu0
      %v4035 = vadd.f32 0.0, %v4034
      %v4036 = vpop.f32.mrb[0].mxu0
      %v4037 = vadd.f32 0.0, %v4036
      %v4038 = vpop.f32.mrb[0].mxu0
      %v4039 = vadd.f32 0.0, %v4038
      %v4040 = vpop.f32.mrb[0].mxu0
      %v4041 = vadd.f32 0.0, %v4040
      %4042 = vmatprep.mubr.bf16.mxu0 0
      %4043 = vmatmul.mubr.bf16.gmra.mrb[0].mxu0 %v3687
      %v4044 = vpop.f32.mrb[0].mxu0
      %v4045 = vadd.f32 0.0, %v4044
      %v4046 = vpop.f32.mrb[0].mxu0
      %v4047 = vadd.f32 0.0, %v4046
      %v4048 = vpop.f32.mrb[0].mxu0
      %v4049 = vadd.f32 0.0, %v4048
      %v4050 = vpop.f32.mrb[0].mxu0
      %v4051 = vadd.f32 0.0, %v4050
      %4052 = vmatprep.mubr.bf16.mxu0 0
      %4053 = vmatmul.mubr.bf16.gmra.mrb[0].mxu0 %v3688
      %v4054 = vpop.f32.mrb[0].mxu0
      %v4055 = vadd.f32 0.0, %v4054
      %v4056 = vpop.f32.mrb[0].mxu0
      %v4057 = vadd.f32 0.0, %v4056
      %v4058 = vpop.f32.mrb[0].mxu0
      %v4059 = vadd.f32 0.0, %v4058
      %v4060 = vpop.f32.mrb[0].mxu0
      %v4061 = vadd.f32 0.0, %v4060
      %4062 = vmatprep.mubr.bf16.mxu0 0
      %4063 = vmatmul.mubr.bf16.gmra.mrb[0].mxu0 %v3689
      %v4064 = vpop.f32.mrb[0].mxu0
      %v4065 = vadd.f32 0.0, %v4064
      %v4066 = vpop.f32.mrb[0].mxu0
      %v4067 = vadd.f32 0.0, %v4066
      %v4068 = vpop.f32.mrb[0].mxu0
      %v4069 = vadd.f32 0.0, %v4068
      %v4070 = vpop.f32.mrb[0].mxu0
      %v4071 = vadd.f32 0.0, %v4070
      %4072 = vmatprep.mubr.bf16.mxu0 0
      %4073 = vmatmul.mubr.bf16.gmra.mrb[0].mxu0 %v3690
      %v4074 = vpop.f32.mrb[0].mxu0
      %v4075 = vadd.f32 0.0, %v4074
      %v4076 = vpop.f32.mrb[0].mxu0
      %v4077 = vadd.f32 0.0, %v4076
      %v4078 = vpop.f32.mrb[0].mxu0
      %v4079 = vadd.f32 0.0, %v4078
      %v4080 = vpop.f32.mrb[0].mxu0
      %v4081 = vadd.f32 0.0, %v4080
      %4082 = vmatprep.mubr.bf16.mxu0 0
      %4083 = vmatmul.mubr.bf16.gmra.mrb[0].mxu0 %v3691
      %v4084 = vpop.f32.mrb[0].mxu0
      %v4085 = vadd.f32 0.0, %v4084
      %v4086 = vpop.f32.mrb[0].mxu0
      %v4087 = vadd.f32 0.0, %v4086
      %v4088 = vpop.f32.mrb[0].mxu0
      %v4089 = vadd.f32 0.0, %v4088
      %v4090 = vpop.f32.mrb[0].mxu0
      %v4091 = vadd.f32 0.0, %v4090
      %4092 = vmatprep.mubr.bf16.mxu0 0
      %4093 = vmatmul.mubr.bf16.gmra.mrb[0].mxu0 %v3692
      %v4094 = vpop.f32.mrb[0].mxu0
      %v4095 = vadd.f32 0.0, %v4094
      %v4096 = vpop.f32.mrb[0].mxu0
      %v4097 = vadd.f32 0.0, %v4096
      %v4098 = vpop.f32.mrb[0].mxu0
      %v4099 = vadd.f32 0.0, %v4098
      %v4100 = vpop.f32.mrb[0].mxu0
      %v4101 = vadd.f32 0.0, %v4100
      %4102 = vmatprep.mubr.bf16.mxu0 0
      %4103 = vmatmul.mubr.bf16.gmra.mrb[0].mxu0 %v3693
      %v4104 = vpop.f32.mrb[0].mxu0
      %v4105 = vadd.f32 0.0, %v4104
      %v4106 = vpop.f32.mrb[0].mxu0
      %v4107 = vadd.f32 0.0, %v4106
      %v4108 = vpop.f32.mrb[0].mxu0
      %v4109 = vadd.f32 0.0, %v4108
      %v4110 = vpop.f32.mrb[0].mxu0
      %v4111 = vadd.f32 0.0, %v4110
      %4112 = vdwg.mxu0
      %s4113 = scalar_lea.vmem %s5, 4
      %v4114 = vld [vmem:[%s4113] sm:$0xf]
      %v4116 = vlaneseq
      %v4117 = vshrl.u32 %v4116, 7
      %v4118 = vsub.s32 0, %v4117
      %v4119 = vrot.slane %v4114, %v4118
      %v4120 = vlaneseq
      %v4121 = vshrl.u32 %v4120, 7
      %v4122 = vsub.s32 1, %v4121
      %v4123 = vrot.slane %v4114, %v4122
      %v4124 = vlaneseq
      %v4125 = vshrl.u32 %v4124, 7
      %v4126 = vsub.s32 2, %v4125
      %v4127 = vrot.slane %v4114, %v4126
      %v4128 = vlaneseq
      %v4129 = vshrl.u32 %v4128, 7
      %v4130 = vsub.s32 3, %v4129
      %v4131 = vrot.slane %v4114, %v4130
      %v4136 = vadd.f32 %v3922, %v4119
      %v4137 = vadd.f32 %v3924, %v4123
      %v4138 = vadd.f32 %v4035, %v4127
      %v4139 = vadd.f32 %v4037, %v4131
      %v4140 = vadd.f32 %v3926, %v4119
      %v4141 = vadd.f32 %v3928, %v4123
      %v4142 = vadd.f32 %v4039, %v4127
      %v4143 = vadd.f32 %v4041, %v4131
      %v4144 = vadd.f32 %v3932, %v4119
      %v4145 = vadd.f32 %v3934, %v4123
      %v4146 = vadd.f32 %v4045, %v4127
      %v4147 = vadd.f32 %v4047, %v4131
      %v4148 = vadd.f32 %v3936, %v4119
      %v4149 = vadd.f32 %v3938, %v4123
      %v4150 = vadd.f32 %v4049, %v4127
      %v4151 = vadd.f32 %v4051, %v4131
      %v4152 = vadd.f32 %v3942, %v4119
      %v4153 = vadd.f32 %v3944, %v4123
      %v4154 = vadd.f32 %v4055, %v4127
      %v4155 = vadd.f32 %v4057, %v4131
      %v4156 = vadd.f32 %v3946, %v4119
      %v4157 = vadd.f32 %v3948, %v4123
      %v4158 = vadd.f32 %v4059, %v4127
      %v4159 = vadd.f32 %v4061, %v4131
      %v4160 = vadd.f32 %v3952, %v4119
      %v4161 = vadd.f32 %v3954, %v4123
      %v4162 = vadd.f32 %v4065, %v4127
      %v4163 = vadd.f32 %v4067, %v4131
      %v4164 = vadd.f32 %v3956, %v4119
      %v4165 = vadd.f32 %v3958, %v4123
      %v4166 = vadd.f32 %v4069, %v4127
      %v4167 = vadd.f32 %v4071, %v4131
      %v4168 = vadd.f32 %v3962, %v4119
      %v4169 = vadd.f32 %v3964, %v4123
      %v4170 = vadd.f32 %v4075, %v4127
      %v4171 = vadd.f32 %v4077, %v4131
      %v4172 = vadd.f32 %v3966, %v4119
      %v4173 = vadd.f32 %v3968, %v4123
      %v4174 = vadd.f32 %v4079, %v4127
      %v4175 = vadd.f32 %v4081, %v4131
      %v4176 = vadd.f32 %v3972, %v4119
      %v4177 = vadd.f32 %v3974, %v4123
      %v4178 = vadd.f32 %v4085, %v4127
      %v4179 = vadd.f32 %v4087, %v4131
      %v4180 = vadd.f32 %v3976, %v4119
      %v4181 = vadd.f32 %v3978, %v4123
      %v4182 = vadd.f32 %v4089, %v4127
      %v4183 = vadd.f32 %v4091, %v4131
      %v4184 = vadd.f32 %v3982, %v4119
      %v4185 = vadd.f32 %v3984, %v4123
      %v4186 = vadd.f32 %v4095, %v4127
      %v4187 = vadd.f32 %v4097, %v4131
      %v4188 = vadd.f32 %v3986, %v4119
      %v4189 = vadd.f32 %v3988, %v4123
      %v4190 = vadd.f32 %v4099, %v4127
      %v4191 = vadd.f32 %v4101, %v4131
      %v4192 = vadd.f32 %v3992, %v4119
      %v4193 = vadd.f32 %v3994, %v4123
      %v4194 = vadd.f32 %v4105, %v4127
      %v4195 = vadd.f32 %v4107, %v4131
      %v4196 = vadd.f32 %v3996, %v4119
      %v4197 = vadd.f32 %v3998, %v4123
      %v4198 = vadd.f32 %v4109, %v4127
      %v4199 = vadd.f32 %v4111, %v4131
      %s4200 = scalar_lea.vmem [#allocation2], 8
      %v4201 = vld [vmem:[%s4200] sm:$0xff]
      %s4202 = scalar_lea.vmem [#allocation3], 16
      %v4203 = vld [vmem:[%s4202] sm:$0xff]
      %v4204 = vld [vmem:[%s4202 + $0x8] sm:$0xff]
      %s4205 = scalar_lea.vmem %s4, 256
      %v4206 = vld [vmem:[%s4205] sm:$0xff]
      %v4207 = vld [vmem:[%s4205 + $0x8] sm:$0xff]
      %v4208 = vld [vmem:[%s4205 + $0x10] sm:$0xff]
      %v4209 = vld [vmem:[%s4205 + $0x18] sm:$0xff]
      %v4210 = vld [vmem:[%s4205 + $0x20] sm:$0xff]
      %v4211 = vld [vmem:[%s4205 + $0x28] sm:$0xff]
      %v4212 = vld [vmem:[%s4205 + $0x30] sm:$0xff]
      %v4213 = vld [vmem:[%s4205 + $0x38] sm:$0xff]
      %v4214 = vld [vmem:[%s4205 + $0x40] sm:$0xff]
      %v4215 = vld [vmem:[%s4205 + $0x48] sm:$0xff]
      %v4216 = vld [vmem:[%s4205 + $0x50] sm:$0xff]
      %v4217 = vld [vmem:[%s4205 + $0x58] sm:$0xff]
      %v4218 = vld [vmem:[%s4205 + $0x60] sm:$0xff]
      %v4219 = vld [vmem:[%s4205 + $0x68] sm:$0xff]
      %v4220 = vld [vmem:[%s4205 + $0x70] sm:$0xff]
      %v4221 = vld [vmem:[%s4205 + $0x78] sm:$0xff]
      %v4222 = vld [vmem:[%s4205 + $0x80] sm:$0xff]
      %v4223 = vld [vmem:[%s4205 + $0x88] sm:$0xff]
      %v4224 = vld [vmem:[%s4205 + $0x90] sm:$0xff]
      %v4225 = vld [vmem:[%s4205 + $0x98] sm:$0xff]
      %v4226 = vld [vmem:[%s4205 + $0xa0] sm:$0xff]
      %v4227 = vld [vmem:[%s4205 + $0xa8] sm:$0xff]
      %v4228 = vld [vmem:[%s4205 + $0xb0] sm:$0xff]
      %v4229 = vld [vmem:[%s4205 + $0xb8] sm:$0xff]
      %v4230 = vld [vmem:[%s4205 + $0xc0] sm:$0xff]
      %v4231 = vld [vmem:[%s4205 + $0xc8] sm:$0xff]
      %v4232 = vld [vmem:[%s4205 + $0xd0] sm:$0xff]
      %v4233 = vld [vmem:[%s4205 + $0xd8] sm:$0xff]
      %v4234 = vld [vmem:[%s4205 + $0xe0] sm:$0xff]
      %v4235 = vld [vmem:[%s4205 + $0xe8] sm:$0xff]
      %v4236 = vld [vmem:[%s4205 + $0xf0] sm:$0xff]
      %v4237 = vld [vmem:[%s4205 + $0xf8] sm:$0xff]
      %v4270 = vunpack.c.l.b16 %v4206
      %v4271 = vunpack.c.h.b16 %v4206
      %v4272 = vunpack.c.l.b16 %v4207
      %v4273 = vunpack.c.h.b16 %v4207
      %v4274 = vunpack.c.l.b16 %v4208
      %v4275 = vunpack.c.h.b16 %v4208
      %v4276 = vunpack.c.l.b16 %v4209
      %v4277 = vunpack.c.h.b16 %v4209
      %v4278 = vunpack.c.l.b16 %v4210
      %v4279 = vunpack.c.h.b16 %v4210
      %v4280 = vunpack.c.l.b16 %v4211
      %v4281 = vunpack.c.h.b16 %v4211
      %v4282 = vunpack.c.l.b16 %v4212
      %v4283 = vunpack.c.h.b16 %v4212
      %v4284 = vunpack.c.l.b16 %v4213
      %v4285 = vunpack.c.h.b16 %v4213
      %v4286 = vunpack.c.l.b16 %v4214
      %v4287 = vunpack.c.h.b16 %v4214
      %v4288 = vunpack.c.l.b16 %v4215
      %v4289 = vunpack.c.h.b16 %v4215
      %v4290 = vunpack.c.l.b16 %v4216
      %v4291 = vunpack.c.h.b16 %v4216
      %v4292 = vunpack.c.l.b16 %v4217
      %v4293 = vunpack.c.h.b16 %v4217
      %v4294 = vunpack.c.l.b16 %v4218
      %v4295 = vunpack.c.h.b16 %v4218
      %v4296 = vunpack.c.l.b16 %v4219
      %v4297 = vunpack.c.h.b16 %v4219
      %v4298 = vunpack.c.l.b16 %v4220
      %v4299 = vunpack.c.h.b16 %v4220
      %v4300 = vunpack.c.l.b16 %v4221
      %v4301 = vunpack.c.h.b16 %v4221
      %v4302 = vunpack.c.l.b16 %v4222
      %v4303 = vunpack.c.h.b16 %v4222
      %v4304 = vunpack.c.l.b16 %v4223
      %v4305 = vunpack.c.h.b16 %v4223
      %v4306 = vunpack.c.l.b16 %v4224
      %v4307 = vunpack.c.h.b16 %v4224
      %v4308 = vunpack.c.l.b16 %v4225
      %v4309 = vunpack.c.h.b16 %v4225
      %v4310 = vunpack.c.l.b16 %v4226
      %v4311 = vunpack.c.h.b16 %v4226
      %v4312 = vunpack.c.l.b16 %v4227
      %v4313 = vunpack.c.h.b16 %v4227
      %v4314 = vunpack.c.l.b16 %v4228
      %v4315 = vunpack.c.h.b16 %v4228
      %v4316 = vunpack.c.l.b16 %v4229
      %v4317 = vunpack.c.h.b16 %v4229
      %v4318 = vunpack.c.l.b16 %v4230
      %v4319 = vunpack.c.h.b16 %v4230
      %v4320 = vunpack.c.l.b16 %v4231
      %v4321 = vunpack.c.h.b16 %v4231
      %v4322 = vunpack.c.l.b16 %v4232
      %v4323 = vunpack.c.h.b16 %v4232
      %v4324 = vunpack.c.l.b16 %v4233
      %v4325 = vunpack.c.h.b16 %v4233
      %v4326 = vunpack.c.l.b16 %v4234
      %v4327 = vunpack.c.h.b16 %v4234
      %v4328 = vunpack.c.l.b16 %v4235
      %v4329 = vunpack.c.h.b16 %v4235
      %v4330 = vunpack.c.l.b16 %v4236
      %v4331 = vunpack.c.h.b16 %v4236
      %v4332 = vunpack.c.l.b16 %v4237
      %v4333 = vunpack.c.h.b16 %v4237
      %v4334 = vpack.c.b16 %v4274, %v4270
      %v4335 = vpack.c.b16 %v4275, %v4271
      %v4336 = vpack.c.b16 %v4276, %v4272
      %v4337 = vpack.c.b16 %v4277, %v4273
      %v4338 = vpack.c.b16 %v4282, %v4278
      %v4339 = vpack.c.b16 %v4283, %v4279
      %v4340 = vpack.c.b16 %v4284, %v4280
      %v4341 = vpack.c.b16 %v4285, %v4281
      %v4342 = vpack.c.b16 %v4290, %v4286
      %v4343 = vpack.c.b16 %v4291, %v4287
      %v4344 = vpack.c.b16 %v4292, %v4288
      %v4345 = vpack.c.b16 %v4293, %v4289
      %v4346 = vpack.c.b16 %v4298, %v4294
      %v4347 = vpack.c.b16 %v4299, %v4295
      %v4348 = vpack.c.b16 %v4300, %v4296
      %v4349 = vpack.c.b16 %v4301, %v4297
      %v4350 = vpack.c.b16 %v4306, %v4302
      %v4351 = vpack.c.b16 %v4307, %v4303
      %v4352 = vpack.c.b16 %v4308, %v4304
      %v4353 = vpack.c.b16 %v4309, %v4305
      %v4354 = vpack.c.b16 %v4314, %v4310
      %v4355 = vpack.c.b16 %v4315, %v4311
      %v4356 = vpack.c.b16 %v4316, %v4312
      %v4357 = vpack.c.b16 %v4317, %v4313
      %v4358 = vpack.c.b16 %v4322, %v4318
      %v4359 = vpack.c.b16 %v4323, %v4319
      %v4360 = vpack.c.b16 %v4324, %v4320
      %v4361 = vpack.c.b16 %v4325, %v4321
      %v4362 = vpack.c.b16 %v4330, %v4326
      %v4363 = vpack.c.b16 %v4331, %v4327
      %v4364 = vpack.c.b16 %v4332, %v4328
      %v4365 = vpack.c.b16 %v4333, %v4329
      %4398 = vmatprep.subr.bf16.mxu0 %v4335
      %4399 = vmatpush1.bf16.msra.mxu0 %v4334
      %4400 = vmatprep.subr.bf16.mxu0 %v4339
      %4401 = vmatpush1.bf16.msra.mxu0 %v4338
      %4402 = vmatprep.subr.bf16.mxu0 %v4343
      %4403 = vmatpush1.bf16.msra.mxu0 %v4342
      %4404 = vmatprep.subr.bf16.mxu0 %v4347
      %4405 = vmatpush1.bf16.msra.mxu0 %v4346
      %4406 = vmatprep.subr.bf16.mxu0 %v4351
      %4407 = vmatpush1.bf16.msra.mxu0 %v4350
      %4408 = vmatprep.subr.bf16.mxu0 %v4355
      %4409 = vmatpush1.bf16.msra.mxu0 %v4354
      %4410 = vmatprep.subr.bf16.mxu0 %v4359
      %4411 = vmatpush1.bf16.msra.mxu0 %v4358
      %4412 = vmatprep.subr.bf16.mxu0 %v4363
      %4413 = vmatpush1.bf16.msra.mxu0 %v4362
      %4414 = vmatprep.subr.bf16.mxu0 0
      %4415 = vmatpush1.bf16.msra.mxu0 0
      %4416 = vmatprep.subr.bf16.mxu0 0
      %4417 = vmatpush1.bf16.msra.mxu0 0
      %4418 = vmatprep.subr.bf16.mxu0 0
      %4419 = vmatpush1.bf16.msra.mxu0 0
      %4420 = vmatprep.subr.bf16.mxu0 0
      %4421 = vmatpush1.bf16.msra.mxu0 0
      %4422 = vmatprep.subr.bf16.mxu0 0
      %4423 = vmatpush1.bf16.msra.mxu0 0
      %4424 = vmatprep.subr.bf16.mxu0 0
      %4425 = vmatpush1.bf16.msra.mxu0 0
      %4426 = vmatprep.subr.bf16.mxu0 0
      %4427 = vmatpush1.bf16.msra.mxu0 0
      %4428 = vmatprep.subr.bf16.mxu0 0
      %4429 = vmatpush1.bf16.msra.mxu0 0
      %4430 = vmatprep.mubr.bf16.mxu0 0
      %4431 = vmatmul.mubr.bf16.gmra.mrb[0].mxu0 %v4201
      %v4432 = vpop.f32.mrb[0].mxu0
      %v4433 = vadd.f32 0.0, %v4432
      %v4434 = vpop.f32.mrb[0].mxu0
      %v4435 = vadd.f32 0.0, %v4434
      %v4436 = vpop.f32.mrb[0].mxu0
      %v4437 = vadd.f32 0.0, %v4436
      %v4438 = vpop.f32.mrb[0].mxu0
      %v4439 = vadd.f32 0.0, %v4438
      %4440 = vdwg.mxu0
      %4441 = vmatprep.subr.bf16.mxu0 %v4337
      %4442 = vmatpush1.bf16.msra.mxu0 %v4336
      %4443 = vmatprep.subr.bf16.mxu0 %v4341
      %4444 = vmatpush1.bf16.msra.mxu0 %v4340
      %4445 = vmatprep.subr.bf16.mxu0 %v4345
      %4446 = vmatpush1.bf16.msra.mxu0 %v4344
      %4447 = vmatprep.subr.bf16.mxu0 %v4349
      %4448 = vmatpush1.bf16.msra.mxu0 %v4348
      %4449 = vmatprep.subr.bf16.mxu0 %v4353
      %4450 = vmatpush1.bf16.msra.mxu0 %v4352
      %4451 = vmatprep.subr.bf16.mxu0 %v4357
      %4452 = vmatpush1.bf16.msra.mxu0 %v4356
      %4453 = vmatprep.subr.bf16.mxu0 %v4361
      %4454 = vmatpush1.bf16.msra.mxu0 %v4360
      %4455 = vmatprep.subr.bf16.mxu0 %v4365
      %4456 = vmatpush1.bf16.msra.mxu0 %v4364
      %4457 = vmatprep.subr.bf16.mxu0 0
      %4458 = vmatpush1.bf16.msra.mxu0 0
      %4459 = vmatprep.subr.bf16.mxu0 0
      %4460 = vmatpush1.bf16.msra.mxu0 0
      %4461 = vmatprep.subr.bf16.mxu0 0
      %4462 = vmatpush1.bf16.msra.mxu0 0
      %4463 = vmatprep.subr.bf16.mxu0 0
      %4464 = vmatpush1.bf16.msra.mxu0 0
      %4465 = vmatprep.subr.bf16.mxu0 0
      %4466 = vmatpush1.bf16.msra.mxu0 0
      %4467 = vmatprep.subr.bf16.mxu0 0
      %4468 = vmatpush1.bf16.msra.mxu0 0
      %4469 = vmatprep.subr.bf16.mxu0 0
      %4470 = vmatpush1.bf16.msra.mxu0 0
      %4471 = vmatprep.subr.bf16.mxu0 0
      %4472 = vmatpush1.bf16.msra.mxu0 0
      %4473 = vmatprep.mubr.bf16.mxu0 0
      %4474 = vmatmul.mubr.bf16.gmra.mrb[0].mxu0 %v4201
      %v4475 = vpop.f32.mrb[0].mxu0
      %v4476 = vadd.f32 0.0, %v4475
      %v4477 = vpop.f32.mrb[0].mxu0
      %v4478 = vadd.f32 0.0, %v4477
      %v4479 = vpop.f32.mrb[0].mxu0
      %v4480 = vadd.f32 0.0, %v4479
      %v4481 = vpop.f32.mrb[0].mxu0
      %v4482 = vadd.f32 0.0, %v4481
      %4483 = vdwg.mxu0
      %v4484 = vadd.f32 %v4136, %v4433
      %v4485 = vadd.f32 %v4137, %v4435
      %v4486 = vadd.f32 %v4138, %v4476
      %v4487 = vadd.f32 %v4139, %v4478
      %v4488 = vadd.f32 %v4140, %v4437
      %v4489 = vadd.f32 %v4141, %v4439
      %v4490 = vadd.f32 %v4142, %v4480
      %v4491 = vadd.f32 %v4143, %v4482
      %v4492 = vxor.u32 %v4484, 2147483648
      %v4493 = vxor.u32 %v4485, 2147483648
      %v4494 = vxor.u32 %v4486, 2147483648
      %v4495 = vxor.u32 %v4488, 2147483648
      %v4496 = vxor.u32 %v4489, 2147483648
      %v4497 = vxor.u32 %v4490, 2147483648
      %v4498 = vmul.f32 %v4492, 1.442695
      %v4499 = vpow.pop %v4498
      %v4500 = vmul.f32 %v4493, 1.442695
      %v4501 = vpow.pop %v4500
      %v4502 = vmul.f32 %v4494, 1.442695
      %v4503 = vpow.pop %v4502
      %v4504 = vmul.f32 %v4495, 1.442695
      %v4505 = vpow.pop %v4504
      %v4506 = vmul.f32 %v4496, 1.442695
      %v4507 = vpow.pop %v4506
      %v4508 = vmul.f32 %v4497, 1.442695
      %v4509 = vpow.pop %v4508
      %v4510 = vadd.f32 %v4499, 1.0
      %v4511 = vadd.f32 %v4501, 1.0
      %v4512 = vadd.f32 %v4503, 1.0
      %v4513 = vadd.f32 %v4505, 1.0
      %v4514 = vadd.f32 %v4507, 1.0
      %v4515 = vadd.f32 %v4509, 1.0
      %v4516 = vrcp.pop %v4510
      %v4517 = vmul.f32 1.0, %v4516
      %v4518 = vrcp.pop %v4511
      %v4519 = vmul.f32 1.0, %v4518
      %v4520 = vrcp.pop %v4512
      %v4521 = vmul.f32 1.0, %v4520
      %v4522 = vrcp.pop %v4513
      %v4523 = vmul.f32 1.0, %v4522
      %v4524 = vrcp.pop %v4514
      %v4525 = vmul.f32 1.0, %v4524
      %v4526 = vrcp.pop %v4515
      %v4527 = vmul.f32 1.0, %v4526
      %v4528 = vtanh.pop %v4487
      %v4529 = vtanh.pop %v4491
      %v4530 = vmul.f32 %v4519, %v4203
      %v4531 = vmul.f32 %v4525, %v4204
      %v4532 = vmul.f32 %v4517, %v4528
      %v4533 = vmul.f32 %v4523, %v4529
      %v4534 = vadd.f32 %v4530, %v4532
      %v4535 = vadd.f32 %v4531, %v4533
      %v4536 = vtanh.pop %v4534
      %v4537 = vtanh.pop %v4535
      %v4538 = vmul.f32 %v4521, %v4536
      %v4539 = vmul.f32 %v4527, %v4537
      %v4540 = vpack.c.bf16 %v4539, %v4538
      %4541 = vst [vmem:[#allocation5] sm:$0xff] %v4540
      %v4542 = vld [vmem:[%s4205] sm:$0xff]
      %v4543 = vld [vmem:[%s4205 + $0x8] sm:$0xff]
      %v4544 = vld [vmem:[%s4205 + $0x10] sm:$0xff]
      %v4545 = vld [vmem:[%s4205 + $0x18] sm:$0xff]
      %v4546 = vld [vmem:[%s4205 + $0x20] sm:$0xff]
      %v4547 = vld [vmem:[%s4205 + $0x28] sm:$0xff]
      %v4548 = vld [vmem:[%s4205 + $0x30] sm:$0xff]
      %v4549 = vld [vmem:[%s4205 + $0x38] sm:$0xff]
      %v4550 = vld [vmem:[%s4205 + $0x40] sm:$0xff]
      %v4551 = vld [vmem:[%s4205 + $0x48] sm:$0xff]
      %v4552 = vld [vmem:[%s4205 + $0x50] sm:$0xff]
      %v4553 = vld [vmem:[%s4205 + $0x58] sm:$0xff]
      %v4554 = vld [vmem:[%s4205 + $0x60] sm:$0xff]
      %v4555 = vld [vmem:[%s4205 + $0x68] sm:$0xff]
      %v4556 = vld [vmem:[%s4205 + $0x70] sm:$0xff]
      %v4557 = vld [vmem:[%s4205 + $0x78] sm:$0xff]
      %v4558 = vld [vmem:[%s4205 + $0x80] sm:$0xff]
      %v4559 = vld [vmem:[%s4205 + $0x88] sm:$0xff]
      %v4560 = vld [vmem:[%s4205 + $0x90] sm:$0xff]
      %v4561 = vld [vmem:[%s4205 + $0x98] sm:$0xff]
      %v4562 = vld [vmem:[%s4205 + $0xa0] sm:$0xff]
      %v4563 = vld [vmem:[%s4205 + $0xa8] sm:$0xff]
      %v4564 = vld [vmem:[%s4205 + $0xb0] sm:$0xff]
      %v4565 = vld [vmem:[%s4205 + $0xb8] sm:$0xff]
      %v4566 = vld [vmem:[%s4205 + $0xc0] sm:$0xff]
      %v4567 = vld [vmem:[%s4205 + $0xc8] sm:$0xff]
      %v4568 = vld [vmem:[%s4205 + $0xd0] sm:$0xff]
      %v4569 = vld [vmem:[%s4205 + $0xd8] sm:$0xff]
      %v4570 = vld [vmem:[%s4205 + $0xe0] sm:$0xff]
      %v4571 = vld [vmem:[%s4205 + $0xe8] sm:$0xff]
      %v4572 = vld [vmem:[%s4205 + $0xf0] sm:$0xff]
      %v4573 = vld [vmem:[%s4205 + $0xf8] sm:$0xff]
      %v4606 = vunpack.c.l.b16 %v4542
      %v4607 = vunpack.c.h.b16 %v4542
      %v4608 = vunpack.c.l.b16 %v4543
      %v4609 = vunpack.c.h.b16 %v4543
      %v4610 = vunpack.c.l.b16 %v4544
      %v4611 = vunpack.c.h.b16 %v4544
      %v4612 = vunpack.c.l.b16 %v4545
      %v4613 = vunpack.c.h.b16 %v4545
      %v4614 = vunpack.c.l.b16 %v4546
      %v4615 = vunpack.c.h.b16 %v4546
      %v4616 = vunpack.c.l.b16 %v4547
      %v4617 = vunpack.c.h.b16 %v4547
      %v4618 = vunpack.c.l.b16 %v4548
      %v4619 = vunpack.c.h.b16 %v4548
      %v4620 = vunpack.c.l.b16 %v4549
      %v4621 = vunpack.c.h.b16 %v4549
      %v4622 = vunpack.c.l.b16 %v4550
      %v4623 = vunpack.c.h.b16 %v4550
      %v4624 = vunpack.c.l.b16 %v4551
      %v4625 = vunpack.c.h.b16 %v4551
      %v4626 = vunpack.c.l.b16 %v4552
      %v4627 = vunpack.c.h.b16 %v4552
      %v4628 = vunpack.c.l.b16 %v4553
      %v4629 = vunpack.c.h.b16 %v4553
      %v4630 = vunpack.c.l.b16 %v4554
      %v4631 = vunpack.c.h.b16 %v4554
      %v4632 = vunpack.c.l.b16 %v4555
      %v4633 = vunpack.c.h.b16 %v4555
      %v4634 = vunpack.c.l.b16 %v4556
      %v4635 = vunpack.c.h.b16 %v4556
      %v4636 = vunpack.c.l.b16 %v4557
      %v4637 = vunpack.c.h.b16 %v4557
      %v4638 = vunpack.c.l.b16 %v4558
      %v4639 = vunpack.c.h.b16 %v4558
      %v4640 = vunpack.c.l.b16 %v4559
      %v4641 = vunpack.c.h.b16 %v4559
      %v4642 = vunpack.c.l.b16 %v4560
      %v4643 = vunpack.c.h.b16 %v4560
      %v4644 = vunpack.c.l.b16 %v4561
      %v4645 = vunpack.c.h.b16 %v4561
      %v4646 = vunpack.c.l.b16 %v4562
      %v4647 = vunpack.c.h.b16 %v4562
      %v4648 = vunpack.c.l.b16 %v4563
      %v4649 = vunpack.c.h.b16 %v4563
      %v4650 = vunpack.c.l.b16 %v4564
      %v4651 = vunpack.c.h.b16 %v4564
      %v4652 = vunpack.c.l.b16 %v4565
      %v4653 = vunpack.c.h.b16 %v4565
      %v4654 = vunpack.c.l.b16 %v4566
      %v4655 = vunpack.c.h.b16 %v4566
      %v4656 = vunpack.c.l.b16 %v4567
      %v4657 = vunpack.c.h.b16 %v4567
      %v4658 = vunpack.c.l.b16 %v4568
      %v4659 = vunpack.c.h.b16 %v4568
      %v4660 = vunpack.c.l.b16 %v4569
      %v4661 = vunpack.c.h.b16 %v4569
      %v4662 = vunpack.c.l.b16 %v4570
      %v4663 = vunpack.c.h.b16 %v4570
      %v4664 = vunpack.c.l.b16 %v4571
      %v4665 = vunpack.c.h.b16 %v4571
      %v4666 = vunpack.c.l.b16 %v4572
      %v4667 = vunpack.c.h.b16 %v4572
      %v4668 = vunpack.c.l.b16 %v4573
      %v4669 = vunpack.c.h.b16 %v4573
      %v4670 = vpack.c.b16 %v4610, %v4606
      %v4671 = vpack.c.b16 %v4611, %v4607
      %v4672 = vpack.c.b16 %v4612, %v4608
      %v4673 = vpack.c.b16 %v4613, %v4609
      %v4674 = vpack.c.b16 %v4618, %v4614
      %v4675 = vpack.c.b16 %v4619, %v4615
      %v4676 = vpack.c.b16 %v4620, %v4616
      %v4677 = vpack.c.b16 %v4621, %v4617
      %v4678 = vpack.c.b16 %v4626, %v4622
      %v4679 = vpack.c.b16 %v4627, %v4623
      %v4680 = vpack.c.b16 %v4628, %v4624
      %v4681 = vpack.c.b16 %v4629, %v4625
      %v4682 = vpack.c.b16 %v4634, %v4630
      %v4683 = vpack.c.b16 %v4635, %v4631
      %v4684 = vpack.c.b16 %v4636, %v4632
      %v4685 = vpack.c.b16 %v4637, %v4633
      %v4686 = vpack.c.b16 %v4642, %v4638
      %v4687 = vpack.c.b16 %v4643, %v4639
      %v4688 = vpack.c.b16 %v4644, %v4640
      %v4689 = vpack.c.b16 %v4645, %v4641
      %v4690 = vpack.c.b16 %v4650, %v4646
      %v4691 = vpack.c.b16 %v4651, %v4647
      %v4692 = vpack.c.b16 %v4652, %v4648
      %v4693 = vpack.c.b16 %v4653, %v4649
      %v4694 = vpack.c.b16 %v4658, %v4654
      %v4695 = vpack.c.b16 %v4659, %v4655
      %v4696 = vpack.c.b16 %v4660, %v4656
      %v4697 = vpack.c.b16 %v4661, %v4657
      %v4698 = vpack.c.b16 %v4666, %v4662
      %v4699 = vpack.c.b16 %v4667, %v4663
      %v4700 = vpack.c.b16 %v4668, %v4664
      %v4701 = vpack.c.b16 %v4669, %v4665
      %4734 = vmatprep.subr.bf16.mxu0 %v4671
      %4735 = vmatpush1.bf16.msra.mxu0 %v4670
      %4736 = vmatprep.subr.bf16.mxu0 %v4675
      %4737 = vmatpush1.bf16.msra.mxu0 %v4674
      %4738 = vmatprep.subr.bf16.mxu0 %v4679
      %4739 = vmatpush1.bf16.msra.mxu0 %v4678
      %4740 = vmatprep.subr.bf16.mxu0 %v4683
      %4741 = vmatpush1.bf16.msra.mxu0 %v4682
      %4742 = vmatprep.subr.bf16.mxu0 %v4687
      %4743 = vmatpush1.bf16.msra.mxu0 %v4686
      %4744 = vmatprep.subr.bf16.mxu0 %v4691
      %4745 = vmatpush1.bf16.msra.mxu0 %v4690
      %4746 = vmatprep.subr.bf16.mxu0 %v4695
      %4747 = vmatpush1.bf16.msra.mxu0 %v4694
      %4748 = vmatprep.subr.bf16.mxu0 %v4699
      %4749 = vmatpush1.bf16.msra.mxu0 %v4698
      %4750 = vmatprep.subr.bf16.mxu0 0
      %4751 = vmatpush1.bf16.msra.mxu0 0
      %4752 = vmatprep.subr.bf16.mxu0 0
      %4753 = vmatpush1.bf16.msra.mxu0 0
      %4754 = vmatprep.subr.bf16.mxu0 0
      %4755 = vmatpush1.bf16.msra.mxu0 0
      %4756 = vmatprep.subr.bf16.mxu0 0
      %4757 = vmatpush1.bf16.msra.mxu0 0
      %4758 = vmatprep.subr.bf16.mxu0 0
      %4759 = vmatpush1.bf16.msra.mxu0 0
      %4760 = vmatprep.subr.bf16.mxu0 0
      %4761 = vmatpush1.bf16.msra.mxu0 0
      %4762 = vmatprep.subr.bf16.mxu0 0
      %4763 = vmatpush1.bf16.msra.mxu0 0
      %4764 = vmatprep.subr.bf16.mxu0 0
      %4765 = vmatpush1.bf16.msra.mxu0 0
      %4766 = vmatprep.mubr.bf16.mxu0 0
      %4767 = vmatmul.mubr.bf16.gmra.mrb[0].mxu0 %v4540
      %v4768 = vpop.f32.mrb[0].mxu0
      %v4769 = vadd.f32 0.0, %v4768
      %v4770 = vpop.f32.mrb[0].mxu0
      %v4771 = vadd.f32 0.0, %v4770
      %v4772 = vpop.f32.mrb[0].mxu0
      %v4773 = vadd.f32 0.0, %v4772
      %v4774 = vpop.f32.mrb[0].mxu0
      %v4775 = vadd.f32 0.0, %v4774
      %4776 = vdwg.mxu0
      %4777 = vmatprep.subr.bf16.mxu0 %v4673
      %4778 = vmatpush1.bf16.msra.mxu0 %v4672
      %4779 = vmatprep.subr.bf16.mxu0 %v4677
      %4780 = vmatpush1.bf16.msra.mxu0 %v4676
      %4781 = vmatprep.subr.bf16.mxu0 %v4681
      %4782 = vmatpush1.bf16.msra.mxu0 %v4680
      %4783 = vmatprep.subr.bf16.mxu0 %v4685
      %4784 = vmatpush1.bf16.msra.mxu0 %v4684
      %4785 = vmatprep.subr.bf16.mxu0 %v4689
      %4786 = vmatpush1.bf16.msra.mxu0 %v4688
      %4787 = vmatprep.subr.bf16.mxu0 %v4693
      %4788 = vmatpush1.bf16.msra.mxu0 %v4692
      %4789 = vmatprep.subr.bf16.mxu0 %v4697
      %4790 = vmatpush1.bf16.msra.mxu0 %v4696
      %4791 = vmatprep.subr.bf16.mxu0 %v4701
      %4792 = vmatpush1.bf16.msra.mxu0 %v4700
      %4793 = vmatprep.subr.bf16.mxu0 0
      %4794 = vmatpush1.bf16.msra.mxu0 0
      %4795 = vmatprep.subr.bf16.mxu0 0
      %4796 = vmatpush1.bf16.msra.mxu0 0
      %4797 = vmatprep.subr.bf16.mxu0 0
      %4798 = vmatpush1.bf16.msra.mxu0 0
      %4799 = vmatprep.subr.bf16.mxu0 0
      %4800 = vmatpush1.bf16.msra.mxu0 0
      %4801 = vmatprep.subr.bf16.mxu0 0
      %4802 = vmatpush1.bf16.msra.mxu0 0
      %4803 = vmatprep.subr.bf16.mxu0 0
      %4804 = vmatpush1.bf16.msra.mxu0 0
      %4805 = vmatprep.subr.bf16.mxu0 0
      %4806 = vmatpush1.bf16.msra.mxu0 0
      %4807 = vmatprep.subr.bf16.mxu0 0
      %4808 = vmatpush1.bf16.msra.mxu0 0
      %4809 = vmatprep.mubr.bf16.mxu0 0
      %4810 = vmatmul.mubr.bf16.gmra.mrb[0].mxu0 %v4540
      %v4811 = vpop.f32.mrb[0].mxu0
      %v4812 = vadd.f32 0.0, %v4811
      %v4813 = vpop.f32.mrb[0].mxu0
      %v4814 = vadd.f32 0.0, %v4813
      %v4815 = vpop.f32.mrb[0].mxu0
      %v4816 = vadd.f32 0.0, %v4815
      %v4817 = vpop.f32.mrb[0].mxu0
      %v4818 = vadd.f32 0.0, %v4817
      %4819 = vdwg.mxu0
      %v4820 = vadd.f32 %v4144, %v4769
      %v4821 = vadd.f32 %v4145, %v4771
      %v4822 = vadd.f32 %v4146, %v4812
      %v4823 = vadd.f32 %v4147, %v4814
      %v4824 = vadd.f32 %v4148, %v4773
      %v4825 = vadd.f32 %v4149, %v4775
      %v4826 = vadd.f32 %v4150, %v4816
      %v4827 = vadd.f32 %v4151, %v4818
      %v4828 = vxor.u32 %v4820, 2147483648
      %v4829 = vxor.u32 %v4821, 2147483648
      %v4830 = vxor.u32 %v4822, 2147483648
      %v4831 = vxor.u32 %v4824, 2147483648
      %v4832 = vxor.u32 %v4825, 2147483648
      %v4833 = vxor.u32 %v4826, 2147483648
      %v4834 = vmul.f32 %v4828, 1.442695
      %v4835 = vpow.pop %v4834
      %v4836 = vmul.f32 %v4829, 1.442695
      %v4837 = vpow.pop %v4836
      %v4838 = vmul.f32 %v4830, 1.442695
      %v4839 = vpow.pop %v4838
      %v4840 = vmul.f32 %v4831, 1.442695
      %v4841 = vpow.pop %v4840
      %v4842 = vmul.f32 %v4832, 1.442695
      %v4843 = vpow.pop %v4842
      %v4844 = vmul.f32 %v4833, 1.442695
      %v4845 = vpow.pop %v4844
      %v4846 = vadd.f32 %v4835, 1.0
      %v4847 = vadd.f32 %v4837, 1.0
      %v4848 = vadd.f32 %v4839, 1.0
      %v4849 = vadd.f32 %v4841, 1.0
      %v4850 = vadd.f32 %v4843, 1.0
      %v4851 = vadd.f32 %v4845, 1.0
      %v4852 = vrcp.pop %v4846
      %v4853 = vmul.f32 1.0, %v4852
      %v4854 = vrcp.pop %v4847
      %v4855 = vmul.f32 1.0, %v4854
      %v4856 = vrcp.pop %v4848
      %v4857 = vmul.f32 1.0, %v4856
      %v4858 = vrcp.pop %v4849
      %v4859 = vmul.f32 1.0, %v4858
      %v4860 = vrcp.pop %v4850
      %v4861 = vmul.f32 1.0, %v4860
      %v4862 = vrcp.pop %v4851
      %v4863 = vmul.f32 1.0, %v4862
      %v4864 = vtanh.pop %v4823
      %v4865 = vtanh.pop %v4827
      %v4866 = vmul.f32 %v4855, %v4534
      %v4867 = vmul.f32 %v4861, %v4535
      %v4868 = vmul.f32 %v4853, %v4864
      %v4869 = vmul.f32 %v4859, %v4865
      %v4870 = vadd.f32 %v4866, %v4868
      %v4871 = vadd.f32 %v4867, %v4869
      %v4872 = vtanh.pop %v4870
      %v4873 = vtanh.pop %v4871
      %v4874 = vmul.f32 %v4857, %v4872
      %v4875 = vmul.f32 %v4863, %v4873
      %v4876 = vpack.c.bf16 %v4875, %v4874
      %4877 = vst [vmem:[%s1659] sm:$0xff] %v4876
      %v4878 = vld [vmem:[%s4205] sm:$0xff]
      %v4879 = vld [vmem:[%s4205 + $0x8] sm:$0xff]
      %v4880 = vld [vmem:[%s4205 + $0x10] sm:$0xff]
      %v4881 = vld [vmem:[%s4205 + $0x18] sm:$0xff]
      %v4882 = vld [vmem:[%s4205 + $0x20] sm:$0xff]
      %v4883 = vld [vmem:[%s4205 + $0x28] sm:$0xff]
      %v4884 = vld [vmem:[%s4205 + $0x30] sm:$0xff]
      %v4885 = vld [vmem:[%s4205 + $0x38] sm:$0xff]
      %v4886 = vld [vmem:[%s4205 + $0x40] sm:$0xff]
      %v4887 = vld [vmem:[%s4205 + $0x48] sm:$0xff]
      %v4888 = vld [vmem:[%s4205 + $0x50] sm:$0xff]
      %v4889 = vld [vmem:[%s4205 + $0x58] sm:$0xff]
      %v4890 = vld [vmem:[%s4205 + $0x60] sm:$0xff]
      %v4891 = vld [vmem:[%s4205 + $0x68] sm:$0xff]
      %v4892 = vld [vmem:[%s4205 + $0x70] sm:$0xff]
      %v4893 = vld [vmem:[%s4205 + $0x78] sm:$0xff]
      %v4894 = vld [vmem:[%s4205 + $0x80] sm:$0xff]
      %v4895 = vld [vmem:[%s4205 + $0x88] sm:$0xff]
      %v4896 = vld [vmem:[%s4205 + $0x90] sm:$0xff]
      %v4897 = vld [vmem:[%s4205 + $0x98] sm:$0xff]
      %v4898 = vld [vmem:[%s4205 + $0xa0] sm:$0xff]
      %v4899 = vld [vmem:[%s4205 + $0xa8] sm:$0xff]
      %v4900 = vld [vmem:[%s4205 + $0xb0] sm:$0xff]
      %v4901 = vld [vmem:[%s4205 + $0xb8] sm:$0xff]
      %v4902 = vld [vmem:[%s4205 + $0xc0] sm:$0xff]
      %v4903 = vld [vmem:[%s4205 + $0xc8] sm:$0xff]
      %v4904 = vld [vmem:[%s4205 + $0xd0] sm:$0xff]
      %v4905 = vld [vmem:[%s4205 + $0xd8] sm:$0xff]
      %v4906 = vld [vmem:[%s4205 + $0xe0] sm:$0xff]
      %v4907 = vld [vmem:[%s4205 + $0xe8] sm:$0xff]
      %v4908 = vld [vmem:[%s4205 + $0xf0] sm:$0xff]
      %v4909 = vld [vmem:[%s4205 + $0xf8] sm:$0xff]
      %v4942 = vunpack.c.l.b16 %v4878
      %v4943 = vunpack.c.h.b16 %v4878
      %v4944 = vunpack.c.l.b16 %v4879
      %v4945 = vunpack.c.h.b16 %v4879
      %v4946 = vunpack.c.l.b16 %v4880
      %v4947 = vunpack.c.h.b16 %v4880
      %v4948 = vunpack.c.l.b16 %v4881
      %v4949 = vunpack.c.h.b16 %v4881
      %v4950 = vunpack.c.l.b16 %v4882
      %v4951 = vunpack.c.h.b16 %v4882
      %v4952 = vunpack.c.l.b16 %v4883
      %v4953 = vunpack.c.h.b16 %v4883
      %v4954 = vunpack.c.l.b16 %v4884
      %v4955 = vunpack.c.h.b16 %v4884
      %v4956 = vunpack.c.l.b16 %v4885
      %v4957 = vunpack.c.h.b16 %v4885
      %v4958 = vunpack.c.l.b16 %v4886
      %v4959 = vunpack.c.h.b16 %v4886
      %v4960 = vunpack.c.l.b16 %v4887
      %v4961 = vunpack.c.h.b16 %v4887
      %v4962 = vunpack.c.l.b16 %v4888
      %v4963 = vunpack.c.h.b16 %v4888
      %v4964 = vunpack.c.l.b16 %v4889
      %v4965 = vunpack.c.h.b16 %v4889
      %v4966 = vunpack.c.l.b16 %v4890
      %v4967 = vunpack.c.h.b16 %v4890
      %v4968 = vunpack.c.l.b16 %v4891
      %v4969 = vunpack.c.h.b16 %v4891
      %v4970 = vunpack.c.l.b16 %v4892
      %v4971 = vunpack.c.h.b16 %v4892
      %v4972 = vunpack.c.l.b16 %v4893
      %v4973 = vunpack.c.h.b16 %v4893
      %v4974 = vunpack.c.l.b16 %v4894
      %v4975 = vunpack.c.h.b16 %v4894
      %v4976 = vunpack.c.l.b16 %v4895
      %v4977 = vunpack.c.h.b16 %v4895
      %v4978 = vunpack.c.l.b16 %v4896
      %v4979 = vunpack.c.h.b16 %v4896
      %v4980 = vunpack.c.l.b16 %v4897
      %v4981 = vunpack.c.h.b16 %v4897
      %v4982 = vunpack.c.l.b16 %v4898
      %v4983 = vunpack.c.h.b16 %v4898
      %v4984 = vunpack.c.l.b16 %v4899
      %v4985 = vunpack.c.h.b16 %v4899
      %v4986 = vunpack.c.l.b16 %v4900
      %v4987 = vunpack.c.h.b16 %v4900
      %v4988 = vunpack.c.l.b16 %v4901
      %v4989 = vunpack.c.h.b16 %v4901
      %v4990 = vunpack.c.l.b16 %v4902
      %v4991 = vunpack.c.h.b16 %v4902
      %v4992 = vunpack.c.l.b16 %v4903
      %v4993 = vunpack.c.h.b16 %v4903
      %v4994 = vunpack.c.l.b16 %v4904
      %v4995 = vunpack.c.h.b16 %v4904
      %v4996 = vunpack.c.l.b16 %v4905
      %v4997 = vunpack.c.h.b16 %v4905
      %v4998 = vunpack.c.l.b16 %v4906
      %v4999 = vunpack.c.h.b16 %v4906
      %v5000 = vunpack.c.l.b16 %v4907
      %v5001 = vunpack.c.h.b16 %v4907
      %v5002 = vunpack.c.l.b16 %v4908
      %v5003 = vunpack.c.h.b16 %v4908
      %v5004 = vunpack.c.l.b16 %v4909
      %v5005 = vunpack.c.h.b16 %v4909
      %v5006 = vpack.c.b16 %v4946, %v4942
      %v5007 = vpack.c.b16 %v4947, %v4943
      %v5008 = vpack.c.b16 %v4948, %v4944
      %v5009 = vpack.c.b16 %v4949, %v4945
      %v5010 = vpack.c.b16 %v4954, %v4950
      %v5011 = vpack.c.b16 %v4955, %v4951
      %v5012 = vpack.c.b16 %v4956, %v4952
      %v5013 = vpack.c.b16 %v4957, %v4953
      %v5014 = vpack.c.b16 %v4962, %v4958
      %v5015 = vpack.c.b16 %v4963, %v4959
      %v5016 = vpack.c.b16 %v4964, %v4960
      %v5017 = vpack.c.b16 %v4965, %v4961
      %v5018 = vpack.c.b16 %v4970, %v4966
      %v5019 = vpack.c.b16 %v4971, %v4967
      %v5020 = vpack.c.b16 %v4972, %v4968
      %v5021 = vpack.c.b16 %v4973, %v4969
      %v5022 = vpack.c.b16 %v4978, %v4974
      %v5023 = vpack.c.b16 %v4979, %v4975
      %v5024 = vpack.c.b16 %v4980, %v4976
      %v5025 = vpack.c.b16 %v4981, %v4977
      %v5026 = vpack.c.b16 %v4986, %v4982
      %v5027 = vpack.c.b16 %v4987, %v4983
      %v5028 = vpack.c.b16 %v4988, %v4984
      %v5029 = vpack.c.b16 %v4989, %v4985
      %v5030 = vpack.c.b16 %v4994, %v4990
      %v5031 = vpack.c.b16 %v4995, %v4991
      %v5032 = vpack.c.b16 %v4996, %v4992
      %v5033 = vpack.c.b16 %v4997, %v4993
      %v5034 = vpack.c.b16 %v5002, %v4998
      %v5035 = vpack.c.b16 %v5003, %v4999
      %v5036 = vpack.c.b16 %v5004, %v5000
      %v5037 = vpack.c.b16 %v5005, %v5001
      %5070 = vmatprep.subr.bf16.mxu0 %v5007
      %5071 = vmatpush1.bf16.msra.mxu0 %v5006
      %5072 = vmatprep.subr.bf16.mxu0 %v5011
      %5073 = vmatpush1.bf16.msra.mxu0 %v5010
      %5074 = vmatprep.subr.bf16.mxu0 %v5015
      %5075 = vmatpush1.bf16.msra.mxu0 %v5014
      %5076 = vmatprep.subr.bf16.mxu0 %v5019
      %5077 = vmatpush1.bf16.msra.mxu0 %v5018
      %5078 = vmatprep.subr.bf16.mxu0 %v5023
      %5079 = vmatpush1.bf16.msra.mxu0 %v5022
      %5080 = vmatprep.subr.bf16.mxu0 %v5027
      %5081 = vmatpush1.bf16.msra.mxu0 %v5026
      %5082 = vmatprep.subr.bf16.mxu0 %v5031
      %5083 = vmatpush1.bf16.msra.mxu0 %v5030
      %5084 = vmatprep.subr.bf16.mxu0 %v5035
      %5085 = vmatpush1.bf16.msra.mxu0 %v5034
      %5086 = vmatprep.subr.bf16.mxu0 0
      %5087 = vmatpush1.bf16.msra.mxu0 0
      %5088 = vmatprep.subr.bf16.mxu0 0
      %5089 = vmatpush1.bf16.msra.mxu0 0
      %5090 = vmatprep.subr.bf16.mxu0 0
      %5091 = vmatpush1.bf16.msra.mxu0 0
      %5092 = vmatprep.subr.bf16.mxu0 0
      %5093 = vmatpush1.bf16.msra.mxu0 0
      %5094 = vmatprep.subr.bf16.mxu0 0
      %5095 = vmatpush1.bf16.msra.mxu0 0
      %5096 = vmatprep.subr.bf16.mxu0 0
      %5097 = vmatpush1.bf16.msra.mxu0 0
      %5098 = vmatprep.subr.bf16.mxu0 0
      %5099 = vmatpush1.bf16.msra.mxu0 0
      %5100 = vmatprep.subr.bf16.mxu0 0
      %5101 = vmatpush1.bf16.msra.mxu0 0
      %5102 = vmatprep.mubr.bf16.mxu0 0
      %5103 = vmatmul.mubr.bf16.gmra.mrb[0].mxu0 %v4876
      %v5104 = vpop.f32.mrb[0].mxu0
      %v5105 = vadd.f32 0.0, %v5104
      %v5106 = vpop.f32.mrb[0].mxu0
      %v5107 = vadd.f32 0.0, %v5106
      %v5108 = vpop.f32.mrb[0].mxu0
      %v5109 = vadd.f32 0.0, %v5108
      %v5110 = vpop.f32.mrb[0].mxu0
      %v5111 = vadd.f32 0.0, %v5110
      %5112 = vdwg.mxu0
      %5113 = vmatprep.subr.bf16.mxu0 %v5009
      %5114 = vmatpush1.bf16.msra.mxu0 %v5008
      %5115 = vmatprep.subr.bf16.mxu0 %v5013
      %5116 = vmatpush1.bf16.msra.mxu0 %v5012
      %5117 = vmatprep.subr.bf16.mxu0 %v5017
      %5118 = vmatpush1.bf16.msra.mxu0 %v5016
      %5119 = vmatprep.subr.bf16.mxu0 %v5021
      %5120 = vmatpush1.bf16.msra.mxu0 %v5020
      %5121 = vmatprep.subr.bf16.mxu0 %v5025
      %5122 = vmatpush1.bf16.msra.mxu0 %v5024
      %5123 = vmatprep.subr.bf16.mxu0 %v5029
      %5124 = vmatpush1.bf16.msra.mxu0 %v5028
      %5125 = vmatprep.subr.bf16.mxu0 %v5033
      %5126 = vmatpush1.bf16.msra.mxu0 %v5032
      %5127 = vmatprep.subr.bf16.mxu0 %v5037
      %5128 = vmatpush1.bf16.msra.mxu0 %v5036
      %5129 = vmatprep.subr.bf16.mxu0 0
      %5130 = vmatpush1.bf16.msra.mxu0 0
      %5131 = vmatprep.subr.bf16.mxu0 0
      %5132 = vmatpush1.bf16.msra.mxu0 0
      %5133 = vmatprep.subr.bf16.mxu0 0
      %5134 = vmatpush1.bf16.msra.mxu0 0
      %5135 = vmatprep.subr.bf16.mxu0 0
      %5136 = vmatpush1.bf16.msra.mxu0 0
      %5137 = vmatprep.subr.bf16.mxu0 0
      %5138 = vmatpush1.bf16.msra.mxu0 0
      %5139 = vmatprep.subr.bf16.mxu0 0
      %5140 = vmatpush1.bf16.msra.mxu0 0
      %5141 = vmatprep.subr.bf16.mxu0 0
      %5142 = vmatpush1.bf16.msra.mxu0 0
      %5143 = vmatprep.subr.bf16.mxu0 0
      %5144 = vmatpush1.bf16.msra.mxu0 0
      %5145 = vmatprep.mubr.bf16.mxu0 0
      %5146 = vmatmul.mubr.bf16.gmra.mrb[0].mxu0 %v4876
      %v5147 = vpop.f32.mrb[0].mxu0
      %v5148 = vadd.f32 0.0, %v5147
      %v5149 = vpop.f32.mrb[0].mxu0
      %v5150 = vadd.f32 0.0, %v5149
      %v5151 = vpop.f32.mrb[0].mxu0
      %v5152 = vadd.f32 0.0, %v5151
      %v5153 = vpop.f32.mrb[0].mxu0
      %v5154 = vadd.f32 0.0, %v5153
      %5155 = vdwg.mxu0
      %v5156 = vadd.f32 %v4152, %v5105
      %v5157 = vadd.f32 %v4153, %v5107
      %v5158 = vadd.f32 %v4154, %v5148
      %v5159 = vadd.f32 %v4155, %v5150
      %v5160 = vadd.f32 %v4156, %v5109
      %v5161 = vadd.f32 %v4157, %v5111
      %v5162 = vadd.f32 %v4158, %v5152
      %v5163 = vadd.f32 %v4159, %v5154
      %v5164 = vxor.u32 %v5156, 2147483648
      %v5165 = vxor.u32 %v5157, 2147483648
      %v5166 = vxor.u32 %v5158, 2147483648
      %v5167 = vxor.u32 %v5160, 2147483648
      %v5168 = vxor.u32 %v5161, 2147483648
      %v5169 = vxor.u32 %v5162, 2147483648
      %v5170 = vmul.f32 %v5164, 1.442695
      %v5171 = vpow.pop %v5170
      %v5172 = vmul.f32 %v5165, 1.442695
      %v5173 = vpow.pop %v5172
      %v5174 = vmul.f32 %v5166, 1.442695
      %v5175 = vpow.pop %v5174
      %v5176 = vmul.f32 %v5167, 1.442695
      %v5177 = vpow.pop %v5176
      %v5178 = vmul.f32 %v5168, 1.442695
      %v5179 = vpow.pop %v5178
      %v5180 = vmul.f32 %v5169, 1.442695
      %v5181 = vpow.pop %v5180
      %v5182 = vadd.f32 %v5171, 1.0
      %v5183 = vadd.f32 %v5173, 1.0
      %v5184 = vadd.f32 %v5175, 1.0
      %v5185 = vadd.f32 %v5177, 1.0
      %v5186 = vadd.f32 %v5179, 1.0
      %v5187 = vadd.f32 %v5181, 1.0
      %v5188 = vrcp.pop %v5182
      %v5189 = vmul.f32 1.0, %v5188
      %v5190 = vrcp.pop %v5183
      %v5191 = vmul.f32 1.0, %v5190
      %v5192 = vrcp.pop %v5184
      %v5193 = vmul.f32 1.0, %v5192
      %v5194 = vrcp.pop %v5185
      %v5195 = vmul.f32 1.0, %v5194
      %v5196 = vrcp.pop %v5186
      %v5197 = vmul.f32 1.0, %v5196
      %v5198 = vrcp.pop %v5187
      %v5199 = vmul.f32 1.0, %v5198
      %v5200 = vtanh.pop %v5159
      %v5201 = vtanh.pop %v5163
      %v5202 = vmul.f32 %v5191, %v4870
      %v5203 = vmul.f32 %v5197, %v4871
      %v5204 = vmul.f32 %v5189, %v5200
      %v5205 = vmul.f32 %v5195, %v5201
      %v5206 = vadd.f32 %v5202, %v5204
      %v5207 = vadd.f32 %v5203, %v5205
      %v5208 = vtanh.pop %v5206
      %v5209 = vtanh.pop %v5207
      %v5210 = vmul.f32 %v5193, %v5208
      %v5211 = vmul.f32 %v5199, %v5209
      %v5212 = vpack.c.bf16 %v5211, %v5210
      %5213 = vst [vmem:[%s1996] sm:$0xff] %v5212
      %v5214 = vld [vmem:[%s4205] sm:$0xff]
      %v5215 = vld [vmem:[%s4205 + $0x8] sm:$0xff]
      %v5216 = vld [vmem:[%s4205 + $0x10] sm:$0xff]
      %v5217 = vld [vmem:[%s4205 + $0x18] sm:$0xff]
      %v5218 = vld [vmem:[%s4205 + $0x20] sm:$0xff]
      %v5219 = vld [vmem:[%s4205 + $0x28] sm:$0xff]
      %v5220 = vld [vmem:[%s4205 + $0x30] sm:$0xff]
      %v5221 = vld [vmem:[%s4205 + $0x38] sm:$0xff]
      %v5222 = vld [vmem:[%s4205 + $0x40] sm:$0xff]
      %v5223 = vld [vmem:[%s4205 + $0x48] sm:$0xff]
      %v5224 = vld [vmem:[%s4205 + $0x50] sm:$0xff]
      %v5225 = vld [vmem:[%s4205 + $0x58] sm:$0xff]
      %v5226 = vld [vmem:[%s4205 + $0x60] sm:$0xff]
      %v5227 = vld [vmem:[%s4205 + $0x68] sm:$0xff]
      %v5228 = vld [vmem:[%s4205 + $0x70] sm:$0xff]
      %v5229 = vld [vmem:[%s4205 + $0x78] sm:$0xff]
      %v5230 = vld [vmem:[%s4205 + $0x80] sm:$0xff]
      %v5231 = vld [vmem:[%s4205 + $0x88] sm:$0xff]
      %v5232 = vld [vmem:[%s4205 + $0x90] sm:$0xff]
      %v5233 = vld [vmem:[%s4205 + $0x98] sm:$0xff]
      %v5234 = vld [vmem:[%s4205 + $0xa0] sm:$0xff]
      %v5235 = vld [vmem:[%s4205 + $0xa8] sm:$0xff]
      %v5236 = vld [vmem:[%s4205 + $0xb0] sm:$0xff]
      %v5237 = vld [vmem:[%s4205 + $0xb8] sm:$0xff]
      %v5238 = vld [vmem:[%s4205 + $0xc0] sm:$0xff]
      %v5239 = vld [vmem:[%s4205 + $0xc8] sm:$0xff]
      %v5240 = vld [vmem:[%s4205 + $0xd0] sm:$0xff]
      %v5241 = vld [vmem:[%s4205 + $0xd8] sm:$0xff]
      %v5242 = vld [vmem:[%s4205 + $0xe0] sm:$0xff]
      %v5243 = vld [vmem:[%s4205 + $0xe8] sm:$0xff]
      %v5244 = vld [vmem:[%s4205 + $0xf0] sm:$0xff]
      %v5245 = vld [vmem:[%s4205 + $0xf8] sm:$0xff]
      %v5278 = vunpack.c.l.b16 %v5214
      %v5279 = vunpack.c.h.b16 %v5214
      %v5280 = vunpack.c.l.b16 %v5215
      %v5281 = vunpack.c.h.b16 %v5215
      %v5282 = vunpack.c.l.b16 %v5216
      %v5283 = vunpack.c.h.b16 %v5216
      %v5284 = vunpack.c.l.b16 %v5217
      %v5285 = vunpack.c.h.b16 %v5217
      %v5286 = vunpack.c.l.b16 %v5218
      %v5287 = vunpack.c.h.b16 %v5218
      %v5288 = vunpack.c.l.b16 %v5219
      %v5289 = vunpack.c.h.b16 %v5219
      %v5290 = vunpack.c.l.b16 %v5220
      %v5291 = vunpack.c.h.b16 %v5220
      %v5292 = vunpack.c.l.b16 %v5221
      %v5293 = vunpack.c.h.b16 %v5221
      %v5294 = vunpack.c.l.b16 %v5222
      %v5295 = vunpack.c.h.b16 %v5222
      %v5296 = vunpack.c.l.b16 %v5223
      %v5297 = vunpack.c.h.b16 %v5223
      %v5298 = vunpack.c.l.b16 %v5224
      %v5299 = vunpack.c.h.b16 %v5224
      %v5300 = vunpack.c.l.b16 %v5225
      %v5301 = vunpack.c.h.b16 %v5225
      %v5302 = vunpack.c.l.b16 %v5226
      %v5303 = vunpack.c.h.b16 %v5226
      %v5304 = vunpack.c.l.b16 %v5227
      %v5305 = vunpack.c.h.b16 %v5227
      %v5306 = vunpack.c.l.b16 %v5228
      %v5307 = vunpack.c.h.b16 %v5228
      %v5308 = vunpack.c.l.b16 %v5229
      %v5309 = vunpack.c.h.b16 %v5229
      %v5310 = vunpack.c.l.b16 %v5230
      %v5311 = vunpack.c.h.b16 %v5230
      %v5312 = vunpack.c.l.b16 %v5231
      %v5313 = vunpack.c.h.b16 %v5231
      %v5314 = vunpack.c.l.b16 %v5232
      %v5315 = vunpack.c.h.b16 %v5232
      %v5316 = vunpack.c.l.b16 %v5233
      %v5317 = vunpack.c.h.b16 %v5233
      %v5318 = vunpack.c.l.b16 %v5234
      %v5319 = vunpack.c.h.b16 %v5234
      %v5320 = vunpack.c.l.b16 %v5235
      %v5321 = vunpack.c.h.b16 %v5235
      %v5322 = vunpack.c.l.b16 %v5236
      %v5323 = vunpack.c.h.b16 %v5236
      %v5324 = vunpack.c.l.b16 %v5237
      %v5325 = vunpack.c.h.b16 %v5237
      %v5326 = vunpack.c.l.b16 %v5238
      %v5327 = vunpack.c.h.b16 %v5238
      %v5328 = vunpack.c.l.b16 %v5239
      %v5329 = vunpack.c.h.b16 %v5239
      %v5330 = vunpack.c.l.b16 %v5240
      %v5331 = vunpack.c.h.b16 %v5240
      %v5332 = vunpack.c.l.b16 %v5241
      %v5333 = vunpack.c.h.b16 %v5241
      %v5334 = vunpack.c.l.b16 %v5242
      %v5335 = vunpack.c.h.b16 %v5242
      %v5336 = vunpack.c.l.b16 %v5243
      %v5337 = vunpack.c.h.b16 %v5243
      %v5338 = vunpack.c.l.b16 %v5244
      %v5339 = vunpack.c.h.b16 %v5244
      %v5340 = vunpack.c.l.b16 %v5245
      %v5341 = vunpack.c.h.b16 %v5245
      %v5342 = vpack.c.b16 %v5282, %v5278
      %v5343 = vpack.c.b16 %v5283, %v5279
      %v5344 = vpack.c.b16 %v5284, %v5280
      %v5345 = vpack.c.b16 %v5285, %v5281
      %v5346 = vpack.c.b16 %v5290, %v5286
      %v5347 = vpack.c.b16 %v5291, %v5287
      %v5348 = vpack.c.b16 %v5292, %v5288
      %v5349 = vpack.c.b16 %v5293, %v5289
      %v5350 = vpack.c.b16 %v5298, %v5294
      %v5351 = vpack.c.b16 %v5299, %v5295
      %v5352 = vpack.c.b16 %v5300, %v5296
      %v5353 = vpack.c.b16 %v5301, %v5297
      %v5354 = vpack.c.b16 %v5306, %v5302
      %v5355 = vpack.c.b16 %v5307, %v5303
      %v5356 = vpack.c.b16 %v5308, %v5304
      %v5357 = vpack.c.b16 %v5309, %v5305
      %v5358 = vpack.c.b16 %v5314, %v5310
      %v5359 = vpack.c.b16 %v5315, %v5311
      %v5360 = vpack.c.b16 %v5316, %v5312
      %v5361 = vpack.c.b16 %v5317, %v5313
      %v5362 = vpack.c.b16 %v5322, %v5318
      %v5363 = vpack.c.b16 %v5323, %v5319
      %v5364 = vpack.c.b16 %v5324, %v5320
      %v5365 = vpack.c.b16 %v5325, %v5321
      %v5366 = vpack.c.b16 %v5330, %v5326
      %v5367 = vpack.c.b16 %v5331, %v5327
      %v5368 = vpack.c.b16 %v5332, %v5328
      %v5369 = vpack.c.b16 %v5333, %v5329
      %v5370 = vpack.c.b16 %v5338, %v5334
      %v5371 = vpack.c.b16 %v5339, %v5335
      %v5372 = vpack.c.b16 %v5340, %v5336
      %v5373 = vpack.c.b16 %v5341, %v5337
      %5406 = vmatprep.subr.bf16.mxu0 %v5343
      %5407 = vmatpush1.bf16.msra.mxu0 %v5342
      %5408 = vmatprep.subr.bf16.mxu0 %v5347
      %5409 = vmatpush1.bf16.msra.mxu0 %v5346
      %5410 = vmatprep.subr.bf16.mxu0 %v5351
      %5411 = vmatpush1.bf16.msra.mxu0 %v5350
      %5412 = vmatprep.subr.bf16.mxu0 %v5355
      %5413 = vmatpush1.bf16.msra.mxu0 %v5354
      %5414 = vmatprep.subr.bf16.mxu0 %v5359
      %5415 = vmatpush1.bf16.msra.mxu0 %v5358
      %5416 = vmatprep.subr.bf16.mxu0 %v5363
      %5417 = vmatpush1.bf16.msra.mxu0 %v5362
      %5418 = vmatprep.subr.bf16.mxu0 %v5367
      %5419 = vmatpush1.bf16.msra.mxu0 %v5366
      %5420 = vmatprep.subr.bf16.mxu0 %v5371
      %5421 = vmatpush1.bf16.msra.mxu0 %v5370
      %5422 = vmatprep.subr.bf16.mxu0 0
      %5423 = vmatpush1.bf16.msra.mxu0 0
      %5424 = vmatprep.subr.bf16.mxu0 0
      %5425 = vmatpush1.bf16.msra.mxu0 0
      %5426 = vmatprep.subr.bf16.mxu0 0
      %5427 = vmatpush1.bf16.msra.mxu0 0
      %5428 = vmatprep.subr.bf16.mxu0 0
      %5429 = vmatpush1.bf16.msra.mxu0 0
      %5430 = vmatprep.subr.bf16.mxu0 0
      %5431 = vmatpush1.bf16.msra.mxu0 0
      %5432 = vmatprep.subr.bf16.mxu0 0
      %5433 = vmatpush1.bf16.msra.mxu0 0
      %5434 = vmatprep.subr.bf16.mxu0 0
      %5435 = vmatpush1.bf16.msra.mxu0 0
      %5436 = vmatprep.subr.bf16.mxu0 0
      %5437 = vmatpush1.bf16.msra.mxu0 0
      %5438 = vmatprep.mubr.bf16.mxu0 0
      %5439 = vmatmul.mubr.bf16.gmra.mrb[0].mxu0 %v5212
      %v5440 = vpop.f32.mrb[0].mxu0
      %v5441 = vadd.f32 0.0, %v5440
      %v5442 = vpop.f32.mrb[0].mxu0
      %v5443 = vadd.f32 0.0, %v5442
      %v5444 = vpop.f32.mrb[0].mxu0
      %v5445 = vadd.f32 0.0, %v5444
      %v5446 = vpop.f32.mrb[0].mxu0
      %v5447 = vadd.f32 0.0, %v5446
      %5448 = vdwg.mxu0
      %5449 = vmatprep.subr.bf16.mxu0 %v5345
      %5450 = vmatpush1.bf16.msra.mxu0 %v5344
      %5451 = vmatprep.subr.bf16.mxu0 %v5349
      %5452 = vmatpush1.bf16.msra.mxu0 %v5348
      %5453 = vmatprep.subr.bf16.mxu0 %v5353
      %5454 = vmatpush1.bf16.msra.mxu0 %v5352
      %5455 = vmatprep.subr.bf16.mxu0 %v5357
      %5456 = vmatpush1.bf16.msra.mxu0 %v5356
      %5457 = vmatprep.subr.bf16.mxu0 %v5361
      %5458 = vmatpush1.bf16.msra.mxu0 %v5360
      %5459 = vmatprep.subr.bf16.mxu0 %v5365
      %5460 = vmatpush1.bf16.msra.mxu0 %v5364
      %5461 = vmatprep.subr.bf16.mxu0 %v5369
      %5462 = vmatpush1.bf16.msra.mxu0 %v5368
      %5463 = vmatprep.subr.bf16.mxu0 %v5373
      %5464 = vmatpush1.bf16.msra.mxu0 %v5372
      %5465 = vmatprep.subr.bf16.mxu0 0
      %5466 = vmatpush1.bf16.msra.mxu0 0
      %5467 = vmatprep.subr.bf16.mxu0 0
      %5468 = vmatpush1.bf16.msra.mxu0 0
      %5469 = vmatprep.subr.bf16.mxu0 0
      %5470 = vmatpush1.bf16.msra.mxu0 0
      %5471 = vmatprep.subr.bf16.mxu0 0
      %5472 = vmatpush1.bf16.msra.mxu0 0
      %5473 = vmatprep.subr.bf16.mxu0 0
      %5474 = vmatpush1.bf16.msra.mxu0 0
      %5475 = vmatprep.subr.bf16.mxu0 0
      %5476 = vmatpush1.bf16.msra.mxu0 0
      %5477 = vmatprep.subr.bf16.mxu0 0
      %5478 = vmatpush1.bf16.msra.mxu0 0
      %5479 = vmatprep.subr.bf16.mxu0 0
      %5480 = vmatpush1.bf16.msra.mxu0 0
      %5481 = vmatprep.mubr.bf16.mxu0 0
      %5482 = vmatmul.mubr.bf16.gmra.mrb[0].mxu0 %v5212
      %v5483 = vpop.f32.mrb[0].mxu0
      %v5484 = vadd.f32 0.0, %v5483
      %v5485 = vpop.f32.mrb[0].mxu0
      %v5486 = vadd.f32 0.0, %v5485
      %v5487 = vpop.f32.mrb[0].mxu0
      %v5488 = vadd.f32 0.0, %v5487
      %v5489 = vpop.f32.mrb[0].mxu0
      %v5490 = vadd.f32 0.0, %v5489
      %5491 = vdwg.mxu0
      %v5492 = vadd.f32 %v4160, %v5441
      %v5493 = vadd.f32 %v4161, %v5443
      %v5494 = vadd.f32 %v4162, %v5484
      %v5495 = vadd.f32 %v4163, %v5486
      %v5496 = vadd.f32 %v4164, %v5445
      %v5497 = vadd.f32 %v4165, %v5447
      %v5498 = vadd.f32 %v4166, %v5488
      %v5499 = vadd.f32 %v4167, %v5490
      %v5500 = vxor.u32 %v5492, 2147483648
      %v5501 = vxor.u32 %v5493, 2147483648
      %v5502 = vxor.u32 %v5494, 2147483648
      %v5503 = vxor.u32 %v5496, 2147483648
      %v5504 = vxor.u32 %v5497, 2147483648
      %v5505 = vxor.u32 %v5498, 2147483648
      %v5506 = vmul.f32 %v5500, 1.442695
      %v5507 = vpow.pop %v5506
      %v5508 = vmul.f32 %v5501, 1.442695
      %v5509 = vpow.pop %v5508
      %v5510 = vmul.f32 %v5502, 1.442695
      %v5511 = vpow.pop %v5510
      %v5512 = vmul.f32 %v5503, 1.442695
      %v5513 = vpow.pop %v5512
      %v5514 = vmul.f32 %v5504, 1.442695
      %v5515 = vpow.pop %v5514
      %v5516 = vmul.f32 %v5505, 1.442695
      %v5517 = vpow.pop %v5516
      %v5518 = vadd.f32 %v5507, 1.0
      %v5519 = vadd.f32 %v5509, 1.0
      %v5520 = vadd.f32 %v5511, 1.0
      %v5521 = vadd.f32 %v5513, 1.0
      %v5522 = vadd.f32 %v5515, 1.0
      %v5523 = vadd.f32 %v5517, 1.0
      %v5524 = vrcp.pop %v5518
      %v5525 = vmul.f32 1.0, %v5524
      %v5526 = vrcp.pop %v5519
      %v5527 = vmul.f32 1.0, %v5526
      %v5528 = vrcp.pop %v5520
      %v5529 = vmul.f32 1.0, %v5528
      %v5530 = vrcp.pop %v5521
      %v5531 = vmul.f32 1.0, %v5530
      %v5532 = vrcp.pop %v5522
      %v5533 = vmul.f32 1.0, %v5532
      %v5534 = vrcp.pop %v5523
      %v5535 = vmul.f32 1.0, %v5534
      %v5536 = vtanh.pop %v5495
      %v5537 = vtanh.pop %v5499
      %v5538 = vmul.f32 %v5527, %v5206
      %v5539 = vmul.f32 %v5533, %v5207
      %v5540 = vmul.f32 %v5525, %v5536
      %v5541 = vmul.f32 %v5531, %v5537
      %v5542 = vadd.f32 %v5538, %v5540
      %v5543 = vadd.f32 %v5539, %v5541
      %v5544 = vtanh.pop %v5542
      %v5545 = vtanh.pop %v5543
      %v5546 = vmul.f32 %v5529, %v5544
      %v5547 = vmul.f32 %v5535, %v5545
      %v5548 = vpack.c.bf16 %v5547, %v5546
      %5549 = vst [vmem:[%s2333] sm:$0xff] %v5548
      %v5550 = vld [vmem:[%s4205] sm:$0xff]
      %v5551 = vld [vmem:[%s4205 + $0x8] sm:$0xff]
      %v5552 = vld [vmem:[%s4205 + $0x10] sm:$0xff]
      %v5553 = vld [vmem:[%s4205 + $0x18] sm:$0xff]
      %v5554 = vld [vmem:[%s4205 + $0x20] sm:$0xff]
      %v5555 = vld [vmem:[%s4205 + $0x28] sm:$0xff]
      %v5556 = vld [vmem:[%s4205 + $0x30] sm:$0xff]
      %v5557 = vld [vmem:[%s4205 + $0x38] sm:$0xff]
      %v5558 = vld [vmem:[%s4205 + $0x40] sm:$0xff]
      %v5559 = vld [vmem:[%s4205 + $0x48] sm:$0xff]
      %v5560 = vld [vmem:[%s4205 + $0x50] sm:$0xff]
      %v5561 = vld [vmem:[%s4205 + $0x58] sm:$0xff]
      %v5562 = vld [vmem:[%s4205 + $0x60] sm:$0xff]
      %v5563 = vld [vmem:[%s4205 + $0x68] sm:$0xff]
      %v5564 = vld [vmem:[%s4205 + $0x70] sm:$0xff]
      %v5565 = vld [vmem:[%s4205 + $0x78] sm:$0xff]
      %v5566 = vld [vmem:[%s4205 + $0x80] sm:$0xff]
      %v5567 = vld [vmem:[%s4205 + $0x88] sm:$0xff]
      %v5568 = vld [vmem:[%s4205 + $0x90] sm:$0xff]
      %v5569 = vld [vmem:[%s4205 + $0x98] sm:$0xff]
      %v5570 = vld [vmem:[%s4205 + $0xa0] sm:$0xff]
      %v5571 = vld [vmem:[%s4205 + $0xa8] sm:$0xff]
      %v5572 = vld [vmem:[%s4205 + $0xb0] sm:$0xff]
      %v5573 = vld [vmem:[%s4205 + $0xb8] sm:$0xff]
      %v5574 = vld [vmem:[%s4205 + $0xc0] sm:$0xff]
      %v5575 = vld [vmem:[%s4205 + $0xc8] sm:$0xff]
      %v5576 = vld [vmem:[%s4205 + $0xd0] sm:$0xff]
      %v5577 = vld [vmem:[%s4205 + $0xd8] sm:$0xff]
      %v5578 = vld [vmem:[%s4205 + $0xe0] sm:$0xff]
      %v5579 = vld [vmem:[%s4205 + $0xe8] sm:$0xff]
      %v5580 = vld [vmem:[%s4205 + $0xf0] sm:$0xff]
      %v5581 = vld [vmem:[%s4205 + $0xf8] sm:$0xff]
      %v5614 = vunpack.c.l.b16 %v5550
      %v5615 = vunpack.c.h.b16 %v5550
      %v5616 = vunpack.c.l.b16 %v5551
      %v5617 = vunpack.c.h.b16 %v5551
      %v5618 = vunpack.c.l.b16 %v5552
      %v5619 = vunpack.c.h.b16 %v5552
      %v5620 = vunpack.c.l.b16 %v5553
      %v5621 = vunpack.c.h.b16 %v5553
      %v5622 = vunpack.c.l.b16 %v5554
      %v5623 = vunpack.c.h.b16 %v5554
      %v5624 = vunpack.c.l.b16 %v5555
      %v5625 = vunpack.c.h.b16 %v5555
      %v5626 = vunpack.c.l.b16 %v5556
      %v5627 = vunpack.c.h.b16 %v5556
      %v5628 = vunpack.c.l.b16 %v5557
      %v5629 = vunpack.c.h.b16 %v5557
      %v5630 = vunpack.c.l.b16 %v5558
      %v5631 = vunpack.c.h.b16 %v5558
      %v5632 = vunpack.c.l.b16 %v5559
      %v5633 = vunpack.c.h.b16 %v5559
      %v5634 = vunpack.c.l.b16 %v5560
      %v5635 = vunpack.c.h.b16 %v5560
      %v5636 = vunpack.c.l.b16 %v5561
      %v5637 = vunpack.c.h.b16 %v5561
      %v5638 = vunpack.c.l.b16 %v5562
      %v5639 = vunpack.c.h.b16 %v5562
      %v5640 = vunpack.c.l.b16 %v5563
      %v5641 = vunpack.c.h.b16 %v5563
      %v5642 = vunpack.c.l.b16 %v5564
      %v5643 = vunpack.c.h.b16 %v5564
      %v5644 = vunpack.c.l.b16 %v5565
      %v5645 = vunpack.c.h.b16 %v5565
      %v5646 = vunpack.c.l.b16 %v5566
      %v5647 = vunpack.c.h.b16 %v5566
      %v5648 = vunpack.c.l.b16 %v5567
      %v5649 = vunpack.c.h.b16 %v5567
      %v5650 = vunpack.c.l.b16 %v5568
      %v5651 = vunpack.c.h.b16 %v5568
      %v5652 = vunpack.c.l.b16 %v5569
      %v5653 = vunpack.c.h.b16 %v5569
      %v5654 = vunpack.c.l.b16 %v5570
      %v5655 = vunpack.c.h.b16 %v5570
      %v5656 = vunpack.c.l.b16 %v5571
      %v5657 = vunpack.c.h.b16 %v5571
      %v5658 = vunpack.c.l.b16 %v5572
      %v5659 = vunpack.c.h.b16 %v5572
      %v5660 = vunpack.c.l.b16 %v5573
      %v5661 = vunpack.c.h.b16 %v5573
      %v5662 = vunpack.c.l.b16 %v5574
      %v5663 = vunpack.c.h.b16 %v5574
      %v5664 = vunpack.c.l.b16 %v5575
      %v5665 = vunpack.c.h.b16 %v5575
      %v5666 = vunpack.c.l.b16 %v5576
      %v5667 = vunpack.c.h.b16 %v5576
      %v5668 = vunpack.c.l.b16 %v5577
      %v5669 = vunpack.c.h.b16 %v5577
      %v5670 = vunpack.c.l.b16 %v5578
      %v5671 = vunpack.c.h.b16 %v5578
      %v5672 = vunpack.c.l.b16 %v5579
      %v5673 = vunpack.c.h.b16 %v5579
      %v5674 = vunpack.c.l.b16 %v5580
      %v5675 = vunpack.c.h.b16 %v5580
      %v5676 = vunpack.c.l.b16 %v5581
      %v5677 = vunpack.c.h.b16 %v5581
      %v5678 = vpack.c.b16 %v5618, %v5614
      %v5679 = vpack.c.b16 %v5619, %v5615
      %v5680 = vpack.c.b16 %v5620, %v5616
      %v5681 = vpack.c.b16 %v5621, %v5617
      %v5682 = vpack.c.b16 %v5626, %v5622
      %v5683 = vpack.c.b16 %v5627, %v5623
      %v5684 = vpack.c.b16 %v5628, %v5624
      %v5685 = vpack.c.b16 %v5629, %v5625
      %v5686 = vpack.c.b16 %v5634, %v5630
      %v5687 = vpack.c.b16 %v5635, %v5631
      %v5688 = vpack.c.b16 %v5636, %v5632
      %v5689 = vpack.c.b16 %v5637, %v5633
      %v5690 = vpack.c.b16 %v5642, %v5638
      %v5691 = vpack.c.b16 %v5643, %v5639
      %v5692 = vpack.c.b16 %v5644, %v5640
      %v5693 = vpack.c.b16 %v5645, %v5641
      %v5694 = vpack.c.b16 %v5650, %v5646
      %v5695 = vpack.c.b16 %v5651, %v5647
      %v5696 = vpack.c.b16 %v5652, %v5648
      %v5697 = vpack.c.b16 %v5653, %v5649
      %v5698 = vpack.c.b16 %v5658, %v5654
      %v5699 = vpack.c.b16 %v5659, %v5655
      %v5700 = vpack.c.b16 %v5660, %v5656
      %v5701 = vpack.c.b16 %v5661, %v5657
      %v5702 = vpack.c.b16 %v5666, %v5662
      %v5703 = vpack.c.b16 %v5667, %v5663
      %v5704 = vpack.c.b16 %v5668, %v5664
      %v5705 = vpack.c.b16 %v5669, %v5665
      %v5706 = vpack.c.b16 %v5674, %v5670
      %v5707 = vpack.c.b16 %v5675, %v5671
      %v5708 = vpack.c.b16 %v5676, %v5672
      %v5709 = vpack.c.b16 %v5677, %v5673
      %5742 = vmatprep.subr.bf16.mxu0 %v5679
      %5743 = vmatpush1.bf16.msra.mxu0 %v5678
      %5744 = vmatprep.subr.bf16.mxu0 %v5683
      %5745 = vmatpush1.bf16.msra.mxu0 %v5682
      %5746 = vmatprep.subr.bf16.mxu0 %v5687
      %5747 = vmatpush1.bf16.msra.mxu0 %v5686
      %5748 = vmatprep.subr.bf16.mxu0 %v5691
      %5749 = vmatpush1.bf16.msra.mxu0 %v5690
      %5750 = vmatprep.subr.bf16.mxu0 %v5695
      %5751 = vmatpush1.bf16.msra.mxu0 %v5694
      %5752 = vmatprep.subr.bf16.mxu0 %v5699
      %5753 = vmatpush1.bf16.msra.mxu0 %v5698
      %5754 = vmatprep.subr.bf16.mxu0 %v5703
      %5755 = vmatpush1.bf16.msra.mxu0 %v5702
      %5756 = vmatprep.subr.bf16.mxu0 %v5707
      %5757 = vmatpush1.bf16.msra.mxu0 %v5706
      %5758 = vmatprep.subr.bf16.mxu0 0
      %5759 = vmatpush1.bf16.msra.mxu0 0
      %5760 = vmatprep.subr.bf16.mxu0 0
      %5761 = vmatpush1.bf16.msra.mxu0 0
      %5762 = vmatprep.subr.bf16.mxu0 0
      %5763 = vmatpush1.bf16.msra.mxu0 0
      %5764 = vmatprep.subr.bf16.mxu0 0
      %5765 = vmatpush1.bf16.msra.mxu0 0
      %5766 = vmatprep.subr.bf16.mxu0 0
      %5767 = vmatpush1.bf16.msra.mxu0 0
      %5768 = vmatprep.subr.bf16.mxu0 0
      %5769 = vmatpush1.bf16.msra.mxu0 0
      %5770 = vmatprep.subr.bf16.mxu0 0
      %5771 = vmatpush1.bf16.msra.mxu0 0
      %5772 = vmatprep.subr.bf16.mxu0 0
      %5773 = vmatpush1.bf16.msra.mxu0 0
      %5774 = vmatprep.mubr.bf16.mxu0 0
      %5775 = vmatmul.mubr.bf16.gmra.mrb[0].mxu0 %v5548
      %v5776 = vpop.f32.mrb[0].mxu0
      %v5777 = vadd.f32 0.0, %v5776
      %v5778 = vpop.f32.mrb[0].mxu0
      %v5779 = vadd.f32 0.0, %v5778
      %v5780 = vpop.f32.mrb[0].mxu0
      %v5781 = vadd.f32 0.0, %v5780
      %v5782 = vpop.f32.mrb[0].mxu0
      %v5783 = vadd.f32 0.0, %v5782
      %5784 = vdwg.mxu0
      %5785 = vmatprep.subr.bf16.mxu0 %v5681
      %5786 = vmatpush1.bf16.msra.mxu0 %v5680
      %5787 = vmatprep.subr.bf16.mxu0 %v5685
      %5788 = vmatpush1.bf16.msra.mxu0 %v5684
      %5789 = vmatprep.subr.bf16.mxu0 %v5689
      %5790 = vmatpush1.bf16.msra.mxu0 %v5688
      %5791 = vmatprep.subr.bf16.mxu0 %v5693
      %5792 = vmatpush1.bf16.msra.mxu0 %v5692
      %5793 = vmatprep.subr.bf16.mxu0 %v5697
      %5794 = vmatpush1.bf16.msra.mxu0 %v5696
      %5795 = vmatprep.subr.bf16.mxu0 %v5701
      %5796 = vmatpush1.bf16.msra.mxu0 %v5700
      %5797 = vmatprep.subr.bf16.mxu0 %v5705
      %5798 = vmatpush1.bf16.msra.mxu0 %v5704
      %5799 = vmatprep.subr.bf16.mxu0 %v5709
      %5800 = vmatpush1.bf16.msra.mxu0 %v5708
      %5801 = vmatprep.subr.bf16.mxu0 0
      %5802 = vmatpush1.bf16.msra.mxu0 0
      %5803 = vmatprep.subr.bf16.mxu0 0
      %5804 = vmatpush1.bf16.msra.mxu0 0
      %5805 = vmatprep.subr.bf16.mxu0 0
      %5806 = vmatpush1.bf16.msra.mxu0 0
      %5807 = vmatprep.subr.bf16.mxu0 0
      %5808 = vmatpush1.bf16.msra.mxu0 0
      %5809 = vmatprep.subr.bf16.mxu0 0
      %5810 = vmatpush1.bf16.msra.mxu0 0
      %5811 = vmatprep.subr.bf16.mxu0 0
      %5812 = vmatpush1.bf16.msra.mxu0 0
      %5813 = vmatprep.subr.bf16.mxu0 0
      %5814 = vmatpush1.bf16.msra.mxu0 0
      %5815 = vmatprep.subr.bf16.mxu0 0
      %5816 = vmatpush1.bf16.msra.mxu0 0
      %5817 = vmatprep.mubr.bf16.mxu0 0
      %5818 = vmatmul.mubr.bf16.gmra.mrb[0].mxu0 %v5548
      %v5819 = vpop.f32.mrb[0].mxu0
      %v5820 = vadd.f32 0.0, %v5819
      %v5821 = vpop.f32.mrb[0].mxu0
      %v5822 = vadd.f32 0.0, %v5821
      %v5823 = vpop.f32.mrb[0].mxu0
      %v5824 = vadd.f32 0.0, %v5823
      %v5825 = vpop.f32.mrb[0].mxu0
      %v5826 = vadd.f32 0.0, %v5825
      %5827 = vdwg.mxu0
      %v5828 = vadd.f32 %v4168, %v5777
      %v5829 = vadd.f32 %v4169, %v5779
      %v5830 = vadd.f32 %v4170, %v5820
      %v5831 = vadd.f32 %v4171, %v5822
      %v5832 = vadd.f32 %v4172, %v5781
      %v5833 = vadd.f32 %v4173, %v5783
      %v5834 = vadd.f32 %v4174, %v5824
      %v5835 = vadd.f32 %v4175, %v5826
      %v5836 = vxor.u32 %v5828, 2147483648
      %v5837 = vxor.u32 %v5829, 2147483648
      %v5838 = vxor.u32 %v5830, 2147483648
      %v5839 = vxor.u32 %v5832, 2147483648
      %v5840 = vxor.u32 %v5833, 2147483648
      %v5841 = vxor.u32 %v5834, 2147483648
      %v5842 = vmul.f32 %v5836, 1.442695
      %v5843 = vpow.pop %v5842
      %v5844 = vmul.f32 %v5837, 1.442695
      %v5845 = vpow.pop %v5844
      %v5846 = vmul.f32 %v5838, 1.442695
      %v5847 = vpow.pop %v5846
      %v5848 = vmul.f32 %v5839, 1.442695
      %v5849 = vpow.pop %v5848
      %v5850 = vmul.f32 %v5840, 1.442695
      %v5851 = vpow.pop %v5850
      %v5852 = vmul.f32 %v5841, 1.442695
      %v5853 = vpow.pop %v5852
      %v5854 = vadd.f32 %v5843, 1.0
      %v5855 = vadd.f32 %v5845, 1.0
      %v5856 = vadd.f32 %v5847, 1.0
      %v5857 = vadd.f32 %v5849, 1.0
      %v5858 = vadd.f32 %v5851, 1.0
      %v5859 = vadd.f32 %v5853, 1.0
      %v5860 = vrcp.pop %v5854
      %v5861 = vmul.f32 1.0, %v5860
      %v5862 = vrcp.pop %v5855
      %v5863 = vmul.f32 1.0, %v5862
      %v5864 = vrcp.pop %v5856
      %v5865 = vmul.f32 1.0, %v5864
      %v5866 = vrcp.pop %v5857
      %v5867 = vmul.f32 1.0, %v5866
      %v5868 = vrcp.pop %v5858
      %v5869 = vmul.f32 1.0, %v5868
      %v5870 = vrcp.pop %v5859
      %v5871 = vmul.f32 1.0, %v5870
      %v5872 = vtanh.pop %v5831
      %v5873 = vtanh.pop %v5835
      %v5874 = vmul.f32 %v5863, %v5542
      %v5875 = vmul.f32 %v5869, %v5543
      %v5876 = vmul.f32 %v5861, %v5872
      %v5877 = vmul.f32 %v5867, %v5873
      %v5878 = vadd.f32 %v5874, %v5876
      %v5879 = vadd.f32 %v5875, %v5877
      %v5880 = vtanh.pop %v5878
      %v5881 = vtanh.pop %v5879
      %v5882 = vmul.f32 %v5865, %v5880
      %v5883 = vmul.f32 %v5871, %v5881
      %v5884 = vpack.c.bf16 %v5883, %v5882
      %5885 = vst [vmem:[%s2670] sm:$0xff] %v5884
      %v5886 = vld [vmem:[%s4205] sm:$0xff]
      %v5887 = vld [vmem:[%s4205 + $0x8] sm:$0xff]
      %v5888 = vld [vmem:[%s4205 + $0x10] sm:$0xff]
      %v5889 = vld [vmem:[%s4205 + $0x18] sm:$0xff]
      %v5890 = vld [vmem:[%s4205 + $0x20] sm:$0xff]
      %v5891 = vld [vmem:[%s4205 + $0x28] sm:$0xff]
      %v5892 = vld [vmem:[%s4205 + $0x30] sm:$0xff]
      %v5893 = vld [vmem:[%s4205 + $0x38] sm:$0xff]
      %v5894 = vld [vmem:[%s4205 + $0x40] sm:$0xff]
      %v5895 = vld [vmem:[%s4205 + $0x48] sm:$0xff]
      %v5896 = vld [vmem:[%s4205 + $0x50] sm:$0xff]
      %v5897 = vld [vmem:[%s4205 + $0x58] sm:$0xff]
      %v5898 = vld [vmem:[%s4205 + $0x60] sm:$0xff]
      %v5899 = vld [vmem:[%s4205 + $0x68] sm:$0xff]
      %v5900 = vld [vmem:[%s4205 + $0x70] sm:$0xff]
      %v5901 = vld [vmem:[%s4205 + $0x78] sm:$0xff]
      %v5902 = vld [vmem:[%s4205 + $0x80] sm:$0xff]
      %v5903 = vld [vmem:[%s4205 + $0x88] sm:$0xff]
      %v5904 = vld [vmem:[%s4205 + $0x90] sm:$0xff]
      %v5905 = vld [vmem:[%s4205 + $0x98] sm:$0xff]
      %v5906 = vld [vmem:[%s4205 + $0xa0] sm:$0xff]
      %v5907 = vld [vmem:[%s4205 + $0xa8] sm:$0xff]
      %v5908 = vld [vmem:[%s4205 + $0xb0] sm:$0xff]
      %v5909 = vld [vmem:[%s4205 + $0xb8] sm:$0xff]
      %v5910 = vld [vmem:[%s4205 + $0xc0] sm:$0xff]
      %v5911 = vld [vmem:[%s4205 + $0xc8] sm:$0xff]
      %v5912 = vld [vmem:[%s4205 + $0xd0] sm:$0xff]
      %v5913 = vld [vmem:[%s4205 + $0xd8] sm:$0xff]
      %v5914 = vld [vmem:[%s4205 + $0xe0] sm:$0xff]
      %v5915 = vld [vmem:[%s4205 + $0xe8] sm:$0xff]
      %v5916 = vld [vmem:[%s4205 + $0xf0] sm:$0xff]
      %v5917 = vld [vmem:[%s4205 + $0xf8] sm:$0xff]
      %v5950 = vunpack.c.l.b16 %v5886
      %v5951 = vunpack.c.h.b16 %v5886
      %v5952 = vunpack.c.l.b16 %v5887
      %v5953 = vunpack.c.h.b16 %v5887
      %v5954 = vunpack.c.l.b16 %v5888
      %v5955 = vunpack.c.h.b16 %v5888
      %v5956 = vunpack.c.l.b16 %v5889
      %v5957 = vunpack.c.h.b16 %v5889
      %v5958 = vunpack.c.l.b16 %v5890
      %v5959 = vunpack.c.h.b16 %v5890
      %v5960 = vunpack.c.l.b16 %v5891
      %v5961 = vunpack.c.h.b16 %v5891
      %v5962 = vunpack.c.l.b16 %v5892
      %v5963 = vunpack.c.h.b16 %v5892
      %v5964 = vunpack.c.l.b16 %v5893
      %v5965 = vunpack.c.h.b16 %v5893
      %v5966 = vunpack.c.l.b16 %v5894
      %v5967 = vunpack.c.h.b16 %v5894
      %v5968 = vunpack.c.l.b16 %v5895
      %v5969 = vunpack.c.h.b16 %v5895
      %v5970 = vunpack.c.l.b16 %v5896
      %v5971 = vunpack.c.h.b16 %v5896
      %v5972 = vunpack.c.l.b16 %v5897
      %v5973 = vunpack.c.h.b16 %v5897
      %v5974 = vunpack.c.l.b16 %v5898
      %v5975 = vunpack.c.h.b16 %v5898
      %v5976 = vunpack.c.l.b16 %v5899
      %v5977 = vunpack.c.h.b16 %v5899
      %v5978 = vunpack.c.l.b16 %v5900
      %v5979 = vunpack.c.h.b16 %v5900
      %v5980 = vunpack.c.l.b16 %v5901
      %v5981 = vunpack.c.h.b16 %v5901
      %v5982 = vunpack.c.l.b16 %v5902
      %v5983 = vunpack.c.h.b16 %v5902
      %v5984 = vunpack.c.l.b16 %v5903
      %v5985 = vunpack.c.h.b16 %v5903
      %v5986 = vunpack.c.l.b16 %v5904
      %v5987 = vunpack.c.h.b16 %v5904
      %v5988 = vunpack.c.l.b16 %v5905
      %v5989 = vunpack.c.h.b16 %v5905
      %v5990 = vunpack.c.l.b16 %v5906
      %v5991 = vunpack.c.h.b16 %v5906
      %v5992 = vunpack.c.l.b16 %v5907
      %v5993 = vunpack.c.h.b16 %v5907
      %v5994 = vunpack.c.l.b16 %v5908
      %v5995 = vunpack.c.h.b16 %v5908
      %v5996 = vunpack.c.l.b16 %v5909
      %v5997 = vunpack.c.h.b16 %v5909
      %v5998 = vunpack.c.l.b16 %v5910
      %v5999 = vunpack.c.h.b16 %v5910
      %v6000 = vunpack.c.l.b16 %v5911
      %v6001 = vunpack.c.h.b16 %v5911
      %v6002 = vunpack.c.l.b16 %v5912
      %v6003 = vunpack.c.h.b16 %v5912
      %v6004 = vunpack.c.l.b16 %v5913
      %v6005 = vunpack.c.h.b16 %v5913
      %v6006 = vunpack.c.l.b16 %v5914
      %v6007 = vunpack.c.h.b16 %v5914
      %v6008 = vunpack.c.l.b16 %v5915
      %v6009 = vunpack.c.h.b16 %v5915
      %v6010 = vunpack.c.l.b16 %v5916
      %v6011 = vunpack.c.h.b16 %v5916
      %v6012 = vunpack.c.l.b16 %v5917
      %v6013 = vunpack.c.h.b16 %v5917
      %v6014 = vpack.c.b16 %v5954, %v5950
      %v6015 = vpack.c.b16 %v5955, %v5951
      %v6016 = vpack.c.b16 %v5956, %v5952
      %v6017 = vpack.c.b16 %v5957, %v5953
      %v6018 = vpack.c.b16 %v5962, %v5958
      %v6019 = vpack.c.b16 %v5963, %v5959
      %v6020 = vpack.c.b16 %v5964, %v5960
      %v6021 = vpack.c.b16 %v5965, %v5961
      %v6022 = vpack.c.b16 %v5970, %v5966
      %v6023 = vpack.c.b16 %v5971, %v5967
      %v6024 = vpack.c.b16 %v5972, %v5968
      %v6025 = vpack.c.b16 %v5973, %v5969
      %v6026 = vpack.c.b16 %v5978, %v5974
      %v6027 = vpack.c.b16 %v5979, %v5975
      %v6028 = vpack.c.b16 %v5980, %v5976
      %v6029 = vpack.c.b16 %v5981, %v5977
      %v6030 = vpack.c.b16 %v5986, %v5982
      %v6031 = vpack.c.b16 %v5987, %v5983
      %v6032 = vpack.c.b16 %v5988, %v5984
      %v6033 = vpack.c.b16 %v5989, %v5985
      %v6034 = vpack.c.b16 %v5994, %v5990
      %v6035 = vpack.c.b16 %v5995, %v5991
      %v6036 = vpack.c.b16 %v5996, %v5992
      %v6037 = vpack.c.b16 %v5997, %v5993
      %v6038 = vpack.c.b16 %v6002, %v5998
      %v6039 = vpack.c.b16 %v6003, %v5999
      %v6040 = vpack.c.b16 %v6004, %v6000
      %v6041 = vpack.c.b16 %v6005, %v6001
      %v6042 = vpack.c.b16 %v6010, %v6006
      %v6043 = vpack.c.b16 %v6011, %v6007
      %v6044 = vpack.c.b16 %v6012, %v6008
      %v6045 = vpack.c.b16 %v6013, %v6009
      %6078 = vmatprep.subr.bf16.mxu0 %v6015
      %6079 = vmatpush1.bf16.msra.mxu0 %v6014
      %6080 = vmatprep.subr.bf16.mxu0 %v6019
      %6081 = vmatpush1.bf16.msra.mxu0 %v6018
      %6082 = vmatprep.subr.bf16.mxu0 %v6023
      %6083 = vmatpush1.bf16.msra.mxu0 %v6022
      %6084 = vmatprep.subr.bf16.mxu0 %v6027
      %6085 = vmatpush1.bf16.msra.mxu0 %v6026
      %6086 = vmatprep.subr.bf16.mxu0 %v6031
      %6087 = vmatpush1.bf16.msra.mxu0 %v6030
      %6088 = vmatprep.subr.bf16.mxu0 %v6035
      %6089 = vmatpush1.bf16.msra.mxu0 %v6034
      %6090 = vmatprep.subr.bf16.mxu0 %v6039
      %6091 = vmatpush1.bf16.msra.mxu0 %v6038
      %6092 = vmatprep.subr.bf16.mxu0 %v6043
      %6093 = vmatpush1.bf16.msra.mxu0 %v6042
      %6094 = vmatprep.subr.bf16.mxu0 0
      %6095 = vmatpush1.bf16.msra.mxu0 0
      %6096 = vmatprep.subr.bf16.mxu0 0
      %6097 = vmatpush1.bf16.msra.mxu0 0
      %6098 = vmatprep.subr.bf16.mxu0 0
      %6099 = vmatpush1.bf16.msra.mxu0 0
      %6100 = vmatprep.subr.bf16.mxu0 0
      %6101 = vmatpush1.bf16.msra.mxu0 0
      %6102 = vmatprep.subr.bf16.mxu0 0
      %6103 = vmatpush1.bf16.msra.mxu0 0
      %6104 = vmatprep.subr.bf16.mxu0 0
      %6105 = vmatpush1.bf16.msra.mxu0 0
      %6106 = vmatprep.subr.bf16.mxu0 0
      %6107 = vmatpush1.bf16.msra.mxu0 0
      %6108 = vmatprep.subr.bf16.mxu0 0
      %6109 = vmatpush1.bf16.msra.mxu0 0
      %6110 = vmatprep.mubr.bf16.mxu0 0
      %6111 = vmatmul.mubr.bf16.gmra.mrb[0].mxu0 %v5884
      %v6112 = vpop.f32.mrb[0].mxu0
      %v6113 = vadd.f32 0.0, %v6112
      %v6114 = vpop.f32.mrb[0].mxu0
      %v6115 = vadd.f32 0.0, %v6114
      %v6116 = vpop.f32.mrb[0].mxu0
      %v6117 = vadd.f32 0.0, %v6116
      %v6118 = vpop.f32.mrb[0].mxu0
      %v6119 = vadd.f32 0.0, %v6118
      %6120 = vdwg.mxu0
      %6121 = vmatprep.subr.bf16.mxu0 %v6017
      %6122 = vmatpush1.bf16.msra.mxu0 %v6016
      %6123 = vmatprep.subr.bf16.mxu0 %v6021
      %6124 = vmatpush1.bf16.msra.mxu0 %v6020
      %6125 = vmatprep.subr.bf16.mxu0 %v6025
      %6126 = vmatpush1.bf16.msra.mxu0 %v6024
      %6127 = vmatprep.subr.bf16.mxu0 %v6029
      %6128 = vmatpush1.bf16.msra.mxu0 %v6028
      %6129 = vmatprep.subr.bf16.mxu0 %v6033
      %6130 = vmatpush1.bf16.msra.mxu0 %v6032
      %6131 = vmatprep.subr.bf16.mxu0 %v6037
      %6132 = vmatpush1.bf16.msra.mxu0 %v6036
      %6133 = vmatprep.subr.bf16.mxu0 %v6041
      %6134 = vmatpush1.bf16.msra.mxu0 %v6040
      %6135 = vmatprep.subr.bf16.mxu0 %v6045
      %6136 = vmatpush1.bf16.msra.mxu0 %v6044
      %6137 = vmatprep.subr.bf16.mxu0 0
      %6138 = vmatpush1.bf16.msra.mxu0 0
      %6139 = vmatprep.subr.bf16.mxu0 0
      %6140 = vmatpush1.bf16.msra.mxu0 0
      %6141 = vmatprep.subr.bf16.mxu0 0
      %6142 = vmatpush1.bf16.msra.mxu0 0
      %6143 = vmatprep.subr.bf16.mxu0 0
      %6144 = vmatpush1.bf16.msra.mxu0 0
      %6145 = vmatprep.subr.bf16.mxu0 0
      %6146 = vmatpush1.bf16.msra.mxu0 0
      %6147 = vmatprep.subr.bf16.mxu0 0
      %6148 = vmatpush1.bf16.msra.mxu0 0
      %6149 = vmatprep.subr.bf16.mxu0 0
      %6150 = vmatpush1.bf16.msra.mxu0 0
      %6151 = vmatprep.subr.bf16.mxu0 0
      %6152 = vmatpush1.bf16.msra.mxu0 0
      %6153 = vmatprep.mubr.bf16.mxu0 0
      %6154 = vmatmul.mubr.bf16.gmra.mrb[0].mxu0 %v5884
      %v6155 = vpop.f32.mrb[0].mxu0
      %v6156 = vadd.f32 0.0, %v6155
      %v6157 = vpop.f32.mrb[0].mxu0
      %v6158 = vadd.f32 0.0, %v6157
      %v6159 = vpop.f32.mrb[0].mxu0
      %v6160 = vadd.f32 0.0, %v6159
      %v6161 = vpop.f32.mrb[0].mxu0
      %v6162 = vadd.f32 0.0, %v6161
      %6163 = vdwg.mxu0
      %v6164 = vadd.f32 %v4176, %v6113
      %v6165 = vadd.f32 %v4177, %v6115
      %v6166 = vadd.f32 %v4178, %v6156
      %v6167 = vadd.f32 %v4179, %v6158
      %v6168 = vadd.f32 %v4180, %v6117
      %v6169 = vadd.f32 %v4181, %v6119
      %v6170 = vadd.f32 %v4182, %v6160
      %v6171 = vadd.f32 %v4183, %v6162
      %v6172 = vxor.u32 %v6164, 2147483648
      %v6173 = vxor.u32 %v6165, 2147483648
      %v6174 = vxor.u32 %v6166, 2147483648
      %v6175 = vxor.u32 %v6168, 2147483648
      %v6176 = vxor.u32 %v6169, 2147483648
      %v6177 = vxor.u32 %v6170, 2147483648
      %v6178 = vmul.f32 %v6172, 1.442695
      %v6179 = vpow.pop %v6178
      %v6180 = vmul.f32 %v6173, 1.442695
      %v6181 = vpow.pop %v6180
      %v6182 = vmul.f32 %v6174, 1.442695
      %v6183 = vpow.pop %v6182
      %v6184 = vmul.f32 %v6175, 1.442695
      %v6185 = vpow.pop %v6184
      %v6186 = vmul.f32 %v6176, 1.442695
      %v6187 = vpow.pop %v6186
      %v6188 = vmul.f32 %v6177, 1.442695
      %v6189 = vpow.pop %v6188
      %v6190 = vadd.f32 %v6179, 1.0
      %v6191 = vadd.f32 %v6181, 1.0
      %v6192 = vadd.f32 %v6183, 1.0
      %v6193 = vadd.f32 %v6185, 1.0
      %v6194 = vadd.f32 %v6187, 1.0
      %v6195 = vadd.f32 %v6189, 1.0
      %v6196 = vrcp.pop %v6190
      %v6197 = vmul.f32 1.0, %v6196
      %v6198 = vrcp.pop %v6191
      %v6199 = vmul.f32 1.0, %v6198
      %v6200 = vrcp.pop %v6192
      %v6201 = vmul.f32 1.0, %v6200
      %v6202 = vrcp.pop %v6193
      %v6203 = vmul.f32 1.0, %v6202
      %v6204 = vrcp.pop %v6194
      %v6205 = vmul.f32 1.0, %v6204
      %v6206 = vrcp.pop %v6195
      %v6207 = vmul.f32 1.0, %v6206
      %v6208 = vtanh.pop %v6167
      %v6209 = vtanh.pop %v6171
      %v6210 = vmul.f32 %v6199, %v5878
      %v6211 = vmul.f32 %v6205, %v5879
      %v6212 = vmul.f32 %v6197, %v6208
      %v6213 = vmul.f32 %v6203, %v6209
      %v6214 = vadd.f32 %v6210, %v6212
      %v6215 = vadd.f32 %v6211, %v6213
      %v6216 = vtanh.pop %v6214
      %v6217 = vtanh.pop %v6215
      %v6218 = vmul.f32 %v6201, %v6216
      %v6219 = vmul.f32 %v6207, %v6217
      %v6220 = vpack.c.bf16 %v6219, %v6218
      %6221 = vst [vmem:[%s3007] sm:$0xff] %v6220
      %v6222 = vld [vmem:[%s4205] sm:$0xff]
      %v6223 = vld [vmem:[%s4205 + $0x8] sm:$0xff]
      %v6224 = vld [vmem:[%s4205 + $0x10] sm:$0xff]
      %v6225 = vld [vmem:[%s4205 + $0x18] sm:$0xff]
      %v6226 = vld [vmem:[%s4205 + $0x20] sm:$0xff]
      %v6227 = vld [vmem:[%s4205 + $0x28] sm:$0xff]
      %v6228 = vld [vmem:[%s4205 + $0x30] sm:$0xff]
      %v6229 = vld [vmem:[%s4205 + $0x38] sm:$0xff]
      %v6230 = vld [vmem:[%s4205 + $0x40] sm:$0xff]
      %v6231 = vld [vmem:[%s4205 + $0x48] sm:$0xff]
      %v6232 = vld [vmem:[%s4205 + $0x50] sm:$0xff]
      %v6233 = vld [vmem:[%s4205 + $0x58] sm:$0xff]
      %v6234 = vld [vmem:[%s4205 + $0x60] sm:$0xff]
      %v6235 = vld [vmem:[%s4205 + $0x68] sm:$0xff]
      %v6236 = vld [vmem:[%s4205 + $0x70] sm:$0xff]
      %v6237 = vld [vmem:[%s4205 + $0x78] sm:$0xff]
      %v6238 = vld [vmem:[%s4205 + $0x80] sm:$0xff]
      %v6239 = vld [vmem:[%s4205 + $0x88] sm:$0xff]
      %v6240 = vld [vmem:[%s4205 + $0x90] sm:$0xff]
      %v6241 = vld [vmem:[%s4205 + $0x98] sm:$0xff]
      %v6242 = vld [vmem:[%s4205 + $0xa0] sm:$0xff]
      %v6243 = vld [vmem:[%s4205 + $0xa8] sm:$0xff]
      %v6244 = vld [vmem:[%s4205 + $0xb0] sm:$0xff]
      %v6245 = vld [vmem:[%s4205 + $0xb8] sm:$0xff]
      %v6246 = vld [vmem:[%s4205 + $0xc0] sm:$0xff]
      %v6247 = vld [vmem:[%s4205 + $0xc8] sm:$0xff]
      %v6248 = vld [vmem:[%s4205 + $0xd0] sm:$0xff]
      %v6249 = vld [vmem:[%s4205 + $0xd8] sm:$0xff]
      %v6250 = vld [vmem:[%s4205 + $0xe0] sm:$0xff]
      %v6251 = vld [vmem:[%s4205 + $0xe8] sm:$0xff]
      %v6252 = vld [vmem:[%s4205 + $0xf0] sm:$0xff]
      %v6253 = vld [vmem:[%s4205 + $0xf8] sm:$0xff]
      %v6286 = vunpack.c.l.b16 %v6222
      %v6287 = vunpack.c.h.b16 %v6222
      %v6288 = vunpack.c.l.b16 %v6223
      %v6289 = vunpack.c.h.b16 %v6223
      %v6290 = vunpack.c.l.b16 %v6224
      %v6291 = vunpack.c.h.b16 %v6224
      %v6292 = vunpack.c.l.b16 %v6225
      %v6293 = vunpack.c.h.b16 %v6225
      %v6294 = vunpack.c.l.b16 %v6226
      %v6295 = vunpack.c.h.b16 %v6226
      %v6296 = vunpack.c.l.b16 %v6227
      %v6297 = vunpack.c.h.b16 %v6227
      %v6298 = vunpack.c.l.b16 %v6228
      %v6299 = vunpack.c.h.b16 %v6228
      %v6300 = vunpack.c.l.b16 %v6229
      %v6301 = vunpack.c.h.b16 %v6229
      %v6302 = vunpack.c.l.b16 %v6230
      %v6303 = vunpack.c.h.b16 %v6230
      %v6304 = vunpack.c.l.b16 %v6231
      %v6305 = vunpack.c.h.b16 %v6231
      %v6306 = vunpack.c.l.b16 %v6232
      %v6307 = vunpack.c.h.b16 %v6232
      %v6308 = vunpack.c.l.b16 %v6233
      %v6309 = vunpack.c.h.b16 %v6233
      %v6310 = vunpack.c.l.b16 %v6234
      %v6311 = vunpack.c.h.b16 %v6234
      %v6312 = vunpack.c.l.b16 %v6235
      %v6313 = vunpack.c.h.b16 %v6235
      %v6314 = vunpack.c.l.b16 %v6236
      %v6315 = vunpack.c.h.b16 %v6236
      %v6316 = vunpack.c.l.b16 %v6237
      %v6317 = vunpack.c.h.b16 %v6237
      %v6318 = vunpack.c.l.b16 %v6238
      %v6319 = vunpack.c.h.b16 %v6238
      %v6320 = vunpack.c.l.b16 %v6239
      %v6321 = vunpack.c.h.b16 %v6239
      %v6322 = vunpack.c.l.b16 %v6240
      %v6323 = vunpack.c.h.b16 %v6240
      %v6324 = vunpack.c.l.b16 %v6241
      %v6325 = vunpack.c.h.b16 %v6241
      %v6326 = vunpack.c.l.b16 %v6242
      %v6327 = vunpack.c.h.b16 %v6242
      %v6328 = vunpack.c.l.b16 %v6243
      %v6329 = vunpack.c.h.b16 %v6243
      %v6330 = vunpack.c.l.b16 %v6244
      %v6331 = vunpack.c.h.b16 %v6244
      %v6332 = vunpack.c.l.b16 %v6245
      %v6333 = vunpack.c.h.b16 %v6245
      %v6334 = vunpack.c.l.b16 %v6246
      %v6335 = vunpack.c.h.b16 %v6246
      %v6336 = vunpack.c.l.b16 %v6247
      %v6337 = vunpack.c.h.b16 %v6247
      %v6338 = vunpack.c.l.b16 %v6248
      %v6339 = vunpack.c.h.b16 %v6248
      %v6340 = vunpack.c.l.b16 %v6249
      %v6341 = vunpack.c.h.b16 %v6249
      %v6342 = vunpack.c.l.b16 %v6250
      %v6343 = vunpack.c.h.b16 %v6250
      %v6344 = vunpack.c.l.b16 %v6251
      %v6345 = vunpack.c.h.b16 %v6251
      %v6346 = vunpack.c.l.b16 %v6252
      %v6347 = vunpack.c.h.b16 %v6252
      %v6348 = vunpack.c.l.b16 %v6253
      %v6349 = vunpack.c.h.b16 %v6253
      %v6350 = vpack.c.b16 %v6290, %v6286
      %v6351 = vpack.c.b16 %v6291, %v6287
      %v6352 = vpack.c.b16 %v6292, %v6288
      %v6353 = vpack.c.b16 %v6293, %v6289
      %v6354 = vpack.c.b16 %v6298, %v6294
      %v6355 = vpack.c.b16 %v6299, %v6295
      %v6356 = vpack.c.b16 %v6300, %v6296
      %v6357 = vpack.c.b16 %v6301, %v6297
      %v6358 = vpack.c.b16 %v6306, %v6302
      %v6359 = vpack.c.b16 %v6307, %v6303
      %v6360 = vpack.c.b16 %v6308, %v6304
      %v6361 = vpack.c.b16 %v6309, %v6305
      %v6362 = vpack.c.b16 %v6314, %v6310
      %v6363 = vpack.c.b16 %v6315, %v6311
      %v6364 = vpack.c.b16 %v6316, %v6312
      %v6365 = vpack.c.b16 %v6317, %v6313
      %v6366 = vpack.c.b16 %v6322, %v6318
      %v6367 = vpack.c.b16 %v6323, %v6319
      %v6368 = vpack.c.b16 %v6324, %v6320
      %v6369 = vpack.c.b16 %v6325, %v6321
      %v6370 = vpack.c.b16 %v6330, %v6326
      %v6371 = vpack.c.b16 %v6331, %v6327
      %v6372 = vpack.c.b16 %v6332, %v6328
      %v6373 = vpack.c.b16 %v6333, %v6329
      %v6374 = vpack.c.b16 %v6338, %v6334
      %v6375 = vpack.c.b16 %v6339, %v6335
      %v6376 = vpack.c.b16 %v6340, %v6336
      %v6377 = vpack.c.b16 %v6341, %v6337
      %v6378 = vpack.c.b16 %v6346, %v6342
      %v6379 = vpack.c.b16 %v6347, %v6343
      %v6380 = vpack.c.b16 %v6348, %v6344
      %v6381 = vpack.c.b16 %v6349, %v6345
      %6414 = vmatprep.subr.bf16.mxu0 %v6351
      %6415 = vmatpush1.bf16.msra.mxu0 %v6350
      %6416 = vmatprep.subr.bf16.mxu0 %v6355
      %6417 = vmatpush1.bf16.msra.mxu0 %v6354
      %6418 = vmatprep.subr.bf16.mxu0 %v6359
      %6419 = vmatpush1.bf16.msra.mxu0 %v6358
      %6420 = vmatprep.subr.bf16.mxu0 %v6363
      %6421 = vmatpush1.bf16.msra.mxu0 %v6362
      %6422 = vmatprep.subr.bf16.mxu0 %v6367
      %6423 = vmatpush1.bf16.msra.mxu0 %v6366
      %6424 = vmatprep.subr.bf16.mxu0 %v6371
      %6425 = vmatpush1.bf16.msra.mxu0 %v6370
      %6426 = vmatprep.subr.bf16.mxu0 %v6375
      %6427 = vmatpush1.bf16.msra.mxu0 %v6374
      %6428 = vmatprep.subr.bf16.mxu0 %v6379
      %6429 = vmatpush1.bf16.msra.mxu0 %v6378
      %6430 = vmatprep.subr.bf16.mxu0 0
      %6431 = vmatpush1.bf16.msra.mxu0 0
      %6432 = vmatprep.subr.bf16.mxu0 0
      %6433 = vmatpush1.bf16.msra.mxu0 0
      %6434 = vmatprep.subr.bf16.mxu0 0
      %6435 = vmatpush1.bf16.msra.mxu0 0
      %6436 = vmatprep.subr.bf16.mxu0 0
      %6437 = vmatpush1.bf16.msra.mxu0 0
      %6438 = vmatprep.subr.bf16.mxu0 0
      %6439 = vmatpush1.bf16.msra.mxu0 0
      %6440 = vmatprep.subr.bf16.mxu0 0
      %6441 = vmatpush1.bf16.msra.mxu0 0
      %6442 = vmatprep.subr.bf16.mxu0 0
      %6443 = vmatpush1.bf16.msra.mxu0 0
      %6444 = vmatprep.subr.bf16.mxu0 0
      %6445 = vmatpush1.bf16.msra.mxu0 0
      %6446 = vmatprep.mubr.bf16.mxu0 0
      %6447 = vmatmul.mubr.bf16.gmra.mrb[0].mxu0 %v6220
      %v6448 = vpop.f32.mrb[0].mxu0
      %v6449 = vadd.f32 0.0, %v6448
      %v6450 = vpop.f32.mrb[0].mxu0
      %v6451 = vadd.f32 0.0, %v6450
      %v6452 = vpop.f32.mrb[0].mxu0
      %v6453 = vadd.f32 0.0, %v6452
      %v6454 = vpop.f32.mrb[0].mxu0
      %v6455 = vadd.f32 0.0, %v6454
      %6456 = vdwg.mxu0
      %6457 = vmatprep.subr.bf16.mxu0 %v6353
      %6458 = vmatpush1.bf16.msra.mxu0 %v6352
      %6459 = vmatprep.subr.bf16.mxu0 %v6357
      %6460 = vmatpush1.bf16.msra.mxu0 %v6356
      %6461 = vmatprep.subr.bf16.mxu0 %v6361
      %6462 = vmatpush1.bf16.msra.mxu0 %v6360
      %6463 = vmatprep.subr.bf16.mxu0 %v6365
      %6464 = vmatpush1.bf16.msra.mxu0 %v6364
      %6465 = vmatprep.subr.bf16.mxu0 %v6369
      %6466 = vmatpush1.bf16.msra.mxu0 %v6368
      %6467 = vmatprep.subr.bf16.mxu0 %v6373
      %6468 = vmatpush1.bf16.msra.mxu0 %v6372
      %6469 = vmatprep.subr.bf16.mxu0 %v6377
      %6470 = vmatpush1.bf16.msra.mxu0 %v6376
      %6471 = vmatprep.subr.bf16.mxu0 %v6381
      %6472 = vmatpush1.bf16.msra.mxu0 %v6380
      %6473 = vmatprep.subr.bf16.mxu0 0
      %6474 = vmatpush1.bf16.msra.mxu0 0
      %6475 = vmatprep.subr.bf16.mxu0 0
      %6476 = vmatpush1.bf16.msra.mxu0 0
      %6477 = vmatprep.subr.bf16.mxu0 0
      %6478 = vmatpush1.bf16.msra.mxu0 0
      %6479 = vmatprep.subr.bf16.mxu0 0
      %6480 = vmatpush1.bf16.msra.mxu0 0
      %6481 = vmatprep.subr.bf16.mxu0 0
      %6482 = vmatpush1.bf16.msra.mxu0 0
      %6483 = vmatprep.subr.bf16.mxu0 0
      %6484 = vmatpush1.bf16.msra.mxu0 0
      %6485 = vmatprep.subr.bf16.mxu0 0
      %6486 = vmatpush1.bf16.msra.mxu0 0
      %6487 = vmatprep.subr.bf16.mxu0 0
      %6488 = vmatpush1.bf16.msra.mxu0 0
      %6489 = vmatprep.mubr.bf16.mxu0 0
      %6490 = vmatmul.mubr.bf16.gmra.mrb[0].mxu0 %v6220
      %v6491 = vpop.f32.mrb[0].mxu0
      %v6492 = vadd.f32 0.0, %v6491
      %v6493 = vpop.f32.mrb[0].mxu0
      %v6494 = vadd.f32 0.0, %v6493
      %v6495 = vpop.f32.mrb[0].mxu0
      %v6496 = vadd.f32 0.0, %v6495
      %v6497 = vpop.f32.mrb[0].mxu0
      %v6498 = vadd.f32 0.0, %v6497
      %6499 = vdwg.mxu0
      %v6500 = vadd.f32 %v4184, %v6449
      %v6501 = vadd.f32 %v4185, %v6451
      %v6502 = vadd.f32 %v4186, %v6492
      %v6503 = vadd.f32 %v4187, %v6494
      %v6504 = vadd.f32 %v4188, %v6453
      %v6505 = vadd.f32 %v4189, %v6455
      %v6506 = vadd.f32 %v4190, %v6496
      %v6507 = vadd.f32 %v4191, %v6498
      %v6508 = vxor.u32 %v6500, 2147483648
      %v6509 = vxor.u32 %v6501, 2147483648
      %v6510 = vxor.u32 %v6502, 2147483648
      %v6511 = vxor.u32 %v6504, 2147483648
      %v6512 = vxor.u32 %v6505, 2147483648
      %v6513 = vxor.u32 %v6506, 2147483648
      %v6514 = vmul.f32 %v6508, 1.442695
      %v6515 = vpow.pop %v6514
      %v6516 = vmul.f32 %v6509, 1.442695
      %v6517 = vpow.pop %v6516
      %v6518 = vmul.f32 %v6510, 1.442695
      %v6519 = vpow.pop %v6518
      %v6520 = vmul.f32 %v6511, 1.442695
      %v6521 = vpow.pop %v6520
      %v6522 = vmul.f32 %v6512, 1.442695
      %v6523 = vpow.pop %v6522
      %v6524 = vmul.f32 %v6513, 1.442695
      %v6525 = vpow.pop %v6524
      %v6526 = vadd.f32 %v6515, 1.0
      %v6527 = vadd.f32 %v6517, 1.0
      %v6528 = vadd.f32 %v6519, 1.0
      %v6529 = vadd.f32 %v6521, 1.0
      %v6530 = vadd.f32 %v6523, 1.0
      %v6531 = vadd.f32 %v6525, 1.0
      %v6532 = vrcp.pop %v6526
      %v6533 = vmul.f32 1.0, %v6532
      %v6534 = vrcp.pop %v6527
      %v6535 = vmul.f32 1.0, %v6534
      %v6536 = vrcp.pop %v6528
      %v6537 = vmul.f32 1.0, %v6536
      %v6538 = vrcp.pop %v6529
      %v6539 = vmul.f32 1.0, %v6538
      %v6540 = vrcp.pop %v6530
      %v6541 = vmul.f32 1.0, %v6540
      %v6542 = vrcp.pop %v6531
      %v6543 = vmul.f32 1.0, %v6542
      %v6544 = vtanh.pop %v6503
      %v6545 = vtanh.pop %v6507
      %v6546 = vmul.f32 %v6535, %v6214
      %v6547 = vmul.f32 %v6541, %v6215
      %v6548 = vmul.f32 %v6533, %v6544
      %v6549 = vmul.f32 %v6539, %v6545
      %v6550 = vadd.f32 %v6546, %v6548
      %v6551 = vadd.f32 %v6547, %v6549
      %v6552 = vtanh.pop %v6550
      %v6553 = vtanh.pop %v6551
      %v6554 = vmul.f32 %v6537, %v6552
      %v6555 = vmul.f32 %v6543, %v6553
      %v6556 = vpack.c.bf16 %v6555, %v6554
      %6557 = vst [vmem:[%s3344] sm:$0xff] %v6556
      %v6558 = vld [vmem:[%s4205] sm:$0xff]
      %v6559 = vld [vmem:[%s4205 + $0x8] sm:$0xff]
      %v6560 = vld [vmem:[%s4205 + $0x10] sm:$0xff]
      %v6561 = vld [vmem:[%s4205 + $0x18] sm:$0xff]
      %v6562 = vld [vmem:[%s4205 + $0x20] sm:$0xff]
      %v6563 = vld [vmem:[%s4205 + $0x28] sm:$0xff]
      %v6564 = vld [vmem:[%s4205 + $0x30] sm:$0xff]
      %v6565 = vld [vmem:[%s4205 + $0x38] sm:$0xff]
      %v6566 = vld [vmem:[%s4205 + $0x40] sm:$0xff]
      %v6567 = vld [vmem:[%s4205 + $0x48] sm:$0xff]
      %v6568 = vld [vmem:[%s4205 + $0x50] sm:$0xff]
      %v6569 = vld [vmem:[%s4205 + $0x58] sm:$0xff]
      %v6570 = vld [vmem:[%s4205 + $0x60] sm:$0xff]
      %v6571 = vld [vmem:[%s4205 + $0x68] sm:$0xff]
      %v6572 = vld [vmem:[%s4205 + $0x70] sm:$0xff]
      %v6573 = vld [vmem:[%s4205 + $0x78] sm:$0xff]
      %v6574 = vld [vmem:[%s4205 + $0x80] sm:$0xff]
      %v6575 = vld [vmem:[%s4205 + $0x88] sm:$0xff]
      %v6576 = vld [vmem:[%s4205 + $0x90] sm:$0xff]
      %v6577 = vld [vmem:[%s4205 + $0x98] sm:$0xff]
      %v6578 = vld [vmem:[%s4205 + $0xa0] sm:$0xff]
      %v6579 = vld [vmem:[%s4205 + $0xa8] sm:$0xff]
      %v6580 = vld [vmem:[%s4205 + $0xb0] sm:$0xff]
      %v6581 = vld [vmem:[%s4205 + $0xb8] sm:$0xff]
      %v6582 = vld [vmem:[%s4205 + $0xc0] sm:$0xff]
      %v6583 = vld [vmem:[%s4205 + $0xc8] sm:$0xff]
      %v6584 = vld [vmem:[%s4205 + $0xd0] sm:$0xff]
      %v6585 = vld [vmem:[%s4205 + $0xd8] sm:$0xff]
      %v6586 = vld [vmem:[%s4205 + $0xe0] sm:$0xff]
      %v6587 = vld [vmem:[%s4205 + $0xe8] sm:$0xff]
      %v6588 = vld [vmem:[%s4205 + $0xf0] sm:$0xff]
      %v6589 = vld [vmem:[%s4205 + $0xf8] sm:$0xff]
      %v6622 = vunpack.c.l.b16 %v6558
      %v6623 = vunpack.c.h.b16 %v6558
      %v6624 = vunpack.c.l.b16 %v6559
      %v6625 = vunpack.c.h.b16 %v6559
      %v6626 = vunpack.c.l.b16 %v6560
      %v6627 = vunpack.c.h.b16 %v6560
      %v6628 = vunpack.c.l.b16 %v6561
      %v6629 = vunpack.c.h.b16 %v6561
      %v6630 = vunpack.c.l.b16 %v6562
      %v6631 = vunpack.c.h.b16 %v6562
      %v6632 = vunpack.c.l.b16 %v6563
      %v6633 = vunpack.c.h.b16 %v6563
      %v6634 = vunpack.c.l.b16 %v6564
      %v6635 = vunpack.c.h.b16 %v6564
      %v6636 = vunpack.c.l.b16 %v6565
      %v6637 = vunpack.c.h.b16 %v6565
      %v6638 = vunpack.c.l.b16 %v6566
      %v6639 = vunpack.c.h.b16 %v6566
      %v6640 = vunpack.c.l.b16 %v6567
      %v6641 = vunpack.c.h.b16 %v6567
      %v6642 = vunpack.c.l.b16 %v6568
      %v6643 = vunpack.c.h.b16 %v6568
      %v6644 = vunpack.c.l.b16 %v6569
      %v6645 = vunpack.c.h.b16 %v6569
      %v6646 = vunpack.c.l.b16 %v6570
      %v6647 = vunpack.c.h.b16 %v6570
      %v6648 = vunpack.c.l.b16 %v6571
      %v6649 = vunpack.c.h.b16 %v6571
      %v6650 = vunpack.c.l.b16 %v6572
      %v6651 = vunpack.c.h.b16 %v6572
      %v6652 = vunpack.c.l.b16 %v6573
      %v6653 = vunpack.c.h.b16 %v6573
      %v6654 = vunpack.c.l.b16 %v6574
      %v6655 = vunpack.c.h.b16 %v6574
      %v6656 = vunpack.c.l.b16 %v6575
      %v6657 = vunpack.c.h.b16 %v6575
      %v6658 = vunpack.c.l.b16 %v6576
      %v6659 = vunpack.c.h.b16 %v6576
      %v6660 = vunpack.c.l.b16 %v6577
      %v6661 = vunpack.c.h.b16 %v6577
      %v6662 = vunpack.c.l.b16 %v6578
      %v6663 = vunpack.c.h.b16 %v6578
      %v6664 = vunpack.c.l.b16 %v6579
      %v6665 = vunpack.c.h.b16 %v6579
      %v6666 = vunpack.c.l.b16 %v6580
      %v6667 = vunpack.c.h.b16 %v6580
      %v6668 = vunpack.c.l.b16 %v6581
      %v6669 = vunpack.c.h.b16 %v6581
      %v6670 = vunpack.c.l.b16 %v6582
      %v6671 = vunpack.c.h.b16 %v6582
      %v6672 = vunpack.c.l.b16 %v6583
      %v6673 = vunpack.c.h.b16 %v6583
      %v6674 = vunpack.c.l.b16 %v6584
      %v6675 = vunpack.c.h.b16 %v6584
      %v6676 = vunpack.c.l.b16 %v6585
      %v6677 = vunpack.c.h.b16 %v6585
      %v6678 = vunpack.c.l.b16 %v6586
      %v6679 = vunpack.c.h.b16 %v6586
      %v6680 = vunpack.c.l.b16 %v6587
      %v6681 = vunpack.c.h.b16 %v6587
      %v6682 = vunpack.c.l.b16 %v6588
      %v6683 = vunpack.c.h.b16 %v6588
      %v6684 = vunpack.c.l.b16 %v6589
      %v6685 = vunpack.c.h.b16 %v6589
      %v6686 = vpack.c.b16 %v6626, %v6622
      %v6687 = vpack.c.b16 %v6627, %v6623
      %v6688 = vpack.c.b16 %v6628, %v6624
      %v6689 = vpack.c.b16 %v6629, %v6625
      %v6690 = vpack.c.b16 %v6634, %v6630
      %v6691 = vpack.c.b16 %v6635, %v6631
      %v6692 = vpack.c.b16 %v6636, %v6632
      %v6693 = vpack.c.b16 %v6637, %v6633
      %v6694 = vpack.c.b16 %v6642, %v6638
      %v6695 = vpack.c.b16 %v6643, %v6639
      %v6696 = vpack.c.b16 %v6644, %v6640
      %v6697 = vpack.c.b16 %v6645, %v6641
      %v6698 = vpack.c.b16 %v6650, %v6646
      %v6699 = vpack.c.b16 %v6651, %v6647
      %v6700 = vpack.c.b16 %v6652, %v6648
      %v6701 = vpack.c.b16 %v6653, %v6649
      %v6702 = vpack.c.b16 %v6658, %v6654
      %v6703 = vpack.c.b16 %v6659, %v6655
      %v6704 = vpack.c.b16 %v6660, %v6656
      %v6705 = vpack.c.b16 %v6661, %v6657
      %v6706 = vpack.c.b16 %v6666, %v6662
      %v6707 = vpack.c.b16 %v6667, %v6663
      %v6708 = vpack.c.b16 %v6668, %v6664
      %v6709 = vpack.c.b16 %v6669, %v6665
      %v6710 = vpack.c.b16 %v6674, %v6670
      %v6711 = vpack.c.b16 %v6675, %v6671
      %v6712 = vpack.c.b16 %v6676, %v6672
      %v6713 = vpack.c.b16 %v6677, %v6673
      %v6714 = vpack.c.b16 %v6682, %v6678
      %v6715 = vpack.c.b16 %v6683, %v6679
      %v6716 = vpack.c.b16 %v6684, %v6680
      %v6717 = vpack.c.b16 %v6685, %v6681
      %6750 = vmatprep.subr.bf16.mxu0 %v6687
      %6751 = vmatpush1.bf16.msra.mxu0 %v6686
      %6752 = vmatprep.subr.bf16.mxu0 %v6691
      %6753 = vmatpush1.bf16.msra.mxu0 %v6690
      %6754 = vmatprep.subr.bf16.mxu0 %v6695
      %6755 = vmatpush1.bf16.msra.mxu0 %v6694
      %6756 = vmatprep.subr.bf16.mxu0 %v6699
      %6757 = vmatpush1.bf16.msra.mxu0 %v6698
      %6758 = vmatprep.subr.bf16.mxu0 %v6703
      %6759 = vmatpush1.bf16.msra.mxu0 %v6702
      %6760 = vmatprep.subr.bf16.mxu0 %v6707
      %6761 = vmatpush1.bf16.msra.mxu0 %v6706
      %6762 = vmatprep.subr.bf16.mxu0 %v6711
      %6763 = vmatpush1.bf16.msra.mxu0 %v6710
      %6764 = vmatprep.subr.bf16.mxu0 %v6715
      %6765 = vmatpush1.bf16.msra.mxu0 %v6714
      %6766 = vmatprep.subr.bf16.mxu0 0
      %6767 = vmatpush1.bf16.msra.mxu0 0
      %6768 = vmatprep.subr.bf16.mxu0 0
      %6769 = vmatpush1.bf16.msra.mxu0 0
      %6770 = vmatprep.subr.bf16.mxu0 0
      %6771 = vmatpush1.bf16.msra.mxu0 0
      %6772 = vmatprep.subr.bf16.mxu0 0
      %6773 = vmatpush1.bf16.msra.mxu0 0
      %6774 = vmatprep.subr.bf16.mxu0 0
      %6775 = vmatpush1.bf16.msra.mxu0 0
      %6776 = vmatprep.subr.bf16.mxu0 0
      %6777 = vmatpush1.bf16.msra.mxu0 0
      %6778 = vmatprep.subr.bf16.mxu0 0
      %6779 = vmatpush1.bf16.msra.mxu0 0
      %6780 = vmatprep.subr.bf16.mxu0 0
      %6781 = vmatpush1.bf16.msra.mxu0 0
      %6782 = vmatprep.mubr.bf16.mxu0 0
      %6783 = vmatmul.mubr.bf16.gmra.mrb[0].mxu0 %v6556
      %v6784 = vpop.f32.mrb[0].mxu0
      %v6785 = vadd.f32 0.0, %v6784
      %v6786 = vpop.f32.mrb[0].mxu0
      %v6787 = vadd.f32 0.0, %v6786
      %v6788 = vpop.f32.mrb[0].mxu0
      %v6789 = vadd.f32 0.0, %v6788
      %v6790 = vpop.f32.mrb[0].mxu0
      %v6791 = vadd.f32 0.0, %v6790
      %6792 = vdwg.mxu0
      %6793 = vmatprep.subr.bf16.mxu0 %v6689
      %6794 = vmatpush1.bf16.msra.mxu0 %v6688
      %6795 = vmatprep.subr.bf16.mxu0 %v6693
      %6796 = vmatpush1.bf16.msra.mxu0 %v6692
      %6797 = vmatprep.subr.bf16.mxu0 %v6697
      %6798 = vmatpush1.bf16.msra.mxu0 %v6696
      %6799 = vmatprep.subr.bf16.mxu0 %v6701
      %6800 = vmatpush1.bf16.msra.mxu0 %v6700
      %6801 = vmatprep.subr.bf16.mxu0 %v6705
      %6802 = vmatpush1.bf16.msra.mxu0 %v6704
      %6803 = vmatprep.subr.bf16.mxu0 %v6709
      %6804 = vmatpush1.bf16.msra.mxu0 %v6708
      %6805 = vmatprep.subr.bf16.mxu0 %v6713
      %6806 = vmatpush1.bf16.msra.mxu0 %v6712
      %6807 = vmatprep.subr.bf16.mxu0 %v6717
      %6808 = vmatpush1.bf16.msra.mxu0 %v6716
      %6809 = vmatprep.subr.bf16.mxu0 0
      %6810 = vmatpush1.bf16.msra.mxu0 0
      %6811 = vmatprep.subr.bf16.mxu0 0
      %6812 = vmatpush1.bf16.msra.mxu0 0
      %6813 = vmatprep.subr.bf16.mxu0 0
      %6814 = vmatpush1.bf16.msra.mxu0 0
      %6815 = vmatprep.subr.bf16.mxu0 0
      %6816 = vmatpush1.bf16.msra.mxu0 0
      %6817 = vmatprep.subr.bf16.mxu0 0
      %6818 = vmatpush1.bf16.msra.mxu0 0
      %6819 = vmatprep.subr.bf16.mxu0 0
      %6820 = vmatpush1.bf16.msra.mxu0 0
      %6821 = vmatprep.subr.bf16.mxu0 0
      %6822 = vmatpush1.bf16.msra.mxu0 0
      %6823 = vmatprep.subr.bf16.mxu0 0
      %6824 = vmatpush1.bf16.msra.mxu0 0
      %6825 = vmatprep.mubr.bf16.mxu0 0
      %6826 = vmatmul.mubr.bf16.gmra.mrb[0].mxu0 %v6556
      %v6827 = vpop.f32.mrb[0].mxu0
      %v6828 = vadd.f32 0.0, %v6827
      %v6829 = vpop.f32.mrb[0].mxu0
      %v6830 = vadd.f32 0.0, %v6829
      %v6831 = vpop.f32.mrb[0].mxu0
      %v6832 = vadd.f32 0.0, %v6831
      %v6833 = vpop.f32.mrb[0].mxu0
      %v6834 = vadd.f32 0.0, %v6833
      %6835 = vdwg.mxu0
      %v6836 = vadd.f32 %v4192, %v6785
      %v6837 = vadd.f32 %v4193, %v6787
      %v6838 = vadd.f32 %v4194, %v6828
      %v6839 = vadd.f32 %v4195, %v6830
      %v6840 = vadd.f32 %v4196, %v6789
      %v6841 = vadd.f32 %v4197, %v6791
      %v6842 = vadd.f32 %v4198, %v6832
      %v6843 = vadd.f32 %v4199, %v6834
      %v6844 = vxor.u32 %v6836, 2147483648
      %v6845 = vxor.u32 %v6837, 2147483648
      %v6846 = vxor.u32 %v6838, 2147483648
      %v6847 = vxor.u32 %v6840, 2147483648
      %v6848 = vxor.u32 %v6841, 2147483648
      %v6849 = vxor.u32 %v6842, 2147483648
      %v6850 = vmul.f32 %v6844, 1.442695
      %v6851 = vpow.pop %v6850
      %v6852 = vmul.f32 %v6845, 1.442695
      %v6853 = vpow.pop %v6852
      %v6854 = vmul.f32 %v6846, 1.442695
      %v6855 = vpow.pop %v6854
      %v6856 = vmul.f32 %v6847, 1.442695
      %v6857 = vpow.pop %v6856
      %v6858 = vmul.f32 %v6848, 1.442695
      %v6859 = vpow.pop %v6858
      %v6860 = vmul.f32 %v6849, 1.442695
      %v6861 = vpow.pop %v6860
      %v6862 = vadd.f32 %v6851, 1.0
      %v6863 = vadd.f32 %v6853, 1.0
      %v6864 = vadd.f32 %v6855, 1.0
      %v6865 = vadd.f32 %v6857, 1.0
      %v6866 = vadd.f32 %v6859, 1.0
      %v6867 = vadd.f32 %v6861, 1.0
      %v6868 = vrcp.pop %v6862
      %v6869 = vmul.f32 1.0, %v6868
      %v6870 = vrcp.pop %v6863
      %v6871 = vmul.f32 1.0, %v6870
      %v6872 = vrcp.pop %v6864
      %v6873 = vmul.f32 1.0, %v6872
      %v6874 = vrcp.pop %v6865
      %v6875 = vmul.f32 1.0, %v6874
      %v6876 = vrcp.pop %v6866
      %v6877 = vmul.f32 1.0, %v6876
      %v6878 = vrcp.pop %v6867
      %v6879 = vmul.f32 1.0, %v6878
      %v6880 = vtanh.pop %v6839
      %v6881 = vtanh.pop %v6843
      %v6882 = vmul.f32 %v6871, %v6550
      %v6883 = vmul.f32 %v6877, %v6551
      %v6884 = vmul.f32 %v6869, %v6880
      %v6885 = vmul.f32 %v6875, %v6881
      %v6886 = vadd.f32 %v6882, %v6884
      %v6887 = vadd.f32 %v6883, %v6885
      %v6888 = vtanh.pop %v6886
      %v6889 = vtanh.pop %v6887
      %v6890 = vmul.f32 %v6873, %v6888
      %v6891 = vmul.f32 %v6879, %v6889
      %v6892 = vpack.c.bf16 %v6891, %v6890
      %6893 = vst [vmem:[%s3681] sm:$0xff] %v6892
      %6894 = vst [vmem:[%s4200] sm:$0xff] %v6892
      %6895 = vst [vmem:[%s4202] sm:$0xff] %v6886
      %6896 = vst [vmem:[%s4202 + $0x8] sm:$0xff] %v6887
      %v6897 = vld [vmem:[#allocation5] sm:$0xff]
      %v6898 = vld [vmem:[#allocation5 + $0x8] sm:$0xff]
      %v6899 = vld [vmem:[#allocation5 + $0x10] sm:$0xff]
      %v6900 = vld [vmem:[#allocation5 + $0x18] sm:$0xff]
      %v6901 = vld [vmem:[#allocation5 + $0x20] sm:$0xff]
      %v6902 = vld [vmem:[#allocation5 + $0x28] sm:$0xff]
      %v6903 = vld [vmem:[#allocation5 + $0x30] sm:$0xff]
      %v6904 = vld [vmem:[#allocation5 + $0x38] sm:$0xff]
      %v6905 = vld [vmem:[%s388] sm:$0xff]
      %v6906 = vld [vmem:[%s388 + $0x8] sm:$0xff]
      %v6907 = vld [vmem:[%s388 + $0x10] sm:$0xff]
      %v6908 = vld [vmem:[%s388 + $0x18] sm:$0xff]
      %v6909 = vld [vmem:[%s388 + $0x20] sm:$0xff]
      %v6910 = vld [vmem:[%s388 + $0x28] sm:$0xff]
      %v6911 = vld [vmem:[%s388 + $0x30] sm:$0xff]
      %v6912 = vld [vmem:[%s388 + $0x38] sm:$0xff]
      %v6913 = vld [vmem:[%s388 + $0x40] sm:$0xff]
      %v6914 = vld [vmem:[%s388 + $0x48] sm:$0xff]
      %v6915 = vld [vmem:[%s388 + $0x50] sm:$0xff]
      %v6916 = vld [vmem:[%s388 + $0x58] sm:$0xff]
      %v6917 = vld [vmem:[%s388 + $0x60] sm:$0xff]
      %v6918 = vld [vmem:[%s388 + $0x68] sm:$0xff]
      %v6919 = vld [vmem:[%s388 + $0x70] sm:$0xff]
      %v6920 = vld [vmem:[%s388 + $0x78] sm:$0xff]
      %v6921 = vld [vmem:[%s6] sm:$0xf]
      %v6922 = vld [vmem:[%s6 + $0x4] sm:$0xf]
      %v6923 = vld [vmem:[%s6 + $0x8] sm:$0xf]
      %v6924 = vld [vmem:[%s6 + $0xc] sm:$0xf]
      %v6925 = vld [vmem:[%s6 + $0x10] sm:$0xf]
      %v6926 = vld [vmem:[%s6 + $0x14] sm:$0xf]
      %v6927 = vld [vmem:[%s6 + $0x18] sm:$0xf]
      %v6928 = vld [vmem:[%s6 + $0x1c] sm:$0xf]
      %v6929 = vld [vmem:[%s6 + $0x20] sm:$0xf]
      %v6930 = vld [vmem:[%s6 + $0x24] sm:$0xf]
      %v6931 = vld [vmem:[%s6 + $0x28] sm:$0xf]
      %v6932 = vld [vmem:[%s6 + $0x2c] sm:$0xf]
      %v6933 = vld [vmem:[%s6 + $0x30] sm:$0xf]
      %v6934 = vld [vmem:[%s6 + $0x34] sm:$0xf]
      %v6935 = vld [vmem:[%s6 + $0x38] sm:$0xf]
      %v6936 = vld [vmem:[%s6 + $0x3c] sm:$0xf]
      %v6937 = vld [vmem:[%s7] sm:$0x1]
      %v6939 = vlaneseq
      %v6940 = vshrl.u32 %v6939, 7
      %v6941 = vsub.s32 0, %v6940
      %v6942 = vrot.slane %v6937, %v6941
      %v6960 = vunpack.c.l.b16 %v6921
      %v6961 = vunpack.c.l.b16 %v6922
      %v6962 = vunpack.c.l.b16 %v6923
      %v6963 = vunpack.c.l.b16 %v6924
      %v6964 = vunpack.c.l.b16 %v6925
      %v6965 = vunpack.c.l.b16 %v6926
      %v6966 = vunpack.c.l.b16 %v6927
      %v6967 = vunpack.c.l.b16 %v6928
      %v6968 = vunpack.c.l.b16 %v6929
      %v6969 = vunpack.c.l.b16 %v6930
      %v6970 = vunpack.c.l.b16 %v6931
      %v6971 = vunpack.c.l.b16 %v6932
      %v6972 = vunpack.c.l.b16 %v6933
      %v6973 = vunpack.c.l.b16 %v6934
      %v6974 = vunpack.c.l.b16 %v6935
      %v6975 = vunpack.c.l.b16 %v6936
      %v6976 = vpack.c.b16 %v6961, %v6960
      %v6977 = vpack.c.b16 %v6963, %v6962
      %v6978 = vpack.c.b16 %v6965, %v6964
      %v6979 = vpack.c.b16 %v6967, %v6966
      %v6980 = vpack.c.b16 %v6969, %v6968
      %v6981 = vpack.c.b16 %v6971, %v6970
      %v6982 = vpack.c.b16 %v6973, %v6972
      %v6983 = vpack.c.b16 %v6975, %v6974
      %6992 = vmatprep.subr.bf16.mxu0 0
      %6993 = vmatpush1.bf16.msra.mxu0 %v6976
      %6994 = vmatprep.subr.bf16.mxu0 0
      %6995 = vmatpush1.bf16.msra.mxu0 %v6977
      %6996 = vmatprep.subr.bf16.mxu0 0
      %6997 = vmatpush1.bf16.msra.mxu0 %v6978
      %6998 = vmatprep.subr.bf16.mxu0 0
      %6999 = vmatpush1.bf16.msra.mxu0 %v6979
      %7000 = vmatprep.subr.bf16.mxu0 0
      %7001 = vmatpush1.bf16.msra.mxu0 %v6980
      %7002 = vmatprep.subr.bf16.mxu0 0
      %7003 = vmatpush1.bf16.msra.mxu0 %v6981
      %7004 = vmatprep.subr.bf16.mxu0 0
      %7005 = vmatpush1.bf16.msra.mxu0 %v6982
      %7006 = vmatprep.subr.bf16.mxu0 0
      %7007 = vmatpush1.bf16.msra.mxu0 %v6983
      %7008 = vmatprep.subr.bf16.mxu0 0
      %7009 = vmatpush1.bf16.msra.mxu0 0
      %7010 = vmatprep.subr.bf16.mxu0 0
      %7011 = vmatpush1.bf16.msra.mxu0 0
      %7012 = vmatprep.subr.bf16.mxu0 0
      %7013 = vmatpush1.bf16.msra.mxu0 0
      %7014 = vmatprep.subr.bf16.mxu0 0
      %7015 = vmatpush1.bf16.msra.mxu0 0
      %7016 = vmatprep.subr.bf16.mxu0 0
      %7017 = vmatpush1.bf16.msra.mxu0 0
      %7018 = vmatprep.subr.bf16.mxu0 0
      %7019 = vmatpush1.bf16.msra.mxu0 0
      %7020 = vmatprep.subr.bf16.mxu0 0
      %7021 = vmatpush1.bf16.msra.mxu0 0
      %7022 = vmatprep.subr.bf16.mxu0 0
      %7023 = vmatpush1.bf16.msra.mxu0 0
      %7024 = vmatprep.mubr.bf16.mxu0 0
      %7025 = vmatmul.mubr.bf16.gmra.mrb[0].mxu0 %v6897
      %v7026 = vpop.f32.mrb[0].mxu0
      %v7027 = vadd.f32 %v6942, %v7026
      %v7028 = vpop.f32.mrb[0].mxu0
      %v7029 = vpop.f32.mrb[0].mxu0
      %v7030 = vadd.f32 %v6942, %v7029
      %v7031 = vpop.f32.mrb[0].mxu0
      %7032 = vmatprep.mubr.bf16.mxu0 0
      %7033 = vmatmul.mubr.bf16.gmra.mrb[0].mxu0 %v6898
      %v7034 = vpop.f32.mrb[0].mxu0
      %v7035 = vadd.f32 %v6942, %v7034
      %v7036 = vpop.f32.mrb[0].mxu0
      %v7037 = vpop.f32.mrb[0].mxu0
      %v7038 = vadd.f32 %v6942, %v7037
      %v7039 = vpop.f32.mrb[0].mxu0
      %7040 = vmatprep.mubr.bf16.mxu0 0
      %7041 = vmatmul.mubr.bf16.gmra.mrb[0].mxu0 %v6899
      %v7042 = vpop.f32.mrb[0].mxu0
      %v7043 = vadd.f32 %v6942, %v7042
      %v7044 = vpop.f32.mrb[0].mxu0
      %v7045 = vpop.f32.mrb[0].mxu0
      %v7046 = vadd.f32 %v6942, %v7045
      %v7047 = vpop.f32.mrb[0].mxu0
      %7048 = vmatprep.mubr.bf16.mxu0 0
      %7049 = vmatmul.mubr.bf16.gmra.mrb[0].mxu0 %v6900
      %v7050 = vpop.f32.mrb[0].mxu0
      %v7051 = vadd.f32 %v6942, %v7050
      %v7052 = vpop.f32.mrb[0].mxu0
      %v7053 = vpop.f32.mrb[0].mxu0
      %v7054 = vadd.f32 %v6942, %v7053
      %v7055 = vpop.f32.mrb[0].mxu0
      %7056 = vmatprep.mubr.bf16.mxu0 0
      %7057 = vmatmul.mubr.bf16.gmra.mrb[0].mxu0 %v6901
      %v7058 = vpop.f32.mrb[0].mxu0
      %v7059 = vadd.f32 %v6942, %v7058
      %v7060 = vpop.f32.mrb[0].mxu0
      %v7061 = vpop.f32.mrb[0].mxu0
      %v7062 = vadd.f32 %v6942, %v7061
      %v7063 = vpop.f32.mrb[0].mxu0
      %7064 = vmatprep.mubr.bf16.mxu0 0
      %7065 = vmatmul.mubr.bf16.gmra.mrb[0].mxu0 %v6902
      %v7066 = vpop.f32.mrb[0].mxu0
      %v7067 = vadd.f32 %v6942, %v7066
      %v7068 = vpop.f32.mrb[0].mxu0
      %v7069 = vpop.f32.mrb[0].mxu0
      %v7070 = vadd.f32 %v6942, %v7069
      %v7071 = vpop.f32.mrb[0].mxu0
      %7072 = vmatprep.mubr.bf16.mxu0 0
      %7073 = vmatmul.mubr.bf16.gmra.mrb[0].mxu0 %v6903
      %v7074 = vpop.f32.mrb[0].mxu0
      %v7075 = vadd.f32 %v6942, %v7074
      %v7076 = vpop.f32.mrb[0].mxu0
      %v7077 = vpop.f32.mrb[0].mxu0
      %v7078 = vadd.f32 %v6942, %v7077
      %v7079 = vpop.f32.mrb[0].mxu0
      %7080 = vmatprep.mubr.bf16.mxu0 0
      %7081 = vmatmul.mubr.bf16.gmra.mrb[0].mxu0 %v6904
      %v7082 = vpop.f32.mrb[0].mxu0
      %v7083 = vadd.f32 %v6942, %v7082
      %v7084 = vpop.f32.mrb[0].mxu0
      %v7085 = vpop.f32.mrb[0].mxu0
      %v7086 = vadd.f32 %v6942, %v7085
      %v7087 = vpop.f32.mrb[0].mxu0
      %7088 = vdwg.mxu0
      %7089 = vmax.xlane.f32.xlu0 %v7027
      %v7090 = vpop.xlane.xlu0 %7089
      %7091 = vmax.xlane.f32.xlu0 %v7030
      %v7092 = vpop.xlane.xlu0 %7091
      %7093 = vmax.xlane.f32.xlu0 %v7035
      %v7094 = vpop.xlane.xlu0 %7093
      %7095 = vmax.xlane.f32.xlu0 %v7038
      %v7096 = vpop.xlane.xlu0 %7095
      %7097 = vmax.xlane.f32.xlu0 %v7043
      %v7098 = vpop.xlane.xlu0 %7097
      %7099 = vmax.xlane.f32.xlu0 %v7046
      %v7100 = vpop.xlane.xlu0 %7099
      %7101 = vmax.xlane.f32.xlu0 %v7051
      %v7102 = vpop.xlane.xlu0 %7101
      %7103 = vmax.xlane.f32.xlu0 %v7054
      %v7104 = vpop.xlane.xlu0 %7103
      %7105 = vmax.xlane.f32.xlu0 %v7059
      %v7106 = vpop.xlane.xlu0 %7105
      %7107 = vmax.xlane.f32.xlu0 %v7062
      %v7108 = vpop.xlane.xlu0 %7107
      %7109 = vmax.xlane.f32.xlu0 %v7067
      %v7110 = vpop.xlane.xlu0 %7109
      %7111 = vmax.xlane.f32.xlu0 %v7070
      %v7112 = vpop.xlane.xlu0 %7111
      %7113 = vmax.xlane.f32.xlu0 %v7075
      %v7114 = vpop.xlane.xlu0 %7113
      %7115 = vmax.xlane.f32.xlu0 %v7078
      %v7116 = vpop.xlane.xlu0 %7115
      %7117 = vmax.xlane.f32.xlu0 %v7083
      %v7118 = vpop.xlane.xlu0 %7117
      %7119 = vmax.xlane.f32.xlu0 %v7086
      %v7120 = vpop.xlane.xlu0 %7119
      %v7121 = vsub.f32 -inf, %v7090
      %v7122 = vsub.f32 -inf, %v7092
      %v7123 = vsub.f32 -inf, %v7094
      %v7124 = vsub.f32 -inf, %v7096
      %v7125 = vsub.f32 -inf, %v7098
      %v7126 = vsub.f32 -inf, %v7100
      %v7127 = vsub.f32 -inf, %v7102
      %v7128 = vsub.f32 -inf, %v7104
      %v7129 = vsub.f32 -inf, %v7106
      %v7130 = vsub.f32 -inf, %v7108
      %v7131 = vsub.f32 -inf, %v7110
      %v7132 = vsub.f32 -inf, %v7112
      %v7133 = vsub.f32 -inf, %v7114
      %v7134 = vsub.f32 -inf, %v7116
      %v7135 = vsub.f32 -inf, %v7118
      %v7136 = vsub.f32 -inf, %v7120
      %v7137 = vmul.f32 %v7121, 1.442695
      %v7138 = vpow.pop %v7137
      %v7139 = vmul.f32 %v7122, 1.442695
      %v7140 = vpow.pop %v7139
      %v7141 = vmul.f32 %v7123, 1.442695
      %v7142 = vpow.pop %v7141
      %v7143 = vmul.f32 %v7124, 1.442695
      %v7144 = vpow.pop %v7143
      %v7145 = vmul.f32 %v7125, 1.442695
      %v7146 = vpow.pop %v7145
      %v7147 = vmul.f32 %v7126, 1.442695
      %v7148 = vpow.pop %v7147
      %v7149 = vmul.f32 %v7127, 1.442695
      %v7150 = vpow.pop %v7149
      %v7151 = vmul.f32 %v7128, 1.442695
      %v7152 = vpow.pop %v7151
      %v7153 = vmul.f32 %v7129, 1.442695
      %v7154 = vpow.pop %v7153
      %v7155 = vmul.f32 %v7130, 1.442695
      %v7156 = vpow.pop %v7155
      %v7157 = vmul.f32 %v7131, 1.442695
      %v7158 = vpow.pop %v7157
      %v7159 = vmul.f32 %v7132, 1.442695
      %v7160 = vpow.pop %v7159
      %v7161 = vmul.f32 %v7133, 1.442695
      %v7162 = vpow.pop %v7161
      %v7163 = vmul.f32 %v7134, 1.442695
      %v7164 = vpow.pop %v7163
      %v7165 = vmul.f32 %v7135, 1.442695
      %v7166 = vpow.pop %v7165
      %v7167 = vmul.f32 %v7136, 1.442695
      %v7168 = vpow.pop %v7167
      %v7169 = vmul.f32 %v7138, 0.0
      %v7170 = vmul.f32 %v7140, 0.0
      %v7171 = vmul.f32 %v7142, 0.0
      %v7172 = vmul.f32 %v7144, 0.0
      %v7173 = vmul.f32 %v7146, 0.0
      %v7174 = vmul.f32 %v7148, 0.0
      %v7175 = vmul.f32 %v7150, 0.0
      %v7176 = vmul.f32 %v7152, 0.0
      %v7177 = vmul.f32 %v7154, 0.0
      %v7178 = vmul.f32 %v7156, 0.0
      %v7179 = vmul.f32 %v7158, 0.0
      %v7180 = vmul.f32 %v7160, 0.0
      %v7181 = vmul.f32 %v7162, 0.0
      %v7182 = vmul.f32 %v7164, 0.0
      %v7183 = vmul.f32 %v7166, 0.0
      %v7184 = vmul.f32 %v7168, 0.0
      %v7185 = vsub.f32 %v7027, %v7090
      %v7186 = vsub.f32 %v7030, %v7092
      %v7187 = vsub.f32 %v7035, %v7094
      %v7188 = vsub.f32 %v7038, %v7096
      %v7189 = vsub.f32 %v7043, %v7098
      %v7190 = vsub.f32 %v7046, %v7100
      %v7191 = vsub.f32 %v7051, %v7102
      %v7192 = vsub.f32 %v7054, %v7104
      %v7193 = vsub.f32 %v7059, %v7106
      %v7194 = vsub.f32 %v7062, %v7108
      %v7195 = vsub.f32 %v7067, %v7110
      %v7196 = vsub.f32 %v7070, %v7112
      %v7197 = vsub.f32 %v7075, %v7114
      %v7198 = vsub.f32 %v7078, %v7116
      %v7199 = vsub.f32 %v7083, %v7118
      %v7200 = vsub.f32 %v7086, %v7120
      %v7201 = vmul.f32 %v7185, 1.442695
      %v7202 = vpow.pop %v7201
      %v7203 = vmul.f32 %v7186, 1.442695
      %v7204 = vpow.pop %v7203
      %v7205 = vmul.f32 %v7187, 1.442695
      %v7206 = vpow.pop %v7205
      %v7207 = vmul.f32 %v7188, 1.442695
      %v7208 = vpow.pop %v7207
      %v7209 = vmul.f32 %v7189, 1.442695
      %v7210 = vpow.pop %v7209
      %v7211 = vmul.f32 %v7190, 1.442695
      %v7212 = vpow.pop %v7211
      %v7213 = vmul.f32 %v7191, 1.442695
      %v7214 = vpow.pop %v7213
      %v7215 = vmul.f32 %v7192, 1.442695
      %v7216 = vpow.pop %v7215
      %v7217 = vmul.f32 %v7193, 1.442695
      %v7218 = vpow.pop %v7217
      %v7219 = vmul.f32 %v7194, 1.442695
      %v7220 = vpow.pop %v7219
      %v7221 = vmul.f32 %v7195, 1.442695
      %v7222 = vpow.pop %v7221
      %v7223 = vmul.f32 %v7196, 1.442695
      %v7224 = vpow.pop %v7223
      %v7225 = vmul.f32 %v7197, 1.442695
      %v7226 = vpow.pop %v7225
      %v7227 = vmul.f32 %v7198, 1.442695
      %v7228 = vpow.pop %v7227
      %v7229 = vmul.f32 %v7199, 1.442695
      %v7230 = vpow.pop %v7229
      %v7231 = vmul.f32 %v7200, 1.442695
      %v7232 = vpow.pop %v7231
      %7233 = vadd.xlane.f32.xlu0 %v7202
      %v7234 = vpop.xlane.xlu0 %7233
      %7235 = vadd.xlane.f32.xlu0 %v7204
      %v7236 = vpop.xlane.xlu0 %7235
      %7237 = vadd.xlane.f32.xlu0 %v7206
      %v7238 = vpop.xlane.xlu0 %7237
      %7239 = vadd.xlane.f32.xlu0 %v7208
      %v7240 = vpop.xlane.xlu0 %7239
      %7241 = vadd.xlane.f32.xlu0 %v7210
      %v7242 = vpop.xlane.xlu0 %7241
      %7243 = vadd.xlane.f32.xlu0 %v7212
      %v7244 = vpop.xlane.xlu0 %7243
      %7245 = vadd.xlane.f32.xlu0 %v7214
      %v7246 = vpop.xlane.xlu0 %7245
      %7247 = vadd.xlane.f32.xlu0 %v7216
      %v7248 = vpop.xlane.xlu0 %7247
      %7249 = vadd.xlane.f32.xlu0 %v7218
      %v7250 = vpop.xlane.xlu0 %7249
      %7251 = vadd.xlane.f32.xlu0 %v7220
      %v7252 = vpop.xlane.xlu0 %7251
      %7253 = vadd.xlane.f32.xlu0 %v7222
      %v7254 = vpop.xlane.xlu0 %7253
      %7255 = vadd.xlane.f32.xlu0 %v7224
      %v7256 = vpop.xlane.xlu0 %7255
      %7257 = vadd.xlane.f32.xlu0 %v7226
      %v7258 = vpop.xlane.xlu0 %7257
      %7259 = vadd.xlane.f32.xlu0 %v7228
      %v7260 = vpop.xlane.xlu0 %7259
      %7261 = vadd.xlane.f32.xlu0 %v7230
      %v7262 = vpop.xlane.xlu0 %7261
      %7263 = vadd.xlane.f32.xlu0 %v7232
      %v7264 = vpop.xlane.xlu0 %7263
      %v7265 = vadd.f32 %v7169, %v7234
      %v7266 = vadd.f32 %v7170, %v7236
      %v7267 = vadd.f32 %v7171, %v7238
      %v7268 = vadd.f32 %v7172, %v7240
      %v7269 = vadd.f32 %v7173, %v7242
      %v7270 = vadd.f32 %v7174, %v7244
      %v7271 = vadd.f32 %v7175, %v7246
      %v7272 = vadd.f32 %v7176, %v7248
      %v7273 = vadd.f32 %v7177, %v7250
      %v7274 = vadd.f32 %v7178, %v7252
      %v7275 = vadd.f32 %v7179, %v7254
      %v7276 = vadd.f32 %v7180, %v7256
      %v7277 = vadd.f32 %v7181, %v7258
      %v7278 = vadd.f32 %v7182, %v7260
      %v7279 = vadd.f32 %v7183, %v7262
      %v7280 = vadd.f32 %v7184, %v7264
      %v7281 = vlaneseq
      %v7282 = vand.u32 %v7281, 127
      %7283 = vset.pattern.permute.xlu0 0
      %7284 = vperm.xlu0 %7283, %v6905
      %v7285 = vpop.permute.xlu0 %7284
      %7286 = vset.pattern.permute.xlu0 0
      %7287 = vperm.xlu0 %7286, %v6906
      %v7288 = vpop.permute.xlu0 %7287
      %7289 = vset.pattern.permute.xlu0 0
      %7290 = vperm.xlu0 %7289, %v6907
      %v7291 = vpop.permute.xlu0 %7290
      %7292 = vset.pattern.permute.xlu0 0
      %7293 = vperm.xlu0 %7292, %v6908
      %v7294 = vpop.permute.xlu0 %7293
      %7295 = vset.pattern.permute.xlu0 0
      %7296 = vperm.xlu0 %7295, %v6909
      %v7297 = vpop.permute.xlu0 %7296
      %7298 = vset.pattern.permute.xlu0 0
      %7299 = vperm.xlu0 %7298, %v6910
      %v7300 = vpop.permute.xlu0 %7299
      %7301 = vset.pattern.permute.xlu0 0
      %7302 = vperm.xlu0 %7301, %v6911
      %v7303 = vpop.permute.xlu0 %7302
      %7304 = vset.pattern.permute.xlu0 0
      %7305 = vperm.xlu0 %7304, %v6912
      %v7306 = vpop.permute.xlu0 %7305
      %7307 = vset.pattern.permute.xlu0 0
      %7308 = vperm.xlu0 %7307, %v6913
      %v7309 = vpop.permute.xlu0 %7308
      %7310 = vset.pattern.permute.xlu0 0
      %7311 = vperm.xlu0 %7310, %v6914
      %v7312 = vpop.permute.xlu0 %7311
      %7313 = vset.pattern.permute.xlu0 0
      %7314 = vperm.xlu0 %7313, %v6915
      %v7315 = vpop.permute.xlu0 %7314
      %7316 = vset.pattern.permute.xlu0 0
      %7317 = vperm.xlu0 %7316, %v6916
      %v7318 = vpop.permute.xlu0 %7317
      %7319 = vset.pattern.permute.xlu0 0
      %7320 = vperm.xlu0 %7319, %v6917
      %v7321 = vpop.permute.xlu0 %7320
      %7322 = vset.pattern.permute.xlu0 0
      %7323 = vperm.xlu0 %7322, %v6918
      %v7324 = vpop.permute.xlu0 %7323
      %7325 = vset.pattern.permute.xlu0 0
      %7326 = vperm.xlu0 %7325, %v6919
      %v7327 = vpop.permute.xlu0 %7326
      %7328 = vset.pattern.permute.xlu0 0
      %7329 = vperm.xlu0 %7328, %v6920
      %v7330 = vpop.permute.xlu0 %7329
      %vm7331 = vcmp.eq.s32.totalorder %v7282, %v7285
      %vm7332 = vcmp.eq.s32.totalorder %v7282, %v7288
      %vm7333 = vcmp.eq.s32.totalorder %v7282, %v7291
      %vm7334 = vcmp.eq.s32.totalorder %v7282, %v7294
      %vm7335 = vcmp.eq.s32.totalorder %v7282, %v7297
      %vm7336 = vcmp.eq.s32.totalorder %v7282, %v7300
      %vm7337 = vcmp.eq.s32.totalorder %v7282, %v7303
      %vm7338 = vcmp.eq.s32.totalorder %v7282, %v7306
      %vm7339 = vcmp.eq.s32.totalorder %v7282, %v7309
      %vm7340 = vcmp.eq.s32.totalorder %v7282, %v7312
      %vm7341 = vcmp.eq.s32.totalorder %v7282, %v7315
      %vm7342 = vcmp.eq.s32.totalorder %v7282, %v7318
      %vm7343 = vcmp.eq.s32.totalorder %v7282, %v7321
      %vm7344 = vcmp.eq.s32.totalorder %v7282, %v7324
      %vm7345 = vcmp.eq.s32.totalorder %v7282, %v7327
      %vm7346 = vcmp.eq.s32.totalorder %v7282, %v7330
      %v7347 = vsel %vm7331, %v7027, 0.0
      %v7348 = vsel %vm7332, %v7030, 0.0
      %v7349 = vsel %vm7333, %v7035, 0.0
      %v7350 = vsel %vm7334, %v7038, 0.0
      %v7351 = vsel %vm7335, %v7043, 0.0
      %v7352 = vsel %vm7336, %v7046, 0.0
      %v7353 = vsel %vm7337, %v7051, 0.0
      %v7354 = vsel %vm7338, %v7054, 0.0
      %v7355 = vsel %vm7339, %v7059, 0.0
      %v7356 = vsel %vm7340, %v7062, 0.0
      %v7357 = vsel %vm7341, %v7067, 0.0
      %v7358 = vsel %vm7342, %v7070, 0.0
      %v7359 = vsel %vm7343, %v7075, 0.0
      %v7360 = vsel %vm7344, %v7078, 0.0
      %v7361 = vsel %vm7345, %v7083, 0.0
      %v7362 = vsel %vm7346, %v7086, 0.0
      %7363 = vadd.xlane.f32.xlu0 %v7347
      %v7364 = vpop.xlane.xlu0 %7363
      %7365 = vadd.xlane.f32.xlu0 %v7348
      %v7366 = vpop.xlane.xlu0 %7365
      %7367 = vadd.xlane.f32.xlu0 %v7349
      %v7368 = vpop.xlane.xlu0 %7367
      %7369 = vadd.xlane.f32.xlu0 %v7350
      %v7370 = vpop.xlane.xlu0 %7369
      %7371 = vadd.xlane.f32.xlu0 %v7351
      %v7372 = vpop.xlane.xlu0 %7371
      %7373 = vadd.xlane.f32.xlu0 %v7352
      %v7374 = vpop.xlane.xlu0 %7373
      %7375 = vadd.xlane.f32.xlu0 %v7353
      %v7376 = vpop.xlane.xlu0 %7375
      %7377 = vadd.xlane.f32.xlu0 %v7354
      %v7378 = vpop.xlane.xlu0 %7377
      %7379 = vadd.xlane.f32.xlu0 %v7355
      %v7380 = vpop.xlane.xlu0 %7379
      %7381 = vadd.xlane.f32.xlu0 %v7356
      %v7382 = vpop.xlane.xlu0 %7381
      %7383 = vadd.xlane.f32.xlu0 %v7357
      %v7384 = vpop.xlane.xlu0 %7383
      %7385 = vadd.xlane.f32.xlu0 %v7358
      %v7386 = vpop.xlane.xlu0 %7385
      %7387 = vadd.xlane.f32.xlu0 %v7359
      %v7388 = vpop.xlane.xlu0 %7387
      %7389 = vadd.xlane.f32.xlu0 %v7360
      %v7390 = vpop.xlane.xlu0 %7389
      %7391 = vadd.xlane.f32.xlu0 %v7361
      %v7392 = vpop.xlane.xlu0 %7391
      %7393 = vadd.xlane.f32.xlu0 %v7362
      %v7394 = vpop.xlane.xlu0 %7393
      %v7395 = vadd.f32 %v7364, 0.0
      %v7396 = vadd.f32 %v7366, 0.0
      %v7397 = vadd.f32 %v7368, 0.0
      %v7398 = vadd.f32 %v7370, 0.0
      %v7399 = vadd.f32 %v7372, 0.0
      %v7400 = vadd.f32 %v7374, 0.0
      %v7401 = vadd.f32 %v7376, 0.0
      %v7402 = vadd.f32 %v7378, 0.0
      %v7403 = vadd.f32 %v7380, 0.0
      %v7404 = vadd.f32 %v7382, 0.0
      %v7405 = vadd.f32 %v7384, 0.0
      %v7406 = vadd.f32 %v7386, 0.0
      %v7407 = vadd.f32 %v7388, 0.0
      %v7408 = vadd.f32 %v7390, 0.0
      %v7409 = vadd.f32 %v7392, 0.0
      %v7410 = vadd.f32 %v7394, 0.0
      %v7411 = vlog2.pop %v7265
      %v7412 = vmul.f32 %v7411, 0.6931472
      %v7413 = vlog2.pop %v7266
      %v7414 = vmul.f32 %v7413, 0.6931472
      %v7415 = vlog2.pop %v7267
      %v7416 = vmul.f32 %v7415, 0.6931472
      %v7417 = vlog2.pop %v7268
      %v7418 = vmul.f32 %v7417, 0.6931472
      %v7419 = vlog2.pop %v7269
      %v7420 = vmul.f32 %v7419, 0.6931472
      %v7421 = vlog2.pop %v7270
      %v7422 = vmul.f32 %v7421, 0.6931472
      %v7423 = vlog2.pop %v7271
      %v7424 = vmul.f32 %v7423, 0.6931472
      %v7425 = vlog2.pop %v7272
      %v7426 = vmul.f32 %v7425, 0.6931472
      %v7427 = vlog2.pop %v7273
      %v7428 = vmul.f32 %v7427, 0.6931472
      %v7429 = vlog2.pop %v7274
      %v7430 = vmul.f32 %v7429, 0.6931472
      %v7431 = vlog2.pop %v7275
      %v7432 = vmul.f32 %v7431, 0.6931472
      %v7433 = vlog2.pop %v7276
      %v7434 = vmul.f32 %v7433, 0.6931472
      %v7435 = vlog2.pop %v7277
      %v7436 = vmul.f32 %v7435, 0.6931472
      %v7437 = vlog2.pop %v7278
      %v7438 = vmul.f32 %v7437, 0.6931472
      %v7439 = vlog2.pop %v7279
      %v7440 = vmul.f32 %v7439, 0.6931472
      %v7441 = vlog2.pop %v7280
      %v7442 = vmul.f32 %v7441, 0.6931472
      %v7443 = vadd.f32 %v7090, %v7412
      %v7444 = vadd.f32 %v7092, %v7414
      %v7445 = vadd.f32 %v7094, %v7416
      %v7446 = vadd.f32 %v7096, %v7418
      %v7447 = vadd.f32 %v7098, %v7420
      %v7448 = vadd.f32 %v7100, %v7422
      %v7449 = vadd.f32 %v7102, %v7424
      %v7450 = vadd.f32 %v7104, %v7426
      %v7451 = vadd.f32 %v7106, %v7428
      %v7452 = vadd.f32 %v7108, %v7430
      %v7453 = vadd.f32 %v7110, %v7432
      %v7454 = vadd.f32 %v7112, %v7434
      %v7455 = vadd.f32 %v7114, %v7436
      %v7456 = vadd.f32 %v7116, %v7438
      %v7457 = vadd.f32 %v7118, %v7440
      %v7458 = vadd.f32 %v7120, %v7442
      %v7459 = vsub.f32 %v7443, %v7395
      %v7460 = vsub.f32 %v7444, %v7396
      %v7461 = vsub.f32 %v7445, %v7397
      %v7462 = vsub.f32 %v7446, %v7398
      %v7463 = vsub.f32 %v7447, %v7399
      %v7464 = vsub.f32 %v7448, %v7400
      %v7465 = vsub.f32 %v7449, %v7401
      %v7466 = vsub.f32 %v7450, %v7402
      %v7467 = vsub.f32 %v7451, %v7403
      %v7468 = vsub.f32 %v7452, %v7404
      %v7469 = vsub.f32 %v7453, %v7405
      %v7470 = vsub.f32 %v7454, %v7406
      %v7471 = vsub.f32 %v7455, %v7407
      %v7472 = vsub.f32 %v7456, %v7408
      %v7473 = vsub.f32 %v7457, %v7409
      %v7474 = vsub.f32 %v7458, %v7410
      %s7475 = smul.u32 %s24, 8
      %v7476 = vstv %s7475
      %v7477 = vadd.s32 %v7476, 1
      %v7478 = vadd.s32 %v7476, 2
      %v7479 = vadd.s32 %v7476, 3
      %v7480 = vadd.s32 %v7476, 4
      %v7481 = vadd.s32 %v7476, 5
      %v7482 = vadd.s32 %v7476, 6
      %v7483 = vadd.s32 %v7476, 7
      %v7484 = vld [vmem:[%s395] sm:$0xff]
      %v7485 = vld [vmem:[%s395 + $0x8] sm:$0xff]
      %vm7486 = vcmp.lt.s32.totalorder %v7476, %v7484
      %vm7487 = vcmp.lt.s32.totalorder %v7476, %v7485
      %vm7488 = vcmp.lt.s32.totalorder %v7477, %v7484
      %vm7489 = vcmp.lt.s32.totalorder %v7477, %v7485
      %vm7490 = vcmp.lt.s32.totalorder %v7478, %v7484
      %vm7491 = vcmp.lt.s32.totalorder %v7478, %v7485
      %vm7492 = vcmp.lt.s32.totalorder %v7479, %v7484
      %vm7493 = vcmp.lt.s32.totalorder %v7479, %v7485
      %vm7494 = vcmp.lt.s32.totalorder %v7480, %v7484
      %vm7495 = vcmp.lt.s32.totalorder %v7480, %v7485
      %vm7496 = vcmp.lt.s32.totalorder %v7481, %v7484
      %vm7497 = vcmp.lt.s32.totalorder %v7481, %v7485
      %vm7498 = vcmp.lt.s32.totalorder %v7482, %v7484
      %vm7499 = vcmp.lt.s32.totalorder %v7482, %v7485
      %vm7500 = vcmp.lt.s32.totalorder %v7483, %v7484
      %vm7501 = vcmp.lt.s32.totalorder %v7483, %v7485
      %v7502 = vld [vmem:[#allocation4] sm:$0xff]
      %v7503 = vld [vmem:[#allocation4 + $0x8] sm:$0xff]
      %v7504 = vsel %vm7486, %v7459, 0.0
      %v7505 = vsel %vm7487, %v7460, 0.0
      %v7506 = vsel %vm7488, %v7461, 0.0
      %v7507 = vsel %vm7489, %v7462, 0.0
      %v7508 = vsel %vm7490, %v7463, 0.0
      %v7509 = vsel %vm7491, %v7464, 0.0
      %v7510 = vsel %vm7492, %v7465, 0.0
      %v7511 = vsel %vm7493, %v7466, 0.0
      %v7512 = vsel %vm7494, %v7467, 0.0
      %v7513 = vsel %vm7495, %v7468, 0.0
      %v7514 = vsel %vm7496, %v7469, 0.0
      %v7515 = vsel %vm7497, %v7470, 0.0
      %v7516 = vsel %vm7498, %v7471, 0.0
      %v7517 = vsel %vm7499, %v7472, 0.0
      %v7518 = vsel %vm7500, %v7473, 0.0
      %v7519 = vsel %vm7501, %v7474, 0.0
      %vm7520 = vcmask 7168
      %v7521 = vsel %vm7520, %v7504, 0.0
      %v7522 = vsel %vm7520, %v7506, 0.0
      %v7523 = vadd.f32 %v7521, %v7522
      %v7524 = vsel %vm7520, %v7508, 0.0
      %v7525 = vadd.f32 %v7523, %v7524
      %v7526 = vsel %vm7520, %v7510, 0.0
      %v7527 = vadd.f32 %v7525, %v7526
      %v7528 = vsel %vm7520, %v7512, 0.0
      %v7529 = vadd.f32 %v7527, %v7528
      %v7530 = vsel %vm7520, %v7514, 0.0
      %v7531 = vadd.f32 %v7529, %v7530
      %v7532 = vsel %vm7520, %v7516, 0.0
      %v7533 = vadd.f32 %v7531, %v7532
      %v7534 = vsel %vm7520, %v7518, 0.0
      %v7535 = vadd.f32 %v7533, %v7534
      %v7536 = vsel %vm7520, %v7505, 0.0
      %v7537 = vsel %vm7520, %v7507, 0.0
      %v7538 = vadd.f32 %v7536, %v7537
      %v7539 = vsel %vm7520, %v7509, 0.0
      %v7540 = vadd.f32 %v7538, %v7539
      %v7541 = vsel %vm7520, %v7511, 0.0
      %v7542 = vadd.f32 %v7540, %v7541
      %v7543 = vsel %vm7520, %v7513, 0.0
      %v7544 = vadd.f32 %v7542, %v7543
      %v7545 = vsel %vm7520, %v7515, 0.0
      %v7546 = vadd.f32 %v7544, %v7545
      %v7547 = vsel %vm7520, %v7517, 0.0
      %v7548 = vadd.f32 %v7546, %v7547
      %v7549 = vsel %vm7520, %v7519, 0.0
      %v7550 = vadd.f32 %v7548, %v7549
      %v7551 = vadd.f32 %v7502, %v7535
      %v7552 = vadd.f32 %v7503, %v7550
      %7553 = vst.msk [vmem:[#allocation4] sm:$0xff] %vm7520, %v7551
      %7554 = vst.msk [vmem:[#allocation4 + $0x8] sm:$0xff] %vm7520, %v7552
      %p7555 = scmp.eq.s32.totalorder %s24, 1
      // Predicated region
      $region57: #{rnn_lm_nll.1} parent=51 // pred_check
        %p7556 = pneg %p7555
      $region58: #{rnn_lm_nll.1} parent=51 // pred_check_branch
        %7558 = sbr.rel (%p7556) target = $region60
      $region59: #{rnn_lm_nll.1} parent=51 // pred_region
        %v7559 = vld [vmem:[#allocation4] sm:$0xff]
        %v7560 = vld [vmem:[#allocation4 + $0x8] sm:$0xff]
        %7561 = vst.msk [vmem:[%s401] sm:$0xff] %vm7520, %v7559
        %7562 = vst.msk [vmem:[%s401 + $0x8] sm:$0xff] %vm7520, %v7560
      $region60: #{rnn_lm_nll.1} parent=51 // pred_fallthru
        _
      %s7563 = smul.u32 2, %s23
      %p7564 = scmp.lt.s32.totalorder %s7563, 1
      %s7565 = scalar_select %p7564, %s7563, 1
      %s7566 = smul.addr %s7565, 8
      %s7567 = scalar_lea.vmem %s8, %s7566
      // Predicated region
      $region61: #{rnn_lm_nll.1} parent=51 // pred_check
        %p7568 = pneg %p236
      $region62: #{rnn_lm_nll.1} parent=51 // pred_check_branch
        %7570 = sbr.rel (%p7568) target = $region64
      $region63: #{rnn_lm_nll.1} parent=51 // pred_region
        %s7571 = smul.u32 2, %s23
      $region64: #{rnn_lm_nll.1} parent=51 // pred_fallthru
        _
      // Predicated region
      $region65: #{rnn_lm_nll.1} parent=51 // pred_check
        %p7572 = pneg %p236
      $region66: #{rnn_lm_nll.1} parent=51 // pred_check_branch
        %7574 = sbr.rel (%p7572) target = $region68
      $region67: #{rnn_lm_nll.1} parent=51 // pred_region
        %s7575 = smul.u32 2, %s23
        %p7576 = scmp.lt.s32.totalorder %s7575, 1
        %s7577 = scalar_select %p7576, %s7575, 1
        %s7578 = smul.addr %s7577, 8
        %s7579 = scalar_lea.vmem %s8, %s7578
      $region68: #{rnn_lm_nll.1} parent=51 // pred_fallthru
        _
    $region52: #{rnn_lm_nll.1} parent=5 // pred_fallthru
      _
    %p7580 = scmp.le.s32.totalorder 2, %s14
    // Predicated region
    $region69: #{rnn_lm_nll.1} parent=5 // pred_check
      %p7581 = pneg %p7580
    $region70: #{rnn_lm_nll.1} parent=5 // pred_check_branch
      %7583 = sbr.rel (%p7581) target = $region72
    $region71: #{rnn_lm_nll.1} parent=5 // pred_region
      %s7584 = ssub.s32 %s14, 2
    $region72: #{rnn_lm_nll.1} parent=5 // pred_fallthru
      _
  $region6: #{rnn_lm_nll.1} parent=0 // loop_footer
    %s18 = sadd.s32 1, %s14
  $region7: #{rnn_lm_nll.1} parent=0 // loop_footer_branch
    %13 = sbr.rel target = $region3
  $region8: #{rnn_lm_nll.1} parent=0 // loop_exit
    _

</llo_original>
